<compile_context>
chip_gen: v6e
topology: v6e:2x2x1
jax: 0.10.0
libtpu: 0.0.40
codegen_flags: <defaults>
</compile_context>

<pallas_src>
import jax
import jax.numpy as jnp
from jax.experimental import pallas as pl
from jax.experimental.pallas import tpu as pltpu


# -----------------------------------------------------------------------------
# Fused Pallas kernel: one image per grid step, everything in VMEM.
# -----------------------------------------------------------------------------
def lsc_fused_kernel(x_ref, w11_ref, b11_ref, w12_ref, b12_ref,
                     w21_ref, b21_ref, w22_ref, b22_ref, o_ref):
    """LargeSeperateConv mode=0 forward for one image.

    x_ref : (1, Hp, Wp, Cin)  zero-padded NHWC input; valid region is
            rows [p, p+H), cols [p, p+W); Wp is padded to a multiple of 8.
    w*_ref: (k, Cin_or_Cmid, Cmid_or_Cout)  per-tap channel-mix matrices,
            w[t][i, o] == torch_weight[o, i, t].
    b*_ref: (1, C) biases.
    o_ref : (1, H, W, Cout)
    """
    _, Hp, Wp, Cin = x_ref.shape
    _, H, W, Cout = o_ref.shape
    k, _, Cmid = w11_ref.shape
    p = k // 2
    f32 = jnp.float32

    xp = x_ref[0].astype(f32)                    # (Hp, Wp, Cin)
    x2d = xp.reshape(Hp * Wp, Cin)               # aligned relabel (Wp % 8 == 0)

    # ---------------- branch 1: conv11 (k,1 over H) -> conv12 (1,k over W) --
    # conv11 along H, computed for all Wp columns, no bias yet: the W-pad
    # columns of x are zero, so the W-pad columns of m1 stay exactly zero,
    # which is what conv12's implicit zero padding requires.
    m1 = None
    for t in range(k):                           # row offsets t*Wp are 8-aligned
        lhs = x2d[t * Wp:(t + H) * Wp, :]
        z = jnp.dot(lhs, w11_ref[t], preferred_element_type=f32)
        m1 = z if m1 is None else m1 + z
    m1 = m1.reshape(H, Wp, Cmid)
    # Add b11 only on the valid W columns [p, p+W).
    col = jax.lax.broadcasted_iota(jnp.int32, (H, Wp, Cmid), 1)
    b11 = jnp.broadcast_to(b11_ref[...].reshape(1, 1, Cmid), (H, Wp, Cmid))
    m1 = m1 + jnp.where((col >= p) & (col < p + W), b11, 0.0)

    # conv12 along W: one matmul per tap on the shared aligned slab, then
    # shift-add the result windows along W.  Bias folded into the init.
    m1_2d = m1.reshape(H * Wp, Cmid)
    out1 = jnp.broadcast_to(b12_ref[...].reshape(1, 1, Cout), (H, W, Cout))
    for t in range(k):
        z = jnp.dot(m1_2d, w12_ref[t], preferred_element_type=f32)
        out1 = out1 + z.reshape(H, Wp, Cout)[:, t:t + W, :]

    # ---------------- branch 2: conv21 (1,k over W) -> conv22 (k,1 over H) --
    # conv21 along W for all Hp rows (H-pad rows of x are zero -> H-pad rows
    # of m2 stay exactly zero, as conv22's zero padding requires).  Reuses x2d.
    m2 = None
    for t in range(k):
        z = jnp.dot(x2d, w21_ref[t], preferred_element_type=f32)
        zt = z.reshape(Hp, Wp, Cmid)[:, t:t + W, :]
        m2 = zt if m2 is None else m2 + zt       # (Hp, W, Cmid)
    row = jax.lax.broadcasted_iota(jnp.int32, (Hp, W, Cmid), 0)
    b21 = jnp.broadcast_to(b21_ref[...].reshape(1, 1, Cmid), (Hp, W, Cmid))
    m2 = m2 + jnp.where((row >= p) & (row < p + H), b21, 0.0)

    # conv22 along H on the (Hp, W, Cmid) intermediate.
    m2_2d = m2.reshape(Hp * W, Cmid)             # aligned relabel (W % 8 == 0)
    out2 = jnp.broadcast_to(b22_ref[...].reshape(1, 1, Cout), (H, W, Cout))
    for t in range(k):                           # row offsets t*W are 8-aligned
        lhs = m2_2d[t * W:(t + H) * W, :]
        z = jnp.dot(lhs, w22_ref[t], preferred_element_type=f32)
        out2 = out2 + z.reshape(H, W, Cout)

    # ---------------- out = relu(out1 + out2) -------------------------------
    out = jnp.maximum(out1 + out2, 0.0)
    o_ref[...] = out.reshape(o_ref.shape).astype(o_ref.dtype)


# -----------------------------------------------------------------------------
# Wrapper
# -----------------------------------------------------------------------------
def large_separate_conv_forward(x_nchw, params):
    """mode=0 forward:  out = relu(conv12(conv11(x)) + conv22(conv21(x)))."""
    x = jnp.transpose(x_nchw, (0, 2, 3, 1))      # NCHW -> NHWC (C -> lanes)
    N, H, W, Cin = x.shape
    k, _, Cmid = params["w11"].shape
    Cout = params["w12"].shape[2]
    assert k % 2 == 1, "same-padding math assumes odd k (module default k=15)"
    p = k // 2

    # Single zero-pad of the input, shared by both branches.  W is padded up
    # to a multiple of 8 so all in-kernel 3D<->2D reshapes are aligned.
    Hp = H + 2 * p
    Wp = ((W + 2 * p + 7) // 8) * 8
    xp = jnp.pad(x, ((0, 0), (p, p), (p, Wp - W - p), (0, 0)))

    out = pl.pallas_call(
        lsc_fused_kernel,
        out_shape=jax.ShapeDtypeStruct((N, H, W, Cout), x.dtype),
        grid=(N,),
        in_specs=[
            pl.BlockSpec((1, Hp, Wp, Cin), lambda n: (n, 0, 0, 0)),
            pl.BlockSpec((k, Cin, Cmid), lambda n: (0, 0, 0)),
            pl.BlockSpec((1, Cmid), lambda n: (0, 0)),
            pl.BlockSpec((k, Cmid, Cout), lambda n: (0, 0, 0)),
            pl.BlockSpec((1, Cout), lambda n: (0, 0)),
            pl.BlockSpec((k, Cin, Cmid), lambda n: (0, 0, 0)),
            pl.BlockSpec((1, Cmid), lambda n: (0, 0)),
            pl.BlockSpec((k, Cmid, Cout), lambda n: (0, 0, 0)),
            pl.BlockSpec((1, Cout), lambda n: (0, 0)),
        ],
        out_specs=pl.BlockSpec((1, H, W, Cout), lambda n: (n, 0, 0, 0)),
        compiler_params=pltpu.CompilerParams(
            dimension_semantics=("parallel",)),   # v7x: one image per TensorCore
    )(xp,
      params["w11"], params["b11"].reshape(1, Cmid),
      params["w12"], params["b12"].reshape(1, Cout),
      params["w21"], params["b21"].reshape(1, Cmid),
      params["w22"], params["b22"].reshape(1, Cout))

    return jnp.transpose(out, (0, 3, 1, 2))      # NHWC -> NCHW


# -----------------------------------------------------------------------------
# Pure-JAX reference (lax conv) for validation
# -----------------------------------------------------------------------------
def ref_forward(x_nchw, params):
    k = params["w11"].shape[0]

    def conv(x, w_kio, b, kind):
        # w_kio: (k, Cin, Cout) -> OIHW
        if kind == "k1":
            w_oihw = jnp.transpose(w_kio, (2, 1, 0))[:, :, :, None]
            pad = ((k // 2, k // 2), (0, 0))
        else:
            w_oihw = jnp.transpose(w_kio, (2, 1, 0))[:, :, None, :]
            pad = ((0, 0), (k // 2, k // 2))
        y = jax.lax.conv_general_dilated(
            x, w_oihw, (1, 1), pad,
            dimension_numbers=("NCHW", "OIHW", "NCHW"))
        return y + b[None, :, None, None]

    o1 = conv(x_nchw, params["w11"], params["b11"], "k1")
    o1 = conv(o1, params["w12"], params["b12"], "1k")
    o2 = conv(x_nchw, params["w21"], params["b21"], "1k")
    o2 = conv(o2, params["w22"], params["b22"], "k1")
    return jnp.maximum(o1 + o2, 0.0)


# -----------------------------------------------------------------------------
if __name__ == "__main__":
    # Small shapes consistent with the module (scaled-down channels).
    N, C_IN, H, W = 2, 8, 16, 16
    C_MID, C_OUT, K = 16, 24, 5

    key = jax.random.PRNGKey(0)
    kx, k11w, k11b, k12w, k12b, k21w, k21b, k22w, k22b = jax.random.split(key, 9)

    x = jax.random.normal(kx, (N, C_IN, H, W), jnp.float32)

    std = 0.01  # normal_init(std=0.01)
    params = {
        # weights stored as (k, Cin, Cout); biases as (Cout,)
        "w11": std * jax.random.normal(k11w, (K, C_IN, C_MID), jnp.float32),
        "b11": std * jax.random.normal(k11b, (C_MID,), jnp.float32),
        "w12": std * jax.random.normal(k12w, (K, C_MID, C_OUT), jnp.float32),
        "b12": std * jax.random.normal(k12b, (C_OUT,), jnp.float32),
        "w21": std * jax.random.normal(k21w, (K, C_IN, C_MID), jnp.float32),
        "b21": std * jax.random.normal(k21b, (C_MID,), jnp.float32),
        "w22": std * jax.random.normal(k22w, (K, C_MID, C_OUT), jnp.float32),
        "b22": std * jax.random.normal(k22b, (C_OUT,), jnp.float32),
    }

    out = jax.jit(large_separate_conv_forward)(x, params)
    out = jax.block_until_ready(out)

    ref = ref_forward(x, params)
    assert out.shape == (N, C_OUT, H, W), out.shape
    assert jnp.allclose(out, ref, atol=1e-6, rtol=1e-4), (
        float(jnp.max(jnp.abs(out - ref))))

    print("KERNEL_OK")
</pallas_src>

<mosaic_0001>
module attributes {stable_mosaic.version = 11 : i64} {
  func.func @lsc_fused_kernel(%arg0: i32, %arg1: memref<1x20x24x8xf32, #tpu.memory_space<vmem>>, %arg2: memref<5x8x16xf32, #tpu.memory_space<vmem>>, %arg3: memref<1x16xf32, #tpu.memory_space<vmem>>, %arg4: memref<5x16x24xf32, #tpu.memory_space<vmem>>, %arg5: memref<1x24xf32, #tpu.memory_space<vmem>>, %arg6: memref<5x8x16xf32, #tpu.memory_space<vmem>>, %arg7: memref<1x16xf32, #tpu.memory_space<vmem>>, %arg8: memref<5x16x24xf32, #tpu.memory_space<vmem>>, %arg9: memref<1x24xf32, #tpu.memory_space<vmem>>, %arg10: memref<1x16x16x24xf32, #tpu.memory_space<vmem>>) attributes {dimension_semantics = [#tpu.dimension_semantics<parallel>], iteration_bounds = array<i64: 2>, scalar_prefetch = 0 : i64, scratch_operands = 0 : i64, tpu.core_type = #tpu.core_type<tc>, window_params = [{transform_indices = @transform_0, window_bounds = array<i64: 1, 20, 24, 8>}, {pipeline_mode = #tpu.pipeline_mode<synchronous>, transform_indices = @transform_1, window_bounds = array<i64: 5, 8, 16>}, {pipeline_mode = #tpu.pipeline_mode<synchronous>, transform_indices = @transform_2, window_bounds = array<i64: 1, 16>}, {pipeline_mode = #tpu.pipeline_mode<synchronous>, transform_indices = @transform_3, window_bounds = array<i64: 5, 16, 24>}, {pipeline_mode = #tpu.pipeline_mode<synchronous>, transform_indices = @transform_4, window_bounds = array<i64: 1, 24>}, {pipeline_mode = #tpu.pipeline_mode<synchronous>, transform_indices = @transform_5, window_bounds = array<i64: 5, 8, 16>}, {pipeline_mode = #tpu.pipeline_mode<synchronous>, transform_indices = @transform_6, window_bounds = array<i64: 1, 16>}, {pipeline_mode = #tpu.pipeline_mode<synchronous>, transform_indices = @transform_7, window_bounds = array<i64: 5, 16, 24>}, {pipeline_mode = #tpu.pipeline_mode<synchronous>, transform_indices = @transform_8, window_bounds = array<i64: 1, 24>}, {transform_indices = @transform_9, window_bounds = array<i64: 1, 16, 16, 24>}]} {
    %c0 = arith.constant 0 : index
    %c0_0 = arith.constant 0 : index
    %c0_1 = arith.constant 0 : index
    %c0_2 = arith.constant 0 : index
    %0 = vector.load %arg1[%c0, %c0_0, %c0_1, %c0_2] : memref<1x20x24x8xf32, #tpu.memory_space<vmem>>, vector<1x20x24x8xf32>
    %1 = vector.shape_cast %0 : vector<1x20x24x8xf32> to vector<20x24x8xf32>
    %2 = vector.shape_cast %1 : vector<20x24x8xf32> to vector<480x8xf32>
    %3 = vector.extract_strided_slice %2 {offsets = [0, 0], sizes = [384, 8], strides = [1, 1]} : vector<480x8xf32> to vector<384x8xf32>
    %c0_3 = arith.constant 0 : index
    %c0_4 = arith.constant 0 : index
    %c0_5 = arith.constant 0 : index
    %4 = vector.load %arg2[%c0_3, %c0_4, %c0_5] : memref<5x8x16xf32, #tpu.memory_space<vmem>>, vector<1x8x16xf32>
    %5 = vector.shape_cast %4 : vector<1x8x16xf32> to vector<8x16xf32>
    %cst = arith.constant dense<0.000000e+00> : vector<384x16xf32>
    %6 = tpu.matmul %3, %5, %cst {dimension_numbers = #tpu.dot_dimension_numbers<[1], [0], [0], [1], [0, 0, 1, 1], [], []>} : vector<384x8xf32>, vector<8x16xf32>, vector<384x16xf32> -> vector<384x16xf32>
    %7 = vector.extract_strided_slice %2 {offsets = [24, 0], sizes = [384, 8], strides = [1, 1]} : vector<480x8xf32> to vector<384x8xf32>
    %c1 = arith.constant 1 : index
    %c0_6 = arith.constant 0 : index
    %c0_7 = arith.constant 0 : index
    %8 = vector.load %arg2[%c1, %c0_6, %c0_7] : memref<5x8x16xf32, #tpu.memory_space<vmem>>, vector<1x8x16xf32>
    %9 = vector.shape_cast %8 : vector<1x8x16xf32> to vector<8x16xf32>
    %cst_8 = arith.constant dense<0.000000e+00> : vector<384x16xf32>
    %10 = tpu.matmul %7, %9, %cst_8 {dimension_numbers = #tpu.dot_dimension_numbers<[1], [0], [0], [1], [0, 0, 1, 1], [], []>} : vector<384x8xf32>, vector<8x16xf32>, vector<384x16xf32> -> vector<384x16xf32>
    %11 = arith.addf %6, %10 : vector<384x16xf32>
    %12 = vector.extract_strided_slice %2 {offsets = [48, 0], sizes = [384, 8], strides = [1, 1]} : vector<480x8xf32> to vector<384x8xf32>
    %c2 = arith.constant 2 : index
    %c0_9 = arith.constant 0 : index
    %c0_10 = arith.constant 0 : index
    %13 = vector.load %arg2[%c2, %c0_9, %c0_10] : memref<5x8x16xf32, #tpu.memory_space<vmem>>, vector<1x8x16xf32>
    %14 = vector.shape_cast %13 : vector<1x8x16xf32> to vector<8x16xf32>
    %cst_11 = arith.constant dense<0.000000e+00> : vector<384x16xf32>
    %15 = tpu.matmul %12, %14, %cst_11 {dimension_numbers = #tpu.dot_dimension_numbers<[1], [0], [0], [1], [0, 0, 1, 1], [], []>} : vector<384x8xf32>, vector<8x16xf32>, vector<384x16xf32> -> vector<384x16xf32>
    %16 = arith.addf %11, %15 : vector<384x16xf32>
    %17 = vector.extract_strided_slice %2 {offsets = [72, 0], sizes = [384, 8], strides = [1, 1]} : vector<480x8xf32> to vector<384x8xf32>
    %c3 = arith.constant 3 : index
    %c0_12 = arith.constant 0 : index
    %c0_13 = arith.constant 0 : index
    %18 = vector.load %arg2[%c3, %c0_12, %c0_13] : memref<5x8x16xf32, #tpu.memory_space<vmem>>, vector<1x8x16xf32>
    %19 = vector.shape_cast %18 : vector<1x8x16xf32> to vector<8x16xf32>
    %cst_14 = arith.constant dense<0.000000e+00> : vector<384x16xf32>
    %20 = tpu.matmul %17, %19, %cst_14 {dimension_numbers = #tpu.dot_dimension_numbers<[1], [0], [0], [1], [0, 0, 1, 1], [], []>} : vector<384x8xf32>, vector<8x16xf32>, vector<384x16xf32> -> vector<384x16xf32>
    %21 = arith.addf %16, %20 : vector<384x16xf32>
    %22 = vector.extract_strided_slice %2 {offsets = [96, 0], sizes = [384, 8], strides = [1, 1]} : vector<480x8xf32> to vector<384x8xf32>
    %c4 = arith.constant 4 : index
    %c0_15 = arith.constant 0 : index
    %c0_16 = arith.constant 0 : index
    %23 = vector.load %arg2[%c4, %c0_15, %c0_16] : memref<5x8x16xf32, #tpu.memory_space<vmem>>, vector<1x8x16xf32>
    %24 = vector.shape_cast %23 : vector<1x8x16xf32> to vector<8x16xf32>
    %cst_17 = arith.constant dense<0.000000e+00> : vector<384x16xf32>
    %25 = tpu.matmul %22, %24, %cst_17 {dimension_numbers = #tpu.dot_dimension_numbers<[1], [0], [0], [1], [0, 0, 1, 1], [], []>} : vector<384x8xf32>, vector<8x16xf32>, vector<384x16xf32> -> vector<384x16xf32>
    %26 = arith.addf %21, %25 : vector<384x16xf32>
    %27 = vector.shape_cast %26 : vector<384x16xf32> to vector<16x24x16xf32>
    %28 = tpu.iota {dimensions = array<i32: 1>} : vector<16x24x16xi32>
    %c0_18 = arith.constant 0 : index
    %c0_19 = arith.constant 0 : index
    %29 = vector.load %arg3[%c0_18, %c0_19] : memref<1x16xf32, #tpu.memory_space<vmem>>, vector<1x16xf32>
    %30 = vector.shape_cast %29 : vector<1x16xf32> to vector<1x1x16xf32>
    %31 = vector.shape_cast %30 : vector<1x1x16xf32> to vector<1x1x16xf32>
    %32 = vector.broadcast %31 : vector<1x1x16xf32> to vector<16x24x16xf32>
    %c2_i32 = arith.constant 2 : i32
    %33 = vector.broadcast %c2_i32 : i32 to vector<16x24x16xi32>
    %34 = arith.cmpi sge, %28, %33 : vector<16x24x16xi32>
    %c18_i32 = arith.constant 18 : i32
    %35 = vector.broadcast %c18_i32 : i32 to vector<16x24x16xi32>
    %36 = arith.cmpi slt, %28, %35 : vector<16x24x16xi32>
    %37 = arith.andi %34, %36 : vector<16x24x16xi1>
    %cst_20 = arith.constant 0.000000e+00 : f32
    %38 = vector.broadcast %cst_20 : f32 to vector<16x24x16xf32>
    %39 = arith.select %37, %32, %38 : vector<16x24x16xi1>, vector<16x24x16xf32>
    %40 = arith.addf %27, %39 : vector<16x24x16xf32>
    %41 = vector.shape_cast %40 : vector<16x24x16xf32> to vector<384x16xf32>
    %c0_21 = arith.constant 0 : index
    %c0_22 = arith.constant 0 : index
    %42 = vector.load %arg5[%c0_21, %c0_22] : memref<1x24xf32, #tpu.memory_space<vmem>>, vector<1x24xf32>
    %43 = vector.shape_cast %42 : vector<1x24xf32> to vector<1x1x24xf32>
    %44 = vector.shape_cast %43 : vector<1x1x24xf32> to vector<1x1x24xf32>
    %45 = vector.broadcast %44 : vector<1x1x24xf32> to vector<16x16x24xf32>
    %c0_23 = arith.constant 0 : index
    %c0_24 = arith.constant 0 : index
    %c0_25 = arith.constant 0 : index
    %46 = vector.load %arg4[%c0_23, %c0_24, %c0_25] : memref<5x16x24xf32, #tpu.memory_space<vmem>>, vector<1x16x24xf32>
    %47 = vector.shape_cast %46 : vector<1x16x24xf32> to vector<16x24xf32>
    %cst_26 = arith.constant dense<0.000000e+00> : vector<384x24xf32>
    %48 = tpu.matmul %41, %47, %cst_26 {dimension_numbers = #tpu.dot_dimension_numbers<[1], [0], [0], [1], [0, 0, 1, 1], [], []>} : vector<384x16xf32>, vector<16x24xf32>, vector<384x24xf32> -> vector<384x24xf32>
    %49 = vector.shape_cast %48 : vector<384x24xf32> to vector<16x24x24xf32>
    %50 = vector.extract_strided_slice %49 {offsets = [0, 0, 0], sizes = [16, 16, 24], strides = [1, 1, 1]} : vector<16x24x24xf32> to vector<16x16x24xf32>
    %51 = arith.addf %45, %50 : vector<16x16x24xf32>
    %c1_27 = arith.constant 1 : index
    %c0_28 = arith.constant 0 : index
    %c0_29 = arith.constant 0 : index
    %52 = vector.load %arg4[%c1_27, %c0_28, %c0_29] : memref<5x16x24xf32, #tpu.memory_space<vmem>>, vector<1x16x24xf32>
    %53 = vector.shape_cast %52 : vector<1x16x24xf32> to vector<16x24xf32>
    %cst_30 = arith.constant dense<0.000000e+00> : vector<384x24xf32>
    %54 = tpu.matmul %41, %53, %cst_30 {dimension_numbers = #tpu.dot_dimension_numbers<[1], [0], [0], [1], [0, 0, 1, 1], [], []>} : vector<384x16xf32>, vector<16x24xf32>, vector<384x24xf32> -> vector<384x24xf32>
    %55 = vector.shape_cast %54 : vector<384x24xf32> to vector<16x24x24xf32>
    %56 = vector.extract_strided_slice %55 {offsets = [0, 1, 0], sizes = [16, 16, 24], strides = [1, 1, 1]} : vector<16x24x24xf32> to vector<16x16x24xf32>
    %57 = arith.addf %51, %56 : vector<16x16x24xf32>
    %c2_31 = arith.constant 2 : index
    %c0_32 = arith.constant 0 : index
    %c0_33 = arith.constant 0 : index
    %58 = vector.load %arg4[%c2_31, %c0_32, %c0_33] : memref<5x16x24xf32, #tpu.memory_space<vmem>>, vector<1x16x24xf32>
    %59 = vector.shape_cast %58 : vector<1x16x24xf32> to vector<16x24xf32>
    %cst_34 = arith.constant dense<0.000000e+00> : vector<384x24xf32>
    %60 = tpu.matmul %41, %59, %cst_34 {dimension_numbers = #tpu.dot_dimension_numbers<[1], [0], [0], [1], [0, 0, 1, 1], [], []>} : vector<384x16xf32>, vector<16x24xf32>, vector<384x24xf32> -> vector<384x24xf32>
    %61 = vector.shape_cast %60 : vector<384x24xf32> to vector<16x24x24xf32>
    %62 = vector.extract_strided_slice %61 {offsets = [0, 2, 0], sizes = [16, 16, 24], strides = [1, 1, 1]} : vector<16x24x24xf32> to vector<16x16x24xf32>
    %63 = arith.addf %57, %62 : vector<16x16x24xf32>
    %c3_35 = arith.constant 3 : index
    %c0_36 = arith.constant 0 : index
    %c0_37 = arith.constant 0 : index
    %64 = vector.load %arg4[%c3_35, %c0_36, %c0_37] : memref<5x16x24xf32, #tpu.memory_space<vmem>>, vector<1x16x24xf32>
    %65 = vector.shape_cast %64 : vector<1x16x24xf32> to vector<16x24xf32>
    %cst_38 = arith.constant dense<0.000000e+00> : vector<384x24xf32>
    %66 = tpu.matmul %41, %65, %cst_38 {dimension_numbers = #tpu.dot_dimension_numbers<[1], [0], [0], [1], [0, 0, 1, 1], [], []>} : vector<384x16xf32>, vector<16x24xf32>, vector<384x24xf32> -> vector<384x24xf32>
    %67 = vector.shape_cast %66 : vector<384x24xf32> to vector<16x24x24xf32>
    %68 = vector.extract_strided_slice %67 {offsets = [0, 3, 0], sizes = [16, 16, 24], strides = [1, 1, 1]} : vector<16x24x24xf32> to vector<16x16x24xf32>
    %69 = arith.addf %63, %68 : vector<16x16x24xf32>
    %c4_39 = arith.constant 4 : index
    %c0_40 = arith.constant 0 : index
    %c0_41 = arith.constant 0 : index
    %70 = vector.load %arg4[%c4_39, %c0_40, %c0_41] : memref<5x16x24xf32, #tpu.memory_space<vmem>>, vector<1x16x24xf32>
    %71 = vector.shape_cast %70 : vector<1x16x24xf32> to vector<16x24xf32>
    %cst_42 = arith.constant dense<0.000000e+00> : vector<384x24xf32>
    %72 = tpu.matmul %41, %71, %cst_42 {dimension_numbers = #tpu.dot_dimension_numbers<[1], [0], [0], [1], [0, 0, 1, 1], [], []>} : vector<384x16xf32>, vector<16x24xf32>, vector<384x24xf32> -> vector<384x24xf32>
    %73 = vector.shape_cast %72 : vector<384x24xf32> to vector<16x24x24xf32>
    %74 = vector.extract_strided_slice %73 {offsets = [0, 4, 0], sizes = [16, 16, 24], strides = [1, 1, 1]} : vector<16x24x24xf32> to vector<16x16x24xf32>
    %75 = arith.addf %69, %74 : vector<16x16x24xf32>
    %c0_43 = arith.constant 0 : index
    %c0_44 = arith.constant 0 : index
    %c0_45 = arith.constant 0 : index
    %76 = vector.load %arg6[%c0_43, %c0_44, %c0_45] : memref<5x8x16xf32, #tpu.memory_space<vmem>>, vector<1x8x16xf32>
    %77 = vector.shape_cast %76 : vector<1x8x16xf32> to vector<8x16xf32>
    %cst_46 = arith.constant dense<0.000000e+00> : vector<480x16xf32>
    %78 = tpu.matmul %2, %77, %cst_46 {dimension_numbers = #tpu.dot_dimension_numbers<[1], [0], [0], [1], [0, 0, 1, 1], [], []>} : vector<480x8xf32>, vector<8x16xf32>, vector<480x16xf32> -> vector<480x16xf32>
    %79 = vector.shape_cast %78 : vector<480x16xf32> to vector<20x24x16xf32>
    %80 = vector.extract_strided_slice %79 {offsets = [0, 0, 0], sizes = [20, 16, 16], strides = [1, 1, 1]} : vector<20x24x16xf32> to vector<20x16x16xf32>
    %c1_47 = arith.constant 1 : index
    %c0_48 = arith.constant 0 : index
    %c0_49 = arith.constant 0 : index
    %81 = vector.load %arg6[%c1_47, %c0_48, %c0_49] : memref<5x8x16xf32, #tpu.memory_space<vmem>>, vector<1x8x16xf32>
    %82 = vector.shape_cast %81 : vector<1x8x16xf32> to vector<8x16xf32>
    %cst_50 = arith.constant dense<0.000000e+00> : vector<480x16xf32>
    %83 = tpu.matmul %2, %82, %cst_50 {dimension_numbers = #tpu.dot_dimension_numbers<[1], [0], [0], [1], [0, 0, 1, 1], [], []>} : vector<480x8xf32>, vector<8x16xf32>, vector<480x16xf32> -> vector<480x16xf32>
    %84 = vector.shape_cast %83 : vector<480x16xf32> to vector<20x24x16xf32>
    %85 = vector.extract_strided_slice %84 {offsets = [0, 1, 0], sizes = [20, 16, 16], strides = [1, 1, 1]} : vector<20x24x16xf32> to vector<20x16x16xf32>
    %86 = arith.addf %80, %85 : vector<20x16x16xf32>
    %c2_51 = arith.constant 2 : index
    %c0_52 = arith.constant 0 : index
    %c0_53 = arith.constant 0 : index
    %87 = vector.load %arg6[%c2_51, %c0_52, %c0_53] : memref<5x8x16xf32, #tpu.memory_space<vmem>>, vector<1x8x16xf32>
    %88 = vector.shape_cast %87 : vector<1x8x16xf32> to vector<8x16xf32>
    %cst_54 = arith.constant dense<0.000000e+00> : vector<480x16xf32>
    %89 = tpu.matmul %2, %88, %cst_54 {dimension_numbers = #tpu.dot_dimension_numbers<[1], [0], [0], [1], [0, 0, 1, 1], [], []>} : vector<480x8xf32>, vector<8x16xf32>, vector<480x16xf32> -> vector<480x16xf32>
    %90 = vector.shape_cast %89 : vector<480x16xf32> to vector<20x24x16xf32>
    %91 = vector.extract_strided_slice %90 {offsets = [0, 2, 0], sizes = [20, 16, 16], strides = [1, 1, 1]} : vector<20x24x16xf32> to vector<20x16x16xf32>
    %92 = arith.addf %86, %91 : vector<20x16x16xf32>
    %c3_55 = arith.constant 3 : index
    %c0_56 = arith.constant 0 : index
    %c0_57 = arith.constant 0 : index
    %93 = vector.load %arg6[%c3_55, %c0_56, %c0_57] : memref<5x8x16xf32, #tpu.memory_space<vmem>>, vector<1x8x16xf32>
    %94 = vector.shape_cast %93 : vector<1x8x16xf32> to vector<8x16xf32>
    %cst_58 = arith.constant dense<0.000000e+00> : vector<480x16xf32>
    %95 = tpu.matmul %2, %94, %cst_58 {dimension_numbers = #tpu.dot_dimension_numbers<[1], [0], [0], [1], [0, 0, 1, 1], [], []>} : vector<480x8xf32>, vector<8x16xf32>, vector<480x16xf32> -> vector<480x16xf32>
    %96 = vector.shape_cast %95 : vector<480x16xf32> to vector<20x24x16xf32>
    %97 = vector.extract_strided_slice %96 {offsets = [0, 3, 0], sizes = [20, 16, 16], strides = [1, 1, 1]} : vector<20x24x16xf32> to vector<20x16x16xf32>
    %98 = arith.addf %92, %97 : vector<20x16x16xf32>
    %c4_59 = arith.constant 4 : index
    %c0_60 = arith.constant 0 : index
    %c0_61 = arith.constant 0 : index
    %99 = vector.load %arg6[%c4_59, %c0_60, %c0_61] : memref<5x8x16xf32, #tpu.memory_space<vmem>>, vector<1x8x16xf32>
    %100 = vector.shape_cast %99 : vector<1x8x16xf32> to vector<8x16xf32>
    %cst_62 = arith.constant dense<0.000000e+00> : vector<480x16xf32>
    %101 = tpu.matmul %2, %100, %cst_62 {dimension_numbers = #tpu.dot_dimension_numbers<[1], [0], [0], [1], [0, 0, 1, 1], [], []>} : vector<480x8xf32>, vector<8x16xf32>, vector<480x16xf32> -> vector<480x16xf32>
    %102 = vector.shape_cast %101 : vector<480x16xf32> to vector<20x24x16xf32>
    %103 = vector.extract_strided_slice %102 {offsets = [0, 4, 0], sizes = [20, 16, 16], strides = [1, 1, 1]} : vector<20x24x16xf32> to vector<20x16x16xf32>
    %104 = arith.addf %98, %103 : vector<20x16x16xf32>
    %105 = tpu.iota {dimensions = array<i32: 0>} : vector<20x16x16xi32>
    %c0_63 = arith.constant 0 : index
    %c0_64 = arith.constant 0 : index
    %106 = vector.load %arg7[%c0_63, %c0_64] : memref<1x16xf32, #tpu.memory_space<vmem>>, vector<1x16xf32>
    %107 = vector.shape_cast %106 : vector<1x16xf32> to vector<1x1x16xf32>
    %108 = vector.shape_cast %107 : vector<1x1x16xf32> to vector<1x1x16xf32>
    %109 = vector.broadcast %108 : vector<1x1x16xf32> to vector<20x16x16xf32>
    %c2_i32_65 = arith.constant 2 : i32
    %110 = vector.broadcast %c2_i32_65 : i32 to vector<20x16x16xi32>
    %111 = arith.cmpi sge, %105, %110 : vector<20x16x16xi32>
    %c18_i32_66 = arith.constant 18 : i32
    %112 = vector.broadcast %c18_i32_66 : i32 to vector<20x16x16xi32>
    %113 = arith.cmpi slt, %105, %112 : vector<20x16x16xi32>
    %114 = arith.andi %111, %113 : vector<20x16x16xi1>
    %cst_67 = arith.constant 0.000000e+00 : f32
    %115 = vector.broadcast %cst_67 : f32 to vector<20x16x16xf32>
    %116 = arith.select %114, %109, %115 : vector<20x16x16xi1>, vector<20x16x16xf32>
    %117 = arith.addf %104, %116 : vector<20x16x16xf32>
    %118 = vector.shape_cast %117 : vector<20x16x16xf32> to vector<320x16xf32>
    %c0_68 = arith.constant 0 : index
    %c0_69 = arith.constant 0 : index
    %119 = vector.load %arg9[%c0_68, %c0_69] : memref<1x24xf32, #tpu.memory_space<vmem>>, vector<1x24xf32>
    %120 = vector.shape_cast %119 : vector<1x24xf32> to vector<1x1x24xf32>
    %121 = vector.shape_cast %120 : vector<1x1x24xf32> to vector<1x1x24xf32>
    %122 = vector.broadcast %121 : vector<1x1x24xf32> to vector<16x16x24xf32>
    %123 = vector.extract_strided_slice %118 {offsets = [0, 0], sizes = [256, 16], strides = [1, 1]} : vector<320x16xf32> to vector<256x16xf32>
    %c0_70 = arith.constant 0 : index
    %c0_71 = arith.constant 0 : index
    %c0_72 = arith.constant 0 : index
    %124 = vector.load %arg8[%c0_70, %c0_71, %c0_72] : memref<5x16x24xf32, #tpu.memory_space<vmem>>, vector<1x16x24xf32>
    %125 = vector.shape_cast %124 : vector<1x16x24xf32> to vector<16x24xf32>
    %cst_73 = arith.constant dense<0.000000e+00> : vector<256x24xf32>
    %126 = tpu.matmul %123, %125, %cst_73 {dimension_numbers = #tpu.dot_dimension_numbers<[1], [0], [0], [1], [0, 0, 1, 1], [], []>} : vector<256x16xf32>, vector<16x24xf32>, vector<256x24xf32> -> vector<256x24xf32>
    %127 = vector.shape_cast %126 : vector<256x24xf32> to vector<16x16x24xf32>
    %128 = arith.addf %122, %127 : vector<16x16x24xf32>
    %129 = vector.extract_strided_slice %118 {offsets = [16, 0], sizes = [256, 16], strides = [1, 1]} : vector<320x16xf32> to vector<256x16xf32>
    %c1_74 = arith.constant 1 : index
    %c0_75 = arith.constant 0 : index
    %c0_76 = arith.constant 0 : index
    %130 = vector.load %arg8[%c1_74, %c0_75, %c0_76] : memref<5x16x24xf32, #tpu.memory_space<vmem>>, vector<1x16x24xf32>
    %131 = vector.shape_cast %130 : vector<1x16x24xf32> to vector<16x24xf32>
    %cst_77 = arith.constant dense<0.000000e+00> : vector<256x24xf32>
    %132 = tpu.matmul %129, %131, %cst_77 {dimension_numbers = #tpu.dot_dimension_numbers<[1], [0], [0], [1], [0, 0, 1, 1], [], []>} : vector<256x16xf32>, vector<16x24xf32>, vector<256x24xf32> -> vector<256x24xf32>
    %133 = vector.shape_cast %132 : vector<256x24xf32> to vector<16x16x24xf32>
    %134 = arith.addf %128, %133 : vector<16x16x24xf32>
    %135 = vector.extract_strided_slice %118 {offsets = [32, 0], sizes = [256, 16], strides = [1, 1]} : vector<320x16xf32> to vector<256x16xf32>
    %c2_78 = arith.constant 2 : index
    %c0_79 = arith.constant 0 : index
    %c0_80 = arith.constant 0 : index
    %136 = vector.load %arg8[%c2_78, %c0_79, %c0_80] : memref<5x16x24xf32, #tpu.memory_space<vmem>>, vector<1x16x24xf32>
    %137 = vector.shape_cast %136 : vector<1x16x24xf32> to vector<16x24xf32>
    %cst_81 = arith.constant dense<0.000000e+00> : vector<256x24xf32>
    %138 = tpu.matmul %135, %137, %cst_81 {dimension_numbers = #tpu.dot_dimension_numbers<[1], [0], [0], [1], [0, 0, 1, 1], [], []>} : vector<256x16xf32>, vector<16x24xf32>, vector<256x24xf32> -> vector<256x24xf32>
    %139 = vector.shape_cast %138 : vector<256x24xf32> to vector<16x16x24xf32>
    %140 = arith.addf %134, %139 : vector<16x16x24xf32>
    %141 = vector.extract_strided_slice %118 {offsets = [48, 0], sizes = [256, 16], strides = [1, 1]} : vector<320x16xf32> to vector<256x16xf32>
    %c3_82 = arith.constant 3 : index
    %c0_83 = arith.constant 0 : index
    %c0_84 = arith.constant 0 : index
    %142 = vector.load %arg8[%c3_82, %c0_83, %c0_84] : memref<5x16x24xf32, #tpu.memory_space<vmem>>, vector<1x16x24xf32>
    %143 = vector.shape_cast %142 : vector<1x16x24xf32> to vector<16x24xf32>
    %cst_85 = arith.constant dense<0.000000e+00> : vector<256x24xf32>
    %144 = tpu.matmul %141, %143, %cst_85 {dimension_numbers = #tpu.dot_dimension_numbers<[1], [0], [0], [1], [0, 0, 1, 1], [], []>} : vector<256x16xf32>, vector<16x24xf32>, vector<256x24xf32> -> vector<256x24xf32>
    %145 = vector.shape_cast %144 : vector<256x24xf32> to vector<16x16x24xf32>
    %146 = arith.addf %140, %145 : vector<16x16x24xf32>
    %147 = vector.extract_strided_slice %118 {offsets = [64, 0], sizes = [256, 16], strides = [1, 1]} : vector<320x16xf32> to vector<256x16xf32>
    %c4_86 = arith.constant 4 : index
    %c0_87 = arith.constant 0 : index
    %c0_88 = arith.constant 0 : index
    %148 = vector.load %arg8[%c4_86, %c0_87, %c0_88] : memref<5x16x24xf32, #tpu.memory_space<vmem>>, vector<1x16x24xf32>
    %149 = vector.shape_cast %148 : vector<1x16x24xf32> to vector<16x24xf32>
    %cst_89 = arith.constant dense<0.000000e+00> : vector<256x24xf32>
    %150 = tpu.matmul %147, %149, %cst_89 {dimension_numbers = #tpu.dot_dimension_numbers<[1], [0], [0], [1], [0, 0, 1, 1], [], []>} : vector<256x16xf32>, vector<16x24xf32>, vector<256x24xf32> -> vector<256x24xf32>
    %151 = vector.shape_cast %150 : vector<256x24xf32> to vector<16x16x24xf32>
    %152 = arith.addf %146, %151 : vector<16x16x24xf32>
    %153 = arith.addf %75, %152 : vector<16x16x24xf32>
    %cst_90 = arith.constant 0.000000e+00 : f32
    %154 = vector.broadcast %cst_90 : f32 to vector<16x16x24xf32>
    %155 = arith.maximumf %153, %154 : vector<16x16x24xf32>
    %156 = vector.shape_cast %155 : vector<16x16x24xf32> to vector<1x16x16x24xf32>
    %c0_91 = arith.constant 0 : index
    %c0_92 = arith.constant 0 : index
    %c0_93 = arith.constant 0 : index
    %c0_94 = arith.constant 0 : index
    %157 = vector.load %arg10[%c0_91, %c0_92, %c0_93, %c0_94] : memref<1x16x16x24xf32, #tpu.memory_space<vmem>>, vector<1x16x16x24xf32>
    tpu.vector_store %arg10[%c0_91, %c0_92, %c0_93, %c0_94], %156 {strides = array<i32>} : memref<1x16x16x24xf32, #tpu.memory_space<vmem>>, vector<1x16x16x24xf32>,
    return
  }
  func.func @transform_0(%arg0: i32) -> (i32, i32, i32, i32) {
    %c0_i32 = arith.constant 0 : i32
    %c0_i32_0 = arith.constant 0 : i32
    %c0_i32_1 = arith.constant 0 : i32
    %c0_i32_2 = arith.constant 0 : i32
    return %arg0, %c0_i32, %c0_i32_0, %c0_i32_1 : i32, i32, i32, i32
  }
  func.func @transform_1(%arg0: i32) -> (i32, i32, i32) {
    %c0_i32 = arith.constant 0 : i32
    %c0_i32_0 = arith.constant 0 : i32
    %c0_i32_1 = arith.constant 0 : i32
    %c0_i32_2 = arith.constant 0 : i32
    return %c0_i32, %c0_i32_0, %c0_i32_1 : i32, i32, i32
  }
  func.func @transform_2(%arg0: i32) -> (i32, i32) {
    %c0_i32 = arith.constant 0 : i32
    %c0_i32_0 = arith.constant 0 : i32
    %c0_i32_1 = arith.constant 0 : i32
    return %c0_i32, %c0_i32_0 : i32, i32
  }
  func.func @transform_3(%arg0: i32) -> (i32, i32, i32) {
    %c0_i32 = arith.constant 0 : i32
    %c0_i32_0 = arith.constant 0 : i32
    %c0_i32_1 = arith.constant 0 : i32
    %c0_i32_2 = arith.constant 0 : i32
    return %c0_i32, %c0_i32_0, %c0_i32_1 : i32, i32, i32
  }
  func.func @transform_4(%arg0: i32) -> (i32, i32) {
    %c0_i32 = arith.constant 0 : i32
    %c0_i32_0 = arith.constant 0 : i32
    %c0_i32_1 = arith.constant 0 : i32
    return %c0_i32, %c0_i32_0 : i32, i32
  }
  func.func @transform_5(%arg0: i32) -> (i32, i32, i32) {
    %c0_i32 = arith.constant 0 : i32
    %c0_i32_0 = arith.constant 0 : i32
    %c0_i32_1 = arith.constant 0 : i32
    %c0_i32_2 = arith.constant 0 : i32
    return %c0_i32, %c0_i32_0, %c0_i32_1 : i32, i32, i32
  }
  func.func @transform_6(%arg0: i32) -> (i32, i32) {
    %c0_i32 = arith.constant 0 : i32
    %c0_i32_0 = arith.constant 0 : i32
    %c0_i32_1 = arith.constant 0 : i32
    return %c0_i32, %c0_i32_0 : i32, i32
  }
  func.func @transform_7(%arg0: i32) -> (i32, i32, i32) {
    %c0_i32 = arith.constant 0 : i32
    %c0_i32_0 = arith.constant 0 : i32
    %c0_i32_1 = arith.constant 0 : i32
    %c0_i32_2 = arith.constant 0 : i32
    return %c0_i32, %c0_i32_0, %c0_i32_1 : i32, i32, i32
  }
  func.func @transform_8(%arg0: i32) -> (i32, i32) {
    %c0_i32 = arith.constant 0 : i32
    %c0_i32_0 = arith.constant 0 : i32
    %c0_i32_1 = arith.constant 0 : i32
    return %c0_i32, %c0_i32_0 : i32, i32
  }
  func.func @transform_9(%arg0: i32) -> (i32, i32, i32, i32) {
    %c0_i32 = arith.constant 0 : i32
    %c0_i32_0 = arith.constant 0 : i32
    %c0_i32_1 = arith.constant 0 : i32
    %c0_i32_2 = arith.constant 0 : i32
    return %arg0, %c0_i32, %c0_i32_0, %c0_i32_1 : i32, i32, i32, i32
  }
}

</mosaic_0001>

<llo_original>
// kernel: large_separate_conv_forward.1
$region0: #{large_separate_conv_forward.1}
  #allocation0 [shape = 'u32[]', space=smem, size = 0x4, offset = 0x4, fixed_abs, tag = 'smem constant byte address 0x4 - core index']
  #allocation1 [shape = 'u32[144,128]{1,0:T(1,128)}', space=vmem, size = 0x12000, scoped, tag = 'internal scratch']
  %s0 = inlined_call_operand.vmem [shape: f32[2,20,24,8], index: 0, kind: input, shape index: {}]
  %s1 = inlined_call_operand.vmem [shape: f32[5,8,16], index: 1, kind: input, shape index: {}]
  %s2 = inlined_call_operand.vmem [shape: f32[1,16], index: 2, kind: input, shape index: {}]
  %s3 = inlined_call_operand.vmem [shape: f32[5,16,24], index: 3, kind: input, shape index: {}]
  %s4 = inlined_call_operand.vmem [shape: f32[1,24], index: 4, kind: input, shape index: {}]
  %s5 = inlined_call_operand.vmem [shape: f32[5,8,16], index: 5, kind: input, shape index: {}]
  %s6 = inlined_call_operand.vmem [shape: f32[1,16], index: 6, kind: input, shape index: {}]
  %s7 = inlined_call_operand.vmem [shape: f32[5,16,24], index: 7, kind: input, shape index: {}]
  %s8 = inlined_call_operand.vmem [shape: f32[1,24], index: 8, kind: input, shape index: {}]
  %s9 = inlined_call_operand.hbm [shape: f32[2,16,16,24], index: 9, kind: output, shape index: {}]
  %s10 = sld [smem:[#allocation0]]
  $region69: #{large_separate_conv_forward.1} parent=0
    _
  %s12 = ssub.s32 1, %s10
  %s13 = scalar_select 0, %s12, %s10
  $region1: #{large_separate_conv_forward.1} parent=0
    #allocation2 [shape = 'u8[262144]{0}', space=vmem, size = 0x40000, scoped, tag = 'output window, operand 0']
    #allocation3 [shape = 's32[2]{0}', space=sflag, size = 0x8, scoped, tag = 'scoped memory for large_separate_conv_forward.1']
    %14 = vsyncpa [#allocation3], 0
    %s15 = scalar_lea.sflag [#allocation3], 1
    %16 = vsyncpa %s15, 0
    loop: start=0, step=1, limit=4
    $region2: #{large_separate_conv_forward.1} parent=1 // loop_pre_header
      _
    $region3: #{large_separate_conv_forward.1} parent=1 // loop_header
      %s18 = sphi 0, %s22
      %p19 = scmp.ge.s32.totalorder %s18, 4
      %s28 = sphi 0, %s30
      %s31 = sphi 0, %s28
      %s32 = sphi 0, %s31
      %s48 = sphi 0, %s32
      %s52 = sphi 0, %s52
      %s54 = sphi 0, %s52
      %s55 = sphi 0, %s54
      %s69 = sphi 0, %s55
      %s73 = sphi 0, %s73
      %s75 = sphi 0, %s73
      %s76 = sphi 0, %s75
      %s90 = sphi 0, %s76
      %s94 = sphi 0, %s94
      %s96 = sphi 0, %s94
      %s97 = sphi 0, %s96
      %s111 = sphi 0, %s97
      %s115 = sphi 0, %s115
      %s117 = sphi 0, %s115
      %s118 = sphi 0, %s117
      %s132 = sphi 0, %s118
      %s136 = sphi 0, %s136
      %s138 = sphi 0, %s136
      %s139 = sphi 0, %s138
      %s153 = sphi 0, %s139
      %s157 = sphi 0, %s157
      %s159 = sphi 0, %s157
      %s160 = sphi 0, %s159
      %s174 = sphi 0, %s160
      %s178 = sphi 0, %s178
      %s180 = sphi 0, %s178
      %s181 = sphi 0, %s180
      %s195 = sphi 0, %s181
      %s199 = sphi 0, %s199
      %s201 = sphi 0, %s199
      %s202 = sphi 0, %s201
      %s216 = sphi 0, %s202
      %s222 = sphi 0, %s224
      %s225 = sphi 0, %s222
      %s226 = sphi 0, %s225
      %s242 = sphi 0, %s226
    $region4: #{large_separate_conv_forward.1} parent=1 // loop_header_branch
      %21 = sbr.rel (%p19) target = $region8
    $region5: #{large_separate_conv_forward.1} parent=1 // loop_body
      %s23 = ssub.s32 %s18, 1
      %s24 = ssub.s32 %s18, 2
      %s25 = sadd.s32 %s18, 1
      %s26 = ssub.s32 %s18, %s25
      %p27 = scmp.eq.s32.totalorder %s26, 0
      %s29 = sadd.s32 %s28, 1
      %s30 = scalar_select %p27, %s28, %s29
      %p33 = pneg %p27
      %p34 = scmp.eq.s32.totalorder %s18, 1
      %p35 = por %p33, %p34
      %p36 = scmp.ne.s32.totalorder %s28, %s31
      %p37 = scmp.eq.s32.totalorder %s18, 0
      %p38 = por %p36, %p37
      %p39 = scmp.ne.s32.totalorder %s28, %s31
      %p40 = scmp.eq.s32.totalorder %s23, 1
      %p41 = por %p39, %p40
      %p42 = scmp.ne.s32.totalorder %s31, %s32
      %p43 = scmp.eq.s32.totalorder %s23, 0
      %p44 = por %p42, %p43
      %p45 = scmp.ne.s32.totalorder %s31, %s32
      %p46 = scmp.eq.s32.totalorder %s24, 1
      %p47 = por %p45, %p46
      %p49 = scmp.ne.s32.totalorder %s32, %s48
      %p50 = scmp.eq.s32.totalorder %s24, 0
      %p51 = por %p49, %p50
      %s53 = sadd.s32 %s52, 1
      %p56 = scmp.eq.s32.totalorder %s18, 1
      %p57 = scmp.ne.s32.totalorder %s52, %s54
      %p58 = scmp.eq.s32.totalorder %s18, 0
      %p59 = por %p57, %p58
      %p60 = scmp.ne.s32.totalorder %s52, %s54
      %p61 = scmp.eq.s32.totalorder %s23, 1
      %p62 = por %p60, %p61
      %p63 = scmp.ne.s32.totalorder %s54, %s55
      %p64 = scmp.eq.s32.totalorder %s23, 0
      %p65 = por %p63, %p64
      %p66 = scmp.ne.s32.totalorder %s54, %s55
      %p67 = scmp.eq.s32.totalorder %s24, 1
      %p68 = por %p66, %p67
      %p70 = scmp.ne.s32.totalorder %s55, %s69
      %p71 = scmp.eq.s32.totalorder %s24, 0
      %p72 = por %p70, %p71
      %s74 = sadd.s32 %s73, 1
      %p77 = scmp.eq.s32.totalorder %s18, 1
      %p78 = scmp.ne.s32.totalorder %s73, %s75
      %p79 = scmp.eq.s32.totalorder %s18, 0
      %p80 = por %p78, %p79
      %p81 = scmp.ne.s32.totalorder %s73, %s75
      %p82 = scmp.eq.s32.totalorder %s23, 1
      %p83 = por %p81, %p82
      %p84 = scmp.ne.s32.totalorder %s75, %s76
      %p85 = scmp.eq.s32.totalorder %s23, 0
      %p86 = por %p84, %p85
      %p87 = scmp.ne.s32.totalorder %s75, %s76
      %p88 = scmp.eq.s32.totalorder %s24, 1
      %p89 = por %p87, %p88
      %p91 = scmp.ne.s32.totalorder %s76, %s90
      %p92 = scmp.eq.s32.totalorder %s24, 0
      %p93 = por %p91, %p92
      %s95 = sadd.s32 %s94, 1
      %p98 = scmp.eq.s32.totalorder %s18, 1
      %p99 = scmp.ne.s32.totalorder %s94, %s96
      %p100 = scmp.eq.s32.totalorder %s18, 0
      %p101 = por %p99, %p100
      %p102 = scmp.ne.s32.totalorder %s94, %s96
      %p103 = scmp.eq.s32.totalorder %s23, 1
      %p104 = por %p102, %p103
      %p105 = scmp.ne.s32.totalorder %s96, %s97
      %p106 = scmp.eq.s32.totalorder %s23, 0
      %p107 = por %p105, %p106
      %p108 = scmp.ne.s32.totalorder %s96, %s97
      %p109 = scmp.eq.s32.totalorder %s24, 1
      %p110 = por %p108, %p109
      %p112 = scmp.ne.s32.totalorder %s97, %s111
      %p113 = scmp.eq.s32.totalorder %s24, 0
      %p114 = por %p112, %p113
      %s116 = sadd.s32 %s115, 1
      %p119 = scmp.eq.s32.totalorder %s18, 1
      %p120 = scmp.ne.s32.totalorder %s115, %s117
      %p121 = scmp.eq.s32.totalorder %s18, 0
      %p122 = por %p120, %p121
      %p123 = scmp.ne.s32.totalorder %s115, %s117
      %p124 = scmp.eq.s32.totalorder %s23, 1
      %p125 = por %p123, %p124
      %p126 = scmp.ne.s32.totalorder %s117, %s118
      %p127 = scmp.eq.s32.totalorder %s23, 0
      %p128 = por %p126, %p127
      %p129 = scmp.ne.s32.totalorder %s117, %s118
      %p130 = scmp.eq.s32.totalorder %s24, 1
      %p131 = por %p129, %p130
      %p133 = scmp.ne.s32.totalorder %s118, %s132
      %p134 = scmp.eq.s32.totalorder %s24, 0
      %p135 = por %p133, %p134
      %s137 = sadd.s32 %s136, 1
      %p140 = scmp.eq.s32.totalorder %s18, 1
      %p141 = scmp.ne.s32.totalorder %s136, %s138
      %p142 = scmp.eq.s32.totalorder %s18, 0
      %p143 = por %p141, %p142
      %p144 = scmp.ne.s32.totalorder %s136, %s138
      %p145 = scmp.eq.s32.totalorder %s23, 1
      %p146 = por %p144, %p145
      %p147 = scmp.ne.s32.totalorder %s138, %s139
      %p148 = scmp.eq.s32.totalorder %s23, 0
      %p149 = por %p147, %p148
      %p150 = scmp.ne.s32.totalorder %s138, %s139
      %p151 = scmp.eq.s32.totalorder %s24, 1
      %p152 = por %p150, %p151
      %p154 = scmp.ne.s32.totalorder %s139, %s153
      %p155 = scmp.eq.s32.totalorder %s24, 0
      %p156 = por %p154, %p155
      %s158 = sadd.s32 %s157, 1
      %p161 = scmp.eq.s32.totalorder %s18, 1
      %p162 = scmp.ne.s32.totalorder %s157, %s159
      %p163 = scmp.eq.s32.totalorder %s18, 0
      %p164 = por %p162, %p163
      %p165 = scmp.ne.s32.totalorder %s157, %s159
      %p166 = scmp.eq.s32.totalorder %s23, 1
      %p167 = por %p165, %p166
      %p168 = scmp.ne.s32.totalorder %s159, %s160
      %p169 = scmp.eq.s32.totalorder %s23, 0
      %p170 = por %p168, %p169
      %p171 = scmp.ne.s32.totalorder %s159, %s160
      %p172 = scmp.eq.s32.totalorder %s24, 1
      %p173 = por %p171, %p172
      %p175 = scmp.ne.s32.totalorder %s160, %s174
      %p176 = scmp.eq.s32.totalorder %s24, 0
      %p177 = por %p175, %p176
      %s179 = sadd.s32 %s178, 1
      %p182 = scmp.eq.s32.totalorder %s18, 1
      %p183 = scmp.ne.s32.totalorder %s178, %s180
      %p184 = scmp.eq.s32.totalorder %s18, 0
      %p185 = por %p183, %p184
      %p186 = scmp.ne.s32.totalorder %s178, %s180
      %p187 = scmp.eq.s32.totalorder %s23, 1
      %p188 = por %p186, %p187
      %p189 = scmp.ne.s32.totalorder %s180, %s181
      %p190 = scmp.eq.s32.totalorder %s23, 0
      %p191 = por %p189, %p190
      %p192 = scmp.ne.s32.totalorder %s180, %s181
      %p193 = scmp.eq.s32.totalorder %s24, 1
      %p194 = por %p192, %p193
      %p196 = scmp.ne.s32.totalorder %s181, %s195
      %p197 = scmp.eq.s32.totalorder %s24, 0
      %p198 = por %p196, %p197
      %s200 = sadd.s32 %s199, 1
      %p203 = scmp.eq.s32.totalorder %s18, 1
      %p204 = scmp.ne.s32.totalorder %s199, %s201
      %p205 = scmp.eq.s32.totalorder %s18, 0
      %p206 = por %p204, %p205
      %p207 = scmp.ne.s32.totalorder %s199, %s201
      %p208 = scmp.eq.s32.totalorder %s23, 1
      %p209 = por %p207, %p208
      %p210 = scmp.ne.s32.totalorder %s201, %s202
      %p211 = scmp.eq.s32.totalorder %s23, 0
      %p212 = por %p210, %p211
      %p213 = scmp.ne.s32.totalorder %s201, %s202
      %p214 = scmp.eq.s32.totalorder %s24, 1
      %p215 = por %p213, %p214
      %p217 = scmp.ne.s32.totalorder %s202, %s216
      %p218 = scmp.eq.s32.totalorder %s24, 0
      %p219 = por %p217, %p218
      %s220 = ssub.s32 %s18, %s25
      %p221 = scmp.eq.s32.totalorder %s220, 0
      %s223 = sadd.s32 %s222, 1
      %s224 = scalar_select %p221, %s222, %s223
      %p227 = pneg %p221
      %p228 = scmp.eq.s32.totalorder %s18, 1
      %p229 = por %p227, %p228
      %p230 = scmp.ne.s32.totalorder %s222, %s225
      %p231 = scmp.eq.s32.totalorder %s18, 0
      %p232 = por %p230, %p231
      %p233 = scmp.ne.s32.totalorder %s222, %s225
      %p234 = scmp.eq.s32.totalorder %s23, 1
      %p235 = por %p233, %p234
      %p236 = scmp.ne.s32.totalorder %s225, %s226
      %p237 = scmp.eq.s32.totalorder %s23, 0
      %p238 = por %p236, %p237
      %p239 = scmp.ne.s32.totalorder %s225, %s226
      %p240 = scmp.eq.s32.totalorder %s24, 1
      %p241 = por %p239, %p240
      %p243 = scmp.ne.s32.totalorder %s226, %s242
      %p244 = scmp.eq.s32.totalorder %s24, 0
      %p245 = por %p243, %p244
      %p246 = scmp.le.s32.totalorder 1, %s18
      %p247 = scmp.lt.s32.totalorder %s18, 3
      %p248 = pnand %p246, %p247
      %p249 = pneg %p248
      // Predicated region
      $region9: #{large_separate_conv_forward.1} parent=5 // pred_check
        _
      $region10: #{large_separate_conv_forward.1} parent=5 // pred_check_branch
        %251 = sbr.rel (%p248) target = $region12
      $region11: #{large_separate_conv_forward.1} parent=5 // pred_region
        %s252 = ssub.s32 %s18, 1
        // Predicated region
        $region13: #{large_separate_conv_forward.1} parent=11 // pred_check
          %p253 = pneg %p65
        $region14: #{large_separate_conv_forward.1} parent=11 // pred_check_branch
          %255 = sbr.rel (%p253) target = $region16
        $region15: #{large_separate_conv_forward.1} parent=11 // pred_region
          _
        $region16: #{large_separate_conv_forward.1} parent=11 // pred_fallthru
          _
        // Predicated region
        $region17: #{large_separate_conv_forward.1} parent=11 // pred_check
          %p256 = pneg %p86
        $region18: #{large_separate_conv_forward.1} parent=11 // pred_check_branch
          %258 = sbr.rel (%p256) target = $region20
        $region19: #{large_separate_conv_forward.1} parent=11 // pred_region
          _
        $region20: #{large_separate_conv_forward.1} parent=11 // pred_fallthru
          _
        // Predicated region
        $region21: #{large_separate_conv_forward.1} parent=11 // pred_check
          %p259 = pneg %p107
        $region22: #{large_separate_conv_forward.1} parent=11 // pred_check_branch
          %261 = sbr.rel (%p259) target = $region24
        $region23: #{large_separate_conv_forward.1} parent=11 // pred_region
          _
        $region24: #{large_separate_conv_forward.1} parent=11 // pred_fallthru
          _
        // Predicated region
        $region25: #{large_separate_conv_forward.1} parent=11 // pred_check
          %p262 = pneg %p128
        $region26: #{large_separate_conv_forward.1} parent=11 // pred_check_branch
          %264 = sbr.rel (%p262) target = $region28
        $region27: #{large_separate_conv_forward.1} parent=11 // pred_region
          _
        $region28: #{large_separate_conv_forward.1} parent=11 // pred_fallthru
          _
        // Predicated region
        $region29: #{large_separate_conv_forward.1} parent=11 // pred_check
          %p265 = pneg %p149
        $region30: #{large_separate_conv_forward.1} parent=11 // pred_check_branch
          %267 = sbr.rel (%p265) target = $region32
        $region31: #{large_separate_conv_forward.1} parent=11 // pred_region
          _
        $region32: #{large_separate_conv_forward.1} parent=11 // pred_fallthru
          _
        // Predicated region
        $region33: #{large_separate_conv_forward.1} parent=11 // pred_check
          %p268 = pneg %p170
        $region34: #{large_separate_conv_forward.1} parent=11 // pred_check_branch
          %270 = sbr.rel (%p268) target = $region36
        $region35: #{large_separate_conv_forward.1} parent=11 // pred_region
          _
        $region36: #{large_separate_conv_forward.1} parent=11 // pred_fallthru
          _
        // Predicated region
        $region37: #{large_separate_conv_forward.1} parent=11 // pred_check
          %p271 = pneg %p191
        $region38: #{large_separate_conv_forward.1} parent=11 // pred_check_branch
          %273 = sbr.rel (%p271) target = $region40
        $region39: #{large_separate_conv_forward.1} parent=11 // pred_region
          _
        $region40: #{large_separate_conv_forward.1} parent=11 // pred_fallthru
          _
        // Predicated region
        $region41: #{large_separate_conv_forward.1} parent=11 // pred_check
          %p274 = pneg %p212
        $region42: #{large_separate_conv_forward.1} parent=11 // pred_check_branch
          %276 = sbr.rel (%p274) target = $region44
        $region43: #{large_separate_conv_forward.1} parent=11 // pred_region
          _
        $region44: #{large_separate_conv_forward.1} parent=11 // pred_fallthru
          _
      $region12: #{large_separate_conv_forward.1} parent=5 // pred_fallthru
        _
      %p277 = scmp.lt.s32.totalorder %s18, 2
      // Predicated region
      $region45: #{large_separate_conv_forward.1} parent=5 // pred_check
        %p278 = pneg %p277
      $region46: #{large_separate_conv_forward.1} parent=5 // pred_check_branch
        %280 = sbr.rel (%p278) target = $region48
      $region47: #{large_separate_conv_forward.1} parent=5 // pred_region
        // Predicated region
        $region49: #{large_separate_conv_forward.1} parent=47 // pred_check
          %p281 = pneg %p38
        $region50: #{large_separate_conv_forward.1} parent=47 // pred_check_branch
          %283 = sbr.rel (%p281) target = $region52
        $region51: #{large_separate_conv_forward.1} parent=47 // pred_region
          %p284 = scmp.lt.s32.totalorder %s18, 1
          %s285 = scalar_select %p284, %s18, 1
          %s286 = smul.addr %s285, 60
          %s287 = smul.addr %s286, 8
          %s288 = scalar_lea.vmem %s0, %s287
        $region52: #{large_separate_conv_forward.1} parent=47 // pred_fallthru
          _
      $region48: #{large_separate_conv_forward.1} parent=5 // pred_fallthru
        _
      %p289 = scmp.le.s32.totalorder 1, %s18
      %p290 = scmp.lt.s32.totalorder %s18, 3
      %p291 = pnand %p289, %p290
      %p292 = pneg %p291
      // Predicated region
      $region53: #{large_separate_conv_forward.1} parent=5 // pred_check
        _
      $region54: #{large_separate_conv_forward.1} parent=5 // pred_check_branch
        %294 = sbr.rel (%p291) target = $region56
      $region55: #{large_separate_conv_forward.1} parent=5 // pred_region
        %s295 = ssub.s32 %s18, 1
        %p296 = scmp.lt.s32.totalorder %s23, 1
        %s297 = scalar_select %p296, %s23, 1
        %s298 = smul.addr %s297, 60
        %s299 = smul.addr %s298, 8
        %s300 = scalar_lea.vmem %s0, %s299
        %p301 = pneg %p44
        %p302 = pneg %p41
        %p303 = pneg %p65
        %p304 = pneg %p62
        %p305 = pneg %p86
        %p306 = pneg %p83
        %p307 = pneg %p107
        %p308 = pneg %p104
        %p309 = pneg %p128
        %p310 = pneg %p125
        %p311 = pneg %p149
        %p312 = pneg %p146
        %p313 = pneg %p170
        %p314 = pneg %p167
        %p315 = pneg %p191
        %p316 = pneg %p188
        %p317 = pneg %p212
        %p318 = pneg %p209
        %p319 = pneg %p238
        %p320 = pneg %p235
        %s321 = sand.u32 %s225, 1
        %s322 = scalar_lea.sflag [#allocation3], %s321
        %s323 = sand.u32 %s225, 1
        %s324 = smul.addr %s323, 256
        %s325 = scalar_lea.vmem [#allocation2], %s324
        %p326 = scmp.lt.s32.totalorder %s23, 1
        %s327 = scalar_select %p326, %s23, 1
        %s328 = smul.addr %s327, 60
        %s329 = smul.addr %s328, 8
        %s330 = scalar_lea.vmem %s0, %s329
        %v331 = vld [vmem:[%s330] sm:$0xff]
        %v332 = vld [vmem:[%s330 + $0x8] sm:$0xff]
        %v333 = vld [vmem:[%s330 + $0x10] sm:$0xff]
        %v334 = vld [vmem:[%s330 + $0x18] sm:$0xff]
        %v335 = vld [vmem:[%s330 + $0x20] sm:$0xff]
        %v336 = vld [vmem:[%s330 + $0x28] sm:$0xff]
        %v337 = vld [vmem:[%s330 + $0x30] sm:$0xff]
        %v338 = vld [vmem:[%s330 + $0x38] sm:$0xff]
        %v339 = vld [vmem:[%s330 + $0x40] sm:$0xff]
        %v340 = vld [vmem:[%s330 + $0x48] sm:$0xff]
        %v341 = vld [vmem:[%s330 + $0x50] sm:$0xff]
        %v342 = vld [vmem:[%s330 + $0x58] sm:$0xff]
        %v343 = vld [vmem:[%s330 + $0x60] sm:$0xff]
        %v344 = vld [vmem:[%s330 + $0x68] sm:$0xff]
        %v345 = vld [vmem:[%s330 + $0x70] sm:$0xff]
        %v346 = vld [vmem:[%s330 + $0x78] sm:$0xff]
        %v347 = vld [vmem:[%s330 + $0x80] sm:$0xff]
        %v348 = vld [vmem:[%s330 + $0x88] sm:$0xff]
        %v349 = vld [vmem:[%s330 + $0x90] sm:$0xff]
        %v350 = vld [vmem:[%s330 + $0x98] sm:$0xff]
        %v351 = vld [vmem:[%s330 + $0xa0] sm:$0xff]
        %v352 = vld [vmem:[%s330 + $0xa8] sm:$0xff]
        %v353 = vld [vmem:[%s330 + $0xb0] sm:$0xff]
        %v354 = vld [vmem:[%s330 + $0xb8] sm:$0xff]
        %v355 = vld [vmem:[%s330 + $0xc0] sm:$0xff]
        %v356 = vld [vmem:[%s330 + $0xc8] sm:$0xff]
        %v357 = vld [vmem:[%s330 + $0xd0] sm:$0xff]
        %v358 = vld [vmem:[%s330 + $0xd8] sm:$0xff]
        %v359 = vld [vmem:[%s330 + $0xe0] sm:$0xff]
        %v360 = vld [vmem:[%s330 + $0xe8] sm:$0xff]
        %v361 = vld [vmem:[%s330 + $0xf0] sm:$0xff]
        %v362 = vld [vmem:[%s330 + $0xf8] sm:$0xff]
        %v363 = vld [vmem:[%s330 + $0x100] sm:$0xff]
        %v364 = vld [vmem:[%s330 + $0x108] sm:$0xff]
        %v365 = vld [vmem:[%s330 + $0x110] sm:$0xff]
        %v366 = vld [vmem:[%s330 + $0x118] sm:$0xff]
        %v367 = vld [vmem:[%s330 + $0x120] sm:$0xff]
        %v368 = vld [vmem:[%s330 + $0x128] sm:$0xff]
        %v369 = vld [vmem:[%s330 + $0x130] sm:$0xff]
        %v370 = vld [vmem:[%s330 + $0x138] sm:$0xff]
        %v371 = vld [vmem:[%s330 + $0x140] sm:$0xff]
        %v372 = vld [vmem:[%s330 + $0x148] sm:$0xff]
        %v373 = vld [vmem:[%s330 + $0x150] sm:$0xff]
        %v374 = vld [vmem:[%s330 + $0x158] sm:$0xff]
        %v375 = vld [vmem:[%s330 + $0x160] sm:$0xff]
        %v376 = vld [vmem:[%s330 + $0x168] sm:$0xff]
        %v377 = vld [vmem:[%s330 + $0x170] sm:$0xff]
        %v378 = vld [vmem:[%s330 + $0x178] sm:$0xff]
        %v379 = vld [vmem:[%s330 + $0x180] sm:$0xff]
        %v380 = vld [vmem:[%s330 + $0x188] sm:$0xff]
        %v381 = vld [vmem:[%s330 + $0x190] sm:$0xff]
        %v382 = vld [vmem:[%s330 + $0x198] sm:$0xff]
        %v383 = vld [vmem:[%s330 + $0x1a0] sm:$0xff]
        %v384 = vld [vmem:[%s330 + $0x1a8] sm:$0xff]
        %v385 = vld [vmem:[%s330 + $0x1b0] sm:$0xff]
        %v386 = vld [vmem:[%s330 + $0x1b8] sm:$0xff]
        %v387 = vld [vmem:[%s330 + $0x1c0] sm:$0xff]
        %v388 = vld [vmem:[%s330 + $0x1c8] sm:$0xff]
        %v389 = vld [vmem:[%s330 + $0x1d0] sm:$0xff]
        %v390 = vld [vmem:[%s330 + $0x1d8] sm:$0xff]
        %v391 = vld [vmem:[%s1] sm:$0xff]
        %s392 = scalar_lea.vmem %s1, 8
        %v393 = vld [vmem:[%s392] sm:$0xff]
        %vm394 = vcmask 64512
        %v396 = vsel %vm394, %v334, 0
        %v399 = vsel %vm394, %v335, 0
        %v402 = vsel %vm394, %v336, 0
        %v405 = vsel %vm394, %v337, 0
        %v408 = vsel %vm394, %v338, 0
        %v411 = vsel %vm394, %v339, 0
        %v414 = vsel %vm394, %v340, 0
        %v417 = vsel %vm394, %v341, 0
        %v420 = vsel %vm394, %v342, 0
        %v423 = vsel %vm394, %v343, 0
        %v426 = vsel %vm394, %v344, 0
        %v429 = vsel %vm394, %v345, 0
        %v432 = vsel %vm394, %v346, 0
        %v435 = vsel %vm394, %v347, 0
        %v438 = vsel %vm394, %v348, 0
        %v441 = vsel %vm394, %v349, 0
        %v444 = vsel %vm394, %v350, 0
        %v447 = vsel %vm394, %v351, 0
        %v450 = vsel %vm394, %v352, 0
        %v453 = vsel %vm394, %v353, 0
        %v456 = vsel %vm394, %v354, 0
        %v459 = vsel %vm394, %v355, 0
        %v462 = vsel %vm394, %v356, 0
        %v465 = vsel %vm394, %v357, 0
        %v468 = vsel %vm394, %v358, 0
        %v471 = vsel %vm394, %v359, 0
        %v474 = vsel %vm394, %v360, 0
        %v477 = vsel %vm394, %v361, 0
        %v480 = vsel %vm394, %v362, 0
        %v483 = vsel %vm394, %v363, 0
        %v486 = vsel %vm394, %v364, 0
        %v489 = vsel %vm394, %v365, 0
        %v492 = vsel %vm394, %v366, 0
        %v495 = vsel %vm394, %v367, 0
        %v498 = vsel %vm394, %v368, 0
        %v501 = vsel %vm394, %v369, 0
        %v504 = vsel %vm394, %v370, 0
        %v507 = vsel %vm394, %v371, 0
        %v510 = vsel %vm394, %v372, 0
        %v513 = vsel %vm394, %v373, 0
        %v516 = vsel %vm394, %v374, 0
        %v519 = vsel %vm394, %v375, 0
        %v522 = vsel %vm394, %v376, 0
        %v525 = vsel %vm394, %v377, 0
        %v528 = vsel %vm394, %v378, 0
        %v531 = vsel %vm394, %v379, 0
        %v534 = vsel %vm394, %v380, 0
        %v537 = vsel %vm394, %v381, 0
        %539 = vmatprep.subr.mxu0 0.0
        %540 = vmatpush1.msra.mxu0 0.0
        %541 = vmatprep.subr.mxu0 0.0
        %542 = vmatpush1.msra.mxu0 0.0
        %543 = vmatprep.subr.mxu0 0.0
        %544 = vmatpush1.msra.mxu0 0.0
        %545 = vmatprep.subr.mxu0 0.0
        %546 = vmatpush1.msra.mxu0 0.0
        %547 = vmatprep.subr.mxu0 0.0
        %548 = vmatpush1.msra.mxu0 0.0
        %549 = vmatprep.subr.mxu0 0.0
        %550 = vmatpush1.msra.mxu0 0.0
        %551 = vmatprep.subr.mxu0 0.0
        %552 = vmatpush1.msra.mxu0 0.0
        %553 = vmatprep.subr.mxu0 0.0
        %554 = vmatpush1.msra.mxu0 0.0
        %555 = vmatprep.subr.mxu0 0.0
        %556 = vmatpush1.msra.mxu0 0.0
        %557 = vmatprep.subr.mxu0 0.0
        %558 = vmatpush1.msra.mxu0 0.0
        %559 = vmatprep.subr.mxu0 0.0
        %560 = vmatpush1.msra.mxu0 0.0
        %561 = vmatprep.subr.mxu0 0.0
        %562 = vmatpush1.msra.mxu0 0.0
        %563 = vmatprep.subr.mxu0 0.0
        %564 = vmatpush1.msra.mxu0 0.0
        %565 = vmatprep.subr.mxu0 0.0
        %566 = vmatpush1.msra.mxu0 0.0
        %567 = vmatprep.subr.mxu0 0.0
        %568 = vmatpush1.msra.mxu0 0.0
        %569 = vmatprep.subr.mxu0 0.0
        %570 = vmatpush1.msra.mxu0 %v393
        %571 = vmatprep.subr.mxu0 0.0
        %572 = vmatpush2.msra.mxu0 0.0
        %573 = vmatprep.subr.mxu0 0.0
        %574 = vmatpush2.msra.mxu0 0.0
        %575 = vmatprep.subr.mxu0 0.0
        %576 = vmatpush2.msra.mxu0 0.0
        %577 = vmatprep.subr.mxu0 0.0
        %578 = vmatpush2.msra.mxu0 0.0
        %579 = vmatprep.subr.mxu0 0.0
        %580 = vmatpush2.msra.mxu0 0.0
        %581 = vmatprep.subr.mxu0 0.0
        %582 = vmatpush2.msra.mxu0 0.0
        %583 = vmatprep.subr.mxu0 0.0
        %584 = vmatpush2.msra.mxu0 0.0
        %585 = vmatprep.subr.mxu0 0.0
        %586 = vmatpush2.msra.mxu0 0.0
        %587 = vmatprep.subr.mxu0 0.0
        %588 = vmatpush2.msra.mxu0 0.0
        %589 = vmatprep.subr.mxu0 0.0
        %590 = vmatpush2.msra.mxu0 0.0
        %591 = vmatprep.subr.mxu0 0.0
        %592 = vmatpush2.msra.mxu0 0.0
        %593 = vmatprep.subr.mxu0 0.0
        %594 = vmatpush2.msra.mxu0 0.0
        %595 = vmatprep.subr.mxu0 0.0
        %596 = vmatpush2.msra.mxu0 0.0
        %597 = vmatprep.subr.mxu0 0.0
        %598 = vmatpush2.msra.mxu0 0.0
        %599 = vmatprep.subr.mxu0 0.0
        %600 = vmatpush2.msra.mxu0 0.0
        %601 = vmatprep.subr.mxu0 0.0
        %602 = vmatpush2.msra.mxu0 0.0
        %603 = vmatprep.mubr.f32.mxu0 0.0
        %604 = vmatmul.mubr.f32.gmra.mxu0 %v396
        %v605 = vpop.f32.mrf.mxu0
        %v606 = vadd.f32 0.0, %v605
        %v607 = vpop.f32.mrf.mxu0
        %608 = vmatprep.mubr.f32.mxu0 0.0
        %609 = vmatmul.mubr.f32.gmra.mxu0 %v399
        %v610 = vpop.f32.mrf.mxu0
        %v611 = vadd.f32 0.0, %v610
        %v612 = vpop.f32.mrf.mxu0
        %613 = vmatprep.mubr.f32.mxu0 0.0
        %614 = vmatmul.mubr.f32.gmra.mxu0 %v402
        %v615 = vpop.f32.mrf.mxu0
        %v616 = vadd.f32 0.0, %v615
        %v617 = vpop.f32.mrf.mxu0
        %618 = vmatprep.mubr.f32.mxu0 0.0
        %619 = vmatmul.mubr.f32.gmra.mxu0 %v405
        %v620 = vpop.f32.mrf.mxu0
        %v621 = vadd.f32 0.0, %v620
        %v622 = vpop.f32.mrf.mxu0
        %623 = vmatprep.mubr.f32.mxu0 0.0
        %624 = vmatmul.mubr.f32.gmra.mxu0 %v408
        %v625 = vpop.f32.mrf.mxu0
        %v626 = vadd.f32 0.0, %v625
        %v627 = vpop.f32.mrf.mxu0
        %628 = vmatprep.mubr.f32.mxu0 0.0
        %629 = vmatmul.mubr.f32.gmra.mxu0 %v411
        %v630 = vpop.f32.mrf.mxu0
        %v631 = vadd.f32 0.0, %v630
        %v632 = vpop.f32.mrf.mxu0
        %633 = vmatprep.mubr.f32.mxu0 0.0
        %634 = vmatmul.mubr.f32.gmra.mxu0 %v414
        %v635 = vpop.f32.mrf.mxu0
        %v636 = vadd.f32 0.0, %v635
        %v637 = vpop.f32.mrf.mxu0
        %638 = vmatprep.mubr.f32.mxu0 0.0
        %639 = vmatmul.mubr.f32.gmra.mxu0 %v417
        %v640 = vpop.f32.mrf.mxu0
        %v641 = vadd.f32 0.0, %v640
        %v642 = vpop.f32.mrf.mxu0
        %643 = vmatprep.mubr.f32.mxu0 0.0
        %644 = vmatmul.mubr.f32.gmra.mxu0 %v420
        %v645 = vpop.f32.mrf.mxu0
        %v646 = vadd.f32 0.0, %v645
        %v647 = vpop.f32.mrf.mxu0
        %648 = vmatprep.mubr.f32.mxu0 0.0
        %649 = vmatmul.mubr.f32.gmra.mxu0 %v423
        %v650 = vpop.f32.mrf.mxu0
        %v651 = vadd.f32 0.0, %v650
        %v652 = vpop.f32.mrf.mxu0
        %653 = vmatprep.mubr.f32.mxu0 0.0
        %654 = vmatmul.mubr.f32.gmra.mxu0 %v426
        %v655 = vpop.f32.mrf.mxu0
        %v656 = vadd.f32 0.0, %v655
        %v657 = vpop.f32.mrf.mxu0
        %658 = vmatprep.mubr.f32.mxu0 0.0
        %659 = vmatmul.mubr.f32.gmra.mxu0 %v429
        %v660 = vpop.f32.mrf.mxu0
        %v661 = vadd.f32 0.0, %v660
        %v662 = vpop.f32.mrf.mxu0
        %663 = vmatprep.mubr.f32.mxu0 0.0
        %664 = vmatmul.mubr.f32.gmra.mxu0 %v432
        %v665 = vpop.f32.mrf.mxu0
        %v666 = vadd.f32 0.0, %v665
        %v667 = vpop.f32.mrf.mxu0
        %668 = vmatprep.mubr.f32.mxu0 0.0
        %669 = vmatmul.mubr.f32.gmra.mxu0 %v435
        %v670 = vpop.f32.mrf.mxu0
        %v671 = vadd.f32 0.0, %v670
        %v672 = vpop.f32.mrf.mxu0
        %673 = vmatprep.mubr.f32.mxu0 0.0
        %674 = vmatmul.mubr.f32.gmra.mxu0 %v438
        %v675 = vpop.f32.mrf.mxu0
        %v676 = vadd.f32 0.0, %v675
        %v677 = vpop.f32.mrf.mxu0
        %678 = vmatprep.mubr.f32.mxu0 0.0
        %679 = vmatmul.mubr.f32.gmra.mxu0 %v441
        %v680 = vpop.f32.mrf.mxu0
        %v681 = vadd.f32 0.0, %v680
        %v682 = vpop.f32.mrf.mxu0
        %683 = vmatprep.mubr.f32.mxu0 0.0
        %684 = vmatmul.mubr.f32.gmra.mxu0 %v444
        %v685 = vpop.f32.mrf.mxu0
        %v686 = vadd.f32 0.0, %v685
        %v687 = vpop.f32.mrf.mxu0
        %688 = vmatprep.mubr.f32.mxu0 0.0
        %689 = vmatmul.mubr.f32.gmra.mxu0 %v447
        %v690 = vpop.f32.mrf.mxu0
        %v691 = vadd.f32 0.0, %v690
        %v692 = vpop.f32.mrf.mxu0
        %693 = vmatprep.mubr.f32.mxu0 0.0
        %694 = vmatmul.mubr.f32.gmra.mxu0 %v450
        %v695 = vpop.f32.mrf.mxu0
        %v696 = vadd.f32 0.0, %v695
        %v697 = vpop.f32.mrf.mxu0
        %698 = vmatprep.mubr.f32.mxu0 0.0
        %699 = vmatmul.mubr.f32.gmra.mxu0 %v453
        %v700 = vpop.f32.mrf.mxu0
        %v701 = vadd.f32 0.0, %v700
        %v702 = vpop.f32.mrf.mxu0
        %703 = vmatprep.mubr.f32.mxu0 0.0
        %704 = vmatmul.mubr.f32.gmra.mxu0 %v456
        %v705 = vpop.f32.mrf.mxu0
        %v706 = vadd.f32 0.0, %v705
        %v707 = vpop.f32.mrf.mxu0
        %708 = vmatprep.mubr.f32.mxu0 0.0
        %709 = vmatmul.mubr.f32.gmra.mxu0 %v459
        %v710 = vpop.f32.mrf.mxu0
        %v711 = vadd.f32 0.0, %v710
        %v712 = vpop.f32.mrf.mxu0
        %713 = vmatprep.mubr.f32.mxu0 0.0
        %714 = vmatmul.mubr.f32.gmra.mxu0 %v462
        %v715 = vpop.f32.mrf.mxu0
        %v716 = vadd.f32 0.0, %v715
        %v717 = vpop.f32.mrf.mxu0
        %718 = vmatprep.mubr.f32.mxu0 0.0
        %719 = vmatmul.mubr.f32.gmra.mxu0 %v465
        %v720 = vpop.f32.mrf.mxu0
        %v721 = vadd.f32 0.0, %v720
        %v722 = vpop.f32.mrf.mxu0
        %723 = vmatprep.mubr.f32.mxu0 0.0
        %724 = vmatmul.mubr.f32.gmra.mxu0 %v468
        %v725 = vpop.f32.mrf.mxu0
        %v726 = vadd.f32 0.0, %v725
        %v727 = vpop.f32.mrf.mxu0
        %728 = vmatprep.mubr.f32.mxu0 0.0
        %729 = vmatmul.mubr.f32.gmra.mxu0 %v471
        %v730 = vpop.f32.mrf.mxu0
        %v731 = vadd.f32 0.0, %v730
        %v732 = vpop.f32.mrf.mxu0
        %733 = vmatprep.mubr.f32.mxu0 0.0
        %734 = vmatmul.mubr.f32.gmra.mxu0 %v474
        %v735 = vpop.f32.mrf.mxu0
        %v736 = vadd.f32 0.0, %v735
        %v737 = vpop.f32.mrf.mxu0
        %738 = vmatprep.mubr.f32.mxu0 0.0
        %739 = vmatmul.mubr.f32.gmra.mxu0 %v477
        %v740 = vpop.f32.mrf.mxu0
        %v741 = vadd.f32 0.0, %v740
        %v742 = vpop.f32.mrf.mxu0
        %743 = vmatprep.mubr.f32.mxu0 0.0
        %744 = vmatmul.mubr.f32.gmra.mxu0 %v480
        %v745 = vpop.f32.mrf.mxu0
        %v746 = vadd.f32 0.0, %v745
        %v747 = vpop.f32.mrf.mxu0
        %748 = vmatprep.mubr.f32.mxu0 0.0
        %749 = vmatmul.mubr.f32.gmra.mxu0 %v483
        %v750 = vpop.f32.mrf.mxu0
        %v751 = vadd.f32 0.0, %v750
        %v752 = vpop.f32.mrf.mxu0
        %753 = vmatprep.mubr.f32.mxu0 0.0
        %754 = vmatmul.mubr.f32.gmra.mxu0 %v486
        %v755 = vpop.f32.mrf.mxu0
        %v756 = vadd.f32 0.0, %v755
        %v757 = vpop.f32.mrf.mxu0
        %758 = vmatprep.mubr.f32.mxu0 0.0
        %759 = vmatmul.mubr.f32.gmra.mxu0 %v489
        %v760 = vpop.f32.mrf.mxu0
        %v761 = vadd.f32 0.0, %v760
        %v762 = vpop.f32.mrf.mxu0
        %763 = vmatprep.mubr.f32.mxu0 0.0
        %764 = vmatmul.mubr.f32.gmra.mxu0 %v492
        %v765 = vpop.f32.mrf.mxu0
        %v766 = vadd.f32 0.0, %v765
        %v767 = vpop.f32.mrf.mxu0
        %768 = vmatprep.mubr.f32.mxu0 0.0
        %769 = vmatmul.mubr.f32.gmra.mxu0 %v495
        %v770 = vpop.f32.mrf.mxu0
        %v771 = vadd.f32 0.0, %v770
        %v772 = vpop.f32.mrf.mxu0
        %773 = vmatprep.mubr.f32.mxu0 0.0
        %774 = vmatmul.mubr.f32.gmra.mxu0 %v498
        %v775 = vpop.f32.mrf.mxu0
        %v776 = vadd.f32 0.0, %v775
        %v777 = vpop.f32.mrf.mxu0
        %778 = vmatprep.mubr.f32.mxu0 0.0
        %779 = vmatmul.mubr.f32.gmra.mxu0 %v501
        %v780 = vpop.f32.mrf.mxu0
        %v781 = vadd.f32 0.0, %v780
        %v782 = vpop.f32.mrf.mxu0
        %783 = vmatprep.mubr.f32.mxu0 0.0
        %784 = vmatmul.mubr.f32.gmra.mxu0 %v504
        %v785 = vpop.f32.mrf.mxu0
        %v786 = vadd.f32 0.0, %v785
        %v787 = vpop.f32.mrf.mxu0
        %788 = vmatprep.mubr.f32.mxu0 0.0
        %789 = vmatmul.mubr.f32.gmra.mxu0 %v507
        %v790 = vpop.f32.mrf.mxu0
        %v791 = vadd.f32 0.0, %v790
        %v792 = vpop.f32.mrf.mxu0
        %793 = vmatprep.mubr.f32.mxu0 0.0
        %794 = vmatmul.mubr.f32.gmra.mxu0 %v510
        %v795 = vpop.f32.mrf.mxu0
        %v796 = vadd.f32 0.0, %v795
        %v797 = vpop.f32.mrf.mxu0
        %798 = vmatprep.mubr.f32.mxu0 0.0
        %799 = vmatmul.mubr.f32.gmra.mxu0 %v513
        %v800 = vpop.f32.mrf.mxu0
        %v801 = vadd.f32 0.0, %v800
        %v802 = vpop.f32.mrf.mxu0
        %803 = vmatprep.mubr.f32.mxu0 0.0
        %804 = vmatmul.mubr.f32.gmra.mxu0 %v516
        %v805 = vpop.f32.mrf.mxu0
        %v806 = vadd.f32 0.0, %v805
        %v807 = vpop.f32.mrf.mxu0
        %808 = vmatprep.mubr.f32.mxu0 0.0
        %809 = vmatmul.mubr.f32.gmra.mxu0 %v519
        %v810 = vpop.f32.mrf.mxu0
        %v811 = vadd.f32 0.0, %v810
        %v812 = vpop.f32.mrf.mxu0
        %813 = vmatprep.mubr.f32.mxu0 0.0
        %814 = vmatmul.mubr.f32.gmra.mxu0 %v522
        %v815 = vpop.f32.mrf.mxu0
        %v816 = vadd.f32 0.0, %v815
        %v817 = vpop.f32.mrf.mxu0
        %818 = vmatprep.mubr.f32.mxu0 0.0
        %819 = vmatmul.mubr.f32.gmra.mxu0 %v525
        %v820 = vpop.f32.mrf.mxu0
        %v821 = vadd.f32 0.0, %v820
        %v822 = vpop.f32.mrf.mxu0
        %823 = vmatprep.mubr.f32.mxu0 0.0
        %824 = vmatmul.mubr.f32.gmra.mxu0 %v528
        %v825 = vpop.f32.mrf.mxu0
        %v826 = vadd.f32 0.0, %v825
        %v827 = vpop.f32.mrf.mxu0
        %828 = vmatprep.mubr.f32.mxu0 0.0
        %829 = vmatmul.mubr.f32.gmra.mxu0 %v531
        %v830 = vpop.f32.mrf.mxu0
        %v831 = vadd.f32 0.0, %v830
        %v832 = vpop.f32.mrf.mxu0
        %833 = vmatprep.mubr.f32.mxu0 0.0
        %834 = vmatmul.mubr.f32.gmra.mxu0 %v534
        %v835 = vpop.f32.mrf.mxu0
        %v836 = vadd.f32 0.0, %v835
        %v837 = vpop.f32.mrf.mxu0
        %838 = vmatprep.mubr.f32.mxu0 0.0
        %839 = vmatmul.mubr.f32.gmra.mxu0 %v537
        %v840 = vpop.f32.mrf.mxu0
        %v841 = vadd.f32 0.0, %v840
        %v842 = vpop.f32.mrf.mxu0
        %843 = vdwg.mxu0
        %v845 = vsel %vm394, %v331, 0
        %v848 = vsel %vm394, %v332, 0
        %v851 = vsel %vm394, %v333, 0
        %853 = vmatprep.subr.mxu0 0.0
        %854 = vmatpush1.msra.mxu0 0.0
        %855 = vmatprep.subr.mxu0 0.0
        %856 = vmatpush1.msra.mxu0 0.0
        %857 = vmatprep.subr.mxu0 0.0
        %858 = vmatpush1.msra.mxu0 0.0
        %859 = vmatprep.subr.mxu0 0.0
        %860 = vmatpush1.msra.mxu0 0.0
        %861 = vmatprep.subr.mxu0 0.0
        %862 = vmatpush1.msra.mxu0 0.0
        %863 = vmatprep.subr.mxu0 0.0
        %864 = vmatpush1.msra.mxu0 0.0
        %865 = vmatprep.subr.mxu0 0.0
        %866 = vmatpush1.msra.mxu0 0.0
        %867 = vmatprep.subr.mxu0 0.0
        %868 = vmatpush1.msra.mxu0 0.0
        %869 = vmatprep.subr.mxu0 0.0
        %870 = vmatpush1.msra.mxu0 0.0
        %871 = vmatprep.subr.mxu0 0.0
        %872 = vmatpush1.msra.mxu0 0.0
        %873 = vmatprep.subr.mxu0 0.0
        %874 = vmatpush1.msra.mxu0 0.0
        %875 = vmatprep.subr.mxu0 0.0
        %876 = vmatpush1.msra.mxu0 0.0
        %877 = vmatprep.subr.mxu0 0.0
        %878 = vmatpush1.msra.mxu0 0.0
        %879 = vmatprep.subr.mxu0 0.0
        %880 = vmatpush1.msra.mxu0 0.0
        %881 = vmatprep.subr.mxu0 0.0
        %882 = vmatpush1.msra.mxu0 0.0
        %883 = vmatprep.subr.mxu0 0.0
        %884 = vmatpush1.msra.mxu0 %v391
        %885 = vmatprep.subr.mxu0 0.0
        %886 = vmatpush2.msra.mxu0 0.0
        %887 = vmatprep.subr.mxu0 0.0
        %888 = vmatpush2.msra.mxu0 0.0
        %889 = vmatprep.subr.mxu0 0.0
        %890 = vmatpush2.msra.mxu0 0.0
        %891 = vmatprep.subr.mxu0 0.0
        %892 = vmatpush2.msra.mxu0 0.0
        %893 = vmatprep.subr.mxu0 0.0
        %894 = vmatpush2.msra.mxu0 0.0
        %895 = vmatprep.subr.mxu0 0.0
        %896 = vmatpush2.msra.mxu0 0.0
        %897 = vmatprep.subr.mxu0 0.0
        %898 = vmatpush2.msra.mxu0 0.0
        %899 = vmatprep.subr.mxu0 0.0
        %900 = vmatpush2.msra.mxu0 0.0
        %901 = vmatprep.subr.mxu0 0.0
        %902 = vmatpush2.msra.mxu0 0.0
        %903 = vmatprep.subr.mxu0 0.0
        %904 = vmatpush2.msra.mxu0 0.0
        %905 = vmatprep.subr.mxu0 0.0
        %906 = vmatpush2.msra.mxu0 0.0
        %907 = vmatprep.subr.mxu0 0.0
        %908 = vmatpush2.msra.mxu0 0.0
        %909 = vmatprep.subr.mxu0 0.0
        %910 = vmatpush2.msra.mxu0 0.0
        %911 = vmatprep.subr.mxu0 0.0
        %912 = vmatpush2.msra.mxu0 0.0
        %913 = vmatprep.subr.mxu0 0.0
        %914 = vmatpush2.msra.mxu0 0.0
        %915 = vmatprep.subr.mxu0 0.0
        %916 = vmatpush2.msra.mxu0 0.0
        %917 = vmatprep.mubr.f32.mxu0 0.0
        %918 = vmatmul.mubr.f32.gmra.mxu0 %v845
        %v919 = vpop.f32.mrf.mxu0
        %v920 = vadd.f32 %v606, %v919
        %v921 = vpop.f32.mrf.mxu0
        %922 = vmatprep.mubr.f32.mxu0 0.0
        %923 = vmatmul.mubr.f32.gmra.mxu0 %v848
        %v924 = vpop.f32.mrf.mxu0
        %v925 = vadd.f32 %v611, %v924
        %v926 = vpop.f32.mrf.mxu0
        %927 = vmatprep.mubr.f32.mxu0 0.0
        %928 = vmatmul.mubr.f32.gmra.mxu0 %v851
        %v929 = vpop.f32.mrf.mxu0
        %v930 = vadd.f32 %v616, %v929
        %v931 = vpop.f32.mrf.mxu0
        %932 = vmatprep.mubr.f32.mxu0 0.0
        %933 = vmatmul.mubr.f32.gmra.mxu0 %v396
        %v934 = vpop.f32.mrf.mxu0
        %v935 = vadd.f32 %v621, %v934
        %v936 = vpop.f32.mrf.mxu0
        %937 = vmatprep.mubr.f32.mxu0 0.0
        %938 = vmatmul.mubr.f32.gmra.mxu0 %v399
        %v939 = vpop.f32.mrf.mxu0
        %v940 = vadd.f32 %v626, %v939
        %v941 = vpop.f32.mrf.mxu0
        %942 = vmatprep.mubr.f32.mxu0 0.0
        %943 = vmatmul.mubr.f32.gmra.mxu0 %v402
        %v944 = vpop.f32.mrf.mxu0
        %v945 = vadd.f32 %v631, %v944
        %v946 = vpop.f32.mrf.mxu0
        %947 = vmatprep.mubr.f32.mxu0 0.0
        %948 = vmatmul.mubr.f32.gmra.mxu0 %v405
        %v949 = vpop.f32.mrf.mxu0
        %v950 = vadd.f32 %v636, %v949
        %v951 = vpop.f32.mrf.mxu0
        %952 = vmatprep.mubr.f32.mxu0 0.0
        %953 = vmatmul.mubr.f32.gmra.mxu0 %v408
        %v954 = vpop.f32.mrf.mxu0
        %v955 = vadd.f32 %v641, %v954
        %v956 = vpop.f32.mrf.mxu0
        %957 = vmatprep.mubr.f32.mxu0 0.0
        %958 = vmatmul.mubr.f32.gmra.mxu0 %v411
        %v959 = vpop.f32.mrf.mxu0
        %v960 = vadd.f32 %v646, %v959
        %v961 = vpop.f32.mrf.mxu0
        %962 = vmatprep.mubr.f32.mxu0 0.0
        %963 = vmatmul.mubr.f32.gmra.mxu0 %v414
        %v964 = vpop.f32.mrf.mxu0
        %v965 = vadd.f32 %v651, %v964
        %v966 = vpop.f32.mrf.mxu0
        %967 = vmatprep.mubr.f32.mxu0 0.0
        %968 = vmatmul.mubr.f32.gmra.mxu0 %v417
        %v969 = vpop.f32.mrf.mxu0
        %v970 = vadd.f32 %v656, %v969
        %v971 = vpop.f32.mrf.mxu0
        %972 = vmatprep.mubr.f32.mxu0 0.0
        %973 = vmatmul.mubr.f32.gmra.mxu0 %v420
        %v974 = vpop.f32.mrf.mxu0
        %v975 = vadd.f32 %v661, %v974
        %v976 = vpop.f32.mrf.mxu0
        %977 = vmatprep.mubr.f32.mxu0 0.0
        %978 = vmatmul.mubr.f32.gmra.mxu0 %v423
        %v979 = vpop.f32.mrf.mxu0
        %v980 = vadd.f32 %v666, %v979
        %v981 = vpop.f32.mrf.mxu0
        %982 = vmatprep.mubr.f32.mxu0 0.0
        %983 = vmatmul.mubr.f32.gmra.mxu0 %v426
        %v984 = vpop.f32.mrf.mxu0
        %v985 = vadd.f32 %v671, %v984
        %v986 = vpop.f32.mrf.mxu0
        %987 = vmatprep.mubr.f32.mxu0 0.0
        %988 = vmatmul.mubr.f32.gmra.mxu0 %v429
        %v989 = vpop.f32.mrf.mxu0
        %v990 = vadd.f32 %v676, %v989
        %v991 = vpop.f32.mrf.mxu0
        %992 = vmatprep.mubr.f32.mxu0 0.0
        %993 = vmatmul.mubr.f32.gmra.mxu0 %v432
        %v994 = vpop.f32.mrf.mxu0
        %v995 = vadd.f32 %v681, %v994
        %v996 = vpop.f32.mrf.mxu0
        %997 = vmatprep.mubr.f32.mxu0 0.0
        %998 = vmatmul.mubr.f32.gmra.mxu0 %v435
        %v999 = vpop.f32.mrf.mxu0
        %v1000 = vadd.f32 %v686, %v999
        %v1001 = vpop.f32.mrf.mxu0
        %1002 = vmatprep.mubr.f32.mxu0 0.0
        %1003 = vmatmul.mubr.f32.gmra.mxu0 %v438
        %v1004 = vpop.f32.mrf.mxu0
        %v1005 = vadd.f32 %v691, %v1004
        %v1006 = vpop.f32.mrf.mxu0
        %1007 = vmatprep.mubr.f32.mxu0 0.0
        %1008 = vmatmul.mubr.f32.gmra.mxu0 %v441
        %v1009 = vpop.f32.mrf.mxu0
        %v1010 = vadd.f32 %v696, %v1009
        %v1011 = vpop.f32.mrf.mxu0
        %1012 = vmatprep.mubr.f32.mxu0 0.0
        %1013 = vmatmul.mubr.f32.gmra.mxu0 %v444
        %v1014 = vpop.f32.mrf.mxu0
        %v1015 = vadd.f32 %v701, %v1014
        %v1016 = vpop.f32.mrf.mxu0
        %1017 = vmatprep.mubr.f32.mxu0 0.0
        %1018 = vmatmul.mubr.f32.gmra.mxu0 %v447
        %v1019 = vpop.f32.mrf.mxu0
        %v1020 = vadd.f32 %v706, %v1019
        %v1021 = vpop.f32.mrf.mxu0
        %1022 = vmatprep.mubr.f32.mxu0 0.0
        %1023 = vmatmul.mubr.f32.gmra.mxu0 %v450
        %v1024 = vpop.f32.mrf.mxu0
        %v1025 = vadd.f32 %v711, %v1024
        %v1026 = vpop.f32.mrf.mxu0
        %1027 = vmatprep.mubr.f32.mxu0 0.0
        %1028 = vmatmul.mubr.f32.gmra.mxu0 %v453
        %v1029 = vpop.f32.mrf.mxu0
        %v1030 = vadd.f32 %v716, %v1029
        %v1031 = vpop.f32.mrf.mxu0
        %1032 = vmatprep.mubr.f32.mxu0 0.0
        %1033 = vmatmul.mubr.f32.gmra.mxu0 %v456
        %v1034 = vpop.f32.mrf.mxu0
        %v1035 = vadd.f32 %v721, %v1034
        %v1036 = vpop.f32.mrf.mxu0
        %1037 = vmatprep.mubr.f32.mxu0 0.0
        %1038 = vmatmul.mubr.f32.gmra.mxu0 %v459
        %v1039 = vpop.f32.mrf.mxu0
        %v1040 = vadd.f32 %v726, %v1039
        %v1041 = vpop.f32.mrf.mxu0
        %1042 = vmatprep.mubr.f32.mxu0 0.0
        %1043 = vmatmul.mubr.f32.gmra.mxu0 %v462
        %v1044 = vpop.f32.mrf.mxu0
        %v1045 = vadd.f32 %v731, %v1044
        %v1046 = vpop.f32.mrf.mxu0
        %1047 = vmatprep.mubr.f32.mxu0 0.0
        %1048 = vmatmul.mubr.f32.gmra.mxu0 %v465
        %v1049 = vpop.f32.mrf.mxu0
        %v1050 = vadd.f32 %v736, %v1049
        %v1051 = vpop.f32.mrf.mxu0
        %1052 = vmatprep.mubr.f32.mxu0 0.0
        %1053 = vmatmul.mubr.f32.gmra.mxu0 %v468
        %v1054 = vpop.f32.mrf.mxu0
        %v1055 = vadd.f32 %v741, %v1054
        %v1056 = vpop.f32.mrf.mxu0
        %1057 = vmatprep.mubr.f32.mxu0 0.0
        %1058 = vmatmul.mubr.f32.gmra.mxu0 %v471
        %v1059 = vpop.f32.mrf.mxu0
        %v1060 = vadd.f32 %v746, %v1059
        %v1061 = vpop.f32.mrf.mxu0
        %1062 = vmatprep.mubr.f32.mxu0 0.0
        %1063 = vmatmul.mubr.f32.gmra.mxu0 %v474
        %v1064 = vpop.f32.mrf.mxu0
        %v1065 = vadd.f32 %v751, %v1064
        %v1066 = vpop.f32.mrf.mxu0
        %1067 = vmatprep.mubr.f32.mxu0 0.0
        %1068 = vmatmul.mubr.f32.gmra.mxu0 %v477
        %v1069 = vpop.f32.mrf.mxu0
        %v1070 = vadd.f32 %v756, %v1069
        %v1071 = vpop.f32.mrf.mxu0
        %1072 = vmatprep.mubr.f32.mxu0 0.0
        %1073 = vmatmul.mubr.f32.gmra.mxu0 %v480
        %v1074 = vpop.f32.mrf.mxu0
        %v1075 = vadd.f32 %v761, %v1074
        %v1076 = vpop.f32.mrf.mxu0
        %1077 = vmatprep.mubr.f32.mxu0 0.0
        %1078 = vmatmul.mubr.f32.gmra.mxu0 %v483
        %v1079 = vpop.f32.mrf.mxu0
        %v1080 = vadd.f32 %v766, %v1079
        %v1081 = vpop.f32.mrf.mxu0
        %1082 = vmatprep.mubr.f32.mxu0 0.0
        %1083 = vmatmul.mubr.f32.gmra.mxu0 %v486
        %v1084 = vpop.f32.mrf.mxu0
        %v1085 = vadd.f32 %v771, %v1084
        %v1086 = vpop.f32.mrf.mxu0
        %1087 = vmatprep.mubr.f32.mxu0 0.0
        %1088 = vmatmul.mubr.f32.gmra.mxu0 %v489
        %v1089 = vpop.f32.mrf.mxu0
        %v1090 = vadd.f32 %v776, %v1089
        %v1091 = vpop.f32.mrf.mxu0
        %1092 = vmatprep.mubr.f32.mxu0 0.0
        %1093 = vmatmul.mubr.f32.gmra.mxu0 %v492
        %v1094 = vpop.f32.mrf.mxu0
        %v1095 = vadd.f32 %v781, %v1094
        %v1096 = vpop.f32.mrf.mxu0
        %1097 = vmatprep.mubr.f32.mxu0 0.0
        %1098 = vmatmul.mubr.f32.gmra.mxu0 %v495
        %v1099 = vpop.f32.mrf.mxu0
        %v1100 = vadd.f32 %v786, %v1099
        %v1101 = vpop.f32.mrf.mxu0
        %1102 = vmatprep.mubr.f32.mxu0 0.0
        %1103 = vmatmul.mubr.f32.gmra.mxu0 %v498
        %v1104 = vpop.f32.mrf.mxu0
        %v1105 = vadd.f32 %v791, %v1104
        %v1106 = vpop.f32.mrf.mxu0
        %1107 = vmatprep.mubr.f32.mxu0 0.0
        %1108 = vmatmul.mubr.f32.gmra.mxu0 %v501
        %v1109 = vpop.f32.mrf.mxu0
        %v1110 = vadd.f32 %v796, %v1109
        %v1111 = vpop.f32.mrf.mxu0
        %1112 = vmatprep.mubr.f32.mxu0 0.0
        %1113 = vmatmul.mubr.f32.gmra.mxu0 %v504
        %v1114 = vpop.f32.mrf.mxu0
        %v1115 = vadd.f32 %v801, %v1114
        %v1116 = vpop.f32.mrf.mxu0
        %1117 = vmatprep.mubr.f32.mxu0 0.0
        %1118 = vmatmul.mubr.f32.gmra.mxu0 %v507
        %v1119 = vpop.f32.mrf.mxu0
        %v1120 = vadd.f32 %v806, %v1119
        %v1121 = vpop.f32.mrf.mxu0
        %1122 = vmatprep.mubr.f32.mxu0 0.0
        %1123 = vmatmul.mubr.f32.gmra.mxu0 %v510
        %v1124 = vpop.f32.mrf.mxu0
        %v1125 = vadd.f32 %v811, %v1124
        %v1126 = vpop.f32.mrf.mxu0
        %1127 = vmatprep.mubr.f32.mxu0 0.0
        %1128 = vmatmul.mubr.f32.gmra.mxu0 %v513
        %v1129 = vpop.f32.mrf.mxu0
        %v1130 = vadd.f32 %v816, %v1129
        %v1131 = vpop.f32.mrf.mxu0
        %1132 = vmatprep.mubr.f32.mxu0 0.0
        %1133 = vmatmul.mubr.f32.gmra.mxu0 %v516
        %v1134 = vpop.f32.mrf.mxu0
        %v1135 = vadd.f32 %v821, %v1134
        %v1136 = vpop.f32.mrf.mxu0
        %1137 = vmatprep.mubr.f32.mxu0 0.0
        %1138 = vmatmul.mubr.f32.gmra.mxu0 %v519
        %v1139 = vpop.f32.mrf.mxu0
        %v1140 = vadd.f32 %v826, %v1139
        %v1141 = vpop.f32.mrf.mxu0
        %1142 = vmatprep.mubr.f32.mxu0 0.0
        %1143 = vmatmul.mubr.f32.gmra.mxu0 %v522
        %v1144 = vpop.f32.mrf.mxu0
        %v1145 = vadd.f32 %v831, %v1144
        %v1146 = vpop.f32.mrf.mxu0
        %1147 = vmatprep.mubr.f32.mxu0 0.0
        %1148 = vmatmul.mubr.f32.gmra.mxu0 %v525
        %v1149 = vpop.f32.mrf.mxu0
        %v1150 = vadd.f32 %v836, %v1149
        %v1151 = vpop.f32.mrf.mxu0
        %1152 = vmatprep.mubr.f32.mxu0 0.0
        %1153 = vmatmul.mubr.f32.gmra.mxu0 %v528
        %v1154 = vpop.f32.mrf.mxu0
        %v1155 = vadd.f32 %v841, %v1154
        %v1156 = vpop.f32.mrf.mxu0
        %1157 = vdwg.mxu0
        %s1158 = scalar_lea.vmem %s1, 16
        %v1159 = vld [vmem:[%s1158] sm:$0xff]
        %v1161 = vsel %vm394, %v382, 0
        %v1164 = vsel %vm394, %v383, 0
        %v1167 = vsel %vm394, %v384, 0
        %1169 = vmatprep.subr.mxu0 0.0
        %1170 = vmatpush1.msra.mxu0 0.0
        %1171 = vmatprep.subr.mxu0 0.0
        %1172 = vmatpush1.msra.mxu0 0.0
        %1173 = vmatprep.subr.mxu0 0.0
        %1174 = vmatpush1.msra.mxu0 0.0
        %1175 = vmatprep.subr.mxu0 0.0
        %1176 = vmatpush1.msra.mxu0 0.0
        %1177 = vmatprep.subr.mxu0 0.0
        %1178 = vmatpush1.msra.mxu0 0.0
        %1179 = vmatprep.subr.mxu0 0.0
        %1180 = vmatpush1.msra.mxu0 0.0
        %1181 = vmatprep.subr.mxu0 0.0
        %1182 = vmatpush1.msra.mxu0 0.0
        %1183 = vmatprep.subr.mxu0 0.0
        %1184 = vmatpush1.msra.mxu0 0.0
        %1185 = vmatprep.subr.mxu0 0.0
        %1186 = vmatpush1.msra.mxu0 0.0
        %1187 = vmatprep.subr.mxu0 0.0
        %1188 = vmatpush1.msra.mxu0 0.0
        %1189 = vmatprep.subr.mxu0 0.0
        %1190 = vmatpush1.msra.mxu0 0.0
        %1191 = vmatprep.subr.mxu0 0.0
        %1192 = vmatpush1.msra.mxu0 0.0
        %1193 = vmatprep.subr.mxu0 0.0
        %1194 = vmatpush1.msra.mxu0 0.0
        %1195 = vmatprep.subr.mxu0 0.0
        %1196 = vmatpush1.msra.mxu0 0.0
        %1197 = vmatprep.subr.mxu0 0.0
        %1198 = vmatpush1.msra.mxu0 0.0
        %1199 = vmatprep.subr.mxu0 0.0
        %1200 = vmatpush1.msra.mxu0 %v1159
        %1201 = vmatprep.subr.mxu0 0.0
        %1202 = vmatpush2.msra.mxu0 0.0
        %1203 = vmatprep.subr.mxu0 0.0
        %1204 = vmatpush2.msra.mxu0 0.0
        %1205 = vmatprep.subr.mxu0 0.0
        %1206 = vmatpush2.msra.mxu0 0.0
        %1207 = vmatprep.subr.mxu0 0.0
        %1208 = vmatpush2.msra.mxu0 0.0
        %1209 = vmatprep.subr.mxu0 0.0
        %1210 = vmatpush2.msra.mxu0 0.0
        %1211 = vmatprep.subr.mxu0 0.0
        %1212 = vmatpush2.msra.mxu0 0.0
        %1213 = vmatprep.subr.mxu0 0.0
        %1214 = vmatpush2.msra.mxu0 0.0
        %1215 = vmatprep.subr.mxu0 0.0
        %1216 = vmatpush2.msra.mxu0 0.0
        %1217 = vmatprep.subr.mxu0 0.0
        %1218 = vmatpush2.msra.mxu0 0.0
        %1219 = vmatprep.subr.mxu0 0.0
        %1220 = vmatpush2.msra.mxu0 0.0
        %1221 = vmatprep.subr.mxu0 0.0
        %1222 = vmatpush2.msra.mxu0 0.0
        %1223 = vmatprep.subr.mxu0 0.0
        %1224 = vmatpush2.msra.mxu0 0.0
        %1225 = vmatprep.subr.mxu0 0.0
        %1226 = vmatpush2.msra.mxu0 0.0
        %1227 = vmatprep.subr.mxu0 0.0
        %1228 = vmatpush2.msra.mxu0 0.0
        %1229 = vmatprep.subr.mxu0 0.0
        %1230 = vmatpush2.msra.mxu0 0.0
        %1231 = vmatprep.subr.mxu0 0.0
        %1232 = vmatpush2.msra.mxu0 0.0
        %1233 = vmatprep.mubr.f32.mxu0 0.0
        %1234 = vmatmul.mubr.f32.gmra.mxu0 %v405
        %v1235 = vpop.f32.mrf.mxu0
        %v1236 = vadd.f32 0.0, %v1235
        %v1237 = vpop.f32.mrf.mxu0
        %1238 = vmatprep.mubr.f32.mxu0 0.0
        %1239 = vmatmul.mubr.f32.gmra.mxu0 %v408
        %v1240 = vpop.f32.mrf.mxu0
        %v1241 = vadd.f32 0.0, %v1240
        %v1242 = vpop.f32.mrf.mxu0
        %1243 = vmatprep.mubr.f32.mxu0 0.0
        %1244 = vmatmul.mubr.f32.gmra.mxu0 %v411
        %v1245 = vpop.f32.mrf.mxu0
        %v1246 = vadd.f32 0.0, %v1245
        %v1247 = vpop.f32.mrf.mxu0
        %1248 = vmatprep.mubr.f32.mxu0 0.0
        %1249 = vmatmul.mubr.f32.gmra.mxu0 %v414
        %v1250 = vpop.f32.mrf.mxu0
        %v1251 = vadd.f32 0.0, %v1250
        %v1252 = vpop.f32.mrf.mxu0
        %1253 = vmatprep.mubr.f32.mxu0 0.0
        %1254 = vmatmul.mubr.f32.gmra.mxu0 %v417
        %v1255 = vpop.f32.mrf.mxu0
        %v1256 = vadd.f32 0.0, %v1255
        %v1257 = vpop.f32.mrf.mxu0
        %1258 = vmatprep.mubr.f32.mxu0 0.0
        %1259 = vmatmul.mubr.f32.gmra.mxu0 %v420
        %v1260 = vpop.f32.mrf.mxu0
        %v1261 = vadd.f32 0.0, %v1260
        %v1262 = vpop.f32.mrf.mxu0
        %1263 = vmatprep.mubr.f32.mxu0 0.0
        %1264 = vmatmul.mubr.f32.gmra.mxu0 %v423
        %v1265 = vpop.f32.mrf.mxu0
        %v1266 = vadd.f32 0.0, %v1265
        %v1267 = vpop.f32.mrf.mxu0
        %1268 = vmatprep.mubr.f32.mxu0 0.0
        %1269 = vmatmul.mubr.f32.gmra.mxu0 %v426
        %v1270 = vpop.f32.mrf.mxu0
        %v1271 = vadd.f32 0.0, %v1270
        %v1272 = vpop.f32.mrf.mxu0
        %1273 = vmatprep.mubr.f32.mxu0 0.0
        %1274 = vmatmul.mubr.f32.gmra.mxu0 %v429
        %v1275 = vpop.f32.mrf.mxu0
        %v1276 = vadd.f32 0.0, %v1275
        %v1277 = vpop.f32.mrf.mxu0
        %1278 = vmatprep.mubr.f32.mxu0 0.0
        %1279 = vmatmul.mubr.f32.gmra.mxu0 %v432
        %v1280 = vpop.f32.mrf.mxu0
        %v1281 = vadd.f32 0.0, %v1280
        %v1282 = vpop.f32.mrf.mxu0
        %1283 = vmatprep.mubr.f32.mxu0 0.0
        %1284 = vmatmul.mubr.f32.gmra.mxu0 %v435
        %v1285 = vpop.f32.mrf.mxu0
        %v1286 = vadd.f32 0.0, %v1285
        %v1287 = vpop.f32.mrf.mxu0
        %1288 = vmatprep.mubr.f32.mxu0 0.0
        %1289 = vmatmul.mubr.f32.gmra.mxu0 %v438
        %v1290 = vpop.f32.mrf.mxu0
        %v1291 = vadd.f32 0.0, %v1290
        %v1292 = vpop.f32.mrf.mxu0
        %1293 = vmatprep.mubr.f32.mxu0 0.0
        %1294 = vmatmul.mubr.f32.gmra.mxu0 %v441
        %v1295 = vpop.f32.mrf.mxu0
        %v1296 = vadd.f32 0.0, %v1295
        %v1297 = vpop.f32.mrf.mxu0
        %1298 = vmatprep.mubr.f32.mxu0 0.0
        %1299 = vmatmul.mubr.f32.gmra.mxu0 %v444
        %v1300 = vpop.f32.mrf.mxu0
        %v1301 = vadd.f32 0.0, %v1300
        %v1302 = vpop.f32.mrf.mxu0
        %1303 = vmatprep.mubr.f32.mxu0 0.0
        %1304 = vmatmul.mubr.f32.gmra.mxu0 %v447
        %v1305 = vpop.f32.mrf.mxu0
        %v1306 = vadd.f32 0.0, %v1305
        %v1307 = vpop.f32.mrf.mxu0
        %1308 = vmatprep.mubr.f32.mxu0 0.0
        %1309 = vmatmul.mubr.f32.gmra.mxu0 %v450
        %v1310 = vpop.f32.mrf.mxu0
        %v1311 = vadd.f32 0.0, %v1310
        %v1312 = vpop.f32.mrf.mxu0
        %1313 = vmatprep.mubr.f32.mxu0 0.0
        %1314 = vmatmul.mubr.f32.gmra.mxu0 %v453
        %v1315 = vpop.f32.mrf.mxu0
        %v1316 = vadd.f32 0.0, %v1315
        %v1317 = vpop.f32.mrf.mxu0
        %1318 = vmatprep.mubr.f32.mxu0 0.0
        %1319 = vmatmul.mubr.f32.gmra.mxu0 %v456
        %v1320 = vpop.f32.mrf.mxu0
        %v1321 = vadd.f32 0.0, %v1320
        %v1322 = vpop.f32.mrf.mxu0
        %1323 = vmatprep.mubr.f32.mxu0 0.0
        %1324 = vmatmul.mubr.f32.gmra.mxu0 %v459
        %v1325 = vpop.f32.mrf.mxu0
        %v1326 = vadd.f32 0.0, %v1325
        %v1327 = vpop.f32.mrf.mxu0
        %1328 = vmatprep.mubr.f32.mxu0 0.0
        %1329 = vmatmul.mubr.f32.gmra.mxu0 %v462
        %v1330 = vpop.f32.mrf.mxu0
        %v1331 = vadd.f32 0.0, %v1330
        %v1332 = vpop.f32.mrf.mxu0
        %1333 = vmatprep.mubr.f32.mxu0 0.0
        %1334 = vmatmul.mubr.f32.gmra.mxu0 %v465
        %v1335 = vpop.f32.mrf.mxu0
        %v1336 = vadd.f32 0.0, %v1335
        %v1337 = vpop.f32.mrf.mxu0
        %1338 = vmatprep.mubr.f32.mxu0 0.0
        %1339 = vmatmul.mubr.f32.gmra.mxu0 %v468
        %v1340 = vpop.f32.mrf.mxu0
        %v1341 = vadd.f32 0.0, %v1340
        %v1342 = vpop.f32.mrf.mxu0
        %1343 = vmatprep.mubr.f32.mxu0 0.0
        %1344 = vmatmul.mubr.f32.gmra.mxu0 %v471
        %v1345 = vpop.f32.mrf.mxu0
        %v1346 = vadd.f32 0.0, %v1345
        %v1347 = vpop.f32.mrf.mxu0
        %1348 = vmatprep.mubr.f32.mxu0 0.0
        %1349 = vmatmul.mubr.f32.gmra.mxu0 %v474
        %v1350 = vpop.f32.mrf.mxu0
        %v1351 = vadd.f32 0.0, %v1350
        %v1352 = vpop.f32.mrf.mxu0
        %1353 = vmatprep.mubr.f32.mxu0 0.0
        %1354 = vmatmul.mubr.f32.gmra.mxu0 %v477
        %v1355 = vpop.f32.mrf.mxu0
        %v1356 = vadd.f32 0.0, %v1355
        %v1357 = vpop.f32.mrf.mxu0
        %1358 = vmatprep.mubr.f32.mxu0 0.0
        %1359 = vmatmul.mubr.f32.gmra.mxu0 %v480
        %v1360 = vpop.f32.mrf.mxu0
        %v1361 = vadd.f32 0.0, %v1360
        %v1362 = vpop.f32.mrf.mxu0
        %1363 = vmatprep.mubr.f32.mxu0 0.0
        %1364 = vmatmul.mubr.f32.gmra.mxu0 %v483
        %v1365 = vpop.f32.mrf.mxu0
        %v1366 = vadd.f32 0.0, %v1365
        %v1367 = vpop.f32.mrf.mxu0
        %1368 = vmatprep.mubr.f32.mxu0 0.0
        %1369 = vmatmul.mubr.f32.gmra.mxu0 %v486
        %v1370 = vpop.f32.mrf.mxu0
        %v1371 = vadd.f32 0.0, %v1370
        %v1372 = vpop.f32.mrf.mxu0
        %1373 = vmatprep.mubr.f32.mxu0 0.0
        %1374 = vmatmul.mubr.f32.gmra.mxu0 %v489
        %v1375 = vpop.f32.mrf.mxu0
        %v1376 = vadd.f32 0.0, %v1375
        %v1377 = vpop.f32.mrf.mxu0
        %1378 = vmatprep.mubr.f32.mxu0 0.0
        %1379 = vmatmul.mubr.f32.gmra.mxu0 %v492
        %v1380 = vpop.f32.mrf.mxu0
        %v1381 = vadd.f32 0.0, %v1380
        %v1382 = vpop.f32.mrf.mxu0
        %1383 = vmatprep.mubr.f32.mxu0 0.0
        %1384 = vmatmul.mubr.f32.gmra.mxu0 %v495
        %v1385 = vpop.f32.mrf.mxu0
        %v1386 = vadd.f32 0.0, %v1385
        %v1387 = vpop.f32.mrf.mxu0
        %1388 = vmatprep.mubr.f32.mxu0 0.0
        %1389 = vmatmul.mubr.f32.gmra.mxu0 %v498
        %v1390 = vpop.f32.mrf.mxu0
        %v1391 = vadd.f32 0.0, %v1390
        %v1392 = vpop.f32.mrf.mxu0
        %1393 = vmatprep.mubr.f32.mxu0 0.0
        %1394 = vmatmul.mubr.f32.gmra.mxu0 %v501
        %v1395 = vpop.f32.mrf.mxu0
        %v1396 = vadd.f32 0.0, %v1395
        %v1397 = vpop.f32.mrf.mxu0
        %1398 = vmatprep.mubr.f32.mxu0 0.0
        %1399 = vmatmul.mubr.f32.gmra.mxu0 %v504
        %v1400 = vpop.f32.mrf.mxu0
        %v1401 = vadd.f32 0.0, %v1400
        %v1402 = vpop.f32.mrf.mxu0
        %1403 = vmatprep.mubr.f32.mxu0 0.0
        %1404 = vmatmul.mubr.f32.gmra.mxu0 %v507
        %v1405 = vpop.f32.mrf.mxu0
        %v1406 = vadd.f32 0.0, %v1405
        %v1407 = vpop.f32.mrf.mxu0
        %1408 = vmatprep.mubr.f32.mxu0 0.0
        %1409 = vmatmul.mubr.f32.gmra.mxu0 %v510
        %v1410 = vpop.f32.mrf.mxu0
        %v1411 = vadd.f32 0.0, %v1410
        %v1412 = vpop.f32.mrf.mxu0
        %1413 = vmatprep.mubr.f32.mxu0 0.0
        %1414 = vmatmul.mubr.f32.gmra.mxu0 %v513
        %v1415 = vpop.f32.mrf.mxu0
        %v1416 = vadd.f32 0.0, %v1415
        %v1417 = vpop.f32.mrf.mxu0
        %1418 = vmatprep.mubr.f32.mxu0 0.0
        %1419 = vmatmul.mubr.f32.gmra.mxu0 %v516
        %v1420 = vpop.f32.mrf.mxu0
        %v1421 = vadd.f32 0.0, %v1420
        %v1422 = vpop.f32.mrf.mxu0
        %1423 = vmatprep.mubr.f32.mxu0 0.0
        %1424 = vmatmul.mubr.f32.gmra.mxu0 %v519
        %v1425 = vpop.f32.mrf.mxu0
        %v1426 = vadd.f32 0.0, %v1425
        %v1427 = vpop.f32.mrf.mxu0
        %1428 = vmatprep.mubr.f32.mxu0 0.0
        %1429 = vmatmul.mubr.f32.gmra.mxu0 %v522
        %v1430 = vpop.f32.mrf.mxu0
        %v1431 = vadd.f32 0.0, %v1430
        %v1432 = vpop.f32.mrf.mxu0
        %1433 = vmatprep.mubr.f32.mxu0 0.0
        %1434 = vmatmul.mubr.f32.gmra.mxu0 %v525
        %v1435 = vpop.f32.mrf.mxu0
        %v1436 = vadd.f32 0.0, %v1435
        %v1437 = vpop.f32.mrf.mxu0
        %1438 = vmatprep.mubr.f32.mxu0 0.0
        %1439 = vmatmul.mubr.f32.gmra.mxu0 %v528
        %v1440 = vpop.f32.mrf.mxu0
        %v1441 = vadd.f32 0.0, %v1440
        %v1442 = vpop.f32.mrf.mxu0
        %1443 = vmatprep.mubr.f32.mxu0 0.0
        %1444 = vmatmul.mubr.f32.gmra.mxu0 %v531
        %v1445 = vpop.f32.mrf.mxu0
        %v1446 = vadd.f32 0.0, %v1445
        %v1447 = vpop.f32.mrf.mxu0
        %1448 = vmatprep.mubr.f32.mxu0 0.0
        %1449 = vmatmul.mubr.f32.gmra.mxu0 %v534
        %v1450 = vpop.f32.mrf.mxu0
        %v1451 = vadd.f32 0.0, %v1450
        %v1452 = vpop.f32.mrf.mxu0
        %1453 = vmatprep.mubr.f32.mxu0 0.0
        %1454 = vmatmul.mubr.f32.gmra.mxu0 %v537
        %v1455 = vpop.f32.mrf.mxu0
        %v1456 = vadd.f32 0.0, %v1455
        %v1457 = vpop.f32.mrf.mxu0
        %1458 = vmatprep.mubr.f32.mxu0 0.0
        %1459 = vmatmul.mubr.f32.gmra.mxu0 %v1161
        %v1460 = vpop.f32.mrf.mxu0
        %v1461 = vadd.f32 0.0, %v1460
        %v1462 = vpop.f32.mrf.mxu0
        %1463 = vmatprep.mubr.f32.mxu0 0.0
        %1464 = vmatmul.mubr.f32.gmra.mxu0 %v1164
        %v1465 = vpop.f32.mrf.mxu0
        %v1466 = vadd.f32 0.0, %v1465
        %v1467 = vpop.f32.mrf.mxu0
        %1468 = vmatprep.mubr.f32.mxu0 0.0
        %1469 = vmatmul.mubr.f32.gmra.mxu0 %v1167
        %v1470 = vpop.f32.mrf.mxu0
        %v1471 = vadd.f32 0.0, %v1470
        %v1472 = vpop.f32.mrf.mxu0
        %1473 = vdwg.mxu0
        %v1474 = vadd.f32 %v920, %v1236
        %v1475 = vadd.f32 %v925, %v1241
        %v1476 = vadd.f32 %v930, %v1246
        %v1477 = vadd.f32 %v935, %v1251
        %v1478 = vadd.f32 %v940, %v1256
        %v1479 = vadd.f32 %v945, %v1261
        %v1480 = vadd.f32 %v950, %v1266
        %v1481 = vadd.f32 %v955, %v1271
        %v1482 = vadd.f32 %v960, %v1276
        %v1483 = vadd.f32 %v965, %v1281
        %v1484 = vadd.f32 %v970, %v1286
        %v1485 = vadd.f32 %v975, %v1291
        %v1486 = vadd.f32 %v980, %v1296
        %v1487 = vadd.f32 %v985, %v1301
        %v1488 = vadd.f32 %v990, %v1306
        %v1489 = vadd.f32 %v995, %v1311
        %v1490 = vadd.f32 %v1000, %v1316
        %v1491 = vadd.f32 %v1005, %v1321
        %v1492 = vadd.f32 %v1010, %v1326
        %v1493 = vadd.f32 %v1015, %v1331
        %v1494 = vadd.f32 %v1020, %v1336
        %v1495 = vadd.f32 %v1025, %v1341
        %v1496 = vadd.f32 %v1030, %v1346
        %v1497 = vadd.f32 %v1035, %v1351
        %v1498 = vadd.f32 %v1040, %v1356
        %v1499 = vadd.f32 %v1045, %v1361
        %v1500 = vadd.f32 %v1050, %v1366
        %v1501 = vadd.f32 %v1055, %v1371
        %v1502 = vadd.f32 %v1060, %v1376
        %v1503 = vadd.f32 %v1065, %v1381
        %v1504 = vadd.f32 %v1070, %v1386
        %v1505 = vadd.f32 %v1075, %v1391
        %v1506 = vadd.f32 %v1080, %v1396
        %v1507 = vadd.f32 %v1085, %v1401
        %v1508 = vadd.f32 %v1090, %v1406
        %v1509 = vadd.f32 %v1095, %v1411
        %v1510 = vadd.f32 %v1100, %v1416
        %v1511 = vadd.f32 %v1105, %v1421
        %v1512 = vadd.f32 %v1110, %v1426
        %v1513 = vadd.f32 %v1115, %v1431
        %v1514 = vadd.f32 %v1120, %v1436
        %v1515 = vadd.f32 %v1125, %v1441
        %v1516 = vadd.f32 %v1130, %v1446
        %v1517 = vadd.f32 %v1135, %v1451
        %v1518 = vadd.f32 %v1140, %v1456
        %v1519 = vadd.f32 %v1145, %v1461
        %v1520 = vadd.f32 %v1150, %v1466
        %v1521 = vadd.f32 %v1155, %v1471
        %s1522 = scalar_lea.vmem %s1, 24
        %v1523 = vld [vmem:[%s1522] sm:$0xff]
        %v1525 = vsel %vm394, %v385, 0
        %v1528 = vsel %vm394, %v386, 0
        %v1531 = vsel %vm394, %v387, 0
        %1533 = vmatprep.subr.mxu0 0.0
        %1534 = vmatpush1.msra.mxu0 0.0
        %1535 = vmatprep.subr.mxu0 0.0
        %1536 = vmatpush1.msra.mxu0 0.0
        %1537 = vmatprep.subr.mxu0 0.0
        %1538 = vmatpush1.msra.mxu0 0.0
        %1539 = vmatprep.subr.mxu0 0.0
        %1540 = vmatpush1.msra.mxu0 0.0
        %1541 = vmatprep.subr.mxu0 0.0
        %1542 = vmatpush1.msra.mxu0 0.0
        %1543 = vmatprep.subr.mxu0 0.0
        %1544 = vmatpush1.msra.mxu0 0.0
        %1545 = vmatprep.subr.mxu0 0.0
        %1546 = vmatpush1.msra.mxu0 0.0
        %1547 = vmatprep.subr.mxu0 0.0
        %1548 = vmatpush1.msra.mxu0 0.0
        %1549 = vmatprep.subr.mxu0 0.0
        %1550 = vmatpush1.msra.mxu0 0.0
        %1551 = vmatprep.subr.mxu0 0.0
        %1552 = vmatpush1.msra.mxu0 0.0
        %1553 = vmatprep.subr.mxu0 0.0
        %1554 = vmatpush1.msra.mxu0 0.0
        %1555 = vmatprep.subr.mxu0 0.0
        %1556 = vmatpush1.msra.mxu0 0.0
        %1557 = vmatprep.subr.mxu0 0.0
        %1558 = vmatpush1.msra.mxu0 0.0
        %1559 = vmatprep.subr.mxu0 0.0
        %1560 = vmatpush1.msra.mxu0 0.0
        %1561 = vmatprep.subr.mxu0 0.0
        %1562 = vmatpush1.msra.mxu0 0.0
        %1563 = vmatprep.subr.mxu0 0.0
        %1564 = vmatpush1.msra.mxu0 %v1523
        %1565 = vmatprep.subr.mxu0 0.0
        %1566 = vmatpush2.msra.mxu0 0.0
        %1567 = vmatprep.subr.mxu0 0.0
        %1568 = vmatpush2.msra.mxu0 0.0
        %1569 = vmatprep.subr.mxu0 0.0
        %1570 = vmatpush2.msra.mxu0 0.0
        %1571 = vmatprep.subr.mxu0 0.0
        %1572 = vmatpush2.msra.mxu0 0.0
        %1573 = vmatprep.subr.mxu0 0.0
        %1574 = vmatpush2.msra.mxu0 0.0
        %1575 = vmatprep.subr.mxu0 0.0
        %1576 = vmatpush2.msra.mxu0 0.0
        %1577 = vmatprep.subr.mxu0 0.0
        %1578 = vmatpush2.msra.mxu0 0.0
        %1579 = vmatprep.subr.mxu0 0.0
        %1580 = vmatpush2.msra.mxu0 0.0
        %1581 = vmatprep.subr.mxu0 0.0
        %1582 = vmatpush2.msra.mxu0 0.0
        %1583 = vmatprep.subr.mxu0 0.0
        %1584 = vmatpush2.msra.mxu0 0.0
        %1585 = vmatprep.subr.mxu0 0.0
        %1586 = vmatpush2.msra.mxu0 0.0
        %1587 = vmatprep.subr.mxu0 0.0
        %1588 = vmatpush2.msra.mxu0 0.0
        %1589 = vmatprep.subr.mxu0 0.0
        %1590 = vmatpush2.msra.mxu0 0.0
        %1591 = vmatprep.subr.mxu0 0.0
        %1592 = vmatpush2.msra.mxu0 0.0
        %1593 = vmatprep.subr.mxu0 0.0
        %1594 = vmatpush2.msra.mxu0 0.0
        %1595 = vmatprep.subr.mxu0 0.0
        %1596 = vmatpush2.msra.mxu0 0.0
        %1597 = vmatprep.mubr.f32.mxu0 0.0
        %1598 = vmatmul.mubr.f32.gmra.mxu0 %v414
        %v1599 = vpop.f32.mrf.mxu0
        %v1600 = vadd.f32 0.0, %v1599
        %v1601 = vpop.f32.mrf.mxu0
        %1602 = vmatprep.mubr.f32.mxu0 0.0
        %1603 = vmatmul.mubr.f32.gmra.mxu0 %v417
        %v1604 = vpop.f32.mrf.mxu0
        %v1605 = vadd.f32 0.0, %v1604
        %v1606 = vpop.f32.mrf.mxu0
        %1607 = vmatprep.mubr.f32.mxu0 0.0
        %1608 = vmatmul.mubr.f32.gmra.mxu0 %v420
        %v1609 = vpop.f32.mrf.mxu0
        %v1610 = vadd.f32 0.0, %v1609
        %v1611 = vpop.f32.mrf.mxu0
        %1612 = vmatprep.mubr.f32.mxu0 0.0
        %1613 = vmatmul.mubr.f32.gmra.mxu0 %v423
        %v1614 = vpop.f32.mrf.mxu0
        %v1615 = vadd.f32 0.0, %v1614
        %v1616 = vpop.f32.mrf.mxu0
        %1617 = vmatprep.mubr.f32.mxu0 0.0
        %1618 = vmatmul.mubr.f32.gmra.mxu0 %v426
        %v1619 = vpop.f32.mrf.mxu0
        %v1620 = vadd.f32 0.0, %v1619
        %v1621 = vpop.f32.mrf.mxu0
        %1622 = vmatprep.mubr.f32.mxu0 0.0
        %1623 = vmatmul.mubr.f32.gmra.mxu0 %v429
        %v1624 = vpop.f32.mrf.mxu0
        %v1625 = vadd.f32 0.0, %v1624
        %v1626 = vpop.f32.mrf.mxu0
        %1627 = vmatprep.mubr.f32.mxu0 0.0
        %1628 = vmatmul.mubr.f32.gmra.mxu0 %v432
        %v1629 = vpop.f32.mrf.mxu0
        %v1630 = vadd.f32 0.0, %v1629
        %v1631 = vpop.f32.mrf.mxu0
        %1632 = vmatprep.mubr.f32.mxu0 0.0
        %1633 = vmatmul.mubr.f32.gmra.mxu0 %v435
        %v1634 = vpop.f32.mrf.mxu0
        %v1635 = vadd.f32 0.0, %v1634
        %v1636 = vpop.f32.mrf.mxu0
        %1637 = vmatprep.mubr.f32.mxu0 0.0
        %1638 = vmatmul.mubr.f32.gmra.mxu0 %v438
        %v1639 = vpop.f32.mrf.mxu0
        %v1640 = vadd.f32 0.0, %v1639
        %v1641 = vpop.f32.mrf.mxu0
        %1642 = vmatprep.mubr.f32.mxu0 0.0
        %1643 = vmatmul.mubr.f32.gmra.mxu0 %v441
        %v1644 = vpop.f32.mrf.mxu0
        %v1645 = vadd.f32 0.0, %v1644
        %v1646 = vpop.f32.mrf.mxu0
        %1647 = vmatprep.mubr.f32.mxu0 0.0
        %1648 = vmatmul.mubr.f32.gmra.mxu0 %v444
        %v1649 = vpop.f32.mrf.mxu0
        %v1650 = vadd.f32 0.0, %v1649
        %v1651 = vpop.f32.mrf.mxu0
        %1652 = vmatprep.mubr.f32.mxu0 0.0
        %1653 = vmatmul.mubr.f32.gmra.mxu0 %v447
        %v1654 = vpop.f32.mrf.mxu0
        %v1655 = vadd.f32 0.0, %v1654
        %v1656 = vpop.f32.mrf.mxu0
        %1657 = vmatprep.mubr.f32.mxu0 0.0
        %1658 = vmatmul.mubr.f32.gmra.mxu0 %v450
        %v1659 = vpop.f32.mrf.mxu0
        %v1660 = vadd.f32 0.0, %v1659
        %v1661 = vpop.f32.mrf.mxu0
        %1662 = vmatprep.mubr.f32.mxu0 0.0
        %1663 = vmatmul.mubr.f32.gmra.mxu0 %v453
        %v1664 = vpop.f32.mrf.mxu0
        %v1665 = vadd.f32 0.0, %v1664
        %v1666 = vpop.f32.mrf.mxu0
        %1667 = vmatprep.mubr.f32.mxu0 0.0
        %1668 = vmatmul.mubr.f32.gmra.mxu0 %v456
        %v1669 = vpop.f32.mrf.mxu0
        %v1670 = vadd.f32 0.0, %v1669
        %v1671 = vpop.f32.mrf.mxu0
        %1672 = vmatprep.mubr.f32.mxu0 0.0
        %1673 = vmatmul.mubr.f32.gmra.mxu0 %v459
        %v1674 = vpop.f32.mrf.mxu0
        %v1675 = vadd.f32 0.0, %v1674
        %v1676 = vpop.f32.mrf.mxu0
        %1677 = vmatprep.mubr.f32.mxu0 0.0
        %1678 = vmatmul.mubr.f32.gmra.mxu0 %v462
        %v1679 = vpop.f32.mrf.mxu0
        %v1680 = vadd.f32 0.0, %v1679
        %v1681 = vpop.f32.mrf.mxu0
        %1682 = vmatprep.mubr.f32.mxu0 0.0
        %1683 = vmatmul.mubr.f32.gmra.mxu0 %v465
        %v1684 = vpop.f32.mrf.mxu0
        %v1685 = vadd.f32 0.0, %v1684
        %v1686 = vpop.f32.mrf.mxu0
        %1687 = vmatprep.mubr.f32.mxu0 0.0
        %1688 = vmatmul.mubr.f32.gmra.mxu0 %v468
        %v1689 = vpop.f32.mrf.mxu0
        %v1690 = vadd.f32 0.0, %v1689
        %v1691 = vpop.f32.mrf.mxu0
        %1692 = vmatprep.mubr.f32.mxu0 0.0
        %1693 = vmatmul.mubr.f32.gmra.mxu0 %v471
        %v1694 = vpop.f32.mrf.mxu0
        %v1695 = vadd.f32 0.0, %v1694
        %v1696 = vpop.f32.mrf.mxu0
        %1697 = vmatprep.mubr.f32.mxu0 0.0
        %1698 = vmatmul.mubr.f32.gmra.mxu0 %v474
        %v1699 = vpop.f32.mrf.mxu0
        %v1700 = vadd.f32 0.0, %v1699
        %v1701 = vpop.f32.mrf.mxu0
        %1702 = vmatprep.mubr.f32.mxu0 0.0
        %1703 = vmatmul.mubr.f32.gmra.mxu0 %v477
        %v1704 = vpop.f32.mrf.mxu0
        %v1705 = vadd.f32 0.0, %v1704
        %v1706 = vpop.f32.mrf.mxu0
        %1707 = vmatprep.mubr.f32.mxu0 0.0
        %1708 = vmatmul.mubr.f32.gmra.mxu0 %v480
        %v1709 = vpop.f32.mrf.mxu0
        %v1710 = vadd.f32 0.0, %v1709
        %v1711 = vpop.f32.mrf.mxu0
        %1712 = vmatprep.mubr.f32.mxu0 0.0
        %1713 = vmatmul.mubr.f32.gmra.mxu0 %v483
        %v1714 = vpop.f32.mrf.mxu0
        %v1715 = vadd.f32 0.0, %v1714
        %v1716 = vpop.f32.mrf.mxu0
        %1717 = vmatprep.mubr.f32.mxu0 0.0
        %1718 = vmatmul.mubr.f32.gmra.mxu0 %v486
        %v1719 = vpop.f32.mrf.mxu0
        %v1720 = vadd.f32 0.0, %v1719
        %v1721 = vpop.f32.mrf.mxu0
        %1722 = vmatprep.mubr.f32.mxu0 0.0
        %1723 = vmatmul.mubr.f32.gmra.mxu0 %v489
        %v1724 = vpop.f32.mrf.mxu0
        %v1725 = vadd.f32 0.0, %v1724
        %v1726 = vpop.f32.mrf.mxu0
        %1727 = vmatprep.mubr.f32.mxu0 0.0
        %1728 = vmatmul.mubr.f32.gmra.mxu0 %v492
        %v1729 = vpop.f32.mrf.mxu0
        %v1730 = vadd.f32 0.0, %v1729
        %v1731 = vpop.f32.mrf.mxu0
        %1732 = vmatprep.mubr.f32.mxu0 0.0
        %1733 = vmatmul.mubr.f32.gmra.mxu0 %v495
        %v1734 = vpop.f32.mrf.mxu0
        %v1735 = vadd.f32 0.0, %v1734
        %v1736 = vpop.f32.mrf.mxu0
        %1737 = vmatprep.mubr.f32.mxu0 0.0
        %1738 = vmatmul.mubr.f32.gmra.mxu0 %v498
        %v1739 = vpop.f32.mrf.mxu0
        %v1740 = vadd.f32 0.0, %v1739
        %v1741 = vpop.f32.mrf.mxu0
        %1742 = vmatprep.mubr.f32.mxu0 0.0
        %1743 = vmatmul.mubr.f32.gmra.mxu0 %v501
        %v1744 = vpop.f32.mrf.mxu0
        %v1745 = vadd.f32 0.0, %v1744
        %v1746 = vpop.f32.mrf.mxu0
        %1747 = vmatprep.mubr.f32.mxu0 0.0
        %1748 = vmatmul.mubr.f32.gmra.mxu0 %v504
        %v1749 = vpop.f32.mrf.mxu0
        %v1750 = vadd.f32 0.0, %v1749
        %v1751 = vpop.f32.mrf.mxu0
        %1752 = vmatprep.mubr.f32.mxu0 0.0
        %1753 = vmatmul.mubr.f32.gmra.mxu0 %v507
        %v1754 = vpop.f32.mrf.mxu0
        %v1755 = vadd.f32 0.0, %v1754
        %v1756 = vpop.f32.mrf.mxu0
        %1757 = vmatprep.mubr.f32.mxu0 0.0
        %1758 = vmatmul.mubr.f32.gmra.mxu0 %v510
        %v1759 = vpop.f32.mrf.mxu0
        %v1760 = vadd.f32 0.0, %v1759
        %v1761 = vpop.f32.mrf.mxu0
        %1762 = vmatprep.mubr.f32.mxu0 0.0
        %1763 = vmatmul.mubr.f32.gmra.mxu0 %v513
        %v1764 = vpop.f32.mrf.mxu0
        %v1765 = vadd.f32 0.0, %v1764
        %v1766 = vpop.f32.mrf.mxu0
        %1767 = vmatprep.mubr.f32.mxu0 0.0
        %1768 = vmatmul.mubr.f32.gmra.mxu0 %v516
        %v1769 = vpop.f32.mrf.mxu0
        %v1770 = vadd.f32 0.0, %v1769
        %v1771 = vpop.f32.mrf.mxu0
        %1772 = vmatprep.mubr.f32.mxu0 0.0
        %1773 = vmatmul.mubr.f32.gmra.mxu0 %v519
        %v1774 = vpop.f32.mrf.mxu0
        %v1775 = vadd.f32 0.0, %v1774
        %v1776 = vpop.f32.mrf.mxu0
        %1777 = vmatprep.mubr.f32.mxu0 0.0
        %1778 = vmatmul.mubr.f32.gmra.mxu0 %v522
        %v1779 = vpop.f32.mrf.mxu0
        %v1780 = vadd.f32 0.0, %v1779
        %v1781 = vpop.f32.mrf.mxu0
        %1782 = vmatprep.mubr.f32.mxu0 0.0
        %1783 = vmatmul.mubr.f32.gmra.mxu0 %v525
        %v1784 = vpop.f32.mrf.mxu0
        %v1785 = vadd.f32 0.0, %v1784
        %v1786 = vpop.f32.mrf.mxu0
        %1787 = vmatprep.mubr.f32.mxu0 0.0
        %1788 = vmatmul.mubr.f32.gmra.mxu0 %v528
        %v1789 = vpop.f32.mrf.mxu0
        %v1790 = vadd.f32 0.0, %v1789
        %v1791 = vpop.f32.mrf.mxu0
        %1792 = vmatprep.mubr.f32.mxu0 0.0
        %1793 = vmatmul.mubr.f32.gmra.mxu0 %v531
        %v1794 = vpop.f32.mrf.mxu0
        %v1795 = vadd.f32 0.0, %v1794
        %v1796 = vpop.f32.mrf.mxu0
        %1797 = vmatprep.mubr.f32.mxu0 0.0
        %1798 = vmatmul.mubr.f32.gmra.mxu0 %v534
        %v1799 = vpop.f32.mrf.mxu0
        %v1800 = vadd.f32 0.0, %v1799
        %v1801 = vpop.f32.mrf.mxu0
        %1802 = vmatprep.mubr.f32.mxu0 0.0
        %1803 = vmatmul.mubr.f32.gmra.mxu0 %v537
        %v1804 = vpop.f32.mrf.mxu0
        %v1805 = vadd.f32 0.0, %v1804
        %v1806 = vpop.f32.mrf.mxu0
        %1807 = vmatprep.mubr.f32.mxu0 0.0
        %1808 = vmatmul.mubr.f32.gmra.mxu0 %v1161
        %v1809 = vpop.f32.mrf.mxu0
        %v1810 = vadd.f32 0.0, %v1809
        %v1811 = vpop.f32.mrf.mxu0
        %1812 = vmatprep.mubr.f32.mxu0 0.0
        %1813 = vmatmul.mubr.f32.gmra.mxu0 %v1164
        %v1814 = vpop.f32.mrf.mxu0
        %v1815 = vadd.f32 0.0, %v1814
        %v1816 = vpop.f32.mrf.mxu0
        %1817 = vmatprep.mubr.f32.mxu0 0.0
        %1818 = vmatmul.mubr.f32.gmra.mxu0 %v1167
        %v1819 = vpop.f32.mrf.mxu0
        %v1820 = vadd.f32 0.0, %v1819
        %v1821 = vpop.f32.mrf.mxu0
        %1822 = vmatprep.mubr.f32.mxu0 0.0
        %1823 = vmatmul.mubr.f32.gmra.mxu0 %v1525
        %v1824 = vpop.f32.mrf.mxu0
        %v1825 = vadd.f32 0.0, %v1824
        %v1826 = vpop.f32.mrf.mxu0
        %1827 = vmatprep.mubr.f32.mxu0 0.0
        %1828 = vmatmul.mubr.f32.gmra.mxu0 %v1528
        %v1829 = vpop.f32.mrf.mxu0
        %v1830 = vadd.f32 0.0, %v1829
        %v1831 = vpop.f32.mrf.mxu0
        %1832 = vmatprep.mubr.f32.mxu0 0.0
        %1833 = vmatmul.mubr.f32.gmra.mxu0 %v1531
        %v1834 = vpop.f32.mrf.mxu0
        %v1835 = vadd.f32 0.0, %v1834
        %v1836 = vpop.f32.mrf.mxu0
        %1837 = vdwg.mxu0
        %v1838 = vadd.f32 %v1474, %v1600
        %v1839 = vadd.f32 %v1475, %v1605
        %v1840 = vadd.f32 %v1476, %v1610
        %v1841 = vadd.f32 %v1477, %v1615
        %v1842 = vadd.f32 %v1478, %v1620
        %v1843 = vadd.f32 %v1479, %v1625
        %v1844 = vadd.f32 %v1480, %v1630
        %v1845 = vadd.f32 %v1481, %v1635
        %v1846 = vadd.f32 %v1482, %v1640
        %v1847 = vadd.f32 %v1483, %v1645
        %v1848 = vadd.f32 %v1484, %v1650
        %v1849 = vadd.f32 %v1485, %v1655
        %v1850 = vadd.f32 %v1486, %v1660
        %v1851 = vadd.f32 %v1487, %v1665
        %v1852 = vadd.f32 %v1488, %v1670
        %v1853 = vadd.f32 %v1489, %v1675
        %v1854 = vadd.f32 %v1490, %v1680
        %v1855 = vadd.f32 %v1491, %v1685
        %v1856 = vadd.f32 %v1492, %v1690
        %v1857 = vadd.f32 %v1493, %v1695
        %v1858 = vadd.f32 %v1494, %v1700
        %v1859 = vadd.f32 %v1495, %v1705
        %v1860 = vadd.f32 %v1496, %v1710
        %v1861 = vadd.f32 %v1497, %v1715
        %v1862 = vadd.f32 %v1498, %v1720
        %v1863 = vadd.f32 %v1499, %v1725
        %v1864 = vadd.f32 %v1500, %v1730
        %v1865 = vadd.f32 %v1501, %v1735
        %v1866 = vadd.f32 %v1502, %v1740
        %v1867 = vadd.f32 %v1503, %v1745
        %v1868 = vadd.f32 %v1504, %v1750
        %v1869 = vadd.f32 %v1505, %v1755
        %v1870 = vadd.f32 %v1506, %v1760
        %v1871 = vadd.f32 %v1507, %v1765
        %v1872 = vadd.f32 %v1508, %v1770
        %v1873 = vadd.f32 %v1509, %v1775
        %v1874 = vadd.f32 %v1510, %v1780
        %v1875 = vadd.f32 %v1511, %v1785
        %v1876 = vadd.f32 %v1512, %v1790
        %v1877 = vadd.f32 %v1513, %v1795
        %v1878 = vadd.f32 %v1514, %v1800
        %v1879 = vadd.f32 %v1515, %v1805
        %v1880 = vadd.f32 %v1516, %v1810
        %v1881 = vadd.f32 %v1517, %v1815
        %v1882 = vadd.f32 %v1518, %v1820
        %v1883 = vadd.f32 %v1519, %v1825
        %v1884 = vadd.f32 %v1520, %v1830
        %v1885 = vadd.f32 %v1521, %v1835
        %s1886 = scalar_lea.vmem %s1, 32
        %v1887 = vld [vmem:[%s1886] sm:$0xff]
        %v1889 = vsel %vm394, %v388, 0
        %v1892 = vsel %vm394, %v389, 0
        %v1895 = vsel %vm394, %v390, 0
        %1897 = vmatprep.subr.mxu0 0.0
        %1898 = vmatpush1.msra.mxu0 0.0
        %1899 = vmatprep.subr.mxu0 0.0
        %1900 = vmatpush1.msra.mxu0 0.0
        %1901 = vmatprep.subr.mxu0 0.0
        %1902 = vmatpush1.msra.mxu0 0.0
        %1903 = vmatprep.subr.mxu0 0.0
        %1904 = vmatpush1.msra.mxu0 0.0
        %1905 = vmatprep.subr.mxu0 0.0
        %1906 = vmatpush1.msra.mxu0 0.0
        %1907 = vmatprep.subr.mxu0 0.0
        %1908 = vmatpush1.msra.mxu0 0.0
        %1909 = vmatprep.subr.mxu0 0.0
        %1910 = vmatpush1.msra.mxu0 0.0
        %1911 = vmatprep.subr.mxu0 0.0
        %1912 = vmatpush1.msra.mxu0 0.0
        %1913 = vmatprep.subr.mxu0 0.0
        %1914 = vmatpush1.msra.mxu0 0.0
        %1915 = vmatprep.subr.mxu0 0.0
        %1916 = vmatpush1.msra.mxu0 0.0
        %1917 = vmatprep.subr.mxu0 0.0
        %1918 = vmatpush1.msra.mxu0 0.0
        %1919 = vmatprep.subr.mxu0 0.0
        %1920 = vmatpush1.msra.mxu0 0.0
        %1921 = vmatprep.subr.mxu0 0.0
        %1922 = vmatpush1.msra.mxu0 0.0
        %1923 = vmatprep.subr.mxu0 0.0
        %1924 = vmatpush1.msra.mxu0 0.0
        %1925 = vmatprep.subr.mxu0 0.0
        %1926 = vmatpush1.msra.mxu0 0.0
        %1927 = vmatprep.subr.mxu0 0.0
        %1928 = vmatpush1.msra.mxu0 %v1887
        %1929 = vmatprep.subr.mxu0 0.0
        %1930 = vmatpush2.msra.mxu0 0.0
        %1931 = vmatprep.subr.mxu0 0.0
        %1932 = vmatpush2.msra.mxu0 0.0
        %1933 = vmatprep.subr.mxu0 0.0
        %1934 = vmatpush2.msra.mxu0 0.0
        %1935 = vmatprep.subr.mxu0 0.0
        %1936 = vmatpush2.msra.mxu0 0.0
        %1937 = vmatprep.subr.mxu0 0.0
        %1938 = vmatpush2.msra.mxu0 0.0
        %1939 = vmatprep.subr.mxu0 0.0
        %1940 = vmatpush2.msra.mxu0 0.0
        %1941 = vmatprep.subr.mxu0 0.0
        %1942 = vmatpush2.msra.mxu0 0.0
        %1943 = vmatprep.subr.mxu0 0.0
        %1944 = vmatpush2.msra.mxu0 0.0
        %1945 = vmatprep.subr.mxu0 0.0
        %1946 = vmatpush2.msra.mxu0 0.0
        %1947 = vmatprep.subr.mxu0 0.0
        %1948 = vmatpush2.msra.mxu0 0.0
        %1949 = vmatprep.subr.mxu0 0.0
        %1950 = vmatpush2.msra.mxu0 0.0
        %1951 = vmatprep.subr.mxu0 0.0
        %1952 = vmatpush2.msra.mxu0 0.0
        %1953 = vmatprep.subr.mxu0 0.0
        %1954 = vmatpush2.msra.mxu0 0.0
        %1955 = vmatprep.subr.mxu0 0.0
        %1956 = vmatpush2.msra.mxu0 0.0
        %1957 = vmatprep.subr.mxu0 0.0
        %1958 = vmatpush2.msra.mxu0 0.0
        %1959 = vmatprep.subr.mxu0 0.0
        %1960 = vmatpush2.msra.mxu0 0.0
        %1961 = vmatprep.mubr.f32.mxu0 0.0
        %1962 = vmatmul.mubr.f32.gmra.mxu0 %v423
        %v1963 = vpop.f32.mrf.mxu0
        %v1964 = vadd.f32 0.0, %v1963
        %v1965 = vpop.f32.mrf.mxu0
        %1966 = vmatprep.mubr.f32.mxu0 0.0
        %1967 = vmatmul.mubr.f32.gmra.mxu0 %v426
        %v1968 = vpop.f32.mrf.mxu0
        %v1969 = vadd.f32 0.0, %v1968
        %v1970 = vpop.f32.mrf.mxu0
        %1971 = vmatprep.mubr.f32.mxu0 0.0
        %1972 = vmatmul.mubr.f32.gmra.mxu0 %v429
        %v1973 = vpop.f32.mrf.mxu0
        %v1974 = vadd.f32 0.0, %v1973
        %v1975 = vpop.f32.mrf.mxu0
        %1976 = vmatprep.mubr.f32.mxu0 0.0
        %1977 = vmatmul.mubr.f32.gmra.mxu0 %v432
        %v1978 = vpop.f32.mrf.mxu0
        %v1979 = vadd.f32 0.0, %v1978
        %v1980 = vpop.f32.mrf.mxu0
        %1981 = vmatprep.mubr.f32.mxu0 0.0
        %1982 = vmatmul.mubr.f32.gmra.mxu0 %v435
        %v1983 = vpop.f32.mrf.mxu0
        %v1984 = vadd.f32 0.0, %v1983
        %v1985 = vpop.f32.mrf.mxu0
        %1986 = vmatprep.mubr.f32.mxu0 0.0
        %1987 = vmatmul.mubr.f32.gmra.mxu0 %v438
        %v1988 = vpop.f32.mrf.mxu0
        %v1989 = vadd.f32 0.0, %v1988
        %v1990 = vpop.f32.mrf.mxu0
        %1991 = vmatprep.mubr.f32.mxu0 0.0
        %1992 = vmatmul.mubr.f32.gmra.mxu0 %v441
        %v1993 = vpop.f32.mrf.mxu0
        %v1994 = vadd.f32 0.0, %v1993
        %v1995 = vpop.f32.mrf.mxu0
        %1996 = vmatprep.mubr.f32.mxu0 0.0
        %1997 = vmatmul.mubr.f32.gmra.mxu0 %v444
        %v1998 = vpop.f32.mrf.mxu0
        %v1999 = vadd.f32 0.0, %v1998
        %v2000 = vpop.f32.mrf.mxu0
        %2001 = vmatprep.mubr.f32.mxu0 0.0
        %2002 = vmatmul.mubr.f32.gmra.mxu0 %v447
        %v2003 = vpop.f32.mrf.mxu0
        %v2004 = vadd.f32 0.0, %v2003
        %v2005 = vpop.f32.mrf.mxu0
        %2006 = vmatprep.mubr.f32.mxu0 0.0
        %2007 = vmatmul.mubr.f32.gmra.mxu0 %v450
        %v2008 = vpop.f32.mrf.mxu0
        %v2009 = vadd.f32 0.0, %v2008
        %v2010 = vpop.f32.mrf.mxu0
        %2011 = vmatprep.mubr.f32.mxu0 0.0
        %2012 = vmatmul.mubr.f32.gmra.mxu0 %v453
        %v2013 = vpop.f32.mrf.mxu0
        %v2014 = vadd.f32 0.0, %v2013
        %v2015 = vpop.f32.mrf.mxu0
        %2016 = vmatprep.mubr.f32.mxu0 0.0
        %2017 = vmatmul.mubr.f32.gmra.mxu0 %v456
        %v2018 = vpop.f32.mrf.mxu0
        %v2019 = vadd.f32 0.0, %v2018
        %v2020 = vpop.f32.mrf.mxu0
        %2021 = vmatprep.mubr.f32.mxu0 0.0
        %2022 = vmatmul.mubr.f32.gmra.mxu0 %v459
        %v2023 = vpop.f32.mrf.mxu0
        %v2024 = vadd.f32 0.0, %v2023
        %v2025 = vpop.f32.mrf.mxu0
        %2026 = vmatprep.mubr.f32.mxu0 0.0
        %2027 = vmatmul.mubr.f32.gmra.mxu0 %v462
        %v2028 = vpop.f32.mrf.mxu0
        %v2029 = vadd.f32 0.0, %v2028
        %v2030 = vpop.f32.mrf.mxu0
        %2031 = vmatprep.mubr.f32.mxu0 0.0
        %2032 = vmatmul.mubr.f32.gmra.mxu0 %v465
        %v2033 = vpop.f32.mrf.mxu0
        %v2034 = vadd.f32 0.0, %v2033
        %v2035 = vpop.f32.mrf.mxu0
        %2036 = vmatprep.mubr.f32.mxu0 0.0
        %2037 = vmatmul.mubr.f32.gmra.mxu0 %v468
        %v2038 = vpop.f32.mrf.mxu0
        %v2039 = vadd.f32 0.0, %v2038
        %v2040 = vpop.f32.mrf.mxu0
        %2041 = vmatprep.mubr.f32.mxu0 0.0
        %2042 = vmatmul.mubr.f32.gmra.mxu0 %v471
        %v2043 = vpop.f32.mrf.mxu0
        %v2044 = vadd.f32 0.0, %v2043
        %v2045 = vpop.f32.mrf.mxu0
        %2046 = vmatprep.mubr.f32.mxu0 0.0
        %2047 = vmatmul.mubr.f32.gmra.mxu0 %v474
        %v2048 = vpop.f32.mrf.mxu0
        %v2049 = vadd.f32 0.0, %v2048
        %v2050 = vpop.f32.mrf.mxu0
        %2051 = vmatprep.mubr.f32.mxu0 0.0
        %2052 = vmatmul.mubr.f32.gmra.mxu0 %v477
        %v2053 = vpop.f32.mrf.mxu0
        %v2054 = vadd.f32 0.0, %v2053
        %v2055 = vpop.f32.mrf.mxu0
        %2056 = vmatprep.mubr.f32.mxu0 0.0
        %2057 = vmatmul.mubr.f32.gmra.mxu0 %v480
        %v2058 = vpop.f32.mrf.mxu0
        %v2059 = vadd.f32 0.0, %v2058
        %v2060 = vpop.f32.mrf.mxu0
        %2061 = vmatprep.mubr.f32.mxu0 0.0
        %2062 = vmatmul.mubr.f32.gmra.mxu0 %v483
        %v2063 = vpop.f32.mrf.mxu0
        %v2064 = vadd.f32 0.0, %v2063
        %v2065 = vpop.f32.mrf.mxu0
        %2066 = vmatprep.mubr.f32.mxu0 0.0
        %2067 = vmatmul.mubr.f32.gmra.mxu0 %v486
        %v2068 = vpop.f32.mrf.mxu0
        %v2069 = vadd.f32 0.0, %v2068
        %v2070 = vpop.f32.mrf.mxu0
        %2071 = vmatprep.mubr.f32.mxu0 0.0
        %2072 = vmatmul.mubr.f32.gmra.mxu0 %v489
        %v2073 = vpop.f32.mrf.mxu0
        %v2074 = vadd.f32 0.0, %v2073
        %v2075 = vpop.f32.mrf.mxu0
        %2076 = vmatprep.mubr.f32.mxu0 0.0
        %2077 = vmatmul.mubr.f32.gmra.mxu0 %v492
        %v2078 = vpop.f32.mrf.mxu0
        %v2079 = vadd.f32 0.0, %v2078
        %v2080 = vpop.f32.mrf.mxu0
        %2081 = vmatprep.mubr.f32.mxu0 0.0
        %2082 = vmatmul.mubr.f32.gmra.mxu0 %v495
        %v2083 = vpop.f32.mrf.mxu0
        %v2084 = vadd.f32 0.0, %v2083
        %v2085 = vpop.f32.mrf.mxu0
        %2086 = vmatprep.mubr.f32.mxu0 0.0
        %2087 = vmatmul.mubr.f32.gmra.mxu0 %v498
        %v2088 = vpop.f32.mrf.mxu0
        %v2089 = vadd.f32 0.0, %v2088
        %v2090 = vpop.f32.mrf.mxu0
        %2091 = vmatprep.mubr.f32.mxu0 0.0
        %2092 = vmatmul.mubr.f32.gmra.mxu0 %v501
        %v2093 = vpop.f32.mrf.mxu0
        %v2094 = vadd.f32 0.0, %v2093
        %v2095 = vpop.f32.mrf.mxu0
        %2096 = vmatprep.mubr.f32.mxu0 0.0
        %2097 = vmatmul.mubr.f32.gmra.mxu0 %v504
        %v2098 = vpop.f32.mrf.mxu0
        %v2099 = vadd.f32 0.0, %v2098
        %v2100 = vpop.f32.mrf.mxu0
        %2101 = vmatprep.mubr.f32.mxu0 0.0
        %2102 = vmatmul.mubr.f32.gmra.mxu0 %v507
        %v2103 = vpop.f32.mrf.mxu0
        %v2104 = vadd.f32 0.0, %v2103
        %v2105 = vpop.f32.mrf.mxu0
        %2106 = vmatprep.mubr.f32.mxu0 0.0
        %2107 = vmatmul.mubr.f32.gmra.mxu0 %v510
        %v2108 = vpop.f32.mrf.mxu0
        %v2109 = vadd.f32 0.0, %v2108
        %v2110 = vpop.f32.mrf.mxu0
        %2111 = vmatprep.mubr.f32.mxu0 0.0
        %2112 = vmatmul.mubr.f32.gmra.mxu0 %v513
        %v2113 = vpop.f32.mrf.mxu0
        %v2114 = vadd.f32 0.0, %v2113
        %v2115 = vpop.f32.mrf.mxu0
        %2116 = vmatprep.mubr.f32.mxu0 0.0
        %2117 = vmatmul.mubr.f32.gmra.mxu0 %v516
        %v2118 = vpop.f32.mrf.mxu0
        %v2119 = vadd.f32 0.0, %v2118
        %v2120 = vpop.f32.mrf.mxu0
        %2121 = vmatprep.mubr.f32.mxu0 0.0
        %2122 = vmatmul.mubr.f32.gmra.mxu0 %v519
        %v2123 = vpop.f32.mrf.mxu0
        %v2124 = vadd.f32 0.0, %v2123
        %v2125 = vpop.f32.mrf.mxu0
        %2126 = vmatprep.mubr.f32.mxu0 0.0
        %2127 = vmatmul.mubr.f32.gmra.mxu0 %v522
        %v2128 = vpop.f32.mrf.mxu0
        %v2129 = vadd.f32 0.0, %v2128
        %v2130 = vpop.f32.mrf.mxu0
        %2131 = vmatprep.mubr.f32.mxu0 0.0
        %2132 = vmatmul.mubr.f32.gmra.mxu0 %v525
        %v2133 = vpop.f32.mrf.mxu0
        %v2134 = vadd.f32 0.0, %v2133
        %v2135 = vpop.f32.mrf.mxu0
        %2136 = vmatprep.mubr.f32.mxu0 0.0
        %2137 = vmatmul.mubr.f32.gmra.mxu0 %v528
        %v2138 = vpop.f32.mrf.mxu0
        %v2139 = vadd.f32 0.0, %v2138
        %v2140 = vpop.f32.mrf.mxu0
        %2141 = vmatprep.mubr.f32.mxu0 0.0
        %2142 = vmatmul.mubr.f32.gmra.mxu0 %v531
        %v2143 = vpop.f32.mrf.mxu0
        %v2144 = vadd.f32 0.0, %v2143
        %v2145 = vpop.f32.mrf.mxu0
        %2146 = vmatprep.mubr.f32.mxu0 0.0
        %2147 = vmatmul.mubr.f32.gmra.mxu0 %v534
        %v2148 = vpop.f32.mrf.mxu0
        %v2149 = vadd.f32 0.0, %v2148
        %v2150 = vpop.f32.mrf.mxu0
        %2151 = vmatprep.mubr.f32.mxu0 0.0
        %2152 = vmatmul.mubr.f32.gmra.mxu0 %v537
        %v2153 = vpop.f32.mrf.mxu0
        %v2154 = vadd.f32 0.0, %v2153
        %v2155 = vpop.f32.mrf.mxu0
        %2156 = vmatprep.mubr.f32.mxu0 0.0
        %2157 = vmatmul.mubr.f32.gmra.mxu0 %v1161
        %v2158 = vpop.f32.mrf.mxu0
        %v2159 = vadd.f32 0.0, %v2158
        %v2160 = vpop.f32.mrf.mxu0
        %2161 = vmatprep.mubr.f32.mxu0 0.0
        %2162 = vmatmul.mubr.f32.gmra.mxu0 %v1164
        %v2163 = vpop.f32.mrf.mxu0
        %v2164 = vadd.f32 0.0, %v2163
        %v2165 = vpop.f32.mrf.mxu0
        %2166 = vmatprep.mubr.f32.mxu0 0.0
        %2167 = vmatmul.mubr.f32.gmra.mxu0 %v1167
        %v2168 = vpop.f32.mrf.mxu0
        %v2169 = vadd.f32 0.0, %v2168
        %v2170 = vpop.f32.mrf.mxu0
        %2171 = vmatprep.mubr.f32.mxu0 0.0
        %2172 = vmatmul.mubr.f32.gmra.mxu0 %v1525
        %v2173 = vpop.f32.mrf.mxu0
        %v2174 = vadd.f32 0.0, %v2173
        %v2175 = vpop.f32.mrf.mxu0
        %2176 = vmatprep.mubr.f32.mxu0 0.0
        %2177 = vmatmul.mubr.f32.gmra.mxu0 %v1528
        %v2178 = vpop.f32.mrf.mxu0
        %v2179 = vadd.f32 0.0, %v2178
        %v2180 = vpop.f32.mrf.mxu0
        %2181 = vmatprep.mubr.f32.mxu0 0.0
        %2182 = vmatmul.mubr.f32.gmra.mxu0 %v1531
        %v2183 = vpop.f32.mrf.mxu0
        %v2184 = vadd.f32 0.0, %v2183
        %v2185 = vpop.f32.mrf.mxu0
        %2186 = vmatprep.mubr.f32.mxu0 0.0
        %2187 = vmatmul.mubr.f32.gmra.mxu0 %v1889
        %v2188 = vpop.f32.mrf.mxu0
        %v2189 = vadd.f32 0.0, %v2188
        %v2190 = vpop.f32.mrf.mxu0
        %2191 = vmatprep.mubr.f32.mxu0 0.0
        %2192 = vmatmul.mubr.f32.gmra.mxu0 %v1892
        %v2193 = vpop.f32.mrf.mxu0
        %v2194 = vadd.f32 0.0, %v2193
        %v2195 = vpop.f32.mrf.mxu0
        %2196 = vmatprep.mubr.f32.mxu0 0.0
        %2197 = vmatmul.mubr.f32.gmra.mxu0 %v1895
        %v2198 = vpop.f32.mrf.mxu0
        %v2199 = vadd.f32 0.0, %v2198
        %v2200 = vpop.f32.mrf.mxu0
        %2201 = vdwg.mxu0
        %v2202 = vadd.f32 %v1838, %v1964
        %v2203 = vadd.f32 %v1839, %v1969
        %v2204 = vadd.f32 %v1840, %v1974
        %v2205 = vadd.f32 %v1841, %v1979
        %v2206 = vadd.f32 %v1842, %v1984
        %v2207 = vadd.f32 %v1843, %v1989
        %v2208 = vadd.f32 %v1844, %v1994
        %v2209 = vadd.f32 %v1845, %v1999
        %v2210 = vadd.f32 %v1846, %v2004
        %v2211 = vadd.f32 %v1847, %v2009
        %v2212 = vadd.f32 %v1848, %v2014
        %v2213 = vadd.f32 %v1849, %v2019
        %v2214 = vadd.f32 %v1850, %v2024
        %v2215 = vadd.f32 %v1851, %v2029
        %v2216 = vadd.f32 %v1852, %v2034
        %v2217 = vadd.f32 %v1853, %v2039
        %v2218 = vadd.f32 %v1854, %v2044
        %v2219 = vadd.f32 %v1855, %v2049
        %v2220 = vadd.f32 %v1856, %v2054
        %v2221 = vadd.f32 %v1857, %v2059
        %v2222 = vadd.f32 %v1858, %v2064
        %v2223 = vadd.f32 %v1859, %v2069
        %v2224 = vadd.f32 %v1860, %v2074
        %v2225 = vadd.f32 %v1861, %v2079
        %v2226 = vadd.f32 %v1862, %v2084
        %v2227 = vadd.f32 %v1863, %v2089
        %v2228 = vadd.f32 %v1864, %v2094
        %v2229 = vadd.f32 %v1865, %v2099
        %v2230 = vadd.f32 %v1866, %v2104
        %v2231 = vadd.f32 %v1867, %v2109
        %v2232 = vadd.f32 %v1868, %v2114
        %v2233 = vadd.f32 %v1869, %v2119
        %v2234 = vadd.f32 %v1870, %v2124
        %v2235 = vadd.f32 %v1871, %v2129
        %v2236 = vadd.f32 %v1872, %v2134
        %v2237 = vadd.f32 %v1873, %v2139
        %v2238 = vadd.f32 %v1874, %v2144
        %v2239 = vadd.f32 %v1875, %v2149
        %v2240 = vadd.f32 %v1876, %v2154
        %v2241 = vadd.f32 %v1877, %v2159
        %v2242 = vadd.f32 %v1878, %v2164
        %v2243 = vadd.f32 %v1879, %v2169
        %v2244 = vadd.f32 %v1880, %v2174
        %v2245 = vadd.f32 %v1881, %v2179
        %v2246 = vadd.f32 %v1882, %v2184
        %v2247 = vadd.f32 %v1883, %v2189
        %v2248 = vadd.f32 %v1884, %v2194
        %v2249 = vadd.f32 %v1885, %v2199
        %v2250 = vlaneseq
        %v2251 = vshrl.u32 %v2250, 7
        %v2252 = vadd.s32 %v2251, 8
        %v2253 = vadd.s32 %v2251, 16
        %v2254 = vld [vmem:[%s2] sm:$0x1]
        %v2256 = vlaneseq
        %v2257 = vshrl.u32 %v2256, 7
        %v2258 = vsub.s32 0, %v2257
        %v2259 = vrot.slane %v2254, %v2258
        %vm2261 = vcmp.ge.s32.totalorder %v2251, 2
        %vm2262 = vcmp.ge.s32.totalorder %v2252, 2
        %vm2263 = vcmp.ge.s32.totalorder %v2253, 2
        %vm2264 = vcmp.lt.s32.totalorder %v2251, 18
        %vm2265 = vcmp.lt.s32.totalorder %v2252, 18
        %vm2266 = vcmp.lt.s32.totalorder %v2253, 18
        %vm2267 = vmand %vm2261, %vm2264
        %vm2268 = vmand %vm2262, %vm2265
        %vm2269 = vmand %vm2263, %vm2266
        %v2270 = vsel %vm2267, %v2259, 0.0
        %v2271 = vsel %vm2268, %v2259, 0.0
        %v2272 = vsel %vm2269, %v2259, 0.0
        %v2273 = vadd.f32 %v2202, %v2270
        %v2274 = vadd.f32 %v2203, %v2271
        %v2275 = vadd.f32 %v2204, %v2272
        %v2276 = vadd.f32 %v2205, %v2270
        %v2277 = vadd.f32 %v2206, %v2271
        %v2278 = vadd.f32 %v2207, %v2272
        %v2279 = vadd.f32 %v2208, %v2270
        %v2280 = vadd.f32 %v2209, %v2271
        %v2281 = vadd.f32 %v2210, %v2272
        %v2282 = vadd.f32 %v2211, %v2270
        %v2283 = vadd.f32 %v2212, %v2271
        %v2284 = vadd.f32 %v2213, %v2272
        %v2285 = vadd.f32 %v2214, %v2270
        %v2286 = vadd.f32 %v2215, %v2271
        %v2287 = vadd.f32 %v2216, %v2272
        %v2288 = vadd.f32 %v2217, %v2270
        %v2289 = vadd.f32 %v2218, %v2271
        %v2290 = vadd.f32 %v2219, %v2272
        %v2291 = vadd.f32 %v2220, %v2270
        %v2292 = vadd.f32 %v2221, %v2271
        %v2293 = vadd.f32 %v2222, %v2272
        %v2294 = vadd.f32 %v2223, %v2270
        %v2295 = vadd.f32 %v2224, %v2271
        %v2296 = vadd.f32 %v2225, %v2272
        %v2297 = vadd.f32 %v2226, %v2270
        %v2298 = vadd.f32 %v2227, %v2271
        %v2299 = vadd.f32 %v2228, %v2272
        %v2300 = vadd.f32 %v2229, %v2270
        %v2301 = vadd.f32 %v2230, %v2271
        %v2302 = vadd.f32 %v2231, %v2272
        %v2303 = vadd.f32 %v2232, %v2270
        %v2304 = vadd.f32 %v2233, %v2271
        %v2305 = vadd.f32 %v2234, %v2272
        %v2306 = vadd.f32 %v2235, %v2270
        %v2307 = vadd.f32 %v2236, %v2271
        %v2308 = vadd.f32 %v2237, %v2272
        %v2309 = vadd.f32 %v2238, %v2270
        %v2310 = vadd.f32 %v2239, %v2271
        %v2311 = vadd.f32 %v2240, %v2272
        %v2312 = vadd.f32 %v2241, %v2270
        %v2313 = vadd.f32 %v2242, %v2271
        %v2314 = vadd.f32 %v2243, %v2272
        %v2315 = vadd.f32 %v2244, %v2270
        %v2316 = vadd.f32 %v2245, %v2271
        %v2317 = vadd.f32 %v2246, %v2272
        %v2318 = vadd.f32 %v2247, %v2270
        %v2319 = vadd.f32 %v2248, %v2271
        %v2320 = vadd.f32 %v2249, %v2272
        %v2321 = vld [vmem:[%s4] sm:$0x1]
        %v2323 = vlaneseq
        %v2324 = vshrl.u32 %v2323, 7
        %v2325 = vsub.s32 0, %v2324
        %v2326 = vrot.slane %v2321, %v2325
        %v2328 = vld [vmem:[%s3] sm:$0xff]
        %v2329 = vld [vmem:[%s3 + $0x8] sm:$0xff]
        %vm2330 = vcmask 130048
        %v2332 = vsel %vm2330, %v2273, 0
        %v2335 = vsel %vm2330, %v2274, 0
        %v2338 = vsel %vm2330, %v2275, 0
        %v2341 = vsel %vm2330, %v2276, 0
        %v2344 = vsel %vm2330, %v2277, 0
        %v2347 = vsel %vm2330, %v2278, 0
        %v2350 = vsel %vm2330, %v2279, 0
        %v2353 = vsel %vm2330, %v2280, 0
        %v2356 = vsel %vm2330, %v2281, 0
        %v2359 = vsel %vm2330, %v2282, 0
        %v2362 = vsel %vm2330, %v2283, 0
        %v2365 = vsel %vm2330, %v2284, 0
        %v2368 = vsel %vm2330, %v2285, 0
        %v2371 = vsel %vm2330, %v2286, 0
        %v2374 = vsel %vm2330, %v2287, 0
        %v2377 = vsel %vm2330, %v2288, 0
        %v2380 = vsel %vm2330, %v2289, 0
        %v2383 = vsel %vm2330, %v2290, 0
        %v2386 = vsel %vm2330, %v2291, 0
        %v2389 = vsel %vm2330, %v2292, 0
        %v2392 = vsel %vm2330, %v2293, 0
        %v2395 = vsel %vm2330, %v2294, 0
        %v2398 = vsel %vm2330, %v2295, 0
        %v2401 = vsel %vm2330, %v2296, 0
        %v2404 = vsel %vm2330, %v2297, 0
        %v2407 = vsel %vm2330, %v2298, 0
        %v2410 = vsel %vm2330, %v2299, 0
        %v2413 = vsel %vm2330, %v2300, 0
        %v2416 = vsel %vm2330, %v2301, 0
        %v2419 = vsel %vm2330, %v2302, 0
        %v2422 = vsel %vm2330, %v2303, 0
        %v2425 = vsel %vm2330, %v2304, 0
        %v2428 = vsel %vm2330, %v2305, 0
        %v2431 = vsel %vm2330, %v2306, 0
        %v2434 = vsel %vm2330, %v2307, 0
        %v2437 = vsel %vm2330, %v2308, 0
        %v2440 = vsel %vm2330, %v2309, 0
        %v2443 = vsel %vm2330, %v2310, 0
        %v2446 = vsel %vm2330, %v2311, 0
        %v2449 = vsel %vm2330, %v2312, 0
        %v2452 = vsel %vm2330, %v2313, 0
        %v2455 = vsel %vm2330, %v2314, 0
        %v2458 = vsel %vm2330, %v2315, 0
        %v2461 = vsel %vm2330, %v2316, 0
        %v2464 = vsel %vm2330, %v2317, 0
        %v2467 = vsel %vm2330, %v2318, 0
        %v2470 = vsel %vm2330, %v2319, 0
        %v2473 = vsel %vm2330, %v2320, 0
        %2475 = vmatprep.subr.mxu0 0.0
        %2476 = vmatpush1.msra.mxu0 0.0
        %2477 = vmatprep.subr.mxu0 0.0
        %2478 = vmatpush1.msra.mxu0 0.0
        %2479 = vmatprep.subr.mxu0 0.0
        %2480 = vmatpush1.msra.mxu0 0.0
        %2481 = vmatprep.subr.mxu0 0.0
        %2482 = vmatpush1.msra.mxu0 0.0
        %2483 = vmatprep.subr.mxu0 0.0
        %2484 = vmatpush1.msra.mxu0 0.0
        %2485 = vmatprep.subr.mxu0 0.0
        %2486 = vmatpush1.msra.mxu0 0.0
        %2487 = vmatprep.subr.mxu0 0.0
        %2488 = vmatpush1.msra.mxu0 0.0
        %2489 = vmatprep.subr.mxu0 0.0
        %2490 = vmatpush1.msra.mxu0 0.0
        %2491 = vmatprep.subr.mxu0 0.0
        %2492 = vmatpush1.msra.mxu0 0.0
        %2493 = vmatprep.subr.mxu0 0.0
        %2494 = vmatpush1.msra.mxu0 0.0
        %2495 = vmatprep.subr.mxu0 0.0
        %2496 = vmatpush1.msra.mxu0 0.0
        %2497 = vmatprep.subr.mxu0 0.0
        %2498 = vmatpush1.msra.mxu0 0.0
        %2499 = vmatprep.subr.mxu0 0.0
        %2500 = vmatpush1.msra.mxu0 0.0
        %2501 = vmatprep.subr.mxu0 0.0
        %2502 = vmatpush1.msra.mxu0 0.0
        %2503 = vmatprep.subr.mxu0 0.0
        %2504 = vmatpush1.msra.mxu0 %v2329
        %2505 = vmatprep.subr.mxu0 0.0
        %2506 = vmatpush1.msra.mxu0 %v2328
        %2507 = vmatprep.subr.mxu0 0.0
        %2508 = vmatpush2.msra.mxu0 0.0
        %2509 = vmatprep.subr.mxu0 0.0
        %2510 = vmatpush2.msra.mxu0 0.0
        %2511 = vmatprep.subr.mxu0 0.0
        %2512 = vmatpush2.msra.mxu0 0.0
        %2513 = vmatprep.subr.mxu0 0.0
        %2514 = vmatpush2.msra.mxu0 0.0
        %2515 = vmatprep.subr.mxu0 0.0
        %2516 = vmatpush2.msra.mxu0 0.0
        %2517 = vmatprep.subr.mxu0 0.0
        %2518 = vmatpush2.msra.mxu0 0.0
        %2519 = vmatprep.subr.mxu0 0.0
        %2520 = vmatpush2.msra.mxu0 0.0
        %2521 = vmatprep.subr.mxu0 0.0
        %2522 = vmatpush2.msra.mxu0 0.0
        %2523 = vmatprep.subr.mxu0 0.0
        %2524 = vmatpush2.msra.mxu0 0.0
        %2525 = vmatprep.subr.mxu0 0.0
        %2526 = vmatpush2.msra.mxu0 0.0
        %2527 = vmatprep.subr.mxu0 0.0
        %2528 = vmatpush2.msra.mxu0 0.0
        %2529 = vmatprep.subr.mxu0 0.0
        %2530 = vmatpush2.msra.mxu0 0.0
        %2531 = vmatprep.subr.mxu0 0.0
        %2532 = vmatpush2.msra.mxu0 0.0
        %2533 = vmatprep.subr.mxu0 0.0
        %2534 = vmatpush2.msra.mxu0 0.0
        %2535 = vmatprep.subr.mxu0 0.0
        %2536 = vmatpush2.msra.mxu0 0.0
        %2537 = vmatprep.subr.mxu0 0.0
        %2538 = vmatpush2.msra.mxu0 0.0
        %2539 = vmatprep.mubr.f32.mxu0 0.0
        %2540 = vmatmul.mubr.f32.gmra.mxu0 %v2332
        %v2541 = vpop.f32.mrf.mxu0
        %v2542 = vadd.f32 0.0, %v2541
        %v2543 = vpop.f32.mrf.mxu0
        %2544 = vmatprep.mubr.f32.mxu0 0.0
        %2545 = vmatmul.mubr.f32.gmra.mxu0 %v2335
        %v2546 = vpop.f32.mrf.mxu0
        %v2547 = vadd.f32 0.0, %v2546
        %v2548 = vpop.f32.mrf.mxu0
        %2549 = vmatprep.mubr.f32.mxu0 0.0
        %2550 = vmatmul.mubr.f32.gmra.mxu0 %v2338
        %v2551 = vpop.f32.mrf.mxu0
        %v2552 = vpop.f32.mrf.mxu0
        %2553 = vmatprep.mubr.f32.mxu0 0.0
        %2554 = vmatmul.mubr.f32.gmra.mxu0 %v2341
        %v2555 = vpop.f32.mrf.mxu0
        %v2556 = vadd.f32 0.0, %v2555
        %v2557 = vpop.f32.mrf.mxu0
        %2558 = vmatprep.mubr.f32.mxu0 0.0
        %2559 = vmatmul.mubr.f32.gmra.mxu0 %v2344
        %v2560 = vpop.f32.mrf.mxu0
        %v2561 = vadd.f32 0.0, %v2560
        %v2562 = vpop.f32.mrf.mxu0
        %2563 = vmatprep.mubr.f32.mxu0 0.0
        %2564 = vmatmul.mubr.f32.gmra.mxu0 %v2347
        %v2565 = vpop.f32.mrf.mxu0
        %v2566 = vpop.f32.mrf.mxu0
        %2567 = vmatprep.mubr.f32.mxu0 0.0
        %2568 = vmatmul.mubr.f32.gmra.mxu0 %v2350
        %v2569 = vpop.f32.mrf.mxu0
        %v2570 = vadd.f32 0.0, %v2569
        %v2571 = vpop.f32.mrf.mxu0
        %2572 = vmatprep.mubr.f32.mxu0 0.0
        %2573 = vmatmul.mubr.f32.gmra.mxu0 %v2353
        %v2574 = vpop.f32.mrf.mxu0
        %v2575 = vadd.f32 0.0, %v2574
        %v2576 = vpop.f32.mrf.mxu0
        %2577 = vmatprep.mubr.f32.mxu0 0.0
        %2578 = vmatmul.mubr.f32.gmra.mxu0 %v2356
        %v2579 = vpop.f32.mrf.mxu0
        %v2580 = vpop.f32.mrf.mxu0
        %2581 = vmatprep.mubr.f32.mxu0 0.0
        %2582 = vmatmul.mubr.f32.gmra.mxu0 %v2359
        %v2583 = vpop.f32.mrf.mxu0
        %v2584 = vadd.f32 0.0, %v2583
        %v2585 = vpop.f32.mrf.mxu0
        %2586 = vmatprep.mubr.f32.mxu0 0.0
        %2587 = vmatmul.mubr.f32.gmra.mxu0 %v2362
        %v2588 = vpop.f32.mrf.mxu0
        %v2589 = vadd.f32 0.0, %v2588
        %v2590 = vpop.f32.mrf.mxu0
        %2591 = vmatprep.mubr.f32.mxu0 0.0
        %2592 = vmatmul.mubr.f32.gmra.mxu0 %v2365
        %v2593 = vpop.f32.mrf.mxu0
        %v2594 = vpop.f32.mrf.mxu0
        %2595 = vmatprep.mubr.f32.mxu0 0.0
        %2596 = vmatmul.mubr.f32.gmra.mxu0 %v2368
        %v2597 = vpop.f32.mrf.mxu0
        %v2598 = vadd.f32 0.0, %v2597
        %v2599 = vpop.f32.mrf.mxu0
        %2600 = vmatprep.mubr.f32.mxu0 0.0
        %2601 = vmatmul.mubr.f32.gmra.mxu0 %v2371
        %v2602 = vpop.f32.mrf.mxu0
        %v2603 = vadd.f32 0.0, %v2602
        %v2604 = vpop.f32.mrf.mxu0
        %2605 = vmatprep.mubr.f32.mxu0 0.0
        %2606 = vmatmul.mubr.f32.gmra.mxu0 %v2374
        %v2607 = vpop.f32.mrf.mxu0
        %v2608 = vpop.f32.mrf.mxu0
        %2609 = vmatprep.mubr.f32.mxu0 0.0
        %2610 = vmatmul.mubr.f32.gmra.mxu0 %v2377
        %v2611 = vpop.f32.mrf.mxu0
        %v2612 = vadd.f32 0.0, %v2611
        %v2613 = vpop.f32.mrf.mxu0
        %2614 = vmatprep.mubr.f32.mxu0 0.0
        %2615 = vmatmul.mubr.f32.gmra.mxu0 %v2380
        %v2616 = vpop.f32.mrf.mxu0
        %v2617 = vadd.f32 0.0, %v2616
        %v2618 = vpop.f32.mrf.mxu0
        %2619 = vmatprep.mubr.f32.mxu0 0.0
        %2620 = vmatmul.mubr.f32.gmra.mxu0 %v2383
        %v2621 = vpop.f32.mrf.mxu0
        %v2622 = vpop.f32.mrf.mxu0
        %2623 = vmatprep.mubr.f32.mxu0 0.0
        %2624 = vmatmul.mubr.f32.gmra.mxu0 %v2386
        %v2625 = vpop.f32.mrf.mxu0
        %v2626 = vadd.f32 0.0, %v2625
        %v2627 = vpop.f32.mrf.mxu0
        %2628 = vmatprep.mubr.f32.mxu0 0.0
        %2629 = vmatmul.mubr.f32.gmra.mxu0 %v2389
        %v2630 = vpop.f32.mrf.mxu0
        %v2631 = vadd.f32 0.0, %v2630
        %v2632 = vpop.f32.mrf.mxu0
        %2633 = vmatprep.mubr.f32.mxu0 0.0
        %2634 = vmatmul.mubr.f32.gmra.mxu0 %v2392
        %v2635 = vpop.f32.mrf.mxu0
        %v2636 = vpop.f32.mrf.mxu0
        %2637 = vmatprep.mubr.f32.mxu0 0.0
        %2638 = vmatmul.mubr.f32.gmra.mxu0 %v2395
        %v2639 = vpop.f32.mrf.mxu0
        %v2640 = vadd.f32 0.0, %v2639
        %v2641 = vpop.f32.mrf.mxu0
        %2642 = vmatprep.mubr.f32.mxu0 0.0
        %2643 = vmatmul.mubr.f32.gmra.mxu0 %v2398
        %v2644 = vpop.f32.mrf.mxu0
        %v2645 = vadd.f32 0.0, %v2644
        %v2646 = vpop.f32.mrf.mxu0
        %2647 = vmatprep.mubr.f32.mxu0 0.0
        %2648 = vmatmul.mubr.f32.gmra.mxu0 %v2401
        %v2649 = vpop.f32.mrf.mxu0
        %v2650 = vpop.f32.mrf.mxu0
        %2651 = vmatprep.mubr.f32.mxu0 0.0
        %2652 = vmatmul.mubr.f32.gmra.mxu0 %v2404
        %v2653 = vpop.f32.mrf.mxu0
        %v2654 = vadd.f32 0.0, %v2653
        %v2655 = vpop.f32.mrf.mxu0
        %2656 = vmatprep.mubr.f32.mxu0 0.0
        %2657 = vmatmul.mubr.f32.gmra.mxu0 %v2407
        %v2658 = vpop.f32.mrf.mxu0
        %v2659 = vadd.f32 0.0, %v2658
        %v2660 = vpop.f32.mrf.mxu0
        %2661 = vmatprep.mubr.f32.mxu0 0.0
        %2662 = vmatmul.mubr.f32.gmra.mxu0 %v2410
        %v2663 = vpop.f32.mrf.mxu0
        %v2664 = vpop.f32.mrf.mxu0
        %2665 = vmatprep.mubr.f32.mxu0 0.0
        %2666 = vmatmul.mubr.f32.gmra.mxu0 %v2413
        %v2667 = vpop.f32.mrf.mxu0
        %v2668 = vadd.f32 0.0, %v2667
        %v2669 = vpop.f32.mrf.mxu0
        %2670 = vmatprep.mubr.f32.mxu0 0.0
        %2671 = vmatmul.mubr.f32.gmra.mxu0 %v2416
        %v2672 = vpop.f32.mrf.mxu0
        %v2673 = vadd.f32 0.0, %v2672
        %v2674 = vpop.f32.mrf.mxu0
        %2675 = vmatprep.mubr.f32.mxu0 0.0
        %2676 = vmatmul.mubr.f32.gmra.mxu0 %v2419
        %v2677 = vpop.f32.mrf.mxu0
        %v2678 = vpop.f32.mrf.mxu0
        %2679 = vmatprep.mubr.f32.mxu0 0.0
        %2680 = vmatmul.mubr.f32.gmra.mxu0 %v2422
        %v2681 = vpop.f32.mrf.mxu0
        %v2682 = vadd.f32 0.0, %v2681
        %v2683 = vpop.f32.mrf.mxu0
        %2684 = vmatprep.mubr.f32.mxu0 0.0
        %2685 = vmatmul.mubr.f32.gmra.mxu0 %v2425
        %v2686 = vpop.f32.mrf.mxu0
        %v2687 = vadd.f32 0.0, %v2686
        %v2688 = vpop.f32.mrf.mxu0
        %2689 = vmatprep.mubr.f32.mxu0 0.0
        %2690 = vmatmul.mubr.f32.gmra.mxu0 %v2428
        %v2691 = vpop.f32.mrf.mxu0
        %v2692 = vpop.f32.mrf.mxu0
        %2693 = vmatprep.mubr.f32.mxu0 0.0
        %2694 = vmatmul.mubr.f32.gmra.mxu0 %v2431
        %v2695 = vpop.f32.mrf.mxu0
        %v2696 = vadd.f32 0.0, %v2695
        %v2697 = vpop.f32.mrf.mxu0
        %2698 = vmatprep.mubr.f32.mxu0 0.0
        %2699 = vmatmul.mubr.f32.gmra.mxu0 %v2434
        %v2700 = vpop.f32.mrf.mxu0
        %v2701 = vadd.f32 0.0, %v2700
        %v2702 = vpop.f32.mrf.mxu0
        %2703 = vmatprep.mubr.f32.mxu0 0.0
        %2704 = vmatmul.mubr.f32.gmra.mxu0 %v2437
        %v2705 = vpop.f32.mrf.mxu0
        %v2706 = vpop.f32.mrf.mxu0
        %2707 = vmatprep.mubr.f32.mxu0 0.0
        %2708 = vmatmul.mubr.f32.gmra.mxu0 %v2440
        %v2709 = vpop.f32.mrf.mxu0
        %v2710 = vadd.f32 0.0, %v2709
        %v2711 = vpop.f32.mrf.mxu0
        %2712 = vmatprep.mubr.f32.mxu0 0.0
        %2713 = vmatmul.mubr.f32.gmra.mxu0 %v2443
        %v2714 = vpop.f32.mrf.mxu0
        %v2715 = vadd.f32 0.0, %v2714
        %v2716 = vpop.f32.mrf.mxu0
        %2717 = vmatprep.mubr.f32.mxu0 0.0
        %2718 = vmatmul.mubr.f32.gmra.mxu0 %v2446
        %v2719 = vpop.f32.mrf.mxu0
        %v2720 = vpop.f32.mrf.mxu0
        %2721 = vmatprep.mubr.f32.mxu0 0.0
        %2722 = vmatmul.mubr.f32.gmra.mxu0 %v2449
        %v2723 = vpop.f32.mrf.mxu0
        %v2724 = vadd.f32 0.0, %v2723
        %v2725 = vpop.f32.mrf.mxu0
        %2726 = vmatprep.mubr.f32.mxu0 0.0
        %2727 = vmatmul.mubr.f32.gmra.mxu0 %v2452
        %v2728 = vpop.f32.mrf.mxu0
        %v2729 = vadd.f32 0.0, %v2728
        %v2730 = vpop.f32.mrf.mxu0
        %2731 = vmatprep.mubr.f32.mxu0 0.0
        %2732 = vmatmul.mubr.f32.gmra.mxu0 %v2455
        %v2733 = vpop.f32.mrf.mxu0
        %v2734 = vpop.f32.mrf.mxu0
        %2735 = vmatprep.mubr.f32.mxu0 0.0
        %2736 = vmatmul.mubr.f32.gmra.mxu0 %v2458
        %v2737 = vpop.f32.mrf.mxu0
        %v2738 = vadd.f32 0.0, %v2737
        %v2739 = vpop.f32.mrf.mxu0
        %2740 = vmatprep.mubr.f32.mxu0 0.0
        %2741 = vmatmul.mubr.f32.gmra.mxu0 %v2461
        %v2742 = vpop.f32.mrf.mxu0
        %v2743 = vadd.f32 0.0, %v2742
        %v2744 = vpop.f32.mrf.mxu0
        %2745 = vmatprep.mubr.f32.mxu0 0.0
        %2746 = vmatmul.mubr.f32.gmra.mxu0 %v2464
        %v2747 = vpop.f32.mrf.mxu0
        %v2748 = vpop.f32.mrf.mxu0
        %2749 = vmatprep.mubr.f32.mxu0 0.0
        %2750 = vmatmul.mubr.f32.gmra.mxu0 %v2467
        %v2751 = vpop.f32.mrf.mxu0
        %v2752 = vadd.f32 0.0, %v2751
        %v2753 = vpop.f32.mrf.mxu0
        %2754 = vmatprep.mubr.f32.mxu0 0.0
        %2755 = vmatmul.mubr.f32.gmra.mxu0 %v2470
        %v2756 = vpop.f32.mrf.mxu0
        %v2757 = vadd.f32 0.0, %v2756
        %v2758 = vpop.f32.mrf.mxu0
        %2759 = vmatprep.mubr.f32.mxu0 0.0
        %2760 = vmatmul.mubr.f32.gmra.mxu0 %v2473
        %v2761 = vpop.f32.mrf.mxu0
        %v2762 = vpop.f32.mrf.mxu0
        %2763 = vdwg.mxu0
        %v2764 = vadd.f32 %v2326, %v2542
        %v2765 = vadd.f32 %v2326, %v2547
        %v2766 = vadd.f32 %v2326, %v2556
        %v2767 = vadd.f32 %v2326, %v2561
        %v2768 = vadd.f32 %v2326, %v2570
        %v2769 = vadd.f32 %v2326, %v2575
        %v2770 = vadd.f32 %v2326, %v2584
        %v2771 = vadd.f32 %v2326, %v2589
        %v2772 = vadd.f32 %v2326, %v2598
        %v2773 = vadd.f32 %v2326, %v2603
        %v2774 = vadd.f32 %v2326, %v2612
        %v2775 = vadd.f32 %v2326, %v2617
        %v2776 = vadd.f32 %v2326, %v2626
        %v2777 = vadd.f32 %v2326, %v2631
        %v2778 = vadd.f32 %v2326, %v2640
        %v2779 = vadd.f32 %v2326, %v2645
        %v2780 = vadd.f32 %v2326, %v2654
        %v2781 = vadd.f32 %v2326, %v2659
        %v2782 = vadd.f32 %v2326, %v2668
        %v2783 = vadd.f32 %v2326, %v2673
        %v2784 = vadd.f32 %v2326, %v2682
        %v2785 = vadd.f32 %v2326, %v2687
        %v2786 = vadd.f32 %v2326, %v2696
        %v2787 = vadd.f32 %v2326, %v2701
        %v2788 = vadd.f32 %v2326, %v2710
        %v2789 = vadd.f32 %v2326, %v2715
        %v2790 = vadd.f32 %v2326, %v2724
        %v2791 = vadd.f32 %v2326, %v2729
        %v2792 = vadd.f32 %v2326, %v2738
        %v2793 = vadd.f32 %v2326, %v2743
        %v2794 = vadd.f32 %v2326, %v2752
        %v2795 = vadd.f32 %v2326, %v2757
        %s2796 = scalar_lea.vmem %s3, 16
        %v2797 = vld [vmem:[%s2796] sm:$0xff]
        %v2798 = vld [vmem:[%s2796 + $0x8] sm:$0xff]
        %2799 = vmatprep.subr.mxu0 0.0
        %2800 = vmatpush1.msra.mxu0 0.0
        %2801 = vmatprep.subr.mxu0 0.0
        %2802 = vmatpush1.msra.mxu0 0.0
        %2803 = vmatprep.subr.mxu0 0.0
        %2804 = vmatpush1.msra.mxu0 0.0
        %2805 = vmatprep.subr.mxu0 0.0
        %2806 = vmatpush1.msra.mxu0 0.0
        %2807 = vmatprep.subr.mxu0 0.0
        %2808 = vmatpush1.msra.mxu0 0.0
        %2809 = vmatprep.subr.mxu0 0.0
        %2810 = vmatpush1.msra.mxu0 0.0
        %2811 = vmatprep.subr.mxu0 0.0
        %2812 = vmatpush1.msra.mxu0 0.0
        %2813 = vmatprep.subr.mxu0 0.0
        %2814 = vmatpush1.msra.mxu0 0.0
        %2815 = vmatprep.subr.mxu0 0.0
        %2816 = vmatpush1.msra.mxu0 0.0
        %2817 = vmatprep.subr.mxu0 0.0
        %2818 = vmatpush1.msra.mxu0 0.0
        %2819 = vmatprep.subr.mxu0 0.0
        %2820 = vmatpush1.msra.mxu0 0.0
        %2821 = vmatprep.subr.mxu0 0.0
        %2822 = vmatpush1.msra.mxu0 0.0
        %2823 = vmatprep.subr.mxu0 0.0
        %2824 = vmatpush1.msra.mxu0 0.0
        %2825 = vmatprep.subr.mxu0 0.0
        %2826 = vmatpush1.msra.mxu0 0.0
        %2827 = vmatprep.subr.mxu0 0.0
        %2828 = vmatpush1.msra.mxu0 %v2798
        %2829 = vmatprep.subr.mxu0 0.0
        %2830 = vmatpush1.msra.mxu0 %v2797
        %2831 = vmatprep.subr.mxu0 0.0
        %2832 = vmatpush2.msra.mxu0 0.0
        %2833 = vmatprep.subr.mxu0 0.0
        %2834 = vmatpush2.msra.mxu0 0.0
        %2835 = vmatprep.subr.mxu0 0.0
        %2836 = vmatpush2.msra.mxu0 0.0
        %2837 = vmatprep.subr.mxu0 0.0
        %2838 = vmatpush2.msra.mxu0 0.0
        %2839 = vmatprep.subr.mxu0 0.0
        %2840 = vmatpush2.msra.mxu0 0.0
        %2841 = vmatprep.subr.mxu0 0.0
        %2842 = vmatpush2.msra.mxu0 0.0
        %2843 = vmatprep.subr.mxu0 0.0
        %2844 = vmatpush2.msra.mxu0 0.0
        %2845 = vmatprep.subr.mxu0 0.0
        %2846 = vmatpush2.msra.mxu0 0.0
        %2847 = vmatprep.subr.mxu0 0.0
        %2848 = vmatpush2.msra.mxu0 0.0
        %2849 = vmatprep.subr.mxu0 0.0
        %2850 = vmatpush2.msra.mxu0 0.0
        %2851 = vmatprep.subr.mxu0 0.0
        %2852 = vmatpush2.msra.mxu0 0.0
        %2853 = vmatprep.subr.mxu0 0.0
        %2854 = vmatpush2.msra.mxu0 0.0
        %2855 = vmatprep.subr.mxu0 0.0
        %2856 = vmatpush2.msra.mxu0 0.0
        %2857 = vmatprep.subr.mxu0 0.0
        %2858 = vmatpush2.msra.mxu0 0.0
        %2859 = vmatprep.subr.mxu0 0.0
        %2860 = vmatpush2.msra.mxu0 0.0
        %2861 = vmatprep.subr.mxu0 0.0
        %2862 = vmatpush2.msra.mxu0 0.0
        %2863 = vmatprep.mubr.f32.mxu0 0.0
        %2864 = vmatmul.mubr.f32.gmra.mxu0 %v2332
        %v2865 = vpop.f32.mrf.mxu0
        %v2866 = vadd.f32 0.0, %v2865
        %v2867 = vpop.f32.mrf.mxu0
        %2868 = vmatprep.mubr.f32.mxu0 0.0
        %2869 = vmatmul.mubr.f32.gmra.mxu0 %v2335
        %v2870 = vpop.f32.mrf.mxu0
        %v2871 = vadd.f32 0.0, %v2870
        %v2872 = vpop.f32.mrf.mxu0
        %2873 = vmatprep.mubr.f32.mxu0 0.0
        %2874 = vmatmul.mubr.f32.gmra.mxu0 %v2338
        %v2875 = vpop.f32.mrf.mxu0
        %v2876 = vadd.f32 0.0, %v2875
        %v2877 = vpop.f32.mrf.mxu0
        %2878 = vmatprep.mubr.f32.mxu0 0.0
        %2879 = vmatmul.mubr.f32.gmra.mxu0 %v2341
        %v2880 = vpop.f32.mrf.mxu0
        %v2881 = vadd.f32 0.0, %v2880
        %v2882 = vpop.f32.mrf.mxu0
        %2883 = vmatprep.mubr.f32.mxu0 0.0
        %2884 = vmatmul.mubr.f32.gmra.mxu0 %v2344
        %v2885 = vpop.f32.mrf.mxu0
        %v2886 = vadd.f32 0.0, %v2885
        %v2887 = vpop.f32.mrf.mxu0
        %2888 = vmatprep.mubr.f32.mxu0 0.0
        %2889 = vmatmul.mubr.f32.gmra.mxu0 %v2347
        %v2890 = vpop.f32.mrf.mxu0
        %v2891 = vadd.f32 0.0, %v2890
        %v2892 = vpop.f32.mrf.mxu0
        %2893 = vmatprep.mubr.f32.mxu0 0.0
        %2894 = vmatmul.mubr.f32.gmra.mxu0 %v2350
        %v2895 = vpop.f32.mrf.mxu0
        %v2896 = vadd.f32 0.0, %v2895
        %v2897 = vpop.f32.mrf.mxu0
        %2898 = vmatprep.mubr.f32.mxu0 0.0
        %2899 = vmatmul.mubr.f32.gmra.mxu0 %v2353
        %v2900 = vpop.f32.mrf.mxu0
        %v2901 = vadd.f32 0.0, %v2900
        %v2902 = vpop.f32.mrf.mxu0
        %2903 = vmatprep.mubr.f32.mxu0 0.0
        %2904 = vmatmul.mubr.f32.gmra.mxu0 %v2356
        %v2905 = vpop.f32.mrf.mxu0
        %v2906 = vadd.f32 0.0, %v2905
        %v2907 = vpop.f32.mrf.mxu0
        %2908 = vmatprep.mubr.f32.mxu0 0.0
        %2909 = vmatmul.mubr.f32.gmra.mxu0 %v2359
        %v2910 = vpop.f32.mrf.mxu0
        %v2911 = vadd.f32 0.0, %v2910
        %v2912 = vpop.f32.mrf.mxu0
        %2913 = vmatprep.mubr.f32.mxu0 0.0
        %2914 = vmatmul.mubr.f32.gmra.mxu0 %v2362
        %v2915 = vpop.f32.mrf.mxu0
        %v2916 = vadd.f32 0.0, %v2915
        %v2917 = vpop.f32.mrf.mxu0
        %2918 = vmatprep.mubr.f32.mxu0 0.0
        %2919 = vmatmul.mubr.f32.gmra.mxu0 %v2365
        %v2920 = vpop.f32.mrf.mxu0
        %v2921 = vadd.f32 0.0, %v2920
        %v2922 = vpop.f32.mrf.mxu0
        %2923 = vmatprep.mubr.f32.mxu0 0.0
        %2924 = vmatmul.mubr.f32.gmra.mxu0 %v2368
        %v2925 = vpop.f32.mrf.mxu0
        %v2926 = vadd.f32 0.0, %v2925
        %v2927 = vpop.f32.mrf.mxu0
        %2928 = vmatprep.mubr.f32.mxu0 0.0
        %2929 = vmatmul.mubr.f32.gmra.mxu0 %v2371
        %v2930 = vpop.f32.mrf.mxu0
        %v2931 = vadd.f32 0.0, %v2930
        %v2932 = vpop.f32.mrf.mxu0
        %2933 = vmatprep.mubr.f32.mxu0 0.0
        %2934 = vmatmul.mubr.f32.gmra.mxu0 %v2374
        %v2935 = vpop.f32.mrf.mxu0
        %v2936 = vadd.f32 0.0, %v2935
        %v2937 = vpop.f32.mrf.mxu0
        %2938 = vmatprep.mubr.f32.mxu0 0.0
        %2939 = vmatmul.mubr.f32.gmra.mxu0 %v2377
        %v2940 = vpop.f32.mrf.mxu0
        %v2941 = vadd.f32 0.0, %v2940
        %v2942 = vpop.f32.mrf.mxu0
        %2943 = vmatprep.mubr.f32.mxu0 0.0
        %2944 = vmatmul.mubr.f32.gmra.mxu0 %v2380
        %v2945 = vpop.f32.mrf.mxu0
        %v2946 = vadd.f32 0.0, %v2945
        %v2947 = vpop.f32.mrf.mxu0
        %2948 = vmatprep.mubr.f32.mxu0 0.0
        %2949 = vmatmul.mubr.f32.gmra.mxu0 %v2383
        %v2950 = vpop.f32.mrf.mxu0
        %v2951 = vadd.f32 0.0, %v2950
        %v2952 = vpop.f32.mrf.mxu0
        %2953 = vmatprep.mubr.f32.mxu0 0.0
        %2954 = vmatmul.mubr.f32.gmra.mxu0 %v2386
        %v2955 = vpop.f32.mrf.mxu0
        %v2956 = vadd.f32 0.0, %v2955
        %v2957 = vpop.f32.mrf.mxu0
        %2958 = vmatprep.mubr.f32.mxu0 0.0
        %2959 = vmatmul.mubr.f32.gmra.mxu0 %v2389
        %v2960 = vpop.f32.mrf.mxu0
        %v2961 = vadd.f32 0.0, %v2960
        %v2962 = vpop.f32.mrf.mxu0
        %2963 = vmatprep.mubr.f32.mxu0 0.0
        %2964 = vmatmul.mubr.f32.gmra.mxu0 %v2392
        %v2965 = vpop.f32.mrf.mxu0
        %v2966 = vadd.f32 0.0, %v2965
        %v2967 = vpop.f32.mrf.mxu0
        %2968 = vmatprep.mubr.f32.mxu0 0.0
        %2969 = vmatmul.mubr.f32.gmra.mxu0 %v2395
        %v2970 = vpop.f32.mrf.mxu0
        %v2971 = vadd.f32 0.0, %v2970
        %v2972 = vpop.f32.mrf.mxu0
        %2973 = vmatprep.mubr.f32.mxu0 0.0
        %2974 = vmatmul.mubr.f32.gmra.mxu0 %v2398
        %v2975 = vpop.f32.mrf.mxu0
        %v2976 = vadd.f32 0.0, %v2975
        %v2977 = vpop.f32.mrf.mxu0
        %2978 = vmatprep.mubr.f32.mxu0 0.0
        %2979 = vmatmul.mubr.f32.gmra.mxu0 %v2401
        %v2980 = vpop.f32.mrf.mxu0
        %v2981 = vadd.f32 0.0, %v2980
        %v2982 = vpop.f32.mrf.mxu0
        %2983 = vmatprep.mubr.f32.mxu0 0.0
        %2984 = vmatmul.mubr.f32.gmra.mxu0 %v2404
        %v2985 = vpop.f32.mrf.mxu0
        %v2986 = vadd.f32 0.0, %v2985
        %v2987 = vpop.f32.mrf.mxu0
        %2988 = vmatprep.mubr.f32.mxu0 0.0
        %2989 = vmatmul.mubr.f32.gmra.mxu0 %v2407
        %v2990 = vpop.f32.mrf.mxu0
        %v2991 = vadd.f32 0.0, %v2990
        %v2992 = vpop.f32.mrf.mxu0
        %2993 = vmatprep.mubr.f32.mxu0 0.0
        %2994 = vmatmul.mubr.f32.gmra.mxu0 %v2410
        %v2995 = vpop.f32.mrf.mxu0
        %v2996 = vadd.f32 0.0, %v2995
        %v2997 = vpop.f32.mrf.mxu0
        %2998 = vmatprep.mubr.f32.mxu0 0.0
        %2999 = vmatmul.mubr.f32.gmra.mxu0 %v2413
        %v3000 = vpop.f32.mrf.mxu0
        %v3001 = vadd.f32 0.0, %v3000
        %v3002 = vpop.f32.mrf.mxu0
        %3003 = vmatprep.mubr.f32.mxu0 0.0
        %3004 = vmatmul.mubr.f32.gmra.mxu0 %v2416
        %v3005 = vpop.f32.mrf.mxu0
        %v3006 = vadd.f32 0.0, %v3005
        %v3007 = vpop.f32.mrf.mxu0
        %3008 = vmatprep.mubr.f32.mxu0 0.0
        %3009 = vmatmul.mubr.f32.gmra.mxu0 %v2419
        %v3010 = vpop.f32.mrf.mxu0
        %v3011 = vadd.f32 0.0, %v3010
        %v3012 = vpop.f32.mrf.mxu0
        %3013 = vmatprep.mubr.f32.mxu0 0.0
        %3014 = vmatmul.mubr.f32.gmra.mxu0 %v2422
        %v3015 = vpop.f32.mrf.mxu0
        %v3016 = vadd.f32 0.0, %v3015
        %v3017 = vpop.f32.mrf.mxu0
        %3018 = vmatprep.mubr.f32.mxu0 0.0
        %3019 = vmatmul.mubr.f32.gmra.mxu0 %v2425
        %v3020 = vpop.f32.mrf.mxu0
        %v3021 = vadd.f32 0.0, %v3020
        %v3022 = vpop.f32.mrf.mxu0
        %3023 = vmatprep.mubr.f32.mxu0 0.0
        %3024 = vmatmul.mubr.f32.gmra.mxu0 %v2428
        %v3025 = vpop.f32.mrf.mxu0
        %v3026 = vadd.f32 0.0, %v3025
        %v3027 = vpop.f32.mrf.mxu0
        %3028 = vmatprep.mubr.f32.mxu0 0.0
        %3029 = vmatmul.mubr.f32.gmra.mxu0 %v2431
        %v3030 = vpop.f32.mrf.mxu0
        %v3031 = vadd.f32 0.0, %v3030
        %v3032 = vpop.f32.mrf.mxu0
        %3033 = vmatprep.mubr.f32.mxu0 0.0
        %3034 = vmatmul.mubr.f32.gmra.mxu0 %v2434
        %v3035 = vpop.f32.mrf.mxu0
        %v3036 = vadd.f32 0.0, %v3035
        %v3037 = vpop.f32.mrf.mxu0
        %3038 = vmatprep.mubr.f32.mxu0 0.0
        %3039 = vmatmul.mubr.f32.gmra.mxu0 %v2437
        %v3040 = vpop.f32.mrf.mxu0
        %v3041 = vadd.f32 0.0, %v3040
        %v3042 = vpop.f32.mrf.mxu0
        %3043 = vmatprep.mubr.f32.mxu0 0.0
        %3044 = vmatmul.mubr.f32.gmra.mxu0 %v2440
        %v3045 = vpop.f32.mrf.mxu0
        %v3046 = vadd.f32 0.0, %v3045
        %v3047 = vpop.f32.mrf.mxu0
        %3048 = vmatprep.mubr.f32.mxu0 0.0
        %3049 = vmatmul.mubr.f32.gmra.mxu0 %v2443
        %v3050 = vpop.f32.mrf.mxu0
        %v3051 = vadd.f32 0.0, %v3050
        %v3052 = vpop.f32.mrf.mxu0
        %3053 = vmatprep.mubr.f32.mxu0 0.0
        %3054 = vmatmul.mubr.f32.gmra.mxu0 %v2446
        %v3055 = vpop.f32.mrf.mxu0
        %v3056 = vadd.f32 0.0, %v3055
        %v3057 = vpop.f32.mrf.mxu0
        %3058 = vmatprep.mubr.f32.mxu0 0.0
        %3059 = vmatmul.mubr.f32.gmra.mxu0 %v2449
        %v3060 = vpop.f32.mrf.mxu0
        %v3061 = vadd.f32 0.0, %v3060
        %v3062 = vpop.f32.mrf.mxu0
        %3063 = vmatprep.mubr.f32.mxu0 0.0
        %3064 = vmatmul.mubr.f32.gmra.mxu0 %v2452
        %v3065 = vpop.f32.mrf.mxu0
        %v3066 = vadd.f32 0.0, %v3065
        %v3067 = vpop.f32.mrf.mxu0
        %3068 = vmatprep.mubr.f32.mxu0 0.0
        %3069 = vmatmul.mubr.f32.gmra.mxu0 %v2455
        %v3070 = vpop.f32.mrf.mxu0
        %v3071 = vadd.f32 0.0, %v3070
        %v3072 = vpop.f32.mrf.mxu0
        %3073 = vmatprep.mubr.f32.mxu0 0.0
        %3074 = vmatmul.mubr.f32.gmra.mxu0 %v2458
        %v3075 = vpop.f32.mrf.mxu0
        %v3076 = vadd.f32 0.0, %v3075
        %v3077 = vpop.f32.mrf.mxu0
        %3078 = vmatprep.mubr.f32.mxu0 0.0
        %3079 = vmatmul.mubr.f32.gmra.mxu0 %v2461
        %v3080 = vpop.f32.mrf.mxu0
        %v3081 = vadd.f32 0.0, %v3080
        %v3082 = vpop.f32.mrf.mxu0
        %3083 = vmatprep.mubr.f32.mxu0 0.0
        %3084 = vmatmul.mubr.f32.gmra.mxu0 %v2464
        %v3085 = vpop.f32.mrf.mxu0
        %v3086 = vadd.f32 0.0, %v3085
        %v3087 = vpop.f32.mrf.mxu0
        %3088 = vmatprep.mubr.f32.mxu0 0.0
        %3089 = vmatmul.mubr.f32.gmra.mxu0 %v2467
        %v3090 = vpop.f32.mrf.mxu0
        %v3091 = vadd.f32 0.0, %v3090
        %v3092 = vpop.f32.mrf.mxu0
        %3093 = vmatprep.mubr.f32.mxu0 0.0
        %3094 = vmatmul.mubr.f32.gmra.mxu0 %v2470
        %v3095 = vpop.f32.mrf.mxu0
        %v3096 = vadd.f32 0.0, %v3095
        %v3097 = vpop.f32.mrf.mxu0
        %3098 = vmatprep.mubr.f32.mxu0 0.0
        %3099 = vmatmul.mubr.f32.gmra.mxu0 %v2473
        %v3100 = vpop.f32.mrf.mxu0
        %v3101 = vadd.f32 0.0, %v3100
        %v3102 = vpop.f32.mrf.mxu0
        %3103 = vdwg.mxu0
        %vm3152 = vcmask 1046528
        %v3153 = vrot.slane %v2866, 1
        %v3154 = vrot.slane %v2871, 1
        %v3155 = vsel %vm3152, %v3153, %v3154
        %v3156 = vrot.slane %v2876, 1
        %v3157 = vsel %vm3152, %v3154, %v3156
        %v3158 = vrot.slane %v2881, 1
        %v3159 = vrot.slane %v2886, 1
        %v3160 = vsel %vm3152, %v3158, %v3159
        %v3161 = vrot.slane %v2891, 1
        %v3162 = vsel %vm3152, %v3159, %v3161
        %v3163 = vrot.slane %v2896, 1
        %v3164 = vrot.slane %v2901, 1
        %v3165 = vsel %vm3152, %v3163, %v3164
        %v3166 = vrot.slane %v2906, 1
        %v3167 = vsel %vm3152, %v3164, %v3166
        %v3168 = vrot.slane %v2911, 1
        %v3169 = vrot.slane %v2916, 1
        %v3170 = vsel %vm3152, %v3168, %v3169
        %v3171 = vrot.slane %v2921, 1
        %v3172 = vsel %vm3152, %v3169, %v3171
        %v3173 = vrot.slane %v2926, 1
        %v3174 = vrot.slane %v2931, 1
        %v3175 = vsel %vm3152, %v3173, %v3174
        %v3176 = vrot.slane %v2936, 1
        %v3177 = vsel %vm3152, %v3174, %v3176
        %v3178 = vrot.slane %v2941, 1
        %v3179 = vrot.slane %v2946, 1
        %v3180 = vsel %vm3152, %v3178, %v3179
        %v3181 = vrot.slane %v2951, 1
        %v3182 = vsel %vm3152, %v3179, %v3181
        %v3183 = vrot.slane %v2956, 1
        %v3184 = vrot.slane %v2961, 1
        %v3185 = vsel %vm3152, %v3183, %v3184
        %v3186 = vrot.slane %v2966, 1
        %v3187 = vsel %vm3152, %v3184, %v3186
        %v3188 = vrot.slane %v2971, 1
        %v3189 = vrot.slane %v2976, 1
        %v3190 = vsel %vm3152, %v3188, %v3189
        %v3191 = vrot.slane %v2981, 1
        %v3192 = vsel %vm3152, %v3189, %v3191
        %v3193 = vrot.slane %v2986, 1
        %v3194 = vrot.slane %v2991, 1
        %v3195 = vsel %vm3152, %v3193, %v3194
        %v3196 = vrot.slane %v2996, 1
        %v3197 = vsel %vm3152, %v3194, %v3196
        %v3198 = vrot.slane %v3001, 1
        %v3199 = vrot.slane %v3006, 1
        %v3200 = vsel %vm3152, %v3198, %v3199
        %v3201 = vrot.slane %v3011, 1
        %v3202 = vsel %vm3152, %v3199, %v3201
        %v3203 = vrot.slane %v3016, 1
        %v3204 = vrot.slane %v3021, 1
        %v3205 = vsel %vm3152, %v3203, %v3204
        %v3206 = vrot.slane %v3026, 1
        %v3207 = vsel %vm3152, %v3204, %v3206
        %v3208 = vrot.slane %v3031, 1
        %v3209 = vrot.slane %v3036, 1
        %v3210 = vsel %vm3152, %v3208, %v3209
        %v3211 = vrot.slane %v3041, 1
        %v3212 = vsel %vm3152, %v3209, %v3211
        %v3213 = vrot.slane %v3046, 1
        %v3214 = vrot.slane %v3051, 1
        %v3215 = vsel %vm3152, %v3213, %v3214
        %v3216 = vrot.slane %v3056, 1
        %v3217 = vsel %vm3152, %v3214, %v3216
        %v3218 = vrot.slane %v3061, 1
        %v3219 = vrot.slane %v3066, 1
        %v3220 = vsel %vm3152, %v3218, %v3219
        %v3221 = vrot.slane %v3071, 1
        %v3222 = vsel %vm3152, %v3219, %v3221
        %v3223 = vrot.slane %v3076, 1
        %v3224 = vrot.slane %v3081, 1
        %v3225 = vsel %vm3152, %v3223, %v3224
        %v3226 = vrot.slane %v3086, 1
        %v3227 = vsel %vm3152, %v3224, %v3226
        %v3228 = vrot.slane %v3091, 1
        %v3229 = vrot.slane %v3096, 1
        %v3230 = vsel %vm3152, %v3228, %v3229
        %v3231 = vrot.slane %v3101, 1
        %v3232 = vsel %vm3152, %v3229, %v3231
        %v3265 = vadd.f32 %v2764, %v3155
        %v3266 = vadd.f32 %v2765, %v3157
        %v3267 = vadd.f32 %v2766, %v3160
        %v3268 = vadd.f32 %v2767, %v3162
        %v3269 = vadd.f32 %v2768, %v3165
        %v3270 = vadd.f32 %v2769, %v3167
        %v3271 = vadd.f32 %v2770, %v3170
        %v3272 = vadd.f32 %v2771, %v3172
        %v3273 = vadd.f32 %v2772, %v3175
        %v3274 = vadd.f32 %v2773, %v3177
        %v3275 = vadd.f32 %v2774, %v3180
        %v3276 = vadd.f32 %v2775, %v3182
        %v3277 = vadd.f32 %v2776, %v3185
        %v3278 = vadd.f32 %v2777, %v3187
        %v3279 = vadd.f32 %v2778, %v3190
        %v3280 = vadd.f32 %v2779, %v3192
        %v3281 = vadd.f32 %v2780, %v3195
        %v3282 = vadd.f32 %v2781, %v3197
        %v3283 = vadd.f32 %v2782, %v3200
        %v3284 = vadd.f32 %v2783, %v3202
        %v3285 = vadd.f32 %v2784, %v3205
        %v3286 = vadd.f32 %v2785, %v3207
        %v3287 = vadd.f32 %v2786, %v3210
        %v3288 = vadd.f32 %v2787, %v3212
        %v3289 = vadd.f32 %v2788, %v3215
        %v3290 = vadd.f32 %v2789, %v3217
        %v3291 = vadd.f32 %v2790, %v3220
        %v3292 = vadd.f32 %v2791, %v3222
        %v3293 = vadd.f32 %v2792, %v3225
        %v3294 = vadd.f32 %v2793, %v3227
        %v3295 = vadd.f32 %v2794, %v3230
        %v3296 = vadd.f32 %v2795, %v3232
        %s3297 = scalar_lea.vmem %s3, 32
        %v3298 = vld [vmem:[%s3297] sm:$0xff]
        %v3299 = vld [vmem:[%s3297 + $0x8] sm:$0xff]
        %3300 = vmatprep.subr.mxu0 0.0
        %3301 = vmatpush1.msra.mxu0 0.0
        %3302 = vmatprep.subr.mxu0 0.0
        %3303 = vmatpush1.msra.mxu0 0.0
        %3304 = vmatprep.subr.mxu0 0.0
        %3305 = vmatpush1.msra.mxu0 0.0
        %3306 = vmatprep.subr.mxu0 0.0
        %3307 = vmatpush1.msra.mxu0 0.0
        %3308 = vmatprep.subr.mxu0 0.0
        %3309 = vmatpush1.msra.mxu0 0.0
        %3310 = vmatprep.subr.mxu0 0.0
        %3311 = vmatpush1.msra.mxu0 0.0
        %3312 = vmatprep.subr.mxu0 0.0
        %3313 = vmatpush1.msra.mxu0 0.0
        %3314 = vmatprep.subr.mxu0 0.0
        %3315 = vmatpush1.msra.mxu0 0.0
        %3316 = vmatprep.subr.mxu0 0.0
        %3317 = vmatpush1.msra.mxu0 0.0
        %3318 = vmatprep.subr.mxu0 0.0
        %3319 = vmatpush1.msra.mxu0 0.0
        %3320 = vmatprep.subr.mxu0 0.0
        %3321 = vmatpush1.msra.mxu0 0.0
        %3322 = vmatprep.subr.mxu0 0.0
        %3323 = vmatpush1.msra.mxu0 0.0
        %3324 = vmatprep.subr.mxu0 0.0
        %3325 = vmatpush1.msra.mxu0 0.0
        %3326 = vmatprep.subr.mxu0 0.0
        %3327 = vmatpush1.msra.mxu0 0.0
        %3328 = vmatprep.subr.mxu0 0.0
        %3329 = vmatpush1.msra.mxu0 %v3299
        %3330 = vmatprep.subr.mxu0 0.0
        %3331 = vmatpush1.msra.mxu0 %v3298
        %3332 = vmatprep.subr.mxu0 0.0
        %3333 = vmatpush2.msra.mxu0 0.0
        %3334 = vmatprep.subr.mxu0 0.0
        %3335 = vmatpush2.msra.mxu0 0.0
        %3336 = vmatprep.subr.mxu0 0.0
        %3337 = vmatpush2.msra.mxu0 0.0
        %3338 = vmatprep.subr.mxu0 0.0
        %3339 = vmatpush2.msra.mxu0 0.0
        %3340 = vmatprep.subr.mxu0 0.0
        %3341 = vmatpush2.msra.mxu0 0.0
        %3342 = vmatprep.subr.mxu0 0.0
        %3343 = vmatpush2.msra.mxu0 0.0
        %3344 = vmatprep.subr.mxu0 0.0
        %3345 = vmatpush2.msra.mxu0 0.0
        %3346 = vmatprep.subr.mxu0 0.0
        %3347 = vmatpush2.msra.mxu0 0.0
        %3348 = vmatprep.subr.mxu0 0.0
        %3349 = vmatpush2.msra.mxu0 0.0
        %3350 = vmatprep.subr.mxu0 0.0
        %3351 = vmatpush2.msra.mxu0 0.0
        %3352 = vmatprep.subr.mxu0 0.0
        %3353 = vmatpush2.msra.mxu0 0.0
        %3354 = vmatprep.subr.mxu0 0.0
        %3355 = vmatpush2.msra.mxu0 0.0
        %3356 = vmatprep.subr.mxu0 0.0
        %3357 = vmatpush2.msra.mxu0 0.0
        %3358 = vmatprep.subr.mxu0 0.0
        %3359 = vmatpush2.msra.mxu0 0.0
        %3360 = vmatprep.subr.mxu0 0.0
        %3361 = vmatpush2.msra.mxu0 0.0
        %3362 = vmatprep.subr.mxu0 0.0
        %3363 = vmatpush2.msra.mxu0 0.0
        %3364 = vmatprep.mubr.f32.mxu0 0.0
        %3365 = vmatmul.mubr.f32.gmra.mxu0 %v2332
        %v3366 = vpop.f32.mrf.mxu0
        %v3367 = vadd.f32 0.0, %v3366
        %v3368 = vpop.f32.mrf.mxu0
        %3369 = vmatprep.mubr.f32.mxu0 0.0
        %3370 = vmatmul.mubr.f32.gmra.mxu0 %v2335
        %v3371 = vpop.f32.mrf.mxu0
        %v3372 = vadd.f32 0.0, %v3371
        %v3373 = vpop.f32.mrf.mxu0
        %3374 = vmatprep.mubr.f32.mxu0 0.0
        %3375 = vmatmul.mubr.f32.gmra.mxu0 %v2338
        %v3376 = vpop.f32.mrf.mxu0
        %v3377 = vadd.f32 0.0, %v3376
        %v3378 = vpop.f32.mrf.mxu0
        %3379 = vmatprep.mubr.f32.mxu0 0.0
        %3380 = vmatmul.mubr.f32.gmra.mxu0 %v2341
        %v3381 = vpop.f32.mrf.mxu0
        %v3382 = vadd.f32 0.0, %v3381
        %v3383 = vpop.f32.mrf.mxu0
        %3384 = vmatprep.mubr.f32.mxu0 0.0
        %3385 = vmatmul.mubr.f32.gmra.mxu0 %v2344
        %v3386 = vpop.f32.mrf.mxu0
        %v3387 = vadd.f32 0.0, %v3386
        %v3388 = vpop.f32.mrf.mxu0
        %3389 = vmatprep.mubr.f32.mxu0 0.0
        %3390 = vmatmul.mubr.f32.gmra.mxu0 %v2347
        %v3391 = vpop.f32.mrf.mxu0
        %v3392 = vadd.f32 0.0, %v3391
        %v3393 = vpop.f32.mrf.mxu0
        %3394 = vmatprep.mubr.f32.mxu0 0.0
        %3395 = vmatmul.mubr.f32.gmra.mxu0 %v2350
        %v3396 = vpop.f32.mrf.mxu0
        %v3397 = vadd.f32 0.0, %v3396
        %v3398 = vpop.f32.mrf.mxu0
        %3399 = vmatprep.mubr.f32.mxu0 0.0
        %3400 = vmatmul.mubr.f32.gmra.mxu0 %v2353
        %v3401 = vpop.f32.mrf.mxu0
        %v3402 = vadd.f32 0.0, %v3401
        %v3403 = vpop.f32.mrf.mxu0
        %3404 = vmatprep.mubr.f32.mxu0 0.0
        %3405 = vmatmul.mubr.f32.gmra.mxu0 %v2356
        %v3406 = vpop.f32.mrf.mxu0
        %v3407 = vadd.f32 0.0, %v3406
        %v3408 = vpop.f32.mrf.mxu0
        %3409 = vmatprep.mubr.f32.mxu0 0.0
        %3410 = vmatmul.mubr.f32.gmra.mxu0 %v2359
        %v3411 = vpop.f32.mrf.mxu0
        %v3412 = vadd.f32 0.0, %v3411
        %v3413 = vpop.f32.mrf.mxu0
        %3414 = vmatprep.mubr.f32.mxu0 0.0
        %3415 = vmatmul.mubr.f32.gmra.mxu0 %v2362
        %v3416 = vpop.f32.mrf.mxu0
        %v3417 = vadd.f32 0.0, %v3416
        %v3418 = vpop.f32.mrf.mxu0
        %3419 = vmatprep.mubr.f32.mxu0 0.0
        %3420 = vmatmul.mubr.f32.gmra.mxu0 %v2365
        %v3421 = vpop.f32.mrf.mxu0
        %v3422 = vadd.f32 0.0, %v3421
        %v3423 = vpop.f32.mrf.mxu0
        %3424 = vmatprep.mubr.f32.mxu0 0.0
        %3425 = vmatmul.mubr.f32.gmra.mxu0 %v2368
        %v3426 = vpop.f32.mrf.mxu0
        %v3427 = vadd.f32 0.0, %v3426
        %v3428 = vpop.f32.mrf.mxu0
        %3429 = vmatprep.mubr.f32.mxu0 0.0
        %3430 = vmatmul.mubr.f32.gmra.mxu0 %v2371
        %v3431 = vpop.f32.mrf.mxu0
        %v3432 = vadd.f32 0.0, %v3431
        %v3433 = vpop.f32.mrf.mxu0
        %3434 = vmatprep.mubr.f32.mxu0 0.0
        %3435 = vmatmul.mubr.f32.gmra.mxu0 %v2374
        %v3436 = vpop.f32.mrf.mxu0
        %v3437 = vadd.f32 0.0, %v3436
        %v3438 = vpop.f32.mrf.mxu0
        %3439 = vmatprep.mubr.f32.mxu0 0.0
        %3440 = vmatmul.mubr.f32.gmra.mxu0 %v2377
        %v3441 = vpop.f32.mrf.mxu0
        %v3442 = vadd.f32 0.0, %v3441
        %v3443 = vpop.f32.mrf.mxu0
        %3444 = vmatprep.mubr.f32.mxu0 0.0
        %3445 = vmatmul.mubr.f32.gmra.mxu0 %v2380
        %v3446 = vpop.f32.mrf.mxu0
        %v3447 = vadd.f32 0.0, %v3446
        %v3448 = vpop.f32.mrf.mxu0
        %3449 = vmatprep.mubr.f32.mxu0 0.0
        %3450 = vmatmul.mubr.f32.gmra.mxu0 %v2383
        %v3451 = vpop.f32.mrf.mxu0
        %v3452 = vadd.f32 0.0, %v3451
        %v3453 = vpop.f32.mrf.mxu0
        %3454 = vmatprep.mubr.f32.mxu0 0.0
        %3455 = vmatmul.mubr.f32.gmra.mxu0 %v2386
        %v3456 = vpop.f32.mrf.mxu0
        %v3457 = vadd.f32 0.0, %v3456
        %v3458 = vpop.f32.mrf.mxu0
        %3459 = vmatprep.mubr.f32.mxu0 0.0
        %3460 = vmatmul.mubr.f32.gmra.mxu0 %v2389
        %v3461 = vpop.f32.mrf.mxu0
        %v3462 = vadd.f32 0.0, %v3461
        %v3463 = vpop.f32.mrf.mxu0
        %3464 = vmatprep.mubr.f32.mxu0 0.0
        %3465 = vmatmul.mubr.f32.gmra.mxu0 %v2392
        %v3466 = vpop.f32.mrf.mxu0
        %v3467 = vadd.f32 0.0, %v3466
        %v3468 = vpop.f32.mrf.mxu0
        %3469 = vmatprep.mubr.f32.mxu0 0.0
        %3470 = vmatmul.mubr.f32.gmra.mxu0 %v2395
        %v3471 = vpop.f32.mrf.mxu0
        %v3472 = vadd.f32 0.0, %v3471
        %v3473 = vpop.f32.mrf.mxu0
        %3474 = vmatprep.mubr.f32.mxu0 0.0
        %3475 = vmatmul.mubr.f32.gmra.mxu0 %v2398
        %v3476 = vpop.f32.mrf.mxu0
        %v3477 = vadd.f32 0.0, %v3476
        %v3478 = vpop.f32.mrf.mxu0
        %3479 = vmatprep.mubr.f32.mxu0 0.0
        %3480 = vmatmul.mubr.f32.gmra.mxu0 %v2401
        %v3481 = vpop.f32.mrf.mxu0
        %v3482 = vadd.f32 0.0, %v3481
        %v3483 = vpop.f32.mrf.mxu0
        %3484 = vmatprep.mubr.f32.mxu0 0.0
        %3485 = vmatmul.mubr.f32.gmra.mxu0 %v2404
        %v3486 = vpop.f32.mrf.mxu0
        %v3487 = vadd.f32 0.0, %v3486
        %v3488 = vpop.f32.mrf.mxu0
        %3489 = vmatprep.mubr.f32.mxu0 0.0
        %3490 = vmatmul.mubr.f32.gmra.mxu0 %v2407
        %v3491 = vpop.f32.mrf.mxu0
        %v3492 = vadd.f32 0.0, %v3491
        %v3493 = vpop.f32.mrf.mxu0
        %3494 = vmatprep.mubr.f32.mxu0 0.0
        %3495 = vmatmul.mubr.f32.gmra.mxu0 %v2410
        %v3496 = vpop.f32.mrf.mxu0
        %v3497 = vadd.f32 0.0, %v3496
        %v3498 = vpop.f32.mrf.mxu0
        %3499 = vmatprep.mubr.f32.mxu0 0.0
        %3500 = vmatmul.mubr.f32.gmra.mxu0 %v2413
        %v3501 = vpop.f32.mrf.mxu0
        %v3502 = vadd.f32 0.0, %v3501
        %v3503 = vpop.f32.mrf.mxu0
        %3504 = vmatprep.mubr.f32.mxu0 0.0
        %3505 = vmatmul.mubr.f32.gmra.mxu0 %v2416
        %v3506 = vpop.f32.mrf.mxu0
        %v3507 = vadd.f32 0.0, %v3506
        %v3508 = vpop.f32.mrf.mxu0
        %3509 = vmatprep.mubr.f32.mxu0 0.0
        %3510 = vmatmul.mubr.f32.gmra.mxu0 %v2419
        %v3511 = vpop.f32.mrf.mxu0
        %v3512 = vadd.f32 0.0, %v3511
        %v3513 = vpop.f32.mrf.mxu0
        %3514 = vmatprep.mubr.f32.mxu0 0.0
        %3515 = vmatmul.mubr.f32.gmra.mxu0 %v2422
        %v3516 = vpop.f32.mrf.mxu0
        %v3517 = vadd.f32 0.0, %v3516
        %v3518 = vpop.f32.mrf.mxu0
        %3519 = vmatprep.mubr.f32.mxu0 0.0
        %3520 = vmatmul.mubr.f32.gmra.mxu0 %v2425
        %v3521 = vpop.f32.mrf.mxu0
        %v3522 = vadd.f32 0.0, %v3521
        %v3523 = vpop.f32.mrf.mxu0
        %3524 = vmatprep.mubr.f32.mxu0 0.0
        %3525 = vmatmul.mubr.f32.gmra.mxu0 %v2428
        %v3526 = vpop.f32.mrf.mxu0
        %v3527 = vadd.f32 0.0, %v3526
        %v3528 = vpop.f32.mrf.mxu0
        %3529 = vmatprep.mubr.f32.mxu0 0.0
        %3530 = vmatmul.mubr.f32.gmra.mxu0 %v2431
        %v3531 = vpop.f32.mrf.mxu0
        %v3532 = vadd.f32 0.0, %v3531
        %v3533 = vpop.f32.mrf.mxu0
        %3534 = vmatprep.mubr.f32.mxu0 0.0
        %3535 = vmatmul.mubr.f32.gmra.mxu0 %v2434
        %v3536 = vpop.f32.mrf.mxu0
        %v3537 = vadd.f32 0.0, %v3536
        %v3538 = vpop.f32.mrf.mxu0
        %3539 = vmatprep.mubr.f32.mxu0 0.0
        %3540 = vmatmul.mubr.f32.gmra.mxu0 %v2437
        %v3541 = vpop.f32.mrf.mxu0
        %v3542 = vadd.f32 0.0, %v3541
        %v3543 = vpop.f32.mrf.mxu0
        %3544 = vmatprep.mubr.f32.mxu0 0.0
        %3545 = vmatmul.mubr.f32.gmra.mxu0 %v2440
        %v3546 = vpop.f32.mrf.mxu0
        %v3547 = vadd.f32 0.0, %v3546
        %v3548 = vpop.f32.mrf.mxu0
        %3549 = vmatprep.mubr.f32.mxu0 0.0
        %3550 = vmatmul.mubr.f32.gmra.mxu0 %v2443
        %v3551 = vpop.f32.mrf.mxu0
        %v3552 = vadd.f32 0.0, %v3551
        %v3553 = vpop.f32.mrf.mxu0
        %3554 = vmatprep.mubr.f32.mxu0 0.0
        %3555 = vmatmul.mubr.f32.gmra.mxu0 %v2446
        %v3556 = vpop.f32.mrf.mxu0
        %v3557 = vadd.f32 0.0, %v3556
        %v3558 = vpop.f32.mrf.mxu0
        %3559 = vmatprep.mubr.f32.mxu0 0.0
        %3560 = vmatmul.mubr.f32.gmra.mxu0 %v2449
        %v3561 = vpop.f32.mrf.mxu0
        %v3562 = vadd.f32 0.0, %v3561
        %v3563 = vpop.f32.mrf.mxu0
        %3564 = vmatprep.mubr.f32.mxu0 0.0
        %3565 = vmatmul.mubr.f32.gmra.mxu0 %v2452
        %v3566 = vpop.f32.mrf.mxu0
        %v3567 = vadd.f32 0.0, %v3566
        %v3568 = vpop.f32.mrf.mxu0
        %3569 = vmatprep.mubr.f32.mxu0 0.0
        %3570 = vmatmul.mubr.f32.gmra.mxu0 %v2455
        %v3571 = vpop.f32.mrf.mxu0
        %v3572 = vadd.f32 0.0, %v3571
        %v3573 = vpop.f32.mrf.mxu0
        %3574 = vmatprep.mubr.f32.mxu0 0.0
        %3575 = vmatmul.mubr.f32.gmra.mxu0 %v2458
        %v3576 = vpop.f32.mrf.mxu0
        %v3577 = vadd.f32 0.0, %v3576
        %v3578 = vpop.f32.mrf.mxu0
        %3579 = vmatprep.mubr.f32.mxu0 0.0
        %3580 = vmatmul.mubr.f32.gmra.mxu0 %v2461
        %v3581 = vpop.f32.mrf.mxu0
        %v3582 = vadd.f32 0.0, %v3581
        %v3583 = vpop.f32.mrf.mxu0
        %3584 = vmatprep.mubr.f32.mxu0 0.0
        %3585 = vmatmul.mubr.f32.gmra.mxu0 %v2464
        %v3586 = vpop.f32.mrf.mxu0
        %v3587 = vadd.f32 0.0, %v3586
        %v3588 = vpop.f32.mrf.mxu0
        %3589 = vmatprep.mubr.f32.mxu0 0.0
        %3590 = vmatmul.mubr.f32.gmra.mxu0 %v2467
        %v3591 = vpop.f32.mrf.mxu0
        %v3592 = vadd.f32 0.0, %v3591
        %v3593 = vpop.f32.mrf.mxu0
        %3594 = vmatprep.mubr.f32.mxu0 0.0
        %3595 = vmatmul.mubr.f32.gmra.mxu0 %v2470
        %v3596 = vpop.f32.mrf.mxu0
        %v3597 = vadd.f32 0.0, %v3596
        %v3598 = vpop.f32.mrf.mxu0
        %3599 = vmatprep.mubr.f32.mxu0 0.0
        %3600 = vmatmul.mubr.f32.gmra.mxu0 %v2473
        %v3601 = vpop.f32.mrf.mxu0
        %v3602 = vadd.f32 0.0, %v3601
        %v3603 = vpop.f32.mrf.mxu0
        %3604 = vdwg.mxu0
        %vm3653 = vcmask 1045504
        %v3654 = vrot.slane %v3367, 2
        %v3655 = vrot.slane %v3372, 2
        %v3656 = vsel %vm3653, %v3654, %v3655
        %v3657 = vrot.slane %v3377, 2
        %v3658 = vsel %vm3653, %v3655, %v3657
        %v3659 = vrot.slane %v3382, 2
        %v3660 = vrot.slane %v3387, 2
        %v3661 = vsel %vm3653, %v3659, %v3660
        %v3662 = vrot.slane %v3392, 2
        %v3663 = vsel %vm3653, %v3660, %v3662
        %v3664 = vrot.slane %v3397, 2
        %v3665 = vrot.slane %v3402, 2
        %v3666 = vsel %vm3653, %v3664, %v3665
        %v3667 = vrot.slane %v3407, 2
        %v3668 = vsel %vm3653, %v3665, %v3667
        %v3669 = vrot.slane %v3412, 2
        %v3670 = vrot.slane %v3417, 2
        %v3671 = vsel %vm3653, %v3669, %v3670
        %v3672 = vrot.slane %v3422, 2
        %v3673 = vsel %vm3653, %v3670, %v3672
        %v3674 = vrot.slane %v3427, 2
        %v3675 = vrot.slane %v3432, 2
        %v3676 = vsel %vm3653, %v3674, %v3675
        %v3677 = vrot.slane %v3437, 2
        %v3678 = vsel %vm3653, %v3675, %v3677
        %v3679 = vrot.slane %v3442, 2
        %v3680 = vrot.slane %v3447, 2
        %v3681 = vsel %vm3653, %v3679, %v3680
        %v3682 = vrot.slane %v3452, 2
        %v3683 = vsel %vm3653, %v3680, %v3682
        %v3684 = vrot.slane %v3457, 2
        %v3685 = vrot.slane %v3462, 2
        %v3686 = vsel %vm3653, %v3684, %v3685
        %v3687 = vrot.slane %v3467, 2
        %v3688 = vsel %vm3653, %v3685, %v3687
        %v3689 = vrot.slane %v3472, 2
        %v3690 = vrot.slane %v3477, 2
        %v3691 = vsel %vm3653, %v3689, %v3690
        %v3692 = vrot.slane %v3482, 2
        %v3693 = vsel %vm3653, %v3690, %v3692
        %v3694 = vrot.slane %v3487, 2
        %v3695 = vrot.slane %v3492, 2
        %v3696 = vsel %vm3653, %v3694, %v3695
        %v3697 = vrot.slane %v3497, 2
        %v3698 = vsel %vm3653, %v3695, %v3697
        %v3699 = vrot.slane %v3502, 2
        %v3700 = vrot.slane %v3507, 2
        %v3701 = vsel %vm3653, %v3699, %v3700
        %v3702 = vrot.slane %v3512, 2
        %v3703 = vsel %vm3653, %v3700, %v3702
        %v3704 = vrot.slane %v3517, 2
        %v3705 = vrot.slane %v3522, 2
        %v3706 = vsel %vm3653, %v3704, %v3705
        %v3707 = vrot.slane %v3527, 2
        %v3708 = vsel %vm3653, %v3705, %v3707
        %v3709 = vrot.slane %v3532, 2
        %v3710 = vrot.slane %v3537, 2
        %v3711 = vsel %vm3653, %v3709, %v3710
        %v3712 = vrot.slane %v3542, 2
        %v3713 = vsel %vm3653, %v3710, %v3712
        %v3714 = vrot.slane %v3547, 2
        %v3715 = vrot.slane %v3552, 2
        %v3716 = vsel %vm3653, %v3714, %v3715
        %v3717 = vrot.slane %v3557, 2
        %v3718 = vsel %vm3653, %v3715, %v3717
        %v3719 = vrot.slane %v3562, 2
        %v3720 = vrot.slane %v3567, 2
        %v3721 = vsel %vm3653, %v3719, %v3720
        %v3722 = vrot.slane %v3572, 2
        %v3723 = vsel %vm3653, %v3720, %v3722
        %v3724 = vrot.slane %v3577, 2
        %v3725 = vrot.slane %v3582, 2
        %v3726 = vsel %vm3653, %v3724, %v3725
        %v3727 = vrot.slane %v3587, 2
        %v3728 = vsel %vm3653, %v3725, %v3727
        %v3729 = vrot.slane %v3592, 2
        %v3730 = vrot.slane %v3597, 2
        %v3731 = vsel %vm3653, %v3729, %v3730
        %v3732 = vrot.slane %v3602, 2
        %v3733 = vsel %vm3653, %v3730, %v3732
        %v3766 = vadd.f32 %v3265, %v3656
        %v3767 = vadd.f32 %v3266, %v3658
        %v3768 = vadd.f32 %v3267, %v3661
        %v3769 = vadd.f32 %v3268, %v3663
        %v3770 = vadd.f32 %v3269, %v3666
        %v3771 = vadd.f32 %v3270, %v3668
        %v3772 = vadd.f32 %v3271, %v3671
        %v3773 = vadd.f32 %v3272, %v3673
        %v3774 = vadd.f32 %v3273, %v3676
        %v3775 = vadd.f32 %v3274, %v3678
        %v3776 = vadd.f32 %v3275, %v3681
        %v3777 = vadd.f32 %v3276, %v3683
        %v3778 = vadd.f32 %v3277, %v3686
        %v3779 = vadd.f32 %v3278, %v3688
        %v3780 = vadd.f32 %v3279, %v3691
        %v3781 = vadd.f32 %v3280, %v3693
        %v3782 = vadd.f32 %v3281, %v3696
        %v3783 = vadd.f32 %v3282, %v3698
        %v3784 = vadd.f32 %v3283, %v3701
        %v3785 = vadd.f32 %v3284, %v3703
        %v3786 = vadd.f32 %v3285, %v3706
        %v3787 = vadd.f32 %v3286, %v3708
        %v3788 = vadd.f32 %v3287, %v3711
        %v3789 = vadd.f32 %v3288, %v3713
        %v3790 = vadd.f32 %v3289, %v3716
        %v3791 = vadd.f32 %v3290, %v3718
        %v3792 = vadd.f32 %v3291, %v3721
        %v3793 = vadd.f32 %v3292, %v3723
        %v3794 = vadd.f32 %v3293, %v3726
        %v3795 = vadd.f32 %v3294, %v3728
        %v3796 = vadd.f32 %v3295, %v3731
        %v3797 = vadd.f32 %v3296, %v3733
        %s3798 = scalar_lea.vmem %s3, 48
        %v3799 = vld [vmem:[%s3798] sm:$0xff]
        %v3800 = vld [vmem:[%s3798 + $0x8] sm:$0xff]
        %3801 = vmatprep.subr.mxu0 0.0
        %3802 = vmatpush1.msra.mxu0 0.0
        %3803 = vmatprep.subr.mxu0 0.0
        %3804 = vmatpush1.msra.mxu0 0.0
        %3805 = vmatprep.subr.mxu0 0.0
        %3806 = vmatpush1.msra.mxu0 0.0
        %3807 = vmatprep.subr.mxu0 0.0
        %3808 = vmatpush1.msra.mxu0 0.0
        %3809 = vmatprep.subr.mxu0 0.0
        %3810 = vmatpush1.msra.mxu0 0.0
        %3811 = vmatprep.subr.mxu0 0.0
        %3812 = vmatpush1.msra.mxu0 0.0
        %3813 = vmatprep.subr.mxu0 0.0
        %3814 = vmatpush1.msra.mxu0 0.0
        %3815 = vmatprep.subr.mxu0 0.0
        %3816 = vmatpush1.msra.mxu0 0.0
        %3817 = vmatprep.subr.mxu0 0.0
        %3818 = vmatpush1.msra.mxu0 0.0
        %3819 = vmatprep.subr.mxu0 0.0
        %3820 = vmatpush1.msra.mxu0 0.0
        %3821 = vmatprep.subr.mxu0 0.0
        %3822 = vmatpush1.msra.mxu0 0.0
        %3823 = vmatprep.subr.mxu0 0.0
        %3824 = vmatpush1.msra.mxu0 0.0
        %3825 = vmatprep.subr.mxu0 0.0
        %3826 = vmatpush1.msra.mxu0 0.0
        %3827 = vmatprep.subr.mxu0 0.0
        %3828 = vmatpush1.msra.mxu0 0.0
        %3829 = vmatprep.subr.mxu0 0.0
        %3830 = vmatpush1.msra.mxu0 %v3800
        %3831 = vmatprep.subr.mxu0 0.0
        %3832 = vmatpush1.msra.mxu0 %v3799
        %3833 = vmatprep.subr.mxu0 0.0
        %3834 = vmatpush2.msra.mxu0 0.0
        %3835 = vmatprep.subr.mxu0 0.0
        %3836 = vmatpush2.msra.mxu0 0.0
        %3837 = vmatprep.subr.mxu0 0.0
        %3838 = vmatpush2.msra.mxu0 0.0
        %3839 = vmatprep.subr.mxu0 0.0
        %3840 = vmatpush2.msra.mxu0 0.0
        %3841 = vmatprep.subr.mxu0 0.0
        %3842 = vmatpush2.msra.mxu0 0.0
        %3843 = vmatprep.subr.mxu0 0.0
        %3844 = vmatpush2.msra.mxu0 0.0
        %3845 = vmatprep.subr.mxu0 0.0
        %3846 = vmatpush2.msra.mxu0 0.0
        %3847 = vmatprep.subr.mxu0 0.0
        %3848 = vmatpush2.msra.mxu0 0.0
        %3849 = vmatprep.subr.mxu0 0.0
        %3850 = vmatpush2.msra.mxu0 0.0
        %3851 = vmatprep.subr.mxu0 0.0
        %3852 = vmatpush2.msra.mxu0 0.0
        %3853 = vmatprep.subr.mxu0 0.0
        %3854 = vmatpush2.msra.mxu0 0.0
        %3855 = vmatprep.subr.mxu0 0.0
        %3856 = vmatpush2.msra.mxu0 0.0
        %3857 = vmatprep.subr.mxu0 0.0
        %3858 = vmatpush2.msra.mxu0 0.0
        %3859 = vmatprep.subr.mxu0 0.0
        %3860 = vmatpush2.msra.mxu0 0.0
        %3861 = vmatprep.subr.mxu0 0.0
        %3862 = vmatpush2.msra.mxu0 0.0
        %3863 = vmatprep.subr.mxu0 0.0
        %3864 = vmatpush2.msra.mxu0 0.0
        %3865 = vmatprep.mubr.f32.mxu0 0.0
        %3866 = vmatmul.mubr.f32.gmra.mxu0 %v2332
        %v3867 = vpop.f32.mrf.mxu0
        %v3868 = vadd.f32 0.0, %v3867
        %v3869 = vpop.f32.mrf.mxu0
        %3870 = vmatprep.mubr.f32.mxu0 0.0
        %3871 = vmatmul.mubr.f32.gmra.mxu0 %v2335
        %v3872 = vpop.f32.mrf.mxu0
        %v3873 = vadd.f32 0.0, %v3872
        %v3874 = vpop.f32.mrf.mxu0
        %3875 = vmatprep.mubr.f32.mxu0 0.0
        %3876 = vmatmul.mubr.f32.gmra.mxu0 %v2338
        %v3877 = vpop.f32.mrf.mxu0
        %v3878 = vadd.f32 0.0, %v3877
        %v3879 = vpop.f32.mrf.mxu0
        %3880 = vmatprep.mubr.f32.mxu0 0.0
        %3881 = vmatmul.mubr.f32.gmra.mxu0 %v2341
        %v3882 = vpop.f32.mrf.mxu0
        %v3883 = vadd.f32 0.0, %v3882
        %v3884 = vpop.f32.mrf.mxu0
        %3885 = vmatprep.mubr.f32.mxu0 0.0
        %3886 = vmatmul.mubr.f32.gmra.mxu0 %v2344
        %v3887 = vpop.f32.mrf.mxu0
        %v3888 = vadd.f32 0.0, %v3887
        %v3889 = vpop.f32.mrf.mxu0
        %3890 = vmatprep.mubr.f32.mxu0 0.0
        %3891 = vmatmul.mubr.f32.gmra.mxu0 %v2347
        %v3892 = vpop.f32.mrf.mxu0
        %v3893 = vadd.f32 0.0, %v3892
        %v3894 = vpop.f32.mrf.mxu0
        %3895 = vmatprep.mubr.f32.mxu0 0.0
        %3896 = vmatmul.mubr.f32.gmra.mxu0 %v2350
        %v3897 = vpop.f32.mrf.mxu0
        %v3898 = vadd.f32 0.0, %v3897
        %v3899 = vpop.f32.mrf.mxu0
        %3900 = vmatprep.mubr.f32.mxu0 0.0
        %3901 = vmatmul.mubr.f32.gmra.mxu0 %v2353
        %v3902 = vpop.f32.mrf.mxu0
        %v3903 = vadd.f32 0.0, %v3902
        %v3904 = vpop.f32.mrf.mxu0
        %3905 = vmatprep.mubr.f32.mxu0 0.0
        %3906 = vmatmul.mubr.f32.gmra.mxu0 %v2356
        %v3907 = vpop.f32.mrf.mxu0
        %v3908 = vadd.f32 0.0, %v3907
        %v3909 = vpop.f32.mrf.mxu0
        %3910 = vmatprep.mubr.f32.mxu0 0.0
        %3911 = vmatmul.mubr.f32.gmra.mxu0 %v2359
        %v3912 = vpop.f32.mrf.mxu0
        %v3913 = vadd.f32 0.0, %v3912
        %v3914 = vpop.f32.mrf.mxu0
        %3915 = vmatprep.mubr.f32.mxu0 0.0
        %3916 = vmatmul.mubr.f32.gmra.mxu0 %v2362
        %v3917 = vpop.f32.mrf.mxu0
        %v3918 = vadd.f32 0.0, %v3917
        %v3919 = vpop.f32.mrf.mxu0
        %3920 = vmatprep.mubr.f32.mxu0 0.0
        %3921 = vmatmul.mubr.f32.gmra.mxu0 %v2365
        %v3922 = vpop.f32.mrf.mxu0
        %v3923 = vadd.f32 0.0, %v3922
        %v3924 = vpop.f32.mrf.mxu0
        %3925 = vmatprep.mubr.f32.mxu0 0.0
        %3926 = vmatmul.mubr.f32.gmra.mxu0 %v2368
        %v3927 = vpop.f32.mrf.mxu0
        %v3928 = vadd.f32 0.0, %v3927
        %v3929 = vpop.f32.mrf.mxu0
        %3930 = vmatprep.mubr.f32.mxu0 0.0
        %3931 = vmatmul.mubr.f32.gmra.mxu0 %v2371
        %v3932 = vpop.f32.mrf.mxu0
        %v3933 = vadd.f32 0.0, %v3932
        %v3934 = vpop.f32.mrf.mxu0
        %3935 = vmatprep.mubr.f32.mxu0 0.0
        %3936 = vmatmul.mubr.f32.gmra.mxu0 %v2374
        %v3937 = vpop.f32.mrf.mxu0
        %v3938 = vadd.f32 0.0, %v3937
        %v3939 = vpop.f32.mrf.mxu0
        %3940 = vmatprep.mubr.f32.mxu0 0.0
        %3941 = vmatmul.mubr.f32.gmra.mxu0 %v2377
        %v3942 = vpop.f32.mrf.mxu0
        %v3943 = vadd.f32 0.0, %v3942
        %v3944 = vpop.f32.mrf.mxu0
        %3945 = vmatprep.mubr.f32.mxu0 0.0
        %3946 = vmatmul.mubr.f32.gmra.mxu0 %v2380
        %v3947 = vpop.f32.mrf.mxu0
        %v3948 = vadd.f32 0.0, %v3947
        %v3949 = vpop.f32.mrf.mxu0
        %3950 = vmatprep.mubr.f32.mxu0 0.0
        %3951 = vmatmul.mubr.f32.gmra.mxu0 %v2383
        %v3952 = vpop.f32.mrf.mxu0
        %v3953 = vadd.f32 0.0, %v3952
        %v3954 = vpop.f32.mrf.mxu0
        %3955 = vmatprep.mubr.f32.mxu0 0.0
        %3956 = vmatmul.mubr.f32.gmra.mxu0 %v2386
        %v3957 = vpop.f32.mrf.mxu0
        %v3958 = vadd.f32 0.0, %v3957
        %v3959 = vpop.f32.mrf.mxu0
        %3960 = vmatprep.mubr.f32.mxu0 0.0
        %3961 = vmatmul.mubr.f32.gmra.mxu0 %v2389
        %v3962 = vpop.f32.mrf.mxu0
        %v3963 = vadd.f32 0.0, %v3962
        %v3964 = vpop.f32.mrf.mxu0
        %3965 = vmatprep.mubr.f32.mxu0 0.0
        %3966 = vmatmul.mubr.f32.gmra.mxu0 %v2392
        %v3967 = vpop.f32.mrf.mxu0
        %v3968 = vadd.f32 0.0, %v3967
        %v3969 = vpop.f32.mrf.mxu0
        %3970 = vmatprep.mubr.f32.mxu0 0.0
        %3971 = vmatmul.mubr.f32.gmra.mxu0 %v2395
        %v3972 = vpop.f32.mrf.mxu0
        %v3973 = vadd.f32 0.0, %v3972
        %v3974 = vpop.f32.mrf.mxu0
        %3975 = vmatprep.mubr.f32.mxu0 0.0
        %3976 = vmatmul.mubr.f32.gmra.mxu0 %v2398
        %v3977 = vpop.f32.mrf.mxu0
        %v3978 = vadd.f32 0.0, %v3977
        %v3979 = vpop.f32.mrf.mxu0
        %3980 = vmatprep.mubr.f32.mxu0 0.0
        %3981 = vmatmul.mubr.f32.gmra.mxu0 %v2401
        %v3982 = vpop.f32.mrf.mxu0
        %v3983 = vadd.f32 0.0, %v3982
        %v3984 = vpop.f32.mrf.mxu0
        %3985 = vmatprep.mubr.f32.mxu0 0.0
        %3986 = vmatmul.mubr.f32.gmra.mxu0 %v2404
        %v3987 = vpop.f32.mrf.mxu0
        %v3988 = vadd.f32 0.0, %v3987
        %v3989 = vpop.f32.mrf.mxu0
        %3990 = vmatprep.mubr.f32.mxu0 0.0
        %3991 = vmatmul.mubr.f32.gmra.mxu0 %v2407
        %v3992 = vpop.f32.mrf.mxu0
        %v3993 = vadd.f32 0.0, %v3992
        %v3994 = vpop.f32.mrf.mxu0
        %3995 = vmatprep.mubr.f32.mxu0 0.0
        %3996 = vmatmul.mubr.f32.gmra.mxu0 %v2410
        %v3997 = vpop.f32.mrf.mxu0
        %v3998 = vadd.f32 0.0, %v3997
        %v3999 = vpop.f32.mrf.mxu0
        %4000 = vmatprep.mubr.f32.mxu0 0.0
        %4001 = vmatmul.mubr.f32.gmra.mxu0 %v2413
        %v4002 = vpop.f32.mrf.mxu0
        %v4003 = vadd.f32 0.0, %v4002
        %v4004 = vpop.f32.mrf.mxu0
        %4005 = vmatprep.mubr.f32.mxu0 0.0
        %4006 = vmatmul.mubr.f32.gmra.mxu0 %v2416
        %v4007 = vpop.f32.mrf.mxu0
        %v4008 = vadd.f32 0.0, %v4007
        %v4009 = vpop.f32.mrf.mxu0
        %4010 = vmatprep.mubr.f32.mxu0 0.0
        %4011 = vmatmul.mubr.f32.gmra.mxu0 %v2419
        %v4012 = vpop.f32.mrf.mxu0
        %v4013 = vadd.f32 0.0, %v4012
        %v4014 = vpop.f32.mrf.mxu0
        %4015 = vmatprep.mubr.f32.mxu0 0.0
        %4016 = vmatmul.mubr.f32.gmra.mxu0 %v2422
        %v4017 = vpop.f32.mrf.mxu0
        %v4018 = vadd.f32 0.0, %v4017
        %v4019 = vpop.f32.mrf.mxu0
        %4020 = vmatprep.mubr.f32.mxu0 0.0
        %4021 = vmatmul.mubr.f32.gmra.mxu0 %v2425
        %v4022 = vpop.f32.mrf.mxu0
        %v4023 = vadd.f32 0.0, %v4022
        %v4024 = vpop.f32.mrf.mxu0
        %4025 = vmatprep.mubr.f32.mxu0 0.0
        %4026 = vmatmul.mubr.f32.gmra.mxu0 %v2428
        %v4027 = vpop.f32.mrf.mxu0
        %v4028 = vadd.f32 0.0, %v4027
        %v4029 = vpop.f32.mrf.mxu0
        %4030 = vmatprep.mubr.f32.mxu0 0.0
        %4031 = vmatmul.mubr.f32.gmra.mxu0 %v2431
        %v4032 = vpop.f32.mrf.mxu0
        %v4033 = vadd.f32 0.0, %v4032
        %v4034 = vpop.f32.mrf.mxu0
        %4035 = vmatprep.mubr.f32.mxu0 0.0
        %4036 = vmatmul.mubr.f32.gmra.mxu0 %v2434
        %v4037 = vpop.f32.mrf.mxu0
        %v4038 = vadd.f32 0.0, %v4037
        %v4039 = vpop.f32.mrf.mxu0
        %4040 = vmatprep.mubr.f32.mxu0 0.0
        %4041 = vmatmul.mubr.f32.gmra.mxu0 %v2437
        %v4042 = vpop.f32.mrf.mxu0
        %v4043 = vadd.f32 0.0, %v4042
        %v4044 = vpop.f32.mrf.mxu0
        %4045 = vmatprep.mubr.f32.mxu0 0.0
        %4046 = vmatmul.mubr.f32.gmra.mxu0 %v2440
        %v4047 = vpop.f32.mrf.mxu0
        %v4048 = vadd.f32 0.0, %v4047
        %v4049 = vpop.f32.mrf.mxu0
        %4050 = vmatprep.mubr.f32.mxu0 0.0
        %4051 = vmatmul.mubr.f32.gmra.mxu0 %v2443
        %v4052 = vpop.f32.mrf.mxu0
        %v4053 = vadd.f32 0.0, %v4052
        %v4054 = vpop.f32.mrf.mxu0
        %4055 = vmatprep.mubr.f32.mxu0 0.0
        %4056 = vmatmul.mubr.f32.gmra.mxu0 %v2446
        %v4057 = vpop.f32.mrf.mxu0
        %v4058 = vadd.f32 0.0, %v4057
        %v4059 = vpop.f32.mrf.mxu0
        %4060 = vmatprep.mubr.f32.mxu0 0.0
        %4061 = vmatmul.mubr.f32.gmra.mxu0 %v2449
        %v4062 = vpop.f32.mrf.mxu0
        %v4063 = vadd.f32 0.0, %v4062
        %v4064 = vpop.f32.mrf.mxu0
        %4065 = vmatprep.mubr.f32.mxu0 0.0
        %4066 = vmatmul.mubr.f32.gmra.mxu0 %v2452
        %v4067 = vpop.f32.mrf.mxu0
        %v4068 = vadd.f32 0.0, %v4067
        %v4069 = vpop.f32.mrf.mxu0
        %4070 = vmatprep.mubr.f32.mxu0 0.0
        %4071 = vmatmul.mubr.f32.gmra.mxu0 %v2455
        %v4072 = vpop.f32.mrf.mxu0
        %v4073 = vadd.f32 0.0, %v4072
        %v4074 = vpop.f32.mrf.mxu0
        %4075 = vmatprep.mubr.f32.mxu0 0.0
        %4076 = vmatmul.mubr.f32.gmra.mxu0 %v2458
        %v4077 = vpop.f32.mrf.mxu0
        %v4078 = vadd.f32 0.0, %v4077
        %v4079 = vpop.f32.mrf.mxu0
        %4080 = vmatprep.mubr.f32.mxu0 0.0
        %4081 = vmatmul.mubr.f32.gmra.mxu0 %v2461
        %v4082 = vpop.f32.mrf.mxu0
        %v4083 = vadd.f32 0.0, %v4082
        %v4084 = vpop.f32.mrf.mxu0
        %4085 = vmatprep.mubr.f32.mxu0 0.0
        %4086 = vmatmul.mubr.f32.gmra.mxu0 %v2464
        %v4087 = vpop.f32.mrf.mxu0
        %v4088 = vadd.f32 0.0, %v4087
        %v4089 = vpop.f32.mrf.mxu0
        %4090 = vmatprep.mubr.f32.mxu0 0.0
        %4091 = vmatmul.mubr.f32.gmra.mxu0 %v2467
        %v4092 = vpop.f32.mrf.mxu0
        %v4093 = vadd.f32 0.0, %v4092
        %v4094 = vpop.f32.mrf.mxu0
        %4095 = vmatprep.mubr.f32.mxu0 0.0
        %4096 = vmatmul.mubr.f32.gmra.mxu0 %v2470
        %v4097 = vpop.f32.mrf.mxu0
        %v4098 = vadd.f32 0.0, %v4097
        %v4099 = vpop.f32.mrf.mxu0
        %4100 = vmatprep.mubr.f32.mxu0 0.0
        %4101 = vmatmul.mubr.f32.gmra.mxu0 %v2473
        %v4102 = vpop.f32.mrf.mxu0
        %v4103 = vadd.f32 0.0, %v4102
        %v4104 = vpop.f32.mrf.mxu0
        %4105 = vdwg.mxu0
        %vm4154 = vcmask 1044480
        %v4155 = vrot.slane %v3868, 3
        %v4156 = vrot.slane %v3873, 3
        %v4157 = vsel %vm4154, %v4155, %v4156
        %v4158 = vrot.slane %v3878, 3
        %v4159 = vsel %vm4154, %v4156, %v4158
        %v4160 = vrot.slane %v3883, 3
        %v4161 = vrot.slane %v3888, 3
        %v4162 = vsel %vm4154, %v4160, %v4161
        %v4163 = vrot.slane %v3893, 3
        %v4164 = vsel %vm4154, %v4161, %v4163
        %v4165 = vrot.slane %v3898, 3
        %v4166 = vrot.slane %v3903, 3
        %v4167 = vsel %vm4154, %v4165, %v4166
        %v4168 = vrot.slane %v3908, 3
        %v4169 = vsel %vm4154, %v4166, %v4168
        %v4170 = vrot.slane %v3913, 3
        %v4171 = vrot.slane %v3918, 3
        %v4172 = vsel %vm4154, %v4170, %v4171
        %v4173 = vrot.slane %v3923, 3
        %v4174 = vsel %vm4154, %v4171, %v4173
        %v4175 = vrot.slane %v3928, 3
        %v4176 = vrot.slane %v3933, 3
        %v4177 = vsel %vm4154, %v4175, %v4176
        %v4178 = vrot.slane %v3938, 3
        %v4179 = vsel %vm4154, %v4176, %v4178
        %v4180 = vrot.slane %v3943, 3
        %v4181 = vrot.slane %v3948, 3
        %v4182 = vsel %vm4154, %v4180, %v4181
        %v4183 = vrot.slane %v3953, 3
        %v4184 = vsel %vm4154, %v4181, %v4183
        %v4185 = vrot.slane %v3958, 3
        %v4186 = vrot.slane %v3963, 3
        %v4187 = vsel %vm4154, %v4185, %v4186
        %v4188 = vrot.slane %v3968, 3
        %v4189 = vsel %vm4154, %v4186, %v4188
        %v4190 = vrot.slane %v3973, 3
        %v4191 = vrot.slane %v3978, 3
        %v4192 = vsel %vm4154, %v4190, %v4191
        %v4193 = vrot.slane %v3983, 3
        %v4194 = vsel %vm4154, %v4191, %v4193
        %v4195 = vrot.slane %v3988, 3
        %v4196 = vrot.slane %v3993, 3
        %v4197 = vsel %vm4154, %v4195, %v4196
        %v4198 = vrot.slane %v3998, 3
        %v4199 = vsel %vm4154, %v4196, %v4198
        %v4200 = vrot.slane %v4003, 3
        %v4201 = vrot.slane %v4008, 3
        %v4202 = vsel %vm4154, %v4200, %v4201
        %v4203 = vrot.slane %v4013, 3
        %v4204 = vsel %vm4154, %v4201, %v4203
        %v4205 = vrot.slane %v4018, 3
        %v4206 = vrot.slane %v4023, 3
        %v4207 = vsel %vm4154, %v4205, %v4206
        %v4208 = vrot.slane %v4028, 3
        %v4209 = vsel %vm4154, %v4206, %v4208
        %v4210 = vrot.slane %v4033, 3
        %v4211 = vrot.slane %v4038, 3
        %v4212 = vsel %vm4154, %v4210, %v4211
        %v4213 = vrot.slane %v4043, 3
        %v4214 = vsel %vm4154, %v4211, %v4213
        %v4215 = vrot.slane %v4048, 3
        %v4216 = vrot.slane %v4053, 3
        %v4217 = vsel %vm4154, %v4215, %v4216
        %v4218 = vrot.slane %v4058, 3
        %v4219 = vsel %vm4154, %v4216, %v4218
        %v4220 = vrot.slane %v4063, 3
        %v4221 = vrot.slane %v4068, 3
        %v4222 = vsel %vm4154, %v4220, %v4221
        %v4223 = vrot.slane %v4073, 3
        %v4224 = vsel %vm4154, %v4221, %v4223
        %v4225 = vrot.slane %v4078, 3
        %v4226 = vrot.slane %v4083, 3
        %v4227 = vsel %vm4154, %v4225, %v4226
        %v4228 = vrot.slane %v4088, 3
        %v4229 = vsel %vm4154, %v4226, %v4228
        %v4230 = vrot.slane %v4093, 3
        %v4231 = vrot.slane %v4098, 3
        %v4232 = vsel %vm4154, %v4230, %v4231
        %v4233 = vrot.slane %v4103, 3
        %v4234 = vsel %vm4154, %v4231, %v4233
        %v4267 = vadd.f32 %v3766, %v4157
        %v4268 = vadd.f32 %v3767, %v4159
        %v4269 = vadd.f32 %v3768, %v4162
        %v4270 = vadd.f32 %v3769, %v4164
        %v4271 = vadd.f32 %v3770, %v4167
        %v4272 = vadd.f32 %v3771, %v4169
        %v4273 = vadd.f32 %v3772, %v4172
        %v4274 = vadd.f32 %v3773, %v4174
        %v4275 = vadd.f32 %v3774, %v4177
        %v4276 = vadd.f32 %v3775, %v4179
        %v4277 = vadd.f32 %v3776, %v4182
        %v4278 = vadd.f32 %v3777, %v4184
        %v4279 = vadd.f32 %v3778, %v4187
        %v4280 = vadd.f32 %v3779, %v4189
        %v4281 = vadd.f32 %v3780, %v4192
        %v4282 = vadd.f32 %v3781, %v4194
        %v4283 = vadd.f32 %v3782, %v4197
        %v4284 = vadd.f32 %v3783, %v4199
        %v4285 = vadd.f32 %v3784, %v4202
        %v4286 = vadd.f32 %v3785, %v4204
        %v4287 = vadd.f32 %v3786, %v4207
        %v4288 = vadd.f32 %v3787, %v4209
        %v4289 = vadd.f32 %v3788, %v4212
        %v4290 = vadd.f32 %v3789, %v4214
        %v4291 = vadd.f32 %v3790, %v4217
        %v4292 = vadd.f32 %v3791, %v4219
        %v4293 = vadd.f32 %v3792, %v4222
        %v4294 = vadd.f32 %v3793, %v4224
        %v4295 = vadd.f32 %v3794, %v4227
        %v4296 = vadd.f32 %v3795, %v4229
        %v4297 = vadd.f32 %v3796, %v4232
        %v4298 = vadd.f32 %v3797, %v4234
        %s4299 = scalar_lea.vmem %s3, 64
        %v4300 = vld [vmem:[%s4299] sm:$0xff]
        %v4301 = vld [vmem:[%s4299 + $0x8] sm:$0xff]
        %4302 = vmatprep.subr.mxu0 0.0
        %4303 = vmatpush1.msra.mxu0 0.0
        %4304 = vmatprep.subr.mxu0 0.0
        %4305 = vmatpush1.msra.mxu0 0.0
        %4306 = vmatprep.subr.mxu0 0.0
        %4307 = vmatpush1.msra.mxu0 0.0
        %4308 = vmatprep.subr.mxu0 0.0
        %4309 = vmatpush1.msra.mxu0 0.0
        %4310 = vmatprep.subr.mxu0 0.0
        %4311 = vmatpush1.msra.mxu0 0.0
        %4312 = vmatprep.subr.mxu0 0.0
        %4313 = vmatpush1.msra.mxu0 0.0
        %4314 = vmatprep.subr.mxu0 0.0
        %4315 = vmatpush1.msra.mxu0 0.0
        %4316 = vmatprep.subr.mxu0 0.0
        %4317 = vmatpush1.msra.mxu0 0.0
        %4318 = vmatprep.subr.mxu0 0.0
        %4319 = vmatpush1.msra.mxu0 0.0
        %4320 = vmatprep.subr.mxu0 0.0
        %4321 = vmatpush1.msra.mxu0 0.0
        %4322 = vmatprep.subr.mxu0 0.0
        %4323 = vmatpush1.msra.mxu0 0.0
        %4324 = vmatprep.subr.mxu0 0.0
        %4325 = vmatpush1.msra.mxu0 0.0
        %4326 = vmatprep.subr.mxu0 0.0
        %4327 = vmatpush1.msra.mxu0 0.0
        %4328 = vmatprep.subr.mxu0 0.0
        %4329 = vmatpush1.msra.mxu0 0.0
        %4330 = vmatprep.subr.mxu0 0.0
        %4331 = vmatpush1.msra.mxu0 %v4301
        %4332 = vmatprep.subr.mxu0 0.0
        %4333 = vmatpush1.msra.mxu0 %v4300
        %4334 = vmatprep.subr.mxu0 0.0
        %4335 = vmatpush2.msra.mxu0 0.0
        %4336 = vmatprep.subr.mxu0 0.0
        %4337 = vmatpush2.msra.mxu0 0.0
        %4338 = vmatprep.subr.mxu0 0.0
        %4339 = vmatpush2.msra.mxu0 0.0
        %4340 = vmatprep.subr.mxu0 0.0
        %4341 = vmatpush2.msra.mxu0 0.0
        %4342 = vmatprep.subr.mxu0 0.0
        %4343 = vmatpush2.msra.mxu0 0.0
        %4344 = vmatprep.subr.mxu0 0.0
        %4345 = vmatpush2.msra.mxu0 0.0
        %4346 = vmatprep.subr.mxu0 0.0
        %4347 = vmatpush2.msra.mxu0 0.0
        %4348 = vmatprep.subr.mxu0 0.0
        %4349 = vmatpush2.msra.mxu0 0.0
        %4350 = vmatprep.subr.mxu0 0.0
        %4351 = vmatpush2.msra.mxu0 0.0
        %4352 = vmatprep.subr.mxu0 0.0
        %4353 = vmatpush2.msra.mxu0 0.0
        %4354 = vmatprep.subr.mxu0 0.0
        %4355 = vmatpush2.msra.mxu0 0.0
        %4356 = vmatprep.subr.mxu0 0.0
        %4357 = vmatpush2.msra.mxu0 0.0
        %4358 = vmatprep.subr.mxu0 0.0
        %4359 = vmatpush2.msra.mxu0 0.0
        %4360 = vmatprep.subr.mxu0 0.0
        %4361 = vmatpush2.msra.mxu0 0.0
        %4362 = vmatprep.subr.mxu0 0.0
        %4363 = vmatpush2.msra.mxu0 0.0
        %4364 = vmatprep.subr.mxu0 0.0
        %4365 = vmatpush2.msra.mxu0 0.0
        %4366 = vmatprep.mubr.f32.mxu0 0.0
        %4367 = vmatmul.mubr.f32.gmra.mxu0 %v2332
        %v4368 = vpop.f32.mrf.mxu0
        %v4369 = vadd.f32 0.0, %v4368
        %v4370 = vpop.f32.mrf.mxu0
        %4371 = vmatprep.mubr.f32.mxu0 0.0
        %4372 = vmatmul.mubr.f32.gmra.mxu0 %v2335
        %v4373 = vpop.f32.mrf.mxu0
        %v4374 = vadd.f32 0.0, %v4373
        %v4375 = vpop.f32.mrf.mxu0
        %4376 = vmatprep.mubr.f32.mxu0 0.0
        %4377 = vmatmul.mubr.f32.gmra.mxu0 %v2338
        %v4378 = vpop.f32.mrf.mxu0
        %v4379 = vadd.f32 0.0, %v4378
        %v4380 = vpop.f32.mrf.mxu0
        %4381 = vmatprep.mubr.f32.mxu0 0.0
        %4382 = vmatmul.mubr.f32.gmra.mxu0 %v2341
        %v4383 = vpop.f32.mrf.mxu0
        %v4384 = vadd.f32 0.0, %v4383
        %v4385 = vpop.f32.mrf.mxu0
        %4386 = vmatprep.mubr.f32.mxu0 0.0
        %4387 = vmatmul.mubr.f32.gmra.mxu0 %v2344
        %v4388 = vpop.f32.mrf.mxu0
        %v4389 = vadd.f32 0.0, %v4388
        %v4390 = vpop.f32.mrf.mxu0
        %4391 = vmatprep.mubr.f32.mxu0 0.0
        %4392 = vmatmul.mubr.f32.gmra.mxu0 %v2347
        %v4393 = vpop.f32.mrf.mxu0
        %v4394 = vadd.f32 0.0, %v4393
        %v4395 = vpop.f32.mrf.mxu0
        %4396 = vmatprep.mubr.f32.mxu0 0.0
        %4397 = vmatmul.mubr.f32.gmra.mxu0 %v2350
        %v4398 = vpop.f32.mrf.mxu0
        %v4399 = vadd.f32 0.0, %v4398
        %v4400 = vpop.f32.mrf.mxu0
        %4401 = vmatprep.mubr.f32.mxu0 0.0
        %4402 = vmatmul.mubr.f32.gmra.mxu0 %v2353
        %v4403 = vpop.f32.mrf.mxu0
        %v4404 = vadd.f32 0.0, %v4403
        %v4405 = vpop.f32.mrf.mxu0
        %4406 = vmatprep.mubr.f32.mxu0 0.0
        %4407 = vmatmul.mubr.f32.gmra.mxu0 %v2356
        %v4408 = vpop.f32.mrf.mxu0
        %v4409 = vadd.f32 0.0, %v4408
        %v4410 = vpop.f32.mrf.mxu0
        %4411 = vmatprep.mubr.f32.mxu0 0.0
        %4412 = vmatmul.mubr.f32.gmra.mxu0 %v2359
        %v4413 = vpop.f32.mrf.mxu0
        %v4414 = vadd.f32 0.0, %v4413
        %v4415 = vpop.f32.mrf.mxu0
        %4416 = vmatprep.mubr.f32.mxu0 0.0
        %4417 = vmatmul.mubr.f32.gmra.mxu0 %v2362
        %v4418 = vpop.f32.mrf.mxu0
        %v4419 = vadd.f32 0.0, %v4418
        %v4420 = vpop.f32.mrf.mxu0
        %4421 = vmatprep.mubr.f32.mxu0 0.0
        %4422 = vmatmul.mubr.f32.gmra.mxu0 %v2365
        %v4423 = vpop.f32.mrf.mxu0
        %v4424 = vadd.f32 0.0, %v4423
        %v4425 = vpop.f32.mrf.mxu0
        %4426 = vmatprep.mubr.f32.mxu0 0.0
        %4427 = vmatmul.mubr.f32.gmra.mxu0 %v2368
        %v4428 = vpop.f32.mrf.mxu0
        %v4429 = vadd.f32 0.0, %v4428
        %v4430 = vpop.f32.mrf.mxu0
        %4431 = vmatprep.mubr.f32.mxu0 0.0
        %4432 = vmatmul.mubr.f32.gmra.mxu0 %v2371
        %v4433 = vpop.f32.mrf.mxu0
        %v4434 = vadd.f32 0.0, %v4433
        %v4435 = vpop.f32.mrf.mxu0
        %4436 = vmatprep.mubr.f32.mxu0 0.0
        %4437 = vmatmul.mubr.f32.gmra.mxu0 %v2374
        %v4438 = vpop.f32.mrf.mxu0
        %v4439 = vadd.f32 0.0, %v4438
        %v4440 = vpop.f32.mrf.mxu0
        %4441 = vmatprep.mubr.f32.mxu0 0.0
        %4442 = vmatmul.mubr.f32.gmra.mxu0 %v2377
        %v4443 = vpop.f32.mrf.mxu0
        %v4444 = vadd.f32 0.0, %v4443
        %v4445 = vpop.f32.mrf.mxu0
        %4446 = vmatprep.mubr.f32.mxu0 0.0
        %4447 = vmatmul.mubr.f32.gmra.mxu0 %v2380
        %v4448 = vpop.f32.mrf.mxu0
        %v4449 = vadd.f32 0.0, %v4448
        %v4450 = vpop.f32.mrf.mxu0
        %4451 = vmatprep.mubr.f32.mxu0 0.0
        %4452 = vmatmul.mubr.f32.gmra.mxu0 %v2383
        %v4453 = vpop.f32.mrf.mxu0
        %v4454 = vadd.f32 0.0, %v4453
        %v4455 = vpop.f32.mrf.mxu0
        %4456 = vmatprep.mubr.f32.mxu0 0.0
        %4457 = vmatmul.mubr.f32.gmra.mxu0 %v2386
        %v4458 = vpop.f32.mrf.mxu0
        %v4459 = vadd.f32 0.0, %v4458
        %v4460 = vpop.f32.mrf.mxu0
        %4461 = vmatprep.mubr.f32.mxu0 0.0
        %4462 = vmatmul.mubr.f32.gmra.mxu0 %v2389
        %v4463 = vpop.f32.mrf.mxu0
        %v4464 = vadd.f32 0.0, %v4463
        %v4465 = vpop.f32.mrf.mxu0
        %4466 = vmatprep.mubr.f32.mxu0 0.0
        %4467 = vmatmul.mubr.f32.gmra.mxu0 %v2392
        %v4468 = vpop.f32.mrf.mxu0
        %v4469 = vadd.f32 0.0, %v4468
        %v4470 = vpop.f32.mrf.mxu0
        %4471 = vmatprep.mubr.f32.mxu0 0.0
        %4472 = vmatmul.mubr.f32.gmra.mxu0 %v2395
        %v4473 = vpop.f32.mrf.mxu0
        %v4474 = vadd.f32 0.0, %v4473
        %v4475 = vpop.f32.mrf.mxu0
        %4476 = vmatprep.mubr.f32.mxu0 0.0
        %4477 = vmatmul.mubr.f32.gmra.mxu0 %v2398
        %v4478 = vpop.f32.mrf.mxu0
        %v4479 = vadd.f32 0.0, %v4478
        %v4480 = vpop.f32.mrf.mxu0
        %4481 = vmatprep.mubr.f32.mxu0 0.0
        %4482 = vmatmul.mubr.f32.gmra.mxu0 %v2401
        %v4483 = vpop.f32.mrf.mxu0
        %v4484 = vadd.f32 0.0, %v4483
        %v4485 = vpop.f32.mrf.mxu0
        %4486 = vmatprep.mubr.f32.mxu0 0.0
        %4487 = vmatmul.mubr.f32.gmra.mxu0 %v2404
        %v4488 = vpop.f32.mrf.mxu0
        %v4489 = vadd.f32 0.0, %v4488
        %v4490 = vpop.f32.mrf.mxu0
        %4491 = vmatprep.mubr.f32.mxu0 0.0
        %4492 = vmatmul.mubr.f32.gmra.mxu0 %v2407
        %v4493 = vpop.f32.mrf.mxu0
        %v4494 = vadd.f32 0.0, %v4493
        %v4495 = vpop.f32.mrf.mxu0
        %4496 = vmatprep.mubr.f32.mxu0 0.0
        %4497 = vmatmul.mubr.f32.gmra.mxu0 %v2410
        %v4498 = vpop.f32.mrf.mxu0
        %v4499 = vadd.f32 0.0, %v4498
        %v4500 = vpop.f32.mrf.mxu0
        %4501 = vmatprep.mubr.f32.mxu0 0.0
        %4502 = vmatmul.mubr.f32.gmra.mxu0 %v2413
        %v4503 = vpop.f32.mrf.mxu0
        %v4504 = vadd.f32 0.0, %v4503
        %v4505 = vpop.f32.mrf.mxu0
        %4506 = vmatprep.mubr.f32.mxu0 0.0
        %4507 = vmatmul.mubr.f32.gmra.mxu0 %v2416
        %v4508 = vpop.f32.mrf.mxu0
        %v4509 = vadd.f32 0.0, %v4508
        %v4510 = vpop.f32.mrf.mxu0
        %4511 = vmatprep.mubr.f32.mxu0 0.0
        %4512 = vmatmul.mubr.f32.gmra.mxu0 %v2419
        %v4513 = vpop.f32.mrf.mxu0
        %v4514 = vadd.f32 0.0, %v4513
        %v4515 = vpop.f32.mrf.mxu0
        %4516 = vmatprep.mubr.f32.mxu0 0.0
        %4517 = vmatmul.mubr.f32.gmra.mxu0 %v2422
        %v4518 = vpop.f32.mrf.mxu0
        %v4519 = vadd.f32 0.0, %v4518
        %v4520 = vpop.f32.mrf.mxu0
        %4521 = vmatprep.mubr.f32.mxu0 0.0
        %4522 = vmatmul.mubr.f32.gmra.mxu0 %v2425
        %v4523 = vpop.f32.mrf.mxu0
        %v4524 = vadd.f32 0.0, %v4523
        %v4525 = vpop.f32.mrf.mxu0
        %4526 = vmatprep.mubr.f32.mxu0 0.0
        %4527 = vmatmul.mubr.f32.gmra.mxu0 %v2428
        %v4528 = vpop.f32.mrf.mxu0
        %v4529 = vadd.f32 0.0, %v4528
        %v4530 = vpop.f32.mrf.mxu0
        %4531 = vmatprep.mubr.f32.mxu0 0.0
        %4532 = vmatmul.mubr.f32.gmra.mxu0 %v2431
        %v4533 = vpop.f32.mrf.mxu0
        %v4534 = vadd.f32 0.0, %v4533
        %v4535 = vpop.f32.mrf.mxu0
        %4536 = vmatprep.mubr.f32.mxu0 0.0
        %4537 = vmatmul.mubr.f32.gmra.mxu0 %v2434
        %v4538 = vpop.f32.mrf.mxu0
        %v4539 = vadd.f32 0.0, %v4538
        %v4540 = vpop.f32.mrf.mxu0
        %4541 = vmatprep.mubr.f32.mxu0 0.0
        %4542 = vmatmul.mubr.f32.gmra.mxu0 %v2437
        %v4543 = vpop.f32.mrf.mxu0
        %v4544 = vadd.f32 0.0, %v4543
        %v4545 = vpop.f32.mrf.mxu0
        %4546 = vmatprep.mubr.f32.mxu0 0.0
        %4547 = vmatmul.mubr.f32.gmra.mxu0 %v2440
        %v4548 = vpop.f32.mrf.mxu0
        %v4549 = vadd.f32 0.0, %v4548
        %v4550 = vpop.f32.mrf.mxu0
        %4551 = vmatprep.mubr.f32.mxu0 0.0
        %4552 = vmatmul.mubr.f32.gmra.mxu0 %v2443
        %v4553 = vpop.f32.mrf.mxu0
        %v4554 = vadd.f32 0.0, %v4553
        %v4555 = vpop.f32.mrf.mxu0
        %4556 = vmatprep.mubr.f32.mxu0 0.0
        %4557 = vmatmul.mubr.f32.gmra.mxu0 %v2446
        %v4558 = vpop.f32.mrf.mxu0
        %v4559 = vadd.f32 0.0, %v4558
        %v4560 = vpop.f32.mrf.mxu0
        %4561 = vmatprep.mubr.f32.mxu0 0.0
        %4562 = vmatmul.mubr.f32.gmra.mxu0 %v2449
        %v4563 = vpop.f32.mrf.mxu0
        %v4564 = vadd.f32 0.0, %v4563
        %v4565 = vpop.f32.mrf.mxu0
        %4566 = vmatprep.mubr.f32.mxu0 0.0
        %4567 = vmatmul.mubr.f32.gmra.mxu0 %v2452
        %v4568 = vpop.f32.mrf.mxu0
        %v4569 = vadd.f32 0.0, %v4568
        %v4570 = vpop.f32.mrf.mxu0
        %4571 = vmatprep.mubr.f32.mxu0 0.0
        %4572 = vmatmul.mubr.f32.gmra.mxu0 %v2455
        %v4573 = vpop.f32.mrf.mxu0
        %v4574 = vadd.f32 0.0, %v4573
        %v4575 = vpop.f32.mrf.mxu0
        %4576 = vmatprep.mubr.f32.mxu0 0.0
        %4577 = vmatmul.mubr.f32.gmra.mxu0 %v2458
        %v4578 = vpop.f32.mrf.mxu0
        %v4579 = vadd.f32 0.0, %v4578
        %v4580 = vpop.f32.mrf.mxu0
        %4581 = vmatprep.mubr.f32.mxu0 0.0
        %4582 = vmatmul.mubr.f32.gmra.mxu0 %v2461
        %v4583 = vpop.f32.mrf.mxu0
        %v4584 = vadd.f32 0.0, %v4583
        %v4585 = vpop.f32.mrf.mxu0
        %4586 = vmatprep.mubr.f32.mxu0 0.0
        %4587 = vmatmul.mubr.f32.gmra.mxu0 %v2464
        %v4588 = vpop.f32.mrf.mxu0
        %v4589 = vadd.f32 0.0, %v4588
        %v4590 = vpop.f32.mrf.mxu0
        %4591 = vmatprep.mubr.f32.mxu0 0.0
        %4592 = vmatmul.mubr.f32.gmra.mxu0 %v2467
        %v4593 = vpop.f32.mrf.mxu0
        %v4594 = vadd.f32 0.0, %v4593
        %v4595 = vpop.f32.mrf.mxu0
        %4596 = vmatprep.mubr.f32.mxu0 0.0
        %4597 = vmatmul.mubr.f32.gmra.mxu0 %v2470
        %v4598 = vpop.f32.mrf.mxu0
        %v4599 = vadd.f32 0.0, %v4598
        %v4600 = vpop.f32.mrf.mxu0
        %4601 = vmatprep.mubr.f32.mxu0 0.0
        %4602 = vmatmul.mubr.f32.gmra.mxu0 %v2473
        %v4603 = vpop.f32.mrf.mxu0
        %v4604 = vadd.f32 0.0, %v4603
        %v4605 = vpop.f32.mrf.mxu0
        %4606 = vdwg.mxu0
        %vm4655 = vcmask 1043456
        %v4656 = vrot.slane %v4369, 4
        %v4657 = vrot.slane %v4374, 4
        %v4658 = vsel %vm4655, %v4656, %v4657
        %v4659 = vrot.slane %v4379, 4
        %v4660 = vsel %vm4655, %v4657, %v4659
        %v4661 = vrot.slane %v4384, 4
        %v4662 = vrot.slane %v4389, 4
        %v4663 = vsel %vm4655, %v4661, %v4662
        %v4664 = vrot.slane %v4394, 4
        %v4665 = vsel %vm4655, %v4662, %v4664
        %v4666 = vrot.slane %v4399, 4
        %v4667 = vrot.slane %v4404, 4
        %v4668 = vsel %vm4655, %v4666, %v4667
        %v4669 = vrot.slane %v4409, 4
        %v4670 = vsel %vm4655, %v4667, %v4669
        %v4671 = vrot.slane %v4414, 4
        %v4672 = vrot.slane %v4419, 4
        %v4673 = vsel %vm4655, %v4671, %v4672
        %v4674 = vrot.slane %v4424, 4
        %v4675 = vsel %vm4655, %v4672, %v4674
        %v4676 = vrot.slane %v4429, 4
        %v4677 = vrot.slane %v4434, 4
        %v4678 = vsel %vm4655, %v4676, %v4677
        %v4679 = vrot.slane %v4439, 4
        %v4680 = vsel %vm4655, %v4677, %v4679
        %v4681 = vrot.slane %v4444, 4
        %v4682 = vrot.slane %v4449, 4
        %v4683 = vsel %vm4655, %v4681, %v4682
        %v4684 = vrot.slane %v4454, 4
        %v4685 = vsel %vm4655, %v4682, %v4684
        %v4686 = vrot.slane %v4459, 4
        %v4687 = vrot.slane %v4464, 4
        %v4688 = vsel %vm4655, %v4686, %v4687
        %v4689 = vrot.slane %v4469, 4
        %v4690 = vsel %vm4655, %v4687, %v4689
        %v4691 = vrot.slane %v4474, 4
        %v4692 = vrot.slane %v4479, 4
        %v4693 = vsel %vm4655, %v4691, %v4692
        %v4694 = vrot.slane %v4484, 4
        %v4695 = vsel %vm4655, %v4692, %v4694
        %v4696 = vrot.slane %v4489, 4
        %v4697 = vrot.slane %v4494, 4
        %v4698 = vsel %vm4655, %v4696, %v4697
        %v4699 = vrot.slane %v4499, 4
        %v4700 = vsel %vm4655, %v4697, %v4699
        %v4701 = vrot.slane %v4504, 4
        %v4702 = vrot.slane %v4509, 4
        %v4703 = vsel %vm4655, %v4701, %v4702
        %v4704 = vrot.slane %v4514, 4
        %v4705 = vsel %vm4655, %v4702, %v4704
        %v4706 = vrot.slane %v4519, 4
        %v4707 = vrot.slane %v4524, 4
        %v4708 = vsel %vm4655, %v4706, %v4707
        %v4709 = vrot.slane %v4529, 4
        %v4710 = vsel %vm4655, %v4707, %v4709
        %v4711 = vrot.slane %v4534, 4
        %v4712 = vrot.slane %v4539, 4
        %v4713 = vsel %vm4655, %v4711, %v4712
        %v4714 = vrot.slane %v4544, 4
        %v4715 = vsel %vm4655, %v4712, %v4714
        %v4716 = vrot.slane %v4549, 4
        %v4717 = vrot.slane %v4554, 4
        %v4718 = vsel %vm4655, %v4716, %v4717
        %v4719 = vrot.slane %v4559, 4
        %v4720 = vsel %vm4655, %v4717, %v4719
        %v4721 = vrot.slane %v4564, 4
        %v4722 = vrot.slane %v4569, 4
        %v4723 = vsel %vm4655, %v4721, %v4722
        %v4724 = vrot.slane %v4574, 4
        %v4725 = vsel %vm4655, %v4722, %v4724
        %v4726 = vrot.slane %v4579, 4
        %v4727 = vrot.slane %v4584, 4
        %v4728 = vsel %vm4655, %v4726, %v4727
        %v4729 = vrot.slane %v4589, 4
        %v4730 = vsel %vm4655, %v4727, %v4729
        %v4731 = vrot.slane %v4594, 4
        %v4732 = vrot.slane %v4599, 4
        %v4733 = vsel %vm4655, %v4731, %v4732
        %v4734 = vrot.slane %v4604, 4
        %v4735 = vsel %vm4655, %v4732, %v4734
        %v4768 = vadd.f32 %v4267, %v4658
        %v4769 = vadd.f32 %v4268, %v4660
        %v4770 = vadd.f32 %v4269, %v4663
        %v4771 = vadd.f32 %v4270, %v4665
        %v4772 = vadd.f32 %v4271, %v4668
        %v4773 = vadd.f32 %v4272, %v4670
        %v4774 = vadd.f32 %v4273, %v4673
        %v4775 = vadd.f32 %v4274, %v4675
        %v4776 = vadd.f32 %v4275, %v4678
        %v4777 = vadd.f32 %v4276, %v4680
        %v4778 = vadd.f32 %v4277, %v4683
        %v4779 = vadd.f32 %v4278, %v4685
        %v4780 = vadd.f32 %v4279, %v4688
        %v4781 = vadd.f32 %v4280, %v4690
        %v4782 = vadd.f32 %v4281, %v4693
        %v4783 = vadd.f32 %v4282, %v4695
        %v4784 = vadd.f32 %v4283, %v4698
        %v4785 = vadd.f32 %v4284, %v4700
        %v4786 = vadd.f32 %v4285, %v4703
        %v4787 = vadd.f32 %v4286, %v4705
        %v4788 = vadd.f32 %v4287, %v4708
        %v4789 = vadd.f32 %v4288, %v4710
        %v4790 = vadd.f32 %v4289, %v4713
        %v4791 = vadd.f32 %v4290, %v4715
        %v4792 = vadd.f32 %v4291, %v4718
        %v4793 = vadd.f32 %v4292, %v4720
        %v4794 = vadd.f32 %v4293, %v4723
        %v4795 = vadd.f32 %v4294, %v4725
        %v4796 = vadd.f32 %v4295, %v4728
        %v4797 = vadd.f32 %v4296, %v4730
        %v4798 = vadd.f32 %v4297, %v4733
        %v4799 = vadd.f32 %v4298, %v4735
        %v4800 = vld [vmem:[%s5] sm:$0xff]
        %4801 = vmatprep.subr.mxu0 0.0
        %4802 = vmatpush1.msra.mxu0 0.0
        %4803 = vmatprep.subr.mxu0 0.0
        %4804 = vmatpush1.msra.mxu0 0.0
        %4805 = vmatprep.subr.mxu0 0.0
        %4806 = vmatpush1.msra.mxu0 0.0
        %4807 = vmatprep.subr.mxu0 0.0
        %4808 = vmatpush1.msra.mxu0 0.0
        %4809 = vmatprep.subr.mxu0 0.0
        %4810 = vmatpush1.msra.mxu0 0.0
        %4811 = vmatprep.subr.mxu0 0.0
        %4812 = vmatpush1.msra.mxu0 0.0
        %4813 = vmatprep.subr.mxu0 0.0
        %4814 = vmatpush1.msra.mxu0 0.0
        %4815 = vmatprep.subr.mxu0 0.0
        %4816 = vmatpush1.msra.mxu0 0.0
        %4817 = vmatprep.subr.mxu0 0.0
        %4818 = vmatpush1.msra.mxu0 0.0
        %4819 = vmatprep.subr.mxu0 0.0
        %4820 = vmatpush1.msra.mxu0 0.0
        %4821 = vmatprep.subr.mxu0 0.0
        %4822 = vmatpush1.msra.mxu0 0.0
        %4823 = vmatprep.subr.mxu0 0.0
        %4824 = vmatpush1.msra.mxu0 0.0
        %4825 = vmatprep.subr.mxu0 0.0
        %4826 = vmatpush1.msra.mxu0 0.0
        %4827 = vmatprep.subr.mxu0 0.0
        %4828 = vmatpush1.msra.mxu0 0.0
        %4829 = vmatprep.subr.mxu0 0.0
        %4830 = vmatpush1.msra.mxu0 0.0
        %4831 = vmatprep.subr.mxu0 0.0
        %4832 = vmatpush1.msra.mxu0 %v4800
        %4833 = vmatprep.subr.mxu0 0.0
        %4834 = vmatpush2.msra.mxu0 0.0
        %4835 = vmatprep.subr.mxu0 0.0
        %4836 = vmatpush2.msra.mxu0 0.0
        %4837 = vmatprep.subr.mxu0 0.0
        %4838 = vmatpush2.msra.mxu0 0.0
        %4839 = vmatprep.subr.mxu0 0.0
        %4840 = vmatpush2.msra.mxu0 0.0
        %4841 = vmatprep.subr.mxu0 0.0
        %4842 = vmatpush2.msra.mxu0 0.0
        %4843 = vmatprep.subr.mxu0 0.0
        %4844 = vmatpush2.msra.mxu0 0.0
        %4845 = vmatprep.subr.mxu0 0.0
        %4846 = vmatpush2.msra.mxu0 0.0
        %4847 = vmatprep.subr.mxu0 0.0
        %4848 = vmatpush2.msra.mxu0 0.0
        %4849 = vmatprep.subr.mxu0 0.0
        %4850 = vmatpush2.msra.mxu0 0.0
        %4851 = vmatprep.subr.mxu0 0.0
        %4852 = vmatpush2.msra.mxu0 0.0
        %4853 = vmatprep.subr.mxu0 0.0
        %4854 = vmatpush2.msra.mxu0 0.0
        %4855 = vmatprep.subr.mxu0 0.0
        %4856 = vmatpush2.msra.mxu0 0.0
        %4857 = vmatprep.subr.mxu0 0.0
        %4858 = vmatpush2.msra.mxu0 0.0
        %4859 = vmatprep.subr.mxu0 0.0
        %4860 = vmatpush2.msra.mxu0 0.0
        %4861 = vmatprep.subr.mxu0 0.0
        %4862 = vmatpush2.msra.mxu0 0.0
        %4863 = vmatprep.subr.mxu0 0.0
        %4864 = vmatpush2.msra.mxu0 0.0
        %4865 = vmatprep.mubr.f32.mxu0 0.0
        %4866 = vmatmul.mubr.f32.gmra.mxu0 %v845
        %v4867 = vpop.f32.mrf.mxu0
        %v4868 = vadd.f32 0.0, %v4867
        %v4869 = vpop.f32.mrf.mxu0
        %4870 = vmatprep.mubr.f32.mxu0 0.0
        %4871 = vmatmul.mubr.f32.gmra.mxu0 %v848
        %v4872 = vpop.f32.mrf.mxu0
        %v4873 = vadd.f32 0.0, %v4872
        %v4874 = vpop.f32.mrf.mxu0
        %4875 = vmatprep.mubr.f32.mxu0 0.0
        %4876 = vmatmul.mubr.f32.gmra.mxu0 %v851
        %v4877 = vpop.f32.mrf.mxu0
        %v4878 = vpop.f32.mrf.mxu0
        %4879 = vmatprep.mubr.f32.mxu0 0.0
        %4880 = vmatmul.mubr.f32.gmra.mxu0 %v396
        %v4881 = vpop.f32.mrf.mxu0
        %v4882 = vadd.f32 0.0, %v4881
        %v4883 = vpop.f32.mrf.mxu0
        %4884 = vmatprep.mubr.f32.mxu0 0.0
        %4885 = vmatmul.mubr.f32.gmra.mxu0 %v399
        %v4886 = vpop.f32.mrf.mxu0
        %v4887 = vadd.f32 0.0, %v4886
        %v4888 = vpop.f32.mrf.mxu0
        %4889 = vmatprep.mubr.f32.mxu0 0.0
        %4890 = vmatmul.mubr.f32.gmra.mxu0 %v402
        %v4891 = vpop.f32.mrf.mxu0
        %v4892 = vpop.f32.mrf.mxu0
        %4893 = vmatprep.mubr.f32.mxu0 0.0
        %4894 = vmatmul.mubr.f32.gmra.mxu0 %v405
        %v4895 = vpop.f32.mrf.mxu0
        %v4896 = vadd.f32 0.0, %v4895
        %v4897 = vpop.f32.mrf.mxu0
        %4898 = vmatprep.mubr.f32.mxu0 0.0
        %4899 = vmatmul.mubr.f32.gmra.mxu0 %v408
        %v4900 = vpop.f32.mrf.mxu0
        %v4901 = vadd.f32 0.0, %v4900
        %v4902 = vpop.f32.mrf.mxu0
        %4903 = vmatprep.mubr.f32.mxu0 0.0
        %4904 = vmatmul.mubr.f32.gmra.mxu0 %v411
        %v4905 = vpop.f32.mrf.mxu0
        %v4906 = vpop.f32.mrf.mxu0
        %4907 = vmatprep.mubr.f32.mxu0 0.0
        %4908 = vmatmul.mubr.f32.gmra.mxu0 %v414
        %v4909 = vpop.f32.mrf.mxu0
        %v4910 = vadd.f32 0.0, %v4909
        %v4911 = vpop.f32.mrf.mxu0
        %4912 = vmatprep.mubr.f32.mxu0 0.0
        %4913 = vmatmul.mubr.f32.gmra.mxu0 %v417
        %v4914 = vpop.f32.mrf.mxu0
        %v4915 = vadd.f32 0.0, %v4914
        %v4916 = vpop.f32.mrf.mxu0
        %4917 = vmatprep.mubr.f32.mxu0 0.0
        %4918 = vmatmul.mubr.f32.gmra.mxu0 %v420
        %v4919 = vpop.f32.mrf.mxu0
        %v4920 = vpop.f32.mrf.mxu0
        %4921 = vmatprep.mubr.f32.mxu0 0.0
        %4922 = vmatmul.mubr.f32.gmra.mxu0 %v423
        %v4923 = vpop.f32.mrf.mxu0
        %v4924 = vadd.f32 0.0, %v4923
        %v4925 = vpop.f32.mrf.mxu0
        %4926 = vmatprep.mubr.f32.mxu0 0.0
        %4927 = vmatmul.mubr.f32.gmra.mxu0 %v426
        %v4928 = vpop.f32.mrf.mxu0
        %v4929 = vadd.f32 0.0, %v4928
        %v4930 = vpop.f32.mrf.mxu0
        %4931 = vmatprep.mubr.f32.mxu0 0.0
        %4932 = vmatmul.mubr.f32.gmra.mxu0 %v429
        %v4933 = vpop.f32.mrf.mxu0
        %v4934 = vpop.f32.mrf.mxu0
        %4935 = vmatprep.mubr.f32.mxu0 0.0
        %4936 = vmatmul.mubr.f32.gmra.mxu0 %v432
        %v4937 = vpop.f32.mrf.mxu0
        %v4938 = vadd.f32 0.0, %v4937
        %v4939 = vpop.f32.mrf.mxu0
        %4940 = vmatprep.mubr.f32.mxu0 0.0
        %4941 = vmatmul.mubr.f32.gmra.mxu0 %v435
        %v4942 = vpop.f32.mrf.mxu0
        %v4943 = vadd.f32 0.0, %v4942
        %v4944 = vpop.f32.mrf.mxu0
        %4945 = vmatprep.mubr.f32.mxu0 0.0
        %4946 = vmatmul.mubr.f32.gmra.mxu0 %v438
        %v4947 = vpop.f32.mrf.mxu0
        %v4948 = vpop.f32.mrf.mxu0
        %4949 = vmatprep.mubr.f32.mxu0 0.0
        %4950 = vmatmul.mubr.f32.gmra.mxu0 %v441
        %v4951 = vpop.f32.mrf.mxu0
        %v4952 = vadd.f32 0.0, %v4951
        %v4953 = vpop.f32.mrf.mxu0
        %4954 = vmatprep.mubr.f32.mxu0 0.0
        %4955 = vmatmul.mubr.f32.gmra.mxu0 %v444
        %v4956 = vpop.f32.mrf.mxu0
        %v4957 = vadd.f32 0.0, %v4956
        %v4958 = vpop.f32.mrf.mxu0
        %4959 = vmatprep.mubr.f32.mxu0 0.0
        %4960 = vmatmul.mubr.f32.gmra.mxu0 %v447
        %v4961 = vpop.f32.mrf.mxu0
        %v4962 = vpop.f32.mrf.mxu0
        %4963 = vmatprep.mubr.f32.mxu0 0.0
        %4964 = vmatmul.mubr.f32.gmra.mxu0 %v450
        %v4965 = vpop.f32.mrf.mxu0
        %v4966 = vadd.f32 0.0, %v4965
        %v4967 = vpop.f32.mrf.mxu0
        %4968 = vmatprep.mubr.f32.mxu0 0.0
        %4969 = vmatmul.mubr.f32.gmra.mxu0 %v453
        %v4970 = vpop.f32.mrf.mxu0
        %v4971 = vadd.f32 0.0, %v4970
        %v4972 = vpop.f32.mrf.mxu0
        %4973 = vmatprep.mubr.f32.mxu0 0.0
        %4974 = vmatmul.mubr.f32.gmra.mxu0 %v456
        %v4975 = vpop.f32.mrf.mxu0
        %v4976 = vpop.f32.mrf.mxu0
        %4977 = vmatprep.mubr.f32.mxu0 0.0
        %4978 = vmatmul.mubr.f32.gmra.mxu0 %v459
        %v4979 = vpop.f32.mrf.mxu0
        %v4980 = vadd.f32 0.0, %v4979
        %v4981 = vpop.f32.mrf.mxu0
        %4982 = vmatprep.mubr.f32.mxu0 0.0
        %4983 = vmatmul.mubr.f32.gmra.mxu0 %v462
        %v4984 = vpop.f32.mrf.mxu0
        %v4985 = vadd.f32 0.0, %v4984
        %v4986 = vpop.f32.mrf.mxu0
        %4987 = vmatprep.mubr.f32.mxu0 0.0
        %4988 = vmatmul.mubr.f32.gmra.mxu0 %v465
        %v4989 = vpop.f32.mrf.mxu0
        %v4990 = vpop.f32.mrf.mxu0
        %4991 = vmatprep.mubr.f32.mxu0 0.0
        %4992 = vmatmul.mubr.f32.gmra.mxu0 %v468
        %v4993 = vpop.f32.mrf.mxu0
        %v4994 = vadd.f32 0.0, %v4993
        %v4995 = vpop.f32.mrf.mxu0
        %4996 = vmatprep.mubr.f32.mxu0 0.0
        %4997 = vmatmul.mubr.f32.gmra.mxu0 %v471
        %v4998 = vpop.f32.mrf.mxu0
        %v4999 = vadd.f32 0.0, %v4998
        %v5000 = vpop.f32.mrf.mxu0
        %5001 = vmatprep.mubr.f32.mxu0 0.0
        %5002 = vmatmul.mubr.f32.gmra.mxu0 %v474
        %v5003 = vpop.f32.mrf.mxu0
        %v5004 = vpop.f32.mrf.mxu0
        %5005 = vmatprep.mubr.f32.mxu0 0.0
        %5006 = vmatmul.mubr.f32.gmra.mxu0 %v477
        %v5007 = vpop.f32.mrf.mxu0
        %v5008 = vadd.f32 0.0, %v5007
        %v5009 = vpop.f32.mrf.mxu0
        %5010 = vmatprep.mubr.f32.mxu0 0.0
        %5011 = vmatmul.mubr.f32.gmra.mxu0 %v480
        %v5012 = vpop.f32.mrf.mxu0
        %v5013 = vadd.f32 0.0, %v5012
        %v5014 = vpop.f32.mrf.mxu0
        %5015 = vmatprep.mubr.f32.mxu0 0.0
        %5016 = vmatmul.mubr.f32.gmra.mxu0 %v483
        %v5017 = vpop.f32.mrf.mxu0
        %v5018 = vpop.f32.mrf.mxu0
        %5019 = vmatprep.mubr.f32.mxu0 0.0
        %5020 = vmatmul.mubr.f32.gmra.mxu0 %v486
        %v5021 = vpop.f32.mrf.mxu0
        %v5022 = vadd.f32 0.0, %v5021
        %v5023 = vpop.f32.mrf.mxu0
        %5024 = vmatprep.mubr.f32.mxu0 0.0
        %5025 = vmatmul.mubr.f32.gmra.mxu0 %v489
        %v5026 = vpop.f32.mrf.mxu0
        %v5027 = vadd.f32 0.0, %v5026
        %v5028 = vpop.f32.mrf.mxu0
        %5029 = vmatprep.mubr.f32.mxu0 0.0
        %5030 = vmatmul.mubr.f32.gmra.mxu0 %v492
        %v5031 = vpop.f32.mrf.mxu0
        %v5032 = vpop.f32.mrf.mxu0
        %5033 = vmatprep.mubr.f32.mxu0 0.0
        %5034 = vmatmul.mubr.f32.gmra.mxu0 %v495
        %v5035 = vpop.f32.mrf.mxu0
        %v5036 = vadd.f32 0.0, %v5035
        %v5037 = vpop.f32.mrf.mxu0
        %5038 = vmatprep.mubr.f32.mxu0 0.0
        %5039 = vmatmul.mubr.f32.gmra.mxu0 %v498
        %v5040 = vpop.f32.mrf.mxu0
        %v5041 = vadd.f32 0.0, %v5040
        %v5042 = vpop.f32.mrf.mxu0
        %5043 = vmatprep.mubr.f32.mxu0 0.0
        %5044 = vmatmul.mubr.f32.gmra.mxu0 %v501
        %v5045 = vpop.f32.mrf.mxu0
        %v5046 = vpop.f32.mrf.mxu0
        %5047 = vmatprep.mubr.f32.mxu0 0.0
        %5048 = vmatmul.mubr.f32.gmra.mxu0 %v504
        %v5049 = vpop.f32.mrf.mxu0
        %v5050 = vadd.f32 0.0, %v5049
        %v5051 = vpop.f32.mrf.mxu0
        %5052 = vmatprep.mubr.f32.mxu0 0.0
        %5053 = vmatmul.mubr.f32.gmra.mxu0 %v507
        %v5054 = vpop.f32.mrf.mxu0
        %v5055 = vadd.f32 0.0, %v5054
        %v5056 = vpop.f32.mrf.mxu0
        %5057 = vmatprep.mubr.f32.mxu0 0.0
        %5058 = vmatmul.mubr.f32.gmra.mxu0 %v510
        %v5059 = vpop.f32.mrf.mxu0
        %v5060 = vpop.f32.mrf.mxu0
        %5061 = vmatprep.mubr.f32.mxu0 0.0
        %5062 = vmatmul.mubr.f32.gmra.mxu0 %v513
        %v5063 = vpop.f32.mrf.mxu0
        %v5064 = vadd.f32 0.0, %v5063
        %v5065 = vpop.f32.mrf.mxu0
        %5066 = vmatprep.mubr.f32.mxu0 0.0
        %5067 = vmatmul.mubr.f32.gmra.mxu0 %v516
        %v5068 = vpop.f32.mrf.mxu0
        %v5069 = vadd.f32 0.0, %v5068
        %v5070 = vpop.f32.mrf.mxu0
        %5071 = vmatprep.mubr.f32.mxu0 0.0
        %5072 = vmatmul.mubr.f32.gmra.mxu0 %v519
        %v5073 = vpop.f32.mrf.mxu0
        %v5074 = vpop.f32.mrf.mxu0
        %5075 = vmatprep.mubr.f32.mxu0 0.0
        %5076 = vmatmul.mubr.f32.gmra.mxu0 %v522
        %v5077 = vpop.f32.mrf.mxu0
        %v5078 = vadd.f32 0.0, %v5077
        %v5079 = vpop.f32.mrf.mxu0
        %5080 = vmatprep.mubr.f32.mxu0 0.0
        %5081 = vmatmul.mubr.f32.gmra.mxu0 %v525
        %v5082 = vpop.f32.mrf.mxu0
        %v5083 = vadd.f32 0.0, %v5082
        %v5084 = vpop.f32.mrf.mxu0
        %5085 = vmatprep.mubr.f32.mxu0 0.0
        %5086 = vmatmul.mubr.f32.gmra.mxu0 %v528
        %v5087 = vpop.f32.mrf.mxu0
        %v5088 = vpop.f32.mrf.mxu0
        %5089 = vmatprep.mubr.f32.mxu0 0.0
        %5090 = vmatmul.mubr.f32.gmra.mxu0 %v531
        %v5091 = vpop.f32.mrf.mxu0
        %v5092 = vadd.f32 0.0, %v5091
        %v5093 = vpop.f32.mrf.mxu0
        %5094 = vmatprep.mubr.f32.mxu0 0.0
        %5095 = vmatmul.mubr.f32.gmra.mxu0 %v534
        %v5096 = vpop.f32.mrf.mxu0
        %v5097 = vadd.f32 0.0, %v5096
        %v5098 = vpop.f32.mrf.mxu0
        %5099 = vmatprep.mubr.f32.mxu0 0.0
        %5100 = vmatmul.mubr.f32.gmra.mxu0 %v537
        %v5101 = vpop.f32.mrf.mxu0
        %v5102 = vpop.f32.mrf.mxu0
        %5103 = vmatprep.mubr.f32.mxu0 0.0
        %5104 = vmatmul.mubr.f32.gmra.mxu0 %v1161
        %v5105 = vpop.f32.mrf.mxu0
        %v5106 = vadd.f32 0.0, %v5105
        %v5107 = vpop.f32.mrf.mxu0
        %5108 = vmatprep.mubr.f32.mxu0 0.0
        %5109 = vmatmul.mubr.f32.gmra.mxu0 %v1164
        %v5110 = vpop.f32.mrf.mxu0
        %v5111 = vadd.f32 0.0, %v5110
        %v5112 = vpop.f32.mrf.mxu0
        %5113 = vmatprep.mubr.f32.mxu0 0.0
        %5114 = vmatmul.mubr.f32.gmra.mxu0 %v1167
        %v5115 = vpop.f32.mrf.mxu0
        %v5116 = vpop.f32.mrf.mxu0
        %5117 = vmatprep.mubr.f32.mxu0 0.0
        %5118 = vmatmul.mubr.f32.gmra.mxu0 %v1525
        %v5119 = vpop.f32.mrf.mxu0
        %v5120 = vadd.f32 0.0, %v5119
        %v5121 = vpop.f32.mrf.mxu0
        %5122 = vmatprep.mubr.f32.mxu0 0.0
        %5123 = vmatmul.mubr.f32.gmra.mxu0 %v1528
        %v5124 = vpop.f32.mrf.mxu0
        %v5125 = vadd.f32 0.0, %v5124
        %v5126 = vpop.f32.mrf.mxu0
        %5127 = vmatprep.mubr.f32.mxu0 0.0
        %5128 = vmatmul.mubr.f32.gmra.mxu0 %v1531
        %v5129 = vpop.f32.mrf.mxu0
        %v5130 = vpop.f32.mrf.mxu0
        %5131 = vmatprep.mubr.f32.mxu0 0.0
        %5132 = vmatmul.mubr.f32.gmra.mxu0 %v1889
        %v5133 = vpop.f32.mrf.mxu0
        %v5134 = vadd.f32 0.0, %v5133
        %v5135 = vpop.f32.mrf.mxu0
        %5136 = vmatprep.mubr.f32.mxu0 0.0
        %5137 = vmatmul.mubr.f32.gmra.mxu0 %v1892
        %v5138 = vpop.f32.mrf.mxu0
        %v5139 = vadd.f32 0.0, %v5138
        %v5140 = vpop.f32.mrf.mxu0
        %5141 = vmatprep.mubr.f32.mxu0 0.0
        %5142 = vmatmul.mubr.f32.gmra.mxu0 %v1895
        %v5143 = vpop.f32.mrf.mxu0
        %v5144 = vpop.f32.mrf.mxu0
        %5145 = vdwg.mxu0
        %s5146 = scalar_lea.vmem %s5, 8
        %v5147 = vld [vmem:[%s5146] sm:$0xff]
        %5148 = vmatprep.subr.mxu0 0.0
        %5149 = vmatpush1.msra.mxu0 0.0
        %5150 = vmatprep.subr.mxu0 0.0
        %5151 = vmatpush1.msra.mxu0 0.0
        %5152 = vmatprep.subr.mxu0 0.0
        %5153 = vmatpush1.msra.mxu0 0.0
        %5154 = vmatprep.subr.mxu0 0.0
        %5155 = vmatpush1.msra.mxu0 0.0
        %5156 = vmatprep.subr.mxu0 0.0
        %5157 = vmatpush1.msra.mxu0 0.0
        %5158 = vmatprep.subr.mxu0 0.0
        %5159 = vmatpush1.msra.mxu0 0.0
        %5160 = vmatprep.subr.mxu0 0.0
        %5161 = vmatpush1.msra.mxu0 0.0
        %5162 = vmatprep.subr.mxu0 0.0
        %5163 = vmatpush1.msra.mxu0 0.0
        %5164 = vmatprep.subr.mxu0 0.0
        %5165 = vmatpush1.msra.mxu0 0.0
        %5166 = vmatprep.subr.mxu0 0.0
        %5167 = vmatpush1.msra.mxu0 0.0
        %5168 = vmatprep.subr.mxu0 0.0
        %5169 = vmatpush1.msra.mxu0 0.0
        %5170 = vmatprep.subr.mxu0 0.0
        %5171 = vmatpush1.msra.mxu0 0.0
        %5172 = vmatprep.subr.mxu0 0.0
        %5173 = vmatpush1.msra.mxu0 0.0
        %5174 = vmatprep.subr.mxu0 0.0
        %5175 = vmatpush1.msra.mxu0 0.0
        %5176 = vmatprep.subr.mxu0 0.0
        %5177 = vmatpush1.msra.mxu0 0.0
        %5178 = vmatprep.subr.mxu0 0.0
        %5179 = vmatpush1.msra.mxu0 %v5147
        %5180 = vmatprep.subr.mxu0 0.0
        %5181 = vmatpush2.msra.mxu0 0.0
        %5182 = vmatprep.subr.mxu0 0.0
        %5183 = vmatpush2.msra.mxu0 0.0
        %5184 = vmatprep.subr.mxu0 0.0
        %5185 = vmatpush2.msra.mxu0 0.0
        %5186 = vmatprep.subr.mxu0 0.0
        %5187 = vmatpush2.msra.mxu0 0.0
        %5188 = vmatprep.subr.mxu0 0.0
        %5189 = vmatpush2.msra.mxu0 0.0
        %5190 = vmatprep.subr.mxu0 0.0
        %5191 = vmatpush2.msra.mxu0 0.0
        %5192 = vmatprep.subr.mxu0 0.0
        %5193 = vmatpush2.msra.mxu0 0.0
        %5194 = vmatprep.subr.mxu0 0.0
        %5195 = vmatpush2.msra.mxu0 0.0
        %5196 = vmatprep.subr.mxu0 0.0
        %5197 = vmatpush2.msra.mxu0 0.0
        %5198 = vmatprep.subr.mxu0 0.0
        %5199 = vmatpush2.msra.mxu0 0.0
        %5200 = vmatprep.subr.mxu0 0.0
        %5201 = vmatpush2.msra.mxu0 0.0
        %5202 = vmatprep.subr.mxu0 0.0
        %5203 = vmatpush2.msra.mxu0 0.0
        %5204 = vmatprep.subr.mxu0 0.0
        %5205 = vmatpush2.msra.mxu0 0.0
        %5206 = vmatprep.subr.mxu0 0.0
        %5207 = vmatpush2.msra.mxu0 0.0
        %5208 = vmatprep.subr.mxu0 0.0
        %5209 = vmatpush2.msra.mxu0 0.0
        %5210 = vmatprep.subr.mxu0 0.0
        %5211 = vmatpush2.msra.mxu0 0.0
        %5212 = vmatprep.mubr.f32.mxu0 0.0
        %5213 = vmatmul.mubr.f32.gmra.mxu0 %v845
        %v5214 = vpop.f32.mrf.mxu0
        %v5215 = vadd.f32 0.0, %v5214
        %v5216 = vpop.f32.mrf.mxu0
        %5217 = vmatprep.mubr.f32.mxu0 0.0
        %5218 = vmatmul.mubr.f32.gmra.mxu0 %v848
        %v5219 = vpop.f32.mrf.mxu0
        %v5220 = vadd.f32 0.0, %v5219
        %v5221 = vpop.f32.mrf.mxu0
        %5222 = vmatprep.mubr.f32.mxu0 0.0
        %5223 = vmatmul.mubr.f32.gmra.mxu0 %v851
        %v5224 = vpop.f32.mrf.mxu0
        %v5225 = vadd.f32 0.0, %v5224
        %v5226 = vpop.f32.mrf.mxu0
        %5227 = vmatprep.mubr.f32.mxu0 0.0
        %5228 = vmatmul.mubr.f32.gmra.mxu0 %v396
        %v5229 = vpop.f32.mrf.mxu0
        %v5230 = vadd.f32 0.0, %v5229
        %v5231 = vpop.f32.mrf.mxu0
        %5232 = vmatprep.mubr.f32.mxu0 0.0
        %5233 = vmatmul.mubr.f32.gmra.mxu0 %v399
        %v5234 = vpop.f32.mrf.mxu0
        %v5235 = vadd.f32 0.0, %v5234
        %v5236 = vpop.f32.mrf.mxu0
        %5237 = vmatprep.mubr.f32.mxu0 0.0
        %5238 = vmatmul.mubr.f32.gmra.mxu0 %v402
        %v5239 = vpop.f32.mrf.mxu0
        %v5240 = vadd.f32 0.0, %v5239
        %v5241 = vpop.f32.mrf.mxu0
        %5242 = vmatprep.mubr.f32.mxu0 0.0
        %5243 = vmatmul.mubr.f32.gmra.mxu0 %v405
        %v5244 = vpop.f32.mrf.mxu0
        %v5245 = vadd.f32 0.0, %v5244
        %v5246 = vpop.f32.mrf.mxu0
        %5247 = vmatprep.mubr.f32.mxu0 0.0
        %5248 = vmatmul.mubr.f32.gmra.mxu0 %v408
        %v5249 = vpop.f32.mrf.mxu0
        %v5250 = vadd.f32 0.0, %v5249
        %v5251 = vpop.f32.mrf.mxu0
        %5252 = vmatprep.mubr.f32.mxu0 0.0
        %5253 = vmatmul.mubr.f32.gmra.mxu0 %v411
        %v5254 = vpop.f32.mrf.mxu0
        %v5255 = vadd.f32 0.0, %v5254
        %v5256 = vpop.f32.mrf.mxu0
        %5257 = vmatprep.mubr.f32.mxu0 0.0
        %5258 = vmatmul.mubr.f32.gmra.mxu0 %v414
        %v5259 = vpop.f32.mrf.mxu0
        %v5260 = vadd.f32 0.0, %v5259
        %v5261 = vpop.f32.mrf.mxu0
        %5262 = vmatprep.mubr.f32.mxu0 0.0
        %5263 = vmatmul.mubr.f32.gmra.mxu0 %v417
        %v5264 = vpop.f32.mrf.mxu0
        %v5265 = vadd.f32 0.0, %v5264
        %v5266 = vpop.f32.mrf.mxu0
        %5267 = vmatprep.mubr.f32.mxu0 0.0
        %5268 = vmatmul.mubr.f32.gmra.mxu0 %v420
        %v5269 = vpop.f32.mrf.mxu0
        %v5270 = vadd.f32 0.0, %v5269
        %v5271 = vpop.f32.mrf.mxu0
        %5272 = vmatprep.mubr.f32.mxu0 0.0
        %5273 = vmatmul.mubr.f32.gmra.mxu0 %v423
        %v5274 = vpop.f32.mrf.mxu0
        %v5275 = vadd.f32 0.0, %v5274
        %v5276 = vpop.f32.mrf.mxu0
        %5277 = vmatprep.mubr.f32.mxu0 0.0
        %5278 = vmatmul.mubr.f32.gmra.mxu0 %v426
        %v5279 = vpop.f32.mrf.mxu0
        %v5280 = vadd.f32 0.0, %v5279
        %v5281 = vpop.f32.mrf.mxu0
        %5282 = vmatprep.mubr.f32.mxu0 0.0
        %5283 = vmatmul.mubr.f32.gmra.mxu0 %v429
        %v5284 = vpop.f32.mrf.mxu0
        %v5285 = vadd.f32 0.0, %v5284
        %v5286 = vpop.f32.mrf.mxu0
        %5287 = vmatprep.mubr.f32.mxu0 0.0
        %5288 = vmatmul.mubr.f32.gmra.mxu0 %v432
        %v5289 = vpop.f32.mrf.mxu0
        %v5290 = vadd.f32 0.0, %v5289
        %v5291 = vpop.f32.mrf.mxu0
        %5292 = vmatprep.mubr.f32.mxu0 0.0
        %5293 = vmatmul.mubr.f32.gmra.mxu0 %v435
        %v5294 = vpop.f32.mrf.mxu0
        %v5295 = vadd.f32 0.0, %v5294
        %v5296 = vpop.f32.mrf.mxu0
        %5297 = vmatprep.mubr.f32.mxu0 0.0
        %5298 = vmatmul.mubr.f32.gmra.mxu0 %v438
        %v5299 = vpop.f32.mrf.mxu0
        %v5300 = vadd.f32 0.0, %v5299
        %v5301 = vpop.f32.mrf.mxu0
        %5302 = vmatprep.mubr.f32.mxu0 0.0
        %5303 = vmatmul.mubr.f32.gmra.mxu0 %v441
        %v5304 = vpop.f32.mrf.mxu0
        %v5305 = vadd.f32 0.0, %v5304
        %v5306 = vpop.f32.mrf.mxu0
        %5307 = vmatprep.mubr.f32.mxu0 0.0
        %5308 = vmatmul.mubr.f32.gmra.mxu0 %v444
        %v5309 = vpop.f32.mrf.mxu0
        %v5310 = vadd.f32 0.0, %v5309
        %v5311 = vpop.f32.mrf.mxu0
        %5312 = vmatprep.mubr.f32.mxu0 0.0
        %5313 = vmatmul.mubr.f32.gmra.mxu0 %v447
        %v5314 = vpop.f32.mrf.mxu0
        %v5315 = vadd.f32 0.0, %v5314
        %v5316 = vpop.f32.mrf.mxu0
        %5317 = vmatprep.mubr.f32.mxu0 0.0
        %5318 = vmatmul.mubr.f32.gmra.mxu0 %v450
        %v5319 = vpop.f32.mrf.mxu0
        %v5320 = vadd.f32 0.0, %v5319
        %v5321 = vpop.f32.mrf.mxu0
        %5322 = vmatprep.mubr.f32.mxu0 0.0
        %5323 = vmatmul.mubr.f32.gmra.mxu0 %v453
        %v5324 = vpop.f32.mrf.mxu0
        %v5325 = vadd.f32 0.0, %v5324
        %v5326 = vpop.f32.mrf.mxu0
        %5327 = vmatprep.mubr.f32.mxu0 0.0
        %5328 = vmatmul.mubr.f32.gmra.mxu0 %v456
        %v5329 = vpop.f32.mrf.mxu0
        %v5330 = vadd.f32 0.0, %v5329
        %v5331 = vpop.f32.mrf.mxu0
        %5332 = vmatprep.mubr.f32.mxu0 0.0
        %5333 = vmatmul.mubr.f32.gmra.mxu0 %v459
        %v5334 = vpop.f32.mrf.mxu0
        %v5335 = vadd.f32 0.0, %v5334
        %v5336 = vpop.f32.mrf.mxu0
        %5337 = vmatprep.mubr.f32.mxu0 0.0
        %5338 = vmatmul.mubr.f32.gmra.mxu0 %v462
        %v5339 = vpop.f32.mrf.mxu0
        %v5340 = vadd.f32 0.0, %v5339
        %v5341 = vpop.f32.mrf.mxu0
        %5342 = vmatprep.mubr.f32.mxu0 0.0
        %5343 = vmatmul.mubr.f32.gmra.mxu0 %v465
        %v5344 = vpop.f32.mrf.mxu0
        %v5345 = vadd.f32 0.0, %v5344
        %v5346 = vpop.f32.mrf.mxu0
        %5347 = vmatprep.mubr.f32.mxu0 0.0
        %5348 = vmatmul.mubr.f32.gmra.mxu0 %v468
        %v5349 = vpop.f32.mrf.mxu0
        %v5350 = vadd.f32 0.0, %v5349
        %v5351 = vpop.f32.mrf.mxu0
        %5352 = vmatprep.mubr.f32.mxu0 0.0
        %5353 = vmatmul.mubr.f32.gmra.mxu0 %v471
        %v5354 = vpop.f32.mrf.mxu0
        %v5355 = vadd.f32 0.0, %v5354
        %v5356 = vpop.f32.mrf.mxu0
        %5357 = vmatprep.mubr.f32.mxu0 0.0
        %5358 = vmatmul.mubr.f32.gmra.mxu0 %v474
        %v5359 = vpop.f32.mrf.mxu0
        %v5360 = vadd.f32 0.0, %v5359
        %v5361 = vpop.f32.mrf.mxu0
        %5362 = vmatprep.mubr.f32.mxu0 0.0
        %5363 = vmatmul.mubr.f32.gmra.mxu0 %v477
        %v5364 = vpop.f32.mrf.mxu0
        %v5365 = vadd.f32 0.0, %v5364
        %v5366 = vpop.f32.mrf.mxu0
        %5367 = vmatprep.mubr.f32.mxu0 0.0
        %5368 = vmatmul.mubr.f32.gmra.mxu0 %v480
        %v5369 = vpop.f32.mrf.mxu0
        %v5370 = vadd.f32 0.0, %v5369
        %v5371 = vpop.f32.mrf.mxu0
        %5372 = vmatprep.mubr.f32.mxu0 0.0
        %5373 = vmatmul.mubr.f32.gmra.mxu0 %v483
        %v5374 = vpop.f32.mrf.mxu0
        %v5375 = vadd.f32 0.0, %v5374
        %v5376 = vpop.f32.mrf.mxu0
        %5377 = vmatprep.mubr.f32.mxu0 0.0
        %5378 = vmatmul.mubr.f32.gmra.mxu0 %v486
        %v5379 = vpop.f32.mrf.mxu0
        %v5380 = vadd.f32 0.0, %v5379
        %v5381 = vpop.f32.mrf.mxu0
        %5382 = vmatprep.mubr.f32.mxu0 0.0
        %5383 = vmatmul.mubr.f32.gmra.mxu0 %v489
        %v5384 = vpop.f32.mrf.mxu0
        %v5385 = vadd.f32 0.0, %v5384
        %v5386 = vpop.f32.mrf.mxu0
        %5387 = vmatprep.mubr.f32.mxu0 0.0
        %5388 = vmatmul.mubr.f32.gmra.mxu0 %v492
        %v5389 = vpop.f32.mrf.mxu0
        %v5390 = vadd.f32 0.0, %v5389
        %v5391 = vpop.f32.mrf.mxu0
        %5392 = vmatprep.mubr.f32.mxu0 0.0
        %5393 = vmatmul.mubr.f32.gmra.mxu0 %v495
        %v5394 = vpop.f32.mrf.mxu0
        %v5395 = vadd.f32 0.0, %v5394
        %v5396 = vpop.f32.mrf.mxu0
        %5397 = vmatprep.mubr.f32.mxu0 0.0
        %5398 = vmatmul.mubr.f32.gmra.mxu0 %v498
        %v5399 = vpop.f32.mrf.mxu0
        %v5400 = vadd.f32 0.0, %v5399
        %v5401 = vpop.f32.mrf.mxu0
        %5402 = vmatprep.mubr.f32.mxu0 0.0
        %5403 = vmatmul.mubr.f32.gmra.mxu0 %v501
        %v5404 = vpop.f32.mrf.mxu0
        %v5405 = vadd.f32 0.0, %v5404
        %v5406 = vpop.f32.mrf.mxu0
        %5407 = vmatprep.mubr.f32.mxu0 0.0
        %5408 = vmatmul.mubr.f32.gmra.mxu0 %v504
        %v5409 = vpop.f32.mrf.mxu0
        %v5410 = vadd.f32 0.0, %v5409
        %v5411 = vpop.f32.mrf.mxu0
        %5412 = vmatprep.mubr.f32.mxu0 0.0
        %5413 = vmatmul.mubr.f32.gmra.mxu0 %v507
        %v5414 = vpop.f32.mrf.mxu0
        %v5415 = vadd.f32 0.0, %v5414
        %v5416 = vpop.f32.mrf.mxu0
        %5417 = vmatprep.mubr.f32.mxu0 0.0
        %5418 = vmatmul.mubr.f32.gmra.mxu0 %v510
        %v5419 = vpop.f32.mrf.mxu0
        %v5420 = vadd.f32 0.0, %v5419
        %v5421 = vpop.f32.mrf.mxu0
        %5422 = vmatprep.mubr.f32.mxu0 0.0
        %5423 = vmatmul.mubr.f32.gmra.mxu0 %v513
        %v5424 = vpop.f32.mrf.mxu0
        %v5425 = vadd.f32 0.0, %v5424
        %v5426 = vpop.f32.mrf.mxu0
        %5427 = vmatprep.mubr.f32.mxu0 0.0
        %5428 = vmatmul.mubr.f32.gmra.mxu0 %v516
        %v5429 = vpop.f32.mrf.mxu0
        %v5430 = vadd.f32 0.0, %v5429
        %v5431 = vpop.f32.mrf.mxu0
        %5432 = vmatprep.mubr.f32.mxu0 0.0
        %5433 = vmatmul.mubr.f32.gmra.mxu0 %v519
        %v5434 = vpop.f32.mrf.mxu0
        %v5435 = vadd.f32 0.0, %v5434
        %v5436 = vpop.f32.mrf.mxu0
        %5437 = vmatprep.mubr.f32.mxu0 0.0
        %5438 = vmatmul.mubr.f32.gmra.mxu0 %v522
        %v5439 = vpop.f32.mrf.mxu0
        %v5440 = vadd.f32 0.0, %v5439
        %v5441 = vpop.f32.mrf.mxu0
        %5442 = vmatprep.mubr.f32.mxu0 0.0
        %5443 = vmatmul.mubr.f32.gmra.mxu0 %v525
        %v5444 = vpop.f32.mrf.mxu0
        %v5445 = vadd.f32 0.0, %v5444
        %v5446 = vpop.f32.mrf.mxu0
        %5447 = vmatprep.mubr.f32.mxu0 0.0
        %5448 = vmatmul.mubr.f32.gmra.mxu0 %v528
        %v5449 = vpop.f32.mrf.mxu0
        %v5450 = vadd.f32 0.0, %v5449
        %v5451 = vpop.f32.mrf.mxu0
        %5452 = vmatprep.mubr.f32.mxu0 0.0
        %5453 = vmatmul.mubr.f32.gmra.mxu0 %v531
        %v5454 = vpop.f32.mrf.mxu0
        %v5455 = vadd.f32 0.0, %v5454
        %v5456 = vpop.f32.mrf.mxu0
        %5457 = vmatprep.mubr.f32.mxu0 0.0
        %5458 = vmatmul.mubr.f32.gmra.mxu0 %v534
        %v5459 = vpop.f32.mrf.mxu0
        %v5460 = vadd.f32 0.0, %v5459
        %v5461 = vpop.f32.mrf.mxu0
        %5462 = vmatprep.mubr.f32.mxu0 0.0
        %5463 = vmatmul.mubr.f32.gmra.mxu0 %v537
        %v5464 = vpop.f32.mrf.mxu0
        %v5465 = vadd.f32 0.0, %v5464
        %v5466 = vpop.f32.mrf.mxu0
        %5467 = vmatprep.mubr.f32.mxu0 0.0
        %5468 = vmatmul.mubr.f32.gmra.mxu0 %v1161
        %v5469 = vpop.f32.mrf.mxu0
        %v5470 = vadd.f32 0.0, %v5469
        %v5471 = vpop.f32.mrf.mxu0
        %5472 = vmatprep.mubr.f32.mxu0 0.0
        %5473 = vmatmul.mubr.f32.gmra.mxu0 %v1164
        %v5474 = vpop.f32.mrf.mxu0
        %v5475 = vadd.f32 0.0, %v5474
        %v5476 = vpop.f32.mrf.mxu0
        %5477 = vmatprep.mubr.f32.mxu0 0.0
        %5478 = vmatmul.mubr.f32.gmra.mxu0 %v1167
        %v5479 = vpop.f32.mrf.mxu0
        %v5480 = vadd.f32 0.0, %v5479
        %v5481 = vpop.f32.mrf.mxu0
        %5482 = vmatprep.mubr.f32.mxu0 0.0
        %5483 = vmatmul.mubr.f32.gmra.mxu0 %v1525
        %v5484 = vpop.f32.mrf.mxu0
        %v5485 = vadd.f32 0.0, %v5484
        %v5486 = vpop.f32.mrf.mxu0
        %5487 = vmatprep.mubr.f32.mxu0 0.0
        %5488 = vmatmul.mubr.f32.gmra.mxu0 %v1528
        %v5489 = vpop.f32.mrf.mxu0
        %v5490 = vadd.f32 0.0, %v5489
        %v5491 = vpop.f32.mrf.mxu0
        %5492 = vmatprep.mubr.f32.mxu0 0.0
        %5493 = vmatmul.mubr.f32.gmra.mxu0 %v1531
        %v5494 = vpop.f32.mrf.mxu0
        %v5495 = vadd.f32 0.0, %v5494
        %v5496 = vpop.f32.mrf.mxu0
        %5497 = vmatprep.mubr.f32.mxu0 0.0
        %5498 = vmatmul.mubr.f32.gmra.mxu0 %v1889
        %v5499 = vpop.f32.mrf.mxu0
        %v5500 = vadd.f32 0.0, %v5499
        %v5501 = vpop.f32.mrf.mxu0
        %5502 = vmatprep.mubr.f32.mxu0 0.0
        %5503 = vmatmul.mubr.f32.gmra.mxu0 %v1892
        %v5504 = vpop.f32.mrf.mxu0
        %v5505 = vadd.f32 0.0, %v5504
        %v5506 = vpop.f32.mrf.mxu0
        %5507 = vmatprep.mubr.f32.mxu0 0.0
        %5508 = vmatmul.mubr.f32.gmra.mxu0 %v1895
        %v5509 = vpop.f32.mrf.mxu0
        %v5510 = vadd.f32 0.0, %v5509
        %v5511 = vpop.f32.mrf.mxu0
        %5512 = vdwg.mxu0
        %v5573 = vrot.slane %v5215, 1
        %v5574 = vrot.slane %v5220, 1
        %v5575 = vsel %vm3152, %v5573, %v5574
        %v5576 = vrot.slane %v5225, 1
        %v5577 = vsel %vm3152, %v5574, %v5576
        %v5578 = vrot.slane %v5230, 1
        %v5579 = vrot.slane %v5235, 1
        %v5580 = vsel %vm3152, %v5578, %v5579
        %v5581 = vrot.slane %v5240, 1
        %v5582 = vsel %vm3152, %v5579, %v5581
        %v5583 = vrot.slane %v5245, 1
        %v5584 = vrot.slane %v5250, 1
        %v5585 = vsel %vm3152, %v5583, %v5584
        %v5586 = vrot.slane %v5255, 1
        %v5587 = vsel %vm3152, %v5584, %v5586
        %v5588 = vrot.slane %v5260, 1
        %v5589 = vrot.slane %v5265, 1
        %v5590 = vsel %vm3152, %v5588, %v5589
        %v5591 = vrot.slane %v5270, 1
        %v5592 = vsel %vm3152, %v5589, %v5591
        %v5593 = vrot.slane %v5275, 1
        %v5594 = vrot.slane %v5280, 1
        %v5595 = vsel %vm3152, %v5593, %v5594
        %v5596 = vrot.slane %v5285, 1
        %v5597 = vsel %vm3152, %v5594, %v5596
        %v5598 = vrot.slane %v5290, 1
        %v5599 = vrot.slane %v5295, 1
        %v5600 = vsel %vm3152, %v5598, %v5599
        %v5601 = vrot.slane %v5300, 1
        %v5602 = vsel %vm3152, %v5599, %v5601
        %v5603 = vrot.slane %v5305, 1
        %v5604 = vrot.slane %v5310, 1
        %v5605 = vsel %vm3152, %v5603, %v5604
        %v5606 = vrot.slane %v5315, 1
        %v5607 = vsel %vm3152, %v5604, %v5606
        %v5608 = vrot.slane %v5320, 1
        %v5609 = vrot.slane %v5325, 1
        %v5610 = vsel %vm3152, %v5608, %v5609
        %v5611 = vrot.slane %v5330, 1
        %v5612 = vsel %vm3152, %v5609, %v5611
        %v5613 = vrot.slane %v5335, 1
        %v5614 = vrot.slane %v5340, 1
        %v5615 = vsel %vm3152, %v5613, %v5614
        %v5616 = vrot.slane %v5345, 1
        %v5617 = vsel %vm3152, %v5614, %v5616
        %v5618 = vrot.slane %v5350, 1
        %v5619 = vrot.slane %v5355, 1
        %v5620 = vsel %vm3152, %v5618, %v5619
        %v5621 = vrot.slane %v5360, 1
        %v5622 = vsel %vm3152, %v5619, %v5621
        %v5623 = vrot.slane %v5365, 1
        %v5624 = vrot.slane %v5370, 1
        %v5625 = vsel %vm3152, %v5623, %v5624
        %v5626 = vrot.slane %v5375, 1
        %v5627 = vsel %vm3152, %v5624, %v5626
        %v5628 = vrot.slane %v5380, 1
        %v5629 = vrot.slane %v5385, 1
        %v5630 = vsel %vm3152, %v5628, %v5629
        %v5631 = vrot.slane %v5390, 1
        %v5632 = vsel %vm3152, %v5629, %v5631
        %v5633 = vrot.slane %v5395, 1
        %v5634 = vrot.slane %v5400, 1
        %v5635 = vsel %vm3152, %v5633, %v5634
        %v5636 = vrot.slane %v5405, 1
        %v5637 = vsel %vm3152, %v5634, %v5636
        %v5638 = vrot.slane %v5410, 1
        %v5639 = vrot.slane %v5415, 1
        %v5640 = vsel %vm3152, %v5638, %v5639
        %v5641 = vrot.slane %v5420, 1
        %v5642 = vsel %vm3152, %v5639, %v5641
        %v5643 = vrot.slane %v5425, 1
        %v5644 = vrot.slane %v5430, 1
        %v5645 = vsel %vm3152, %v5643, %v5644
        %v5646 = vrot.slane %v5435, 1
        %v5647 = vsel %vm3152, %v5644, %v5646
        %v5648 = vrot.slane %v5440, 1
        %v5649 = vrot.slane %v5445, 1
        %v5650 = vsel %vm3152, %v5648, %v5649
        %v5651 = vrot.slane %v5450, 1
        %v5652 = vsel %vm3152, %v5649, %v5651
        %v5653 = vrot.slane %v5455, 1
        %v5654 = vrot.slane %v5460, 1
        %v5655 = vsel %vm3152, %v5653, %v5654
        %v5656 = vrot.slane %v5465, 1
        %v5657 = vsel %vm3152, %v5654, %v5656
        %v5658 = vrot.slane %v5470, 1
        %v5659 = vrot.slane %v5475, 1
        %v5660 = vsel %vm3152, %v5658, %v5659
        %v5661 = vrot.slane %v5480, 1
        %v5662 = vsel %vm3152, %v5659, %v5661
        %v5663 = vrot.slane %v5485, 1
        %v5664 = vrot.slane %v5490, 1
        %v5665 = vsel %vm3152, %v5663, %v5664
        %v5666 = vrot.slane %v5495, 1
        %v5667 = vsel %vm3152, %v5664, %v5666
        %v5668 = vrot.slane %v5500, 1
        %v5669 = vrot.slane %v5505, 1
        %v5670 = vsel %vm3152, %v5668, %v5669
        %v5671 = vrot.slane %v5510, 1
        %v5672 = vsel %vm3152, %v5669, %v5671
        %v5713 = vadd.f32 %v4868, %v5575
        %v5714 = vadd.f32 %v4873, %v5577
        %v5715 = vadd.f32 %v4882, %v5580
        %v5716 = vadd.f32 %v4887, %v5582
        %v5717 = vadd.f32 %v4896, %v5585
        %v5718 = vadd.f32 %v4901, %v5587
        %v5719 = vadd.f32 %v4910, %v5590
        %v5720 = vadd.f32 %v4915, %v5592
        %v5721 = vadd.f32 %v4924, %v5595
        %v5722 = vadd.f32 %v4929, %v5597
        %v5723 = vadd.f32 %v4938, %v5600
        %v5724 = vadd.f32 %v4943, %v5602
        %v5725 = vadd.f32 %v4952, %v5605
        %v5726 = vadd.f32 %v4957, %v5607
        %v5727 = vadd.f32 %v4966, %v5610
        %v5728 = vadd.f32 %v4971, %v5612
        %v5729 = vadd.f32 %v4980, %v5615
        %v5730 = vadd.f32 %v4985, %v5617
        %v5731 = vadd.f32 %v4994, %v5620
        %v5732 = vadd.f32 %v4999, %v5622
        %v5733 = vadd.f32 %v5008, %v5625
        %v5734 = vadd.f32 %v5013, %v5627
        %v5735 = vadd.f32 %v5022, %v5630
        %v5736 = vadd.f32 %v5027, %v5632
        %v5737 = vadd.f32 %v5036, %v5635
        %v5738 = vadd.f32 %v5041, %v5637
        %v5739 = vadd.f32 %v5050, %v5640
        %v5740 = vadd.f32 %v5055, %v5642
        %v5741 = vadd.f32 %v5064, %v5645
        %v5742 = vadd.f32 %v5069, %v5647
        %v5743 = vadd.f32 %v5078, %v5650
        %v5744 = vadd.f32 %v5083, %v5652
        %v5745 = vadd.f32 %v5092, %v5655
        %v5746 = vadd.f32 %v5097, %v5657
        %v5747 = vadd.f32 %v5106, %v5660
        %v5748 = vadd.f32 %v5111, %v5662
        %v5749 = vadd.f32 %v5120, %v5665
        %v5750 = vadd.f32 %v5125, %v5667
        %v5751 = vadd.f32 %v5134, %v5670
        %v5752 = vadd.f32 %v5139, %v5672
        %s5753 = scalar_lea.vmem %s5, 16
        %v5754 = vld [vmem:[%s5753] sm:$0xff]
        %5755 = vmatprep.subr.mxu0 0.0
        %5756 = vmatpush1.msra.mxu0 0.0
        %5757 = vmatprep.subr.mxu0 0.0
        %5758 = vmatpush1.msra.mxu0 0.0
        %5759 = vmatprep.subr.mxu0 0.0
        %5760 = vmatpush1.msra.mxu0 0.0
        %5761 = vmatprep.subr.mxu0 0.0
        %5762 = vmatpush1.msra.mxu0 0.0
        %5763 = vmatprep.subr.mxu0 0.0
        %5764 = vmatpush1.msra.mxu0 0.0
        %5765 = vmatprep.subr.mxu0 0.0
        %5766 = vmatpush1.msra.mxu0 0.0
        %5767 = vmatprep.subr.mxu0 0.0
        %5768 = vmatpush1.msra.mxu0 0.0
        %5769 = vmatprep.subr.mxu0 0.0
        %5770 = vmatpush1.msra.mxu0 0.0
        %5771 = vmatprep.subr.mxu0 0.0
        %5772 = vmatpush1.msra.mxu0 0.0
        %5773 = vmatprep.subr.mxu0 0.0
        %5774 = vmatpush1.msra.mxu0 0.0
        %5775 = vmatprep.subr.mxu0 0.0
        %5776 = vmatpush1.msra.mxu0 0.0
        %5777 = vmatprep.subr.mxu0 0.0
        %5778 = vmatpush1.msra.mxu0 0.0
        %5779 = vmatprep.subr.mxu0 0.0
        %5780 = vmatpush1.msra.mxu0 0.0
        %5781 = vmatprep.subr.mxu0 0.0
        %5782 = vmatpush1.msra.mxu0 0.0
        %5783 = vmatprep.subr.mxu0 0.0
        %5784 = vmatpush1.msra.mxu0 0.0
        %5785 = vmatprep.subr.mxu0 0.0
        %5786 = vmatpush1.msra.mxu0 %v5754
        %5787 = vmatprep.subr.mxu0 0.0
        %5788 = vmatpush2.msra.mxu0 0.0
        %5789 = vmatprep.subr.mxu0 0.0
        %5790 = vmatpush2.msra.mxu0 0.0
        %5791 = vmatprep.subr.mxu0 0.0
        %5792 = vmatpush2.msra.mxu0 0.0
        %5793 = vmatprep.subr.mxu0 0.0
        %5794 = vmatpush2.msra.mxu0 0.0
        %5795 = vmatprep.subr.mxu0 0.0
        %5796 = vmatpush2.msra.mxu0 0.0
        %5797 = vmatprep.subr.mxu0 0.0
        %5798 = vmatpush2.msra.mxu0 0.0
        %5799 = vmatprep.subr.mxu0 0.0
        %5800 = vmatpush2.msra.mxu0 0.0
        %5801 = vmatprep.subr.mxu0 0.0
        %5802 = vmatpush2.msra.mxu0 0.0
        %5803 = vmatprep.subr.mxu0 0.0
        %5804 = vmatpush2.msra.mxu0 0.0
        %5805 = vmatprep.subr.mxu0 0.0
        %5806 = vmatpush2.msra.mxu0 0.0
        %5807 = vmatprep.subr.mxu0 0.0
        %5808 = vmatpush2.msra.mxu0 0.0
        %5809 = vmatprep.subr.mxu0 0.0
        %5810 = vmatpush2.msra.mxu0 0.0
        %5811 = vmatprep.subr.mxu0 0.0
        %5812 = vmatpush2.msra.mxu0 0.0
        %5813 = vmatprep.subr.mxu0 0.0
        %5814 = vmatpush2.msra.mxu0 0.0
        %5815 = vmatprep.subr.mxu0 0.0
        %5816 = vmatpush2.msra.mxu0 0.0
        %5817 = vmatprep.subr.mxu0 0.0
        %5818 = vmatpush2.msra.mxu0 0.0
        %5819 = vmatprep.mubr.f32.mxu0 0.0
        %5820 = vmatmul.mubr.f32.gmra.mxu0 %v845
        %v5821 = vpop.f32.mrf.mxu0
        %v5822 = vadd.f32 0.0, %v5821
        %v5823 = vpop.f32.mrf.mxu0
        %5824 = vmatprep.mubr.f32.mxu0 0.0
        %5825 = vmatmul.mubr.f32.gmra.mxu0 %v848
        %v5826 = vpop.f32.mrf.mxu0
        %v5827 = vadd.f32 0.0, %v5826
        %v5828 = vpop.f32.mrf.mxu0
        %5829 = vmatprep.mubr.f32.mxu0 0.0
        %5830 = vmatmul.mubr.f32.gmra.mxu0 %v851
        %v5831 = vpop.f32.mrf.mxu0
        %v5832 = vadd.f32 0.0, %v5831
        %v5833 = vpop.f32.mrf.mxu0
        %5834 = vmatprep.mubr.f32.mxu0 0.0
        %5835 = vmatmul.mubr.f32.gmra.mxu0 %v396
        %v5836 = vpop.f32.mrf.mxu0
        %v5837 = vadd.f32 0.0, %v5836
        %v5838 = vpop.f32.mrf.mxu0
        %5839 = vmatprep.mubr.f32.mxu0 0.0
        %5840 = vmatmul.mubr.f32.gmra.mxu0 %v399
        %v5841 = vpop.f32.mrf.mxu0
        %v5842 = vadd.f32 0.0, %v5841
        %v5843 = vpop.f32.mrf.mxu0
        %5844 = vmatprep.mubr.f32.mxu0 0.0
        %5845 = vmatmul.mubr.f32.gmra.mxu0 %v402
        %v5846 = vpop.f32.mrf.mxu0
        %v5847 = vadd.f32 0.0, %v5846
        %v5848 = vpop.f32.mrf.mxu0
        %5849 = vmatprep.mubr.f32.mxu0 0.0
        %5850 = vmatmul.mubr.f32.gmra.mxu0 %v405
        %v5851 = vpop.f32.mrf.mxu0
        %v5852 = vadd.f32 0.0, %v5851
        %v5853 = vpop.f32.mrf.mxu0
        %5854 = vmatprep.mubr.f32.mxu0 0.0
        %5855 = vmatmul.mubr.f32.gmra.mxu0 %v408
        %v5856 = vpop.f32.mrf.mxu0
        %v5857 = vadd.f32 0.0, %v5856
        %v5858 = vpop.f32.mrf.mxu0
        %5859 = vmatprep.mubr.f32.mxu0 0.0
        %5860 = vmatmul.mubr.f32.gmra.mxu0 %v411
        %v5861 = vpop.f32.mrf.mxu0
        %v5862 = vadd.f32 0.0, %v5861
        %v5863 = vpop.f32.mrf.mxu0
        %5864 = vmatprep.mubr.f32.mxu0 0.0
        %5865 = vmatmul.mubr.f32.gmra.mxu0 %v414
        %v5866 = vpop.f32.mrf.mxu0
        %v5867 = vadd.f32 0.0, %v5866
        %v5868 = vpop.f32.mrf.mxu0
        %5869 = vmatprep.mubr.f32.mxu0 0.0
        %5870 = vmatmul.mubr.f32.gmra.mxu0 %v417
        %v5871 = vpop.f32.mrf.mxu0
        %v5872 = vadd.f32 0.0, %v5871
        %v5873 = vpop.f32.mrf.mxu0
        %5874 = vmatprep.mubr.f32.mxu0 0.0
        %5875 = vmatmul.mubr.f32.gmra.mxu0 %v420
        %v5876 = vpop.f32.mrf.mxu0
        %v5877 = vadd.f32 0.0, %v5876
        %v5878 = vpop.f32.mrf.mxu0
        %5879 = vmatprep.mubr.f32.mxu0 0.0
        %5880 = vmatmul.mubr.f32.gmra.mxu0 %v423
        %v5881 = vpop.f32.mrf.mxu0
        %v5882 = vadd.f32 0.0, %v5881
        %v5883 = vpop.f32.mrf.mxu0
        %5884 = vmatprep.mubr.f32.mxu0 0.0
        %5885 = vmatmul.mubr.f32.gmra.mxu0 %v426
        %v5886 = vpop.f32.mrf.mxu0
        %v5887 = vadd.f32 0.0, %v5886
        %v5888 = vpop.f32.mrf.mxu0
        %5889 = vmatprep.mubr.f32.mxu0 0.0
        %5890 = vmatmul.mubr.f32.gmra.mxu0 %v429
        %v5891 = vpop.f32.mrf.mxu0
        %v5892 = vadd.f32 0.0, %v5891
        %v5893 = vpop.f32.mrf.mxu0
        %5894 = vmatprep.mubr.f32.mxu0 0.0
        %5895 = vmatmul.mubr.f32.gmra.mxu0 %v432
        %v5896 = vpop.f32.mrf.mxu0
        %v5897 = vadd.f32 0.0, %v5896
        %v5898 = vpop.f32.mrf.mxu0
        %5899 = vmatprep.mubr.f32.mxu0 0.0
        %5900 = vmatmul.mubr.f32.gmra.mxu0 %v435
        %v5901 = vpop.f32.mrf.mxu0
        %v5902 = vadd.f32 0.0, %v5901
        %v5903 = vpop.f32.mrf.mxu0
        %5904 = vmatprep.mubr.f32.mxu0 0.0
        %5905 = vmatmul.mubr.f32.gmra.mxu0 %v438
        %v5906 = vpop.f32.mrf.mxu0
        %v5907 = vadd.f32 0.0, %v5906
        %v5908 = vpop.f32.mrf.mxu0
        %5909 = vmatprep.mubr.f32.mxu0 0.0
        %5910 = vmatmul.mubr.f32.gmra.mxu0 %v441
        %v5911 = vpop.f32.mrf.mxu0
        %v5912 = vadd.f32 0.0, %v5911
        %v5913 = vpop.f32.mrf.mxu0
        %5914 = vmatprep.mubr.f32.mxu0 0.0
        %5915 = vmatmul.mubr.f32.gmra.mxu0 %v444
        %v5916 = vpop.f32.mrf.mxu0
        %v5917 = vadd.f32 0.0, %v5916
        %v5918 = vpop.f32.mrf.mxu0
        %5919 = vmatprep.mubr.f32.mxu0 0.0
        %5920 = vmatmul.mubr.f32.gmra.mxu0 %v447
        %v5921 = vpop.f32.mrf.mxu0
        %v5922 = vadd.f32 0.0, %v5921
        %v5923 = vpop.f32.mrf.mxu0
        %5924 = vmatprep.mubr.f32.mxu0 0.0
        %5925 = vmatmul.mubr.f32.gmra.mxu0 %v450
        %v5926 = vpop.f32.mrf.mxu0
        %v5927 = vadd.f32 0.0, %v5926
        %v5928 = vpop.f32.mrf.mxu0
        %5929 = vmatprep.mubr.f32.mxu0 0.0
        %5930 = vmatmul.mubr.f32.gmra.mxu0 %v453
        %v5931 = vpop.f32.mrf.mxu0
        %v5932 = vadd.f32 0.0, %v5931
        %v5933 = vpop.f32.mrf.mxu0
        %5934 = vmatprep.mubr.f32.mxu0 0.0
        %5935 = vmatmul.mubr.f32.gmra.mxu0 %v456
        %v5936 = vpop.f32.mrf.mxu0
        %v5937 = vadd.f32 0.0, %v5936
        %v5938 = vpop.f32.mrf.mxu0
        %5939 = vmatprep.mubr.f32.mxu0 0.0
        %5940 = vmatmul.mubr.f32.gmra.mxu0 %v459
        %v5941 = vpop.f32.mrf.mxu0
        %v5942 = vadd.f32 0.0, %v5941
        %v5943 = vpop.f32.mrf.mxu0
        %5944 = vmatprep.mubr.f32.mxu0 0.0
        %5945 = vmatmul.mubr.f32.gmra.mxu0 %v462
        %v5946 = vpop.f32.mrf.mxu0
        %v5947 = vadd.f32 0.0, %v5946
        %v5948 = vpop.f32.mrf.mxu0
        %5949 = vmatprep.mubr.f32.mxu0 0.0
        %5950 = vmatmul.mubr.f32.gmra.mxu0 %v465
        %v5951 = vpop.f32.mrf.mxu0
        %v5952 = vadd.f32 0.0, %v5951
        %v5953 = vpop.f32.mrf.mxu0
        %5954 = vmatprep.mubr.f32.mxu0 0.0
        %5955 = vmatmul.mubr.f32.gmra.mxu0 %v468
        %v5956 = vpop.f32.mrf.mxu0
        %v5957 = vadd.f32 0.0, %v5956
        %v5958 = vpop.f32.mrf.mxu0
        %5959 = vmatprep.mubr.f32.mxu0 0.0
        %5960 = vmatmul.mubr.f32.gmra.mxu0 %v471
        %v5961 = vpop.f32.mrf.mxu0
        %v5962 = vadd.f32 0.0, %v5961
        %v5963 = vpop.f32.mrf.mxu0
        %5964 = vmatprep.mubr.f32.mxu0 0.0
        %5965 = vmatmul.mubr.f32.gmra.mxu0 %v474
        %v5966 = vpop.f32.mrf.mxu0
        %v5967 = vadd.f32 0.0, %v5966
        %v5968 = vpop.f32.mrf.mxu0
        %5969 = vmatprep.mubr.f32.mxu0 0.0
        %5970 = vmatmul.mubr.f32.gmra.mxu0 %v477
        %v5971 = vpop.f32.mrf.mxu0
        %v5972 = vadd.f32 0.0, %v5971
        %v5973 = vpop.f32.mrf.mxu0
        %5974 = vmatprep.mubr.f32.mxu0 0.0
        %5975 = vmatmul.mubr.f32.gmra.mxu0 %v480
        %v5976 = vpop.f32.mrf.mxu0
        %v5977 = vadd.f32 0.0, %v5976
        %v5978 = vpop.f32.mrf.mxu0
        %5979 = vmatprep.mubr.f32.mxu0 0.0
        %5980 = vmatmul.mubr.f32.gmra.mxu0 %v483
        %v5981 = vpop.f32.mrf.mxu0
        %v5982 = vadd.f32 0.0, %v5981
        %v5983 = vpop.f32.mrf.mxu0
        %5984 = vmatprep.mubr.f32.mxu0 0.0
        %5985 = vmatmul.mubr.f32.gmra.mxu0 %v486
        %v5986 = vpop.f32.mrf.mxu0
        %v5987 = vadd.f32 0.0, %v5986
        %v5988 = vpop.f32.mrf.mxu0
        %5989 = vmatprep.mubr.f32.mxu0 0.0
        %5990 = vmatmul.mubr.f32.gmra.mxu0 %v489
        %v5991 = vpop.f32.mrf.mxu0
        %v5992 = vadd.f32 0.0, %v5991
        %v5993 = vpop.f32.mrf.mxu0
        %5994 = vmatprep.mubr.f32.mxu0 0.0
        %5995 = vmatmul.mubr.f32.gmra.mxu0 %v492
        %v5996 = vpop.f32.mrf.mxu0
        %v5997 = vadd.f32 0.0, %v5996
        %v5998 = vpop.f32.mrf.mxu0
        %5999 = vmatprep.mubr.f32.mxu0 0.0
        %6000 = vmatmul.mubr.f32.gmra.mxu0 %v495
        %v6001 = vpop.f32.mrf.mxu0
        %v6002 = vadd.f32 0.0, %v6001
        %v6003 = vpop.f32.mrf.mxu0
        %6004 = vmatprep.mubr.f32.mxu0 0.0
        %6005 = vmatmul.mubr.f32.gmra.mxu0 %v498
        %v6006 = vpop.f32.mrf.mxu0
        %v6007 = vadd.f32 0.0, %v6006
        %v6008 = vpop.f32.mrf.mxu0
        %6009 = vmatprep.mubr.f32.mxu0 0.0
        %6010 = vmatmul.mubr.f32.gmra.mxu0 %v501
        %v6011 = vpop.f32.mrf.mxu0
        %v6012 = vadd.f32 0.0, %v6011
        %v6013 = vpop.f32.mrf.mxu0
        %6014 = vmatprep.mubr.f32.mxu0 0.0
        %6015 = vmatmul.mubr.f32.gmra.mxu0 %v504
        %v6016 = vpop.f32.mrf.mxu0
        %v6017 = vadd.f32 0.0, %v6016
        %v6018 = vpop.f32.mrf.mxu0
        %6019 = vmatprep.mubr.f32.mxu0 0.0
        %6020 = vmatmul.mubr.f32.gmra.mxu0 %v507
        %v6021 = vpop.f32.mrf.mxu0
        %v6022 = vadd.f32 0.0, %v6021
        %v6023 = vpop.f32.mrf.mxu0
        %6024 = vmatprep.mubr.f32.mxu0 0.0
        %6025 = vmatmul.mubr.f32.gmra.mxu0 %v510
        %v6026 = vpop.f32.mrf.mxu0
        %v6027 = vadd.f32 0.0, %v6026
        %v6028 = vpop.f32.mrf.mxu0
        %6029 = vmatprep.mubr.f32.mxu0 0.0
        %6030 = vmatmul.mubr.f32.gmra.mxu0 %v513
        %v6031 = vpop.f32.mrf.mxu0
        %v6032 = vadd.f32 0.0, %v6031
        %v6033 = vpop.f32.mrf.mxu0
        %6034 = vmatprep.mubr.f32.mxu0 0.0
        %6035 = vmatmul.mubr.f32.gmra.mxu0 %v516
        %v6036 = vpop.f32.mrf.mxu0
        %v6037 = vadd.f32 0.0, %v6036
        %v6038 = vpop.f32.mrf.mxu0
        %6039 = vmatprep.mubr.f32.mxu0 0.0
        %6040 = vmatmul.mubr.f32.gmra.mxu0 %v519
        %v6041 = vpop.f32.mrf.mxu0
        %v6042 = vadd.f32 0.0, %v6041
        %v6043 = vpop.f32.mrf.mxu0
        %6044 = vmatprep.mubr.f32.mxu0 0.0
        %6045 = vmatmul.mubr.f32.gmra.mxu0 %v522
        %v6046 = vpop.f32.mrf.mxu0
        %v6047 = vadd.f32 0.0, %v6046
        %v6048 = vpop.f32.mrf.mxu0
        %6049 = vmatprep.mubr.f32.mxu0 0.0
        %6050 = vmatmul.mubr.f32.gmra.mxu0 %v525
        %v6051 = vpop.f32.mrf.mxu0
        %v6052 = vadd.f32 0.0, %v6051
        %v6053 = vpop.f32.mrf.mxu0
        %6054 = vmatprep.mubr.f32.mxu0 0.0
        %6055 = vmatmul.mubr.f32.gmra.mxu0 %v528
        %v6056 = vpop.f32.mrf.mxu0
        %v6057 = vadd.f32 0.0, %v6056
        %v6058 = vpop.f32.mrf.mxu0
        %6059 = vmatprep.mubr.f32.mxu0 0.0
        %6060 = vmatmul.mubr.f32.gmra.mxu0 %v531
        %v6061 = vpop.f32.mrf.mxu0
        %v6062 = vadd.f32 0.0, %v6061
        %v6063 = vpop.f32.mrf.mxu0
        %6064 = vmatprep.mubr.f32.mxu0 0.0
        %6065 = vmatmul.mubr.f32.gmra.mxu0 %v534
        %v6066 = vpop.f32.mrf.mxu0
        %v6067 = vadd.f32 0.0, %v6066
        %v6068 = vpop.f32.mrf.mxu0
        %6069 = vmatprep.mubr.f32.mxu0 0.0
        %6070 = vmatmul.mubr.f32.gmra.mxu0 %v537
        %v6071 = vpop.f32.mrf.mxu0
        %v6072 = vadd.f32 0.0, %v6071
        %v6073 = vpop.f32.mrf.mxu0
        %6074 = vmatprep.mubr.f32.mxu0 0.0
        %6075 = vmatmul.mubr.f32.gmra.mxu0 %v1161
        %v6076 = vpop.f32.mrf.mxu0
        %v6077 = vadd.f32 0.0, %v6076
        %v6078 = vpop.f32.mrf.mxu0
        %6079 = vmatprep.mubr.f32.mxu0 0.0
        %6080 = vmatmul.mubr.f32.gmra.mxu0 %v1164
        %v6081 = vpop.f32.mrf.mxu0
        %v6082 = vadd.f32 0.0, %v6081
        %v6083 = vpop.f32.mrf.mxu0
        %6084 = vmatprep.mubr.f32.mxu0 0.0
        %6085 = vmatmul.mubr.f32.gmra.mxu0 %v1167
        %v6086 = vpop.f32.mrf.mxu0
        %v6087 = vadd.f32 0.0, %v6086
        %v6088 = vpop.f32.mrf.mxu0
        %6089 = vmatprep.mubr.f32.mxu0 0.0
        %6090 = vmatmul.mubr.f32.gmra.mxu0 %v1525
        %v6091 = vpop.f32.mrf.mxu0
        %v6092 = vadd.f32 0.0, %v6091
        %v6093 = vpop.f32.mrf.mxu0
        %6094 = vmatprep.mubr.f32.mxu0 0.0
        %6095 = vmatmul.mubr.f32.gmra.mxu0 %v1528
        %v6096 = vpop.f32.mrf.mxu0
        %v6097 = vadd.f32 0.0, %v6096
        %v6098 = vpop.f32.mrf.mxu0
        %6099 = vmatprep.mubr.f32.mxu0 0.0
        %6100 = vmatmul.mubr.f32.gmra.mxu0 %v1531
        %v6101 = vpop.f32.mrf.mxu0
        %v6102 = vadd.f32 0.0, %v6101
        %v6103 = vpop.f32.mrf.mxu0
        %6104 = vmatprep.mubr.f32.mxu0 0.0
        %6105 = vmatmul.mubr.f32.gmra.mxu0 %v1889
        %v6106 = vpop.f32.mrf.mxu0
        %v6107 = vadd.f32 0.0, %v6106
        %v6108 = vpop.f32.mrf.mxu0
        %6109 = vmatprep.mubr.f32.mxu0 0.0
        %6110 = vmatmul.mubr.f32.gmra.mxu0 %v1892
        %v6111 = vpop.f32.mrf.mxu0
        %v6112 = vadd.f32 0.0, %v6111
        %v6113 = vpop.f32.mrf.mxu0
        %6114 = vmatprep.mubr.f32.mxu0 0.0
        %6115 = vmatmul.mubr.f32.gmra.mxu0 %v1895
        %v6116 = vpop.f32.mrf.mxu0
        %v6117 = vadd.f32 0.0, %v6116
        %v6118 = vpop.f32.mrf.mxu0
        %6119 = vdwg.mxu0
        %v6180 = vrot.slane %v5822, 2
        %v6181 = vrot.slane %v5827, 2
        %v6182 = vsel %vm3653, %v6180, %v6181
        %v6183 = vrot.slane %v5832, 2
        %v6184 = vsel %vm3653, %v6181, %v6183
        %v6185 = vrot.slane %v5837, 2
        %v6186 = vrot.slane %v5842, 2
        %v6187 = vsel %vm3653, %v6185, %v6186
        %v6188 = vrot.slane %v5847, 2
        %v6189 = vsel %vm3653, %v6186, %v6188
        %v6190 = vrot.slane %v5852, 2
        %v6191 = vrot.slane %v5857, 2
        %v6192 = vsel %vm3653, %v6190, %v6191
        %v6193 = vrot.slane %v5862, 2
        %v6194 = vsel %vm3653, %v6191, %v6193
        %v6195 = vrot.slane %v5867, 2
        %v6196 = vrot.slane %v5872, 2
        %v6197 = vsel %vm3653, %v6195, %v6196
        %v6198 = vrot.slane %v5877, 2
        %v6199 = vsel %vm3653, %v6196, %v6198
        %v6200 = vrot.slane %v5882, 2
        %v6201 = vrot.slane %v5887, 2
        %v6202 = vsel %vm3653, %v6200, %v6201
        %v6203 = vrot.slane %v5892, 2
        %v6204 = vsel %vm3653, %v6201, %v6203
        %v6205 = vrot.slane %v5897, 2
        %v6206 = vrot.slane %v5902, 2
        %v6207 = vsel %vm3653, %v6205, %v6206
        %v6208 = vrot.slane %v5907, 2
        %v6209 = vsel %vm3653, %v6206, %v6208
        %v6210 = vrot.slane %v5912, 2
        %v6211 = vrot.slane %v5917, 2
        %v6212 = vsel %vm3653, %v6210, %v6211
        %v6213 = vrot.slane %v5922, 2
        %v6214 = vsel %vm3653, %v6211, %v6213
        %v6215 = vrot.slane %v5927, 2
        %v6216 = vrot.slane %v5932, 2
        %v6217 = vsel %vm3653, %v6215, %v6216
        %v6218 = vrot.slane %v5937, 2
        %v6219 = vsel %vm3653, %v6216, %v6218
        %v6220 = vrot.slane %v5942, 2
        %v6221 = vrot.slane %v5947, 2
        %v6222 = vsel %vm3653, %v6220, %v6221
        %v6223 = vrot.slane %v5952, 2
        %v6224 = vsel %vm3653, %v6221, %v6223
        %v6225 = vrot.slane %v5957, 2
        %v6226 = vrot.slane %v5962, 2
        %v6227 = vsel %vm3653, %v6225, %v6226
        %v6228 = vrot.slane %v5967, 2
        %v6229 = vsel %vm3653, %v6226, %v6228
        %v6230 = vrot.slane %v5972, 2
        %v6231 = vrot.slane %v5977, 2
        %v6232 = vsel %vm3653, %v6230, %v6231
        %v6233 = vrot.slane %v5982, 2
        %v6234 = vsel %vm3653, %v6231, %v6233
        %v6235 = vrot.slane %v5987, 2
        %v6236 = vrot.slane %v5992, 2
        %v6237 = vsel %vm3653, %v6235, %v6236
        %v6238 = vrot.slane %v5997, 2
        %v6239 = vsel %vm3653, %v6236, %v6238
        %v6240 = vrot.slane %v6002, 2
        %v6241 = vrot.slane %v6007, 2
        %v6242 = vsel %vm3653, %v6240, %v6241
        %v6243 = vrot.slane %v6012, 2
        %v6244 = vsel %vm3653, %v6241, %v6243
        %v6245 = vrot.slane %v6017, 2
        %v6246 = vrot.slane %v6022, 2
        %v6247 = vsel %vm3653, %v6245, %v6246
        %v6248 = vrot.slane %v6027, 2
        %v6249 = vsel %vm3653, %v6246, %v6248
        %v6250 = vrot.slane %v6032, 2
        %v6251 = vrot.slane %v6037, 2
        %v6252 = vsel %vm3653, %v6250, %v6251
        %v6253 = vrot.slane %v6042, 2
        %v6254 = vsel %vm3653, %v6251, %v6253
        %v6255 = vrot.slane %v6047, 2
        %v6256 = vrot.slane %v6052, 2
        %v6257 = vsel %vm3653, %v6255, %v6256
        %v6258 = vrot.slane %v6057, 2
        %v6259 = vsel %vm3653, %v6256, %v6258
        %v6260 = vrot.slane %v6062, 2
        %v6261 = vrot.slane %v6067, 2
        %v6262 = vsel %vm3653, %v6260, %v6261
        %v6263 = vrot.slane %v6072, 2
        %v6264 = vsel %vm3653, %v6261, %v6263
        %v6265 = vrot.slane %v6077, 2
        %v6266 = vrot.slane %v6082, 2
        %v6267 = vsel %vm3653, %v6265, %v6266
        %v6268 = vrot.slane %v6087, 2
        %v6269 = vsel %vm3653, %v6266, %v6268
        %v6270 = vrot.slane %v6092, 2
        %v6271 = vrot.slane %v6097, 2
        %v6272 = vsel %vm3653, %v6270, %v6271
        %v6273 = vrot.slane %v6102, 2
        %v6274 = vsel %vm3653, %v6271, %v6273
        %v6275 = vrot.slane %v6107, 2
        %v6276 = vrot.slane %v6112, 2
        %v6277 = vsel %vm3653, %v6275, %v6276
        %v6278 = vrot.slane %v6117, 2
        %v6279 = vsel %vm3653, %v6276, %v6278
        %v6320 = vadd.f32 %v5713, %v6182
        %v6321 = vadd.f32 %v5714, %v6184
        %v6322 = vadd.f32 %v5715, %v6187
        %v6323 = vadd.f32 %v5716, %v6189
        %v6324 = vadd.f32 %v5717, %v6192
        %v6325 = vadd.f32 %v5718, %v6194
        %v6326 = vadd.f32 %v5719, %v6197
        %v6327 = vadd.f32 %v5720, %v6199
        %v6328 = vadd.f32 %v5721, %v6202
        %v6329 = vadd.f32 %v5722, %v6204
        %v6330 = vadd.f32 %v5723, %v6207
        %v6331 = vadd.f32 %v5724, %v6209
        %v6332 = vadd.f32 %v5725, %v6212
        %v6333 = vadd.f32 %v5726, %v6214
        %v6334 = vadd.f32 %v5727, %v6217
        %v6335 = vadd.f32 %v5728, %v6219
        %v6336 = vadd.f32 %v5729, %v6222
        %v6337 = vadd.f32 %v5730, %v6224
        %v6338 = vadd.f32 %v5731, %v6227
        %v6339 = vadd.f32 %v5732, %v6229
        %v6340 = vadd.f32 %v5733, %v6232
        %v6341 = vadd.f32 %v5734, %v6234
        %v6342 = vadd.f32 %v5735, %v6237
        %v6343 = vadd.f32 %v5736, %v6239
        %v6344 = vadd.f32 %v5737, %v6242
        %v6345 = vadd.f32 %v5738, %v6244
        %v6346 = vadd.f32 %v5739, %v6247
        %v6347 = vadd.f32 %v5740, %v6249
        %v6348 = vadd.f32 %v5741, %v6252
        %v6349 = vadd.f32 %v5742, %v6254
        %v6350 = vadd.f32 %v5743, %v6257
        %v6351 = vadd.f32 %v5744, %v6259
        %v6352 = vadd.f32 %v5745, %v6262
        %v6353 = vadd.f32 %v5746, %v6264
        %v6354 = vadd.f32 %v5747, %v6267
        %v6355 = vadd.f32 %v5748, %v6269
        %v6356 = vadd.f32 %v5749, %v6272
        %v6357 = vadd.f32 %v5750, %v6274
        %v6358 = vadd.f32 %v5751, %v6277
        %v6359 = vadd.f32 %v5752, %v6279
        %s6360 = scalar_lea.vmem %s5, 24
        %v6361 = vld [vmem:[%s6360] sm:$0xff]
        %6362 = vmatprep.subr.mxu0 0.0
        %6363 = vmatpush1.msra.mxu0 0.0
        %6364 = vmatprep.subr.mxu0 0.0
        %6365 = vmatpush1.msra.mxu0 0.0
        %6366 = vmatprep.subr.mxu0 0.0
        %6367 = vmatpush1.msra.mxu0 0.0
        %6368 = vmatprep.subr.mxu0 0.0
        %6369 = vmatpush1.msra.mxu0 0.0
        %6370 = vmatprep.subr.mxu0 0.0
        %6371 = vmatpush1.msra.mxu0 0.0
        %6372 = vmatprep.subr.mxu0 0.0
        %6373 = vmatpush1.msra.mxu0 0.0
        %6374 = vmatprep.subr.mxu0 0.0
        %6375 = vmatpush1.msra.mxu0 0.0
        %6376 = vmatprep.subr.mxu0 0.0
        %6377 = vmatpush1.msra.mxu0 0.0
        %6378 = vmatprep.subr.mxu0 0.0
        %6379 = vmatpush1.msra.mxu0 0.0
        %6380 = vmatprep.subr.mxu0 0.0
        %6381 = vmatpush1.msra.mxu0 0.0
        %6382 = vmatprep.subr.mxu0 0.0
        %6383 = vmatpush1.msra.mxu0 0.0
        %6384 = vmatprep.subr.mxu0 0.0
        %6385 = vmatpush1.msra.mxu0 0.0
        %6386 = vmatprep.subr.mxu0 0.0
        %6387 = vmatpush1.msra.mxu0 0.0
        %6388 = vmatprep.subr.mxu0 0.0
        %6389 = vmatpush1.msra.mxu0 0.0
        %6390 = vmatprep.subr.mxu0 0.0
        %6391 = vmatpush1.msra.mxu0 0.0
        %6392 = vmatprep.subr.mxu0 0.0
        %6393 = vmatpush1.msra.mxu0 %v6361
        %6394 = vmatprep.subr.mxu0 0.0
        %6395 = vmatpush2.msra.mxu0 0.0
        %6396 = vmatprep.subr.mxu0 0.0
        %6397 = vmatpush2.msra.mxu0 0.0
        %6398 = vmatprep.subr.mxu0 0.0
        %6399 = vmatpush2.msra.mxu0 0.0
        %6400 = vmatprep.subr.mxu0 0.0
        %6401 = vmatpush2.msra.mxu0 0.0
        %6402 = vmatprep.subr.mxu0 0.0
        %6403 = vmatpush2.msra.mxu0 0.0
        %6404 = vmatprep.subr.mxu0 0.0
        %6405 = vmatpush2.msra.mxu0 0.0
        %6406 = vmatprep.subr.mxu0 0.0
        %6407 = vmatpush2.msra.mxu0 0.0
        %6408 = vmatprep.subr.mxu0 0.0
        %6409 = vmatpush2.msra.mxu0 0.0
        %6410 = vmatprep.subr.mxu0 0.0
        %6411 = vmatpush2.msra.mxu0 0.0
        %6412 = vmatprep.subr.mxu0 0.0
        %6413 = vmatpush2.msra.mxu0 0.0
        %6414 = vmatprep.subr.mxu0 0.0
        %6415 = vmatpush2.msra.mxu0 0.0
        %6416 = vmatprep.subr.mxu0 0.0
        %6417 = vmatpush2.msra.mxu0 0.0
        %6418 = vmatprep.subr.mxu0 0.0
        %6419 = vmatpush2.msra.mxu0 0.0
        %6420 = vmatprep.subr.mxu0 0.0
        %6421 = vmatpush2.msra.mxu0 0.0
        %6422 = vmatprep.subr.mxu0 0.0
        %6423 = vmatpush2.msra.mxu0 0.0
        %6424 = vmatprep.subr.mxu0 0.0
        %6425 = vmatpush2.msra.mxu0 0.0
        %6426 = vmatprep.mubr.f32.mxu0 0.0
        %6427 = vmatmul.mubr.f32.gmra.mxu0 %v845
        %v6428 = vpop.f32.mrf.mxu0
        %v6429 = vadd.f32 0.0, %v6428
        %v6430 = vpop.f32.mrf.mxu0
        %6431 = vmatprep.mubr.f32.mxu0 0.0
        %6432 = vmatmul.mubr.f32.gmra.mxu0 %v848
        %v6433 = vpop.f32.mrf.mxu0
        %v6434 = vadd.f32 0.0, %v6433
        %v6435 = vpop.f32.mrf.mxu0
        %6436 = vmatprep.mubr.f32.mxu0 0.0
        %6437 = vmatmul.mubr.f32.gmra.mxu0 %v851
        %v6438 = vpop.f32.mrf.mxu0
        %v6439 = vadd.f32 0.0, %v6438
        %v6440 = vpop.f32.mrf.mxu0
        %6441 = vmatprep.mubr.f32.mxu0 0.0
        %6442 = vmatmul.mubr.f32.gmra.mxu0 %v396
        %v6443 = vpop.f32.mrf.mxu0
        %v6444 = vadd.f32 0.0, %v6443
        %v6445 = vpop.f32.mrf.mxu0
        %6446 = vmatprep.mubr.f32.mxu0 0.0
        %6447 = vmatmul.mubr.f32.gmra.mxu0 %v399
        %v6448 = vpop.f32.mrf.mxu0
        %v6449 = vadd.f32 0.0, %v6448
        %v6450 = vpop.f32.mrf.mxu0
        %6451 = vmatprep.mubr.f32.mxu0 0.0
        %6452 = vmatmul.mubr.f32.gmra.mxu0 %v402
        %v6453 = vpop.f32.mrf.mxu0
        %v6454 = vadd.f32 0.0, %v6453
        %v6455 = vpop.f32.mrf.mxu0
        %6456 = vmatprep.mubr.f32.mxu0 0.0
        %6457 = vmatmul.mubr.f32.gmra.mxu0 %v405
        %v6458 = vpop.f32.mrf.mxu0
        %v6459 = vadd.f32 0.0, %v6458
        %v6460 = vpop.f32.mrf.mxu0
        %6461 = vmatprep.mubr.f32.mxu0 0.0
        %6462 = vmatmul.mubr.f32.gmra.mxu0 %v408
        %v6463 = vpop.f32.mrf.mxu0
        %v6464 = vadd.f32 0.0, %v6463
        %v6465 = vpop.f32.mrf.mxu0
        %6466 = vmatprep.mubr.f32.mxu0 0.0
        %6467 = vmatmul.mubr.f32.gmra.mxu0 %v411
        %v6468 = vpop.f32.mrf.mxu0
        %v6469 = vadd.f32 0.0, %v6468
        %v6470 = vpop.f32.mrf.mxu0
        %6471 = vmatprep.mubr.f32.mxu0 0.0
        %6472 = vmatmul.mubr.f32.gmra.mxu0 %v414
        %v6473 = vpop.f32.mrf.mxu0
        %v6474 = vadd.f32 0.0, %v6473
        %v6475 = vpop.f32.mrf.mxu0
        %6476 = vmatprep.mubr.f32.mxu0 0.0
        %6477 = vmatmul.mubr.f32.gmra.mxu0 %v417
        %v6478 = vpop.f32.mrf.mxu0
        %v6479 = vadd.f32 0.0, %v6478
        %v6480 = vpop.f32.mrf.mxu0
        %6481 = vmatprep.mubr.f32.mxu0 0.0
        %6482 = vmatmul.mubr.f32.gmra.mxu0 %v420
        %v6483 = vpop.f32.mrf.mxu0
        %v6484 = vadd.f32 0.0, %v6483
        %v6485 = vpop.f32.mrf.mxu0
        %6486 = vmatprep.mubr.f32.mxu0 0.0
        %6487 = vmatmul.mubr.f32.gmra.mxu0 %v423
        %v6488 = vpop.f32.mrf.mxu0
        %v6489 = vadd.f32 0.0, %v6488
        %v6490 = vpop.f32.mrf.mxu0
        %6491 = vmatprep.mubr.f32.mxu0 0.0
        %6492 = vmatmul.mubr.f32.gmra.mxu0 %v426
        %v6493 = vpop.f32.mrf.mxu0
        %v6494 = vadd.f32 0.0, %v6493
        %v6495 = vpop.f32.mrf.mxu0
        %6496 = vmatprep.mubr.f32.mxu0 0.0
        %6497 = vmatmul.mubr.f32.gmra.mxu0 %v429
        %v6498 = vpop.f32.mrf.mxu0
        %v6499 = vadd.f32 0.0, %v6498
        %v6500 = vpop.f32.mrf.mxu0
        %6501 = vmatprep.mubr.f32.mxu0 0.0
        %6502 = vmatmul.mubr.f32.gmra.mxu0 %v432
        %v6503 = vpop.f32.mrf.mxu0
        %v6504 = vadd.f32 0.0, %v6503
        %v6505 = vpop.f32.mrf.mxu0
        %6506 = vmatprep.mubr.f32.mxu0 0.0
        %6507 = vmatmul.mubr.f32.gmra.mxu0 %v435
        %v6508 = vpop.f32.mrf.mxu0
        %v6509 = vadd.f32 0.0, %v6508
        %v6510 = vpop.f32.mrf.mxu0
        %6511 = vmatprep.mubr.f32.mxu0 0.0
        %6512 = vmatmul.mubr.f32.gmra.mxu0 %v438
        %v6513 = vpop.f32.mrf.mxu0
        %v6514 = vadd.f32 0.0, %v6513
        %v6515 = vpop.f32.mrf.mxu0
        %6516 = vmatprep.mubr.f32.mxu0 0.0
        %6517 = vmatmul.mubr.f32.gmra.mxu0 %v441
        %v6518 = vpop.f32.mrf.mxu0
        %v6519 = vadd.f32 0.0, %v6518
        %v6520 = vpop.f32.mrf.mxu0
        %6521 = vmatprep.mubr.f32.mxu0 0.0
        %6522 = vmatmul.mubr.f32.gmra.mxu0 %v444
        %v6523 = vpop.f32.mrf.mxu0
        %v6524 = vadd.f32 0.0, %v6523
        %v6525 = vpop.f32.mrf.mxu0
        %6526 = vmatprep.mubr.f32.mxu0 0.0
        %6527 = vmatmul.mubr.f32.gmra.mxu0 %v447
        %v6528 = vpop.f32.mrf.mxu0
        %v6529 = vadd.f32 0.0, %v6528
        %v6530 = vpop.f32.mrf.mxu0
        %6531 = vmatprep.mubr.f32.mxu0 0.0
        %6532 = vmatmul.mubr.f32.gmra.mxu0 %v450
        %v6533 = vpop.f32.mrf.mxu0
        %v6534 = vadd.f32 0.0, %v6533
        %v6535 = vpop.f32.mrf.mxu0
        %6536 = vmatprep.mubr.f32.mxu0 0.0
        %6537 = vmatmul.mubr.f32.gmra.mxu0 %v453
        %v6538 = vpop.f32.mrf.mxu0
        %v6539 = vadd.f32 0.0, %v6538
        %v6540 = vpop.f32.mrf.mxu0
        %6541 = vmatprep.mubr.f32.mxu0 0.0
        %6542 = vmatmul.mubr.f32.gmra.mxu0 %v456
        %v6543 = vpop.f32.mrf.mxu0
        %v6544 = vadd.f32 0.0, %v6543
        %v6545 = vpop.f32.mrf.mxu0
        %6546 = vmatprep.mubr.f32.mxu0 0.0
        %6547 = vmatmul.mubr.f32.gmra.mxu0 %v459
        %v6548 = vpop.f32.mrf.mxu0
        %v6549 = vadd.f32 0.0, %v6548
        %v6550 = vpop.f32.mrf.mxu0
        %6551 = vmatprep.mubr.f32.mxu0 0.0
        %6552 = vmatmul.mubr.f32.gmra.mxu0 %v462
        %v6553 = vpop.f32.mrf.mxu0
        %v6554 = vadd.f32 0.0, %v6553
        %v6555 = vpop.f32.mrf.mxu0
        %6556 = vmatprep.mubr.f32.mxu0 0.0
        %6557 = vmatmul.mubr.f32.gmra.mxu0 %v465
        %v6558 = vpop.f32.mrf.mxu0
        %v6559 = vadd.f32 0.0, %v6558
        %v6560 = vpop.f32.mrf.mxu0
        %6561 = vmatprep.mubr.f32.mxu0 0.0
        %6562 = vmatmul.mubr.f32.gmra.mxu0 %v468
        %v6563 = vpop.f32.mrf.mxu0
        %v6564 = vadd.f32 0.0, %v6563
        %v6565 = vpop.f32.mrf.mxu0
        %6566 = vmatprep.mubr.f32.mxu0 0.0
        %6567 = vmatmul.mubr.f32.gmra.mxu0 %v471
        %v6568 = vpop.f32.mrf.mxu0
        %v6569 = vadd.f32 0.0, %v6568
        %v6570 = vpop.f32.mrf.mxu0
        %6571 = vmatprep.mubr.f32.mxu0 0.0
        %6572 = vmatmul.mubr.f32.gmra.mxu0 %v474
        %v6573 = vpop.f32.mrf.mxu0
        %v6574 = vadd.f32 0.0, %v6573
        %v6575 = vpop.f32.mrf.mxu0
        %6576 = vmatprep.mubr.f32.mxu0 0.0
        %6577 = vmatmul.mubr.f32.gmra.mxu0 %v477
        %v6578 = vpop.f32.mrf.mxu0
        %v6579 = vadd.f32 0.0, %v6578
        %v6580 = vpop.f32.mrf.mxu0
        %6581 = vmatprep.mubr.f32.mxu0 0.0
        %6582 = vmatmul.mubr.f32.gmra.mxu0 %v480
        %v6583 = vpop.f32.mrf.mxu0
        %v6584 = vadd.f32 0.0, %v6583
        %v6585 = vpop.f32.mrf.mxu0
        %6586 = vmatprep.mubr.f32.mxu0 0.0
        %6587 = vmatmul.mubr.f32.gmra.mxu0 %v483
        %v6588 = vpop.f32.mrf.mxu0
        %v6589 = vadd.f32 0.0, %v6588
        %v6590 = vpop.f32.mrf.mxu0
        %6591 = vmatprep.mubr.f32.mxu0 0.0
        %6592 = vmatmul.mubr.f32.gmra.mxu0 %v486
        %v6593 = vpop.f32.mrf.mxu0
        %v6594 = vadd.f32 0.0, %v6593
        %v6595 = vpop.f32.mrf.mxu0
        %6596 = vmatprep.mubr.f32.mxu0 0.0
        %6597 = vmatmul.mubr.f32.gmra.mxu0 %v489
        %v6598 = vpop.f32.mrf.mxu0
        %v6599 = vadd.f32 0.0, %v6598
        %v6600 = vpop.f32.mrf.mxu0
        %6601 = vmatprep.mubr.f32.mxu0 0.0
        %6602 = vmatmul.mubr.f32.gmra.mxu0 %v492
        %v6603 = vpop.f32.mrf.mxu0
        %v6604 = vadd.f32 0.0, %v6603
        %v6605 = vpop.f32.mrf.mxu0
        %6606 = vmatprep.mubr.f32.mxu0 0.0
        %6607 = vmatmul.mubr.f32.gmra.mxu0 %v495
        %v6608 = vpop.f32.mrf.mxu0
        %v6609 = vadd.f32 0.0, %v6608
        %v6610 = vpop.f32.mrf.mxu0
        %6611 = vmatprep.mubr.f32.mxu0 0.0
        %6612 = vmatmul.mubr.f32.gmra.mxu0 %v498
        %v6613 = vpop.f32.mrf.mxu0
        %v6614 = vadd.f32 0.0, %v6613
        %v6615 = vpop.f32.mrf.mxu0
        %6616 = vmatprep.mubr.f32.mxu0 0.0
        %6617 = vmatmul.mubr.f32.gmra.mxu0 %v501
        %v6618 = vpop.f32.mrf.mxu0
        %v6619 = vadd.f32 0.0, %v6618
        %v6620 = vpop.f32.mrf.mxu0
        %6621 = vmatprep.mubr.f32.mxu0 0.0
        %6622 = vmatmul.mubr.f32.gmra.mxu0 %v504
        %v6623 = vpop.f32.mrf.mxu0
        %v6624 = vadd.f32 0.0, %v6623
        %v6625 = vpop.f32.mrf.mxu0
        %6626 = vmatprep.mubr.f32.mxu0 0.0
        %6627 = vmatmul.mubr.f32.gmra.mxu0 %v507
        %v6628 = vpop.f32.mrf.mxu0
        %v6629 = vadd.f32 0.0, %v6628
        %v6630 = vpop.f32.mrf.mxu0
        %6631 = vmatprep.mubr.f32.mxu0 0.0
        %6632 = vmatmul.mubr.f32.gmra.mxu0 %v510
        %v6633 = vpop.f32.mrf.mxu0
        %v6634 = vadd.f32 0.0, %v6633
        %v6635 = vpop.f32.mrf.mxu0
        %6636 = vmatprep.mubr.f32.mxu0 0.0
        %6637 = vmatmul.mubr.f32.gmra.mxu0 %v513
        %v6638 = vpop.f32.mrf.mxu0
        %v6639 = vadd.f32 0.0, %v6638
        %v6640 = vpop.f32.mrf.mxu0
        %6641 = vmatprep.mubr.f32.mxu0 0.0
        %6642 = vmatmul.mubr.f32.gmra.mxu0 %v516
        %v6643 = vpop.f32.mrf.mxu0
        %v6644 = vadd.f32 0.0, %v6643
        %v6645 = vpop.f32.mrf.mxu0
        %6646 = vmatprep.mubr.f32.mxu0 0.0
        %6647 = vmatmul.mubr.f32.gmra.mxu0 %v519
        %v6648 = vpop.f32.mrf.mxu0
        %v6649 = vadd.f32 0.0, %v6648
        %v6650 = vpop.f32.mrf.mxu0
        %6651 = vmatprep.mubr.f32.mxu0 0.0
        %6652 = vmatmul.mubr.f32.gmra.mxu0 %v522
        %v6653 = vpop.f32.mrf.mxu0
        %v6654 = vadd.f32 0.0, %v6653
        %v6655 = vpop.f32.mrf.mxu0
        %6656 = vmatprep.mubr.f32.mxu0 0.0
        %6657 = vmatmul.mubr.f32.gmra.mxu0 %v525
        %v6658 = vpop.f32.mrf.mxu0
        %v6659 = vadd.f32 0.0, %v6658
        %v6660 = vpop.f32.mrf.mxu0
        %6661 = vmatprep.mubr.f32.mxu0 0.0
        %6662 = vmatmul.mubr.f32.gmra.mxu0 %v528
        %v6663 = vpop.f32.mrf.mxu0
        %v6664 = vadd.f32 0.0, %v6663
        %v6665 = vpop.f32.mrf.mxu0
        %6666 = vmatprep.mubr.f32.mxu0 0.0
        %6667 = vmatmul.mubr.f32.gmra.mxu0 %v531
        %v6668 = vpop.f32.mrf.mxu0
        %v6669 = vadd.f32 0.0, %v6668
        %v6670 = vpop.f32.mrf.mxu0
        %6671 = vmatprep.mubr.f32.mxu0 0.0
        %6672 = vmatmul.mubr.f32.gmra.mxu0 %v534
        %v6673 = vpop.f32.mrf.mxu0
        %v6674 = vadd.f32 0.0, %v6673
        %v6675 = vpop.f32.mrf.mxu0
        %6676 = vmatprep.mubr.f32.mxu0 0.0
        %6677 = vmatmul.mubr.f32.gmra.mxu0 %v537
        %v6678 = vpop.f32.mrf.mxu0
        %v6679 = vadd.f32 0.0, %v6678
        %v6680 = vpop.f32.mrf.mxu0
        %6681 = vmatprep.mubr.f32.mxu0 0.0
        %6682 = vmatmul.mubr.f32.gmra.mxu0 %v1161
        %v6683 = vpop.f32.mrf.mxu0
        %v6684 = vadd.f32 0.0, %v6683
        %v6685 = vpop.f32.mrf.mxu0
        %6686 = vmatprep.mubr.f32.mxu0 0.0
        %6687 = vmatmul.mubr.f32.gmra.mxu0 %v1164
        %v6688 = vpop.f32.mrf.mxu0
        %v6689 = vadd.f32 0.0, %v6688
        %v6690 = vpop.f32.mrf.mxu0
        %6691 = vmatprep.mubr.f32.mxu0 0.0
        %6692 = vmatmul.mubr.f32.gmra.mxu0 %v1167
        %v6693 = vpop.f32.mrf.mxu0
        %v6694 = vadd.f32 0.0, %v6693
        %v6695 = vpop.f32.mrf.mxu0
        %6696 = vmatprep.mubr.f32.mxu0 0.0
        %6697 = vmatmul.mubr.f32.gmra.mxu0 %v1525
        %v6698 = vpop.f32.mrf.mxu0
        %v6699 = vadd.f32 0.0, %v6698
        %v6700 = vpop.f32.mrf.mxu0
        %6701 = vmatprep.mubr.f32.mxu0 0.0
        %6702 = vmatmul.mubr.f32.gmra.mxu0 %v1528
        %v6703 = vpop.f32.mrf.mxu0
        %v6704 = vadd.f32 0.0, %v6703
        %v6705 = vpop.f32.mrf.mxu0
        %6706 = vmatprep.mubr.f32.mxu0 0.0
        %6707 = vmatmul.mubr.f32.gmra.mxu0 %v1531
        %v6708 = vpop.f32.mrf.mxu0
        %v6709 = vadd.f32 0.0, %v6708
        %v6710 = vpop.f32.mrf.mxu0
        %6711 = vmatprep.mubr.f32.mxu0 0.0
        %6712 = vmatmul.mubr.f32.gmra.mxu0 %v1889
        %v6713 = vpop.f32.mrf.mxu0
        %v6714 = vadd.f32 0.0, %v6713
        %v6715 = vpop.f32.mrf.mxu0
        %6716 = vmatprep.mubr.f32.mxu0 0.0
        %6717 = vmatmul.mubr.f32.gmra.mxu0 %v1892
        %v6718 = vpop.f32.mrf.mxu0
        %v6719 = vadd.f32 0.0, %v6718
        %v6720 = vpop.f32.mrf.mxu0
        %6721 = vmatprep.mubr.f32.mxu0 0.0
        %6722 = vmatmul.mubr.f32.gmra.mxu0 %v1895
        %v6723 = vpop.f32.mrf.mxu0
        %v6724 = vadd.f32 0.0, %v6723
        %v6725 = vpop.f32.mrf.mxu0
        %6726 = vdwg.mxu0
        %v6787 = vrot.slane %v6429, 3
        %v6788 = vrot.slane %v6434, 3
        %v6789 = vsel %vm4154, %v6787, %v6788
        %v6790 = vrot.slane %v6439, 3
        %v6791 = vsel %vm4154, %v6788, %v6790
        %v6792 = vrot.slane %v6444, 3
        %v6793 = vrot.slane %v6449, 3
        %v6794 = vsel %vm4154, %v6792, %v6793
        %v6795 = vrot.slane %v6454, 3
        %v6796 = vsel %vm4154, %v6793, %v6795
        %v6797 = vrot.slane %v6459, 3
        %v6798 = vrot.slane %v6464, 3
        %v6799 = vsel %vm4154, %v6797, %v6798
        %v6800 = vrot.slane %v6469, 3
        %v6801 = vsel %vm4154, %v6798, %v6800
        %v6802 = vrot.slane %v6474, 3
        %v6803 = vrot.slane %v6479, 3
        %v6804 = vsel %vm4154, %v6802, %v6803
        %v6805 = vrot.slane %v6484, 3
        %v6806 = vsel %vm4154, %v6803, %v6805
        %v6807 = vrot.slane %v6489, 3
        %v6808 = vrot.slane %v6494, 3
        %v6809 = vsel %vm4154, %v6807, %v6808
        %v6810 = vrot.slane %v6499, 3
        %v6811 = vsel %vm4154, %v6808, %v6810
        %v6812 = vrot.slane %v6504, 3
        %v6813 = vrot.slane %v6509, 3
        %v6814 = vsel %vm4154, %v6812, %v6813
        %v6815 = vrot.slane %v6514, 3
        %v6816 = vsel %vm4154, %v6813, %v6815
        %v6817 = vrot.slane %v6519, 3
        %v6818 = vrot.slane %v6524, 3
        %v6819 = vsel %vm4154, %v6817, %v6818
        %v6820 = vrot.slane %v6529, 3
        %v6821 = vsel %vm4154, %v6818, %v6820
        %v6822 = vrot.slane %v6534, 3
        %v6823 = vrot.slane %v6539, 3
        %v6824 = vsel %vm4154, %v6822, %v6823
        %v6825 = vrot.slane %v6544, 3
        %v6826 = vsel %vm4154, %v6823, %v6825
        %v6827 = vrot.slane %v6549, 3
        %v6828 = vrot.slane %v6554, 3
        %v6829 = vsel %vm4154, %v6827, %v6828
        %v6830 = vrot.slane %v6559, 3
        %v6831 = vsel %vm4154, %v6828, %v6830
        %v6832 = vrot.slane %v6564, 3
        %v6833 = vrot.slane %v6569, 3
        %v6834 = vsel %vm4154, %v6832, %v6833
        %v6835 = vrot.slane %v6574, 3
        %v6836 = vsel %vm4154, %v6833, %v6835
        %v6837 = vrot.slane %v6579, 3
        %v6838 = vrot.slane %v6584, 3
        %v6839 = vsel %vm4154, %v6837, %v6838
        %v6840 = vrot.slane %v6589, 3
        %v6841 = vsel %vm4154, %v6838, %v6840
        %v6842 = vrot.slane %v6594, 3
        %v6843 = vrot.slane %v6599, 3
        %v6844 = vsel %vm4154, %v6842, %v6843
        %v6845 = vrot.slane %v6604, 3
        %v6846 = vsel %vm4154, %v6843, %v6845
        %v6847 = vrot.slane %v6609, 3
        %v6848 = vrot.slane %v6614, 3
        %v6849 = vsel %vm4154, %v6847, %v6848
        %v6850 = vrot.slane %v6619, 3
        %v6851 = vsel %vm4154, %v6848, %v6850
        %v6852 = vrot.slane %v6624, 3
        %v6853 = vrot.slane %v6629, 3
        %v6854 = vsel %vm4154, %v6852, %v6853
        %v6855 = vrot.slane %v6634, 3
        %v6856 = vsel %vm4154, %v6853, %v6855
        %v6857 = vrot.slane %v6639, 3
        %v6858 = vrot.slane %v6644, 3
        %v6859 = vsel %vm4154, %v6857, %v6858
        %v6860 = vrot.slane %v6649, 3
        %v6861 = vsel %vm4154, %v6858, %v6860
        %v6862 = vrot.slane %v6654, 3
        %v6863 = vrot.slane %v6659, 3
        %v6864 = vsel %vm4154, %v6862, %v6863
        %v6865 = vrot.slane %v6664, 3
        %v6866 = vsel %vm4154, %v6863, %v6865
        %v6867 = vrot.slane %v6669, 3
        %v6868 = vrot.slane %v6674, 3
        %v6869 = vsel %vm4154, %v6867, %v6868
        %v6870 = vrot.slane %v6679, 3
        %v6871 = vsel %vm4154, %v6868, %v6870
        %v6872 = vrot.slane %v6684, 3
        %v6873 = vrot.slane %v6689, 3
        %v6874 = vsel %vm4154, %v6872, %v6873
        %v6875 = vrot.slane %v6694, 3
        %v6876 = vsel %vm4154, %v6873, %v6875
        %v6877 = vrot.slane %v6699, 3
        %v6878 = vrot.slane %v6704, 3
        %v6879 = vsel %vm4154, %v6877, %v6878
        %v6880 = vrot.slane %v6709, 3
        %v6881 = vsel %vm4154, %v6878, %v6880
        %v6882 = vrot.slane %v6714, 3
        %v6883 = vrot.slane %v6719, 3
        %v6884 = vsel %vm4154, %v6882, %v6883
        %v6885 = vrot.slane %v6724, 3
        %v6886 = vsel %vm4154, %v6883, %v6885
        %v6927 = vadd.f32 %v6320, %v6789
        %v6928 = vadd.f32 %v6321, %v6791
        %v6929 = vadd.f32 %v6322, %v6794
        %v6930 = vadd.f32 %v6323, %v6796
        %v6931 = vadd.f32 %v6324, %v6799
        %v6932 = vadd.f32 %v6325, %v6801
        %v6933 = vadd.f32 %v6326, %v6804
        %v6934 = vadd.f32 %v6327, %v6806
        %v6935 = vadd.f32 %v6328, %v6809
        %v6936 = vadd.f32 %v6329, %v6811
        %v6937 = vadd.f32 %v6330, %v6814
        %v6938 = vadd.f32 %v6331, %v6816
        %v6939 = vadd.f32 %v6332, %v6819
        %v6940 = vadd.f32 %v6333, %v6821
        %v6941 = vadd.f32 %v6334, %v6824
        %v6942 = vadd.f32 %v6335, %v6826
        %v6943 = vadd.f32 %v6336, %v6829
        %v6944 = vadd.f32 %v6337, %v6831
        %v6945 = vadd.f32 %v6338, %v6834
        %v6946 = vadd.f32 %v6339, %v6836
        %v6947 = vadd.f32 %v6340, %v6839
        %v6948 = vadd.f32 %v6341, %v6841
        %v6949 = vadd.f32 %v6342, %v6844
        %v6950 = vadd.f32 %v6343, %v6846
        %v6951 = vadd.f32 %v6344, %v6849
        %v6952 = vadd.f32 %v6345, %v6851
        %v6953 = vadd.f32 %v6346, %v6854
        %v6954 = vadd.f32 %v6347, %v6856
        %v6955 = vadd.f32 %v6348, %v6859
        %v6956 = vadd.f32 %v6349, %v6861
        %v6957 = vadd.f32 %v6350, %v6864
        %v6958 = vadd.f32 %v6351, %v6866
        %v6959 = vadd.f32 %v6352, %v6869
        %v6960 = vadd.f32 %v6353, %v6871
        %v6961 = vadd.f32 %v6354, %v6874
        %v6962 = vadd.f32 %v6355, %v6876
        %v6963 = vadd.f32 %v6356, %v6879
        %v6964 = vadd.f32 %v6357, %v6881
        %v6965 = vadd.f32 %v6358, %v6884
        %v6966 = vadd.f32 %v6359, %v6886
        %s6967 = scalar_lea.vmem %s5, 32
        %v6968 = vld [vmem:[%s6967] sm:$0xff]
        %6969 = vmatprep.subr.mxu0 0.0
        %6970 = vmatpush1.msra.mxu0 0.0
        %6971 = vmatprep.subr.mxu0 0.0
        %6972 = vmatpush1.msra.mxu0 0.0
        %6973 = vmatprep.subr.mxu0 0.0
        %6974 = vmatpush1.msra.mxu0 0.0
        %6975 = vmatprep.subr.mxu0 0.0
        %6976 = vmatpush1.msra.mxu0 0.0
        %6977 = vmatprep.subr.mxu0 0.0
        %6978 = vmatpush1.msra.mxu0 0.0
        %6979 = vmatprep.subr.mxu0 0.0
        %6980 = vmatpush1.msra.mxu0 0.0
        %6981 = vmatprep.subr.mxu0 0.0
        %6982 = vmatpush1.msra.mxu0 0.0
        %6983 = vmatprep.subr.mxu0 0.0
        %6984 = vmatpush1.msra.mxu0 0.0
        %6985 = vmatprep.subr.mxu0 0.0
        %6986 = vmatpush1.msra.mxu0 0.0
        %6987 = vmatprep.subr.mxu0 0.0
        %6988 = vmatpush1.msra.mxu0 0.0
        %6989 = vmatprep.subr.mxu0 0.0
        %6990 = vmatpush1.msra.mxu0 0.0
        %6991 = vmatprep.subr.mxu0 0.0
        %6992 = vmatpush1.msra.mxu0 0.0
        %6993 = vmatprep.subr.mxu0 0.0
        %6994 = vmatpush1.msra.mxu0 0.0
        %6995 = vmatprep.subr.mxu0 0.0
        %6996 = vmatpush1.msra.mxu0 0.0
        %6997 = vmatprep.subr.mxu0 0.0
        %6998 = vmatpush1.msra.mxu0 0.0
        %6999 = vmatprep.subr.mxu0 0.0
        %7000 = vmatpush1.msra.mxu0 %v6968
        %7001 = vmatprep.subr.mxu0 0.0
        %7002 = vmatpush2.msra.mxu0 0.0
        %7003 = vmatprep.subr.mxu0 0.0
        %7004 = vmatpush2.msra.mxu0 0.0
        %7005 = vmatprep.subr.mxu0 0.0
        %7006 = vmatpush2.msra.mxu0 0.0
        %7007 = vmatprep.subr.mxu0 0.0
        %7008 = vmatpush2.msra.mxu0 0.0
        %7009 = vmatprep.subr.mxu0 0.0
        %7010 = vmatpush2.msra.mxu0 0.0
        %7011 = vmatprep.subr.mxu0 0.0
        %7012 = vmatpush2.msra.mxu0 0.0
        %7013 = vmatprep.subr.mxu0 0.0
        %7014 = vmatpush2.msra.mxu0 0.0
        %7015 = vmatprep.subr.mxu0 0.0
        %7016 = vmatpush2.msra.mxu0 0.0
        %7017 = vmatprep.subr.mxu0 0.0
        %7018 = vmatpush2.msra.mxu0 0.0
        %7019 = vmatprep.subr.mxu0 0.0
        %7020 = vmatpush2.msra.mxu0 0.0
        %7021 = vmatprep.subr.mxu0 0.0
        %7022 = vmatpush2.msra.mxu0 0.0
        %7023 = vmatprep.subr.mxu0 0.0
        %7024 = vmatpush2.msra.mxu0 0.0
        %7025 = vmatprep.subr.mxu0 0.0
        %7026 = vmatpush2.msra.mxu0 0.0
        %7027 = vmatprep.subr.mxu0 0.0
        %7028 = vmatpush2.msra.mxu0 0.0
        %7029 = vmatprep.subr.mxu0 0.0
        %7030 = vmatpush2.msra.mxu0 0.0
        %7031 = vmatprep.subr.mxu0 0.0
        %7032 = vmatpush2.msra.mxu0 0.0
        %7033 = vmatprep.mubr.f32.mxu0 0.0
        %7034 = vmatmul.mubr.f32.gmra.mxu0 %v845
        %v7035 = vpop.f32.mrf.mxu0
        %v7036 = vadd.f32 0.0, %v7035
        %v7037 = vpop.f32.mrf.mxu0
        %7038 = vmatprep.mubr.f32.mxu0 0.0
        %7039 = vmatmul.mubr.f32.gmra.mxu0 %v848
        %v7040 = vpop.f32.mrf.mxu0
        %v7041 = vadd.f32 0.0, %v7040
        %v7042 = vpop.f32.mrf.mxu0
        %7043 = vmatprep.mubr.f32.mxu0 0.0
        %7044 = vmatmul.mubr.f32.gmra.mxu0 %v851
        %v7045 = vpop.f32.mrf.mxu0
        %v7046 = vadd.f32 0.0, %v7045
        %v7047 = vpop.f32.mrf.mxu0
        %7048 = vmatprep.mubr.f32.mxu0 0.0
        %7049 = vmatmul.mubr.f32.gmra.mxu0 %v396
        %v7050 = vpop.f32.mrf.mxu0
        %v7051 = vadd.f32 0.0, %v7050
        %v7052 = vpop.f32.mrf.mxu0
        %7053 = vmatprep.mubr.f32.mxu0 0.0
        %7054 = vmatmul.mubr.f32.gmra.mxu0 %v399
        %v7055 = vpop.f32.mrf.mxu0
        %v7056 = vadd.f32 0.0, %v7055
        %v7057 = vpop.f32.mrf.mxu0
        %7058 = vmatprep.mubr.f32.mxu0 0.0
        %7059 = vmatmul.mubr.f32.gmra.mxu0 %v402
        %v7060 = vpop.f32.mrf.mxu0
        %v7061 = vadd.f32 0.0, %v7060
        %v7062 = vpop.f32.mrf.mxu0
        %7063 = vmatprep.mubr.f32.mxu0 0.0
        %7064 = vmatmul.mubr.f32.gmra.mxu0 %v405
        %v7065 = vpop.f32.mrf.mxu0
        %v7066 = vadd.f32 0.0, %v7065
        %v7067 = vpop.f32.mrf.mxu0
        %7068 = vmatprep.mubr.f32.mxu0 0.0
        %7069 = vmatmul.mubr.f32.gmra.mxu0 %v408
        %v7070 = vpop.f32.mrf.mxu0
        %v7071 = vadd.f32 0.0, %v7070
        %v7072 = vpop.f32.mrf.mxu0
        %7073 = vmatprep.mubr.f32.mxu0 0.0
        %7074 = vmatmul.mubr.f32.gmra.mxu0 %v411
        %v7075 = vpop.f32.mrf.mxu0
        %v7076 = vadd.f32 0.0, %v7075
        %v7077 = vpop.f32.mrf.mxu0
        %7078 = vmatprep.mubr.f32.mxu0 0.0
        %7079 = vmatmul.mubr.f32.gmra.mxu0 %v414
        %v7080 = vpop.f32.mrf.mxu0
        %v7081 = vadd.f32 0.0, %v7080
        %v7082 = vpop.f32.mrf.mxu0
        %7083 = vmatprep.mubr.f32.mxu0 0.0
        %7084 = vmatmul.mubr.f32.gmra.mxu0 %v417
        %v7085 = vpop.f32.mrf.mxu0
        %v7086 = vadd.f32 0.0, %v7085
        %v7087 = vpop.f32.mrf.mxu0
        %7088 = vmatprep.mubr.f32.mxu0 0.0
        %7089 = vmatmul.mubr.f32.gmra.mxu0 %v420
        %v7090 = vpop.f32.mrf.mxu0
        %v7091 = vadd.f32 0.0, %v7090
        %v7092 = vpop.f32.mrf.mxu0
        %7093 = vmatprep.mubr.f32.mxu0 0.0
        %7094 = vmatmul.mubr.f32.gmra.mxu0 %v423
        %v7095 = vpop.f32.mrf.mxu0
        %v7096 = vadd.f32 0.0, %v7095
        %v7097 = vpop.f32.mrf.mxu0
        %7098 = vmatprep.mubr.f32.mxu0 0.0
        %7099 = vmatmul.mubr.f32.gmra.mxu0 %v426
        %v7100 = vpop.f32.mrf.mxu0
        %v7101 = vadd.f32 0.0, %v7100
        %v7102 = vpop.f32.mrf.mxu0
        %7103 = vmatprep.mubr.f32.mxu0 0.0
        %7104 = vmatmul.mubr.f32.gmra.mxu0 %v429
        %v7105 = vpop.f32.mrf.mxu0
        %v7106 = vadd.f32 0.0, %v7105
        %v7107 = vpop.f32.mrf.mxu0
        %7108 = vmatprep.mubr.f32.mxu0 0.0
        %7109 = vmatmul.mubr.f32.gmra.mxu0 %v432
        %v7110 = vpop.f32.mrf.mxu0
        %v7111 = vadd.f32 0.0, %v7110
        %v7112 = vpop.f32.mrf.mxu0
        %7113 = vmatprep.mubr.f32.mxu0 0.0
        %7114 = vmatmul.mubr.f32.gmra.mxu0 %v435
        %v7115 = vpop.f32.mrf.mxu0
        %v7116 = vadd.f32 0.0, %v7115
        %v7117 = vpop.f32.mrf.mxu0
        %7118 = vmatprep.mubr.f32.mxu0 0.0
        %7119 = vmatmul.mubr.f32.gmra.mxu0 %v438
        %v7120 = vpop.f32.mrf.mxu0
        %v7121 = vadd.f32 0.0, %v7120
        %v7122 = vpop.f32.mrf.mxu0
        %7123 = vmatprep.mubr.f32.mxu0 0.0
        %7124 = vmatmul.mubr.f32.gmra.mxu0 %v441
        %v7125 = vpop.f32.mrf.mxu0
        %v7126 = vadd.f32 0.0, %v7125
        %v7127 = vpop.f32.mrf.mxu0
        %7128 = vmatprep.mubr.f32.mxu0 0.0
        %7129 = vmatmul.mubr.f32.gmra.mxu0 %v444
        %v7130 = vpop.f32.mrf.mxu0
        %v7131 = vadd.f32 0.0, %v7130
        %v7132 = vpop.f32.mrf.mxu0
        %7133 = vmatprep.mubr.f32.mxu0 0.0
        %7134 = vmatmul.mubr.f32.gmra.mxu0 %v447
        %v7135 = vpop.f32.mrf.mxu0
        %v7136 = vadd.f32 0.0, %v7135
        %v7137 = vpop.f32.mrf.mxu0
        %7138 = vmatprep.mubr.f32.mxu0 0.0
        %7139 = vmatmul.mubr.f32.gmra.mxu0 %v450
        %v7140 = vpop.f32.mrf.mxu0
        %v7141 = vadd.f32 0.0, %v7140
        %v7142 = vpop.f32.mrf.mxu0
        %7143 = vmatprep.mubr.f32.mxu0 0.0
        %7144 = vmatmul.mubr.f32.gmra.mxu0 %v453
        %v7145 = vpop.f32.mrf.mxu0
        %v7146 = vadd.f32 0.0, %v7145
        %v7147 = vpop.f32.mrf.mxu0
        %7148 = vmatprep.mubr.f32.mxu0 0.0
        %7149 = vmatmul.mubr.f32.gmra.mxu0 %v456
        %v7150 = vpop.f32.mrf.mxu0
        %v7151 = vadd.f32 0.0, %v7150
        %v7152 = vpop.f32.mrf.mxu0
        %7153 = vmatprep.mubr.f32.mxu0 0.0
        %7154 = vmatmul.mubr.f32.gmra.mxu0 %v459
        %v7155 = vpop.f32.mrf.mxu0
        %v7156 = vadd.f32 0.0, %v7155
        %v7157 = vpop.f32.mrf.mxu0
        %7158 = vmatprep.mubr.f32.mxu0 0.0
        %7159 = vmatmul.mubr.f32.gmra.mxu0 %v462
        %v7160 = vpop.f32.mrf.mxu0
        %v7161 = vadd.f32 0.0, %v7160
        %v7162 = vpop.f32.mrf.mxu0
        %7163 = vmatprep.mubr.f32.mxu0 0.0
        %7164 = vmatmul.mubr.f32.gmra.mxu0 %v465
        %v7165 = vpop.f32.mrf.mxu0
        %v7166 = vadd.f32 0.0, %v7165
        %v7167 = vpop.f32.mrf.mxu0
        %7168 = vmatprep.mubr.f32.mxu0 0.0
        %7169 = vmatmul.mubr.f32.gmra.mxu0 %v468
        %v7170 = vpop.f32.mrf.mxu0
        %v7171 = vadd.f32 0.0, %v7170
        %v7172 = vpop.f32.mrf.mxu0
        %7173 = vmatprep.mubr.f32.mxu0 0.0
        %7174 = vmatmul.mubr.f32.gmra.mxu0 %v471
        %v7175 = vpop.f32.mrf.mxu0
        %v7176 = vadd.f32 0.0, %v7175
        %v7177 = vpop.f32.mrf.mxu0
        %7178 = vmatprep.mubr.f32.mxu0 0.0
        %7179 = vmatmul.mubr.f32.gmra.mxu0 %v474
        %v7180 = vpop.f32.mrf.mxu0
        %v7181 = vadd.f32 0.0, %v7180
        %v7182 = vpop.f32.mrf.mxu0
        %7183 = vmatprep.mubr.f32.mxu0 0.0
        %7184 = vmatmul.mubr.f32.gmra.mxu0 %v477
        %v7185 = vpop.f32.mrf.mxu0
        %v7186 = vadd.f32 0.0, %v7185
        %v7187 = vpop.f32.mrf.mxu0
        %7188 = vmatprep.mubr.f32.mxu0 0.0
        %7189 = vmatmul.mubr.f32.gmra.mxu0 %v480
        %v7190 = vpop.f32.mrf.mxu0
        %v7191 = vadd.f32 0.0, %v7190
        %v7192 = vpop.f32.mrf.mxu0
        %7193 = vmatprep.mubr.f32.mxu0 0.0
        %7194 = vmatmul.mubr.f32.gmra.mxu0 %v483
        %v7195 = vpop.f32.mrf.mxu0
        %v7196 = vadd.f32 0.0, %v7195
        %v7197 = vpop.f32.mrf.mxu0
        %7198 = vmatprep.mubr.f32.mxu0 0.0
        %7199 = vmatmul.mubr.f32.gmra.mxu0 %v486
        %v7200 = vpop.f32.mrf.mxu0
        %v7201 = vadd.f32 0.0, %v7200
        %v7202 = vpop.f32.mrf.mxu0
        %7203 = vmatprep.mubr.f32.mxu0 0.0
        %7204 = vmatmul.mubr.f32.gmra.mxu0 %v489
        %v7205 = vpop.f32.mrf.mxu0
        %v7206 = vadd.f32 0.0, %v7205
        %v7207 = vpop.f32.mrf.mxu0
        %7208 = vmatprep.mubr.f32.mxu0 0.0
        %7209 = vmatmul.mubr.f32.gmra.mxu0 %v492
        %v7210 = vpop.f32.mrf.mxu0
        %v7211 = vadd.f32 0.0, %v7210
        %v7212 = vpop.f32.mrf.mxu0
        %7213 = vmatprep.mubr.f32.mxu0 0.0
        %7214 = vmatmul.mubr.f32.gmra.mxu0 %v495
        %v7215 = vpop.f32.mrf.mxu0
        %v7216 = vadd.f32 0.0, %v7215
        %v7217 = vpop.f32.mrf.mxu0
        %7218 = vmatprep.mubr.f32.mxu0 0.0
        %7219 = vmatmul.mubr.f32.gmra.mxu0 %v498
        %v7220 = vpop.f32.mrf.mxu0
        %v7221 = vadd.f32 0.0, %v7220
        %v7222 = vpop.f32.mrf.mxu0
        %7223 = vmatprep.mubr.f32.mxu0 0.0
        %7224 = vmatmul.mubr.f32.gmra.mxu0 %v501
        %v7225 = vpop.f32.mrf.mxu0
        %v7226 = vadd.f32 0.0, %v7225
        %v7227 = vpop.f32.mrf.mxu0
        %7228 = vmatprep.mubr.f32.mxu0 0.0
        %7229 = vmatmul.mubr.f32.gmra.mxu0 %v504
        %v7230 = vpop.f32.mrf.mxu0
        %v7231 = vadd.f32 0.0, %v7230
        %v7232 = vpop.f32.mrf.mxu0
        %7233 = vmatprep.mubr.f32.mxu0 0.0
        %7234 = vmatmul.mubr.f32.gmra.mxu0 %v507
        %v7235 = vpop.f32.mrf.mxu0
        %v7236 = vadd.f32 0.0, %v7235
        %v7237 = vpop.f32.mrf.mxu0
        %7238 = vmatprep.mubr.f32.mxu0 0.0
        %7239 = vmatmul.mubr.f32.gmra.mxu0 %v510
        %v7240 = vpop.f32.mrf.mxu0
        %v7241 = vadd.f32 0.0, %v7240
        %v7242 = vpop.f32.mrf.mxu0
        %7243 = vmatprep.mubr.f32.mxu0 0.0
        %7244 = vmatmul.mubr.f32.gmra.mxu0 %v513
        %v7245 = vpop.f32.mrf.mxu0
        %v7246 = vadd.f32 0.0, %v7245
        %v7247 = vpop.f32.mrf.mxu0
        %7248 = vmatprep.mubr.f32.mxu0 0.0
        %7249 = vmatmul.mubr.f32.gmra.mxu0 %v516
        %v7250 = vpop.f32.mrf.mxu0
        %v7251 = vadd.f32 0.0, %v7250
        %v7252 = vpop.f32.mrf.mxu0
        %7253 = vmatprep.mubr.f32.mxu0 0.0
        %7254 = vmatmul.mubr.f32.gmra.mxu0 %v519
        %v7255 = vpop.f32.mrf.mxu0
        %v7256 = vadd.f32 0.0, %v7255
        %v7257 = vpop.f32.mrf.mxu0
        %7258 = vmatprep.mubr.f32.mxu0 0.0
        %7259 = vmatmul.mubr.f32.gmra.mxu0 %v522
        %v7260 = vpop.f32.mrf.mxu0
        %v7261 = vadd.f32 0.0, %v7260
        %v7262 = vpop.f32.mrf.mxu0
        %7263 = vmatprep.mubr.f32.mxu0 0.0
        %7264 = vmatmul.mubr.f32.gmra.mxu0 %v525
        %v7265 = vpop.f32.mrf.mxu0
        %v7266 = vadd.f32 0.0, %v7265
        %v7267 = vpop.f32.mrf.mxu0
        %7268 = vmatprep.mubr.f32.mxu0 0.0
        %7269 = vmatmul.mubr.f32.gmra.mxu0 %v528
        %v7270 = vpop.f32.mrf.mxu0
        %v7271 = vadd.f32 0.0, %v7270
        %v7272 = vpop.f32.mrf.mxu0
        %7273 = vmatprep.mubr.f32.mxu0 0.0
        %7274 = vmatmul.mubr.f32.gmra.mxu0 %v531
        %v7275 = vpop.f32.mrf.mxu0
        %v7276 = vadd.f32 0.0, %v7275
        %v7277 = vpop.f32.mrf.mxu0
        %7278 = vmatprep.mubr.f32.mxu0 0.0
        %7279 = vmatmul.mubr.f32.gmra.mxu0 %v534
        %v7280 = vpop.f32.mrf.mxu0
        %v7281 = vadd.f32 0.0, %v7280
        %v7282 = vpop.f32.mrf.mxu0
        %7283 = vmatprep.mubr.f32.mxu0 0.0
        %7284 = vmatmul.mubr.f32.gmra.mxu0 %v537
        %v7285 = vpop.f32.mrf.mxu0
        %v7286 = vadd.f32 0.0, %v7285
        %v7287 = vpop.f32.mrf.mxu0
        %7288 = vmatprep.mubr.f32.mxu0 0.0
        %7289 = vmatmul.mubr.f32.gmra.mxu0 %v1161
        %v7290 = vpop.f32.mrf.mxu0
        %v7291 = vadd.f32 0.0, %v7290
        %v7292 = vpop.f32.mrf.mxu0
        %7293 = vmatprep.mubr.f32.mxu0 0.0
        %7294 = vmatmul.mubr.f32.gmra.mxu0 %v1164
        %v7295 = vpop.f32.mrf.mxu0
        %v7296 = vadd.f32 0.0, %v7295
        %v7297 = vpop.f32.mrf.mxu0
        %7298 = vmatprep.mubr.f32.mxu0 0.0
        %7299 = vmatmul.mubr.f32.gmra.mxu0 %v1167
        %v7300 = vpop.f32.mrf.mxu0
        %v7301 = vadd.f32 0.0, %v7300
        %v7302 = vpop.f32.mrf.mxu0
        %7303 = vmatprep.mubr.f32.mxu0 0.0
        %7304 = vmatmul.mubr.f32.gmra.mxu0 %v1525
        %v7305 = vpop.f32.mrf.mxu0
        %v7306 = vadd.f32 0.0, %v7305
        %v7307 = vpop.f32.mrf.mxu0
        %7308 = vmatprep.mubr.f32.mxu0 0.0
        %7309 = vmatmul.mubr.f32.gmra.mxu0 %v1528
        %v7310 = vpop.f32.mrf.mxu0
        %v7311 = vadd.f32 0.0, %v7310
        %v7312 = vpop.f32.mrf.mxu0
        %7313 = vmatprep.mubr.f32.mxu0 0.0
        %7314 = vmatmul.mubr.f32.gmra.mxu0 %v1531
        %v7315 = vpop.f32.mrf.mxu0
        %v7316 = vadd.f32 0.0, %v7315
        %v7317 = vpop.f32.mrf.mxu0
        %7318 = vmatprep.mubr.f32.mxu0 0.0
        %7319 = vmatmul.mubr.f32.gmra.mxu0 %v1889
        %v7320 = vpop.f32.mrf.mxu0
        %v7321 = vadd.f32 0.0, %v7320
        %v7322 = vpop.f32.mrf.mxu0
        %7323 = vmatprep.mubr.f32.mxu0 0.0
        %7324 = vmatmul.mubr.f32.gmra.mxu0 %v1892
        %v7325 = vpop.f32.mrf.mxu0
        %v7326 = vadd.f32 0.0, %v7325
        %v7327 = vpop.f32.mrf.mxu0
        %7328 = vmatprep.mubr.f32.mxu0 0.0
        %7329 = vmatmul.mubr.f32.gmra.mxu0 %v1895
        %v7330 = vpop.f32.mrf.mxu0
        %v7331 = vadd.f32 0.0, %v7330
        %v7332 = vpop.f32.mrf.mxu0
        %7333 = vdwg.mxu0
        %v7394 = vrot.slane %v7036, 4
        %v7395 = vrot.slane %v7041, 4
        %v7396 = vsel %vm4655, %v7394, %v7395
        %v7397 = vrot.slane %v7046, 4
        %v7398 = vsel %vm4655, %v7395, %v7397
        %v7399 = vrot.slane %v7051, 4
        %v7400 = vrot.slane %v7056, 4
        %v7401 = vsel %vm4655, %v7399, %v7400
        %v7402 = vrot.slane %v7061, 4
        %v7403 = vsel %vm4655, %v7400, %v7402
        %v7404 = vrot.slane %v7066, 4
        %v7405 = vrot.slane %v7071, 4
        %v7406 = vsel %vm4655, %v7404, %v7405
        %v7407 = vrot.slane %v7076, 4
        %v7408 = vsel %vm4655, %v7405, %v7407
        %v7409 = vrot.slane %v7081, 4
        %v7410 = vrot.slane %v7086, 4
        %v7411 = vsel %vm4655, %v7409, %v7410
        %v7412 = vrot.slane %v7091, 4
        %v7413 = vsel %vm4655, %v7410, %v7412
        %v7414 = vrot.slane %v7096, 4
        %v7415 = vrot.slane %v7101, 4
        %v7416 = vsel %vm4655, %v7414, %v7415
        %v7417 = vrot.slane %v7106, 4
        %v7418 = vsel %vm4655, %v7415, %v7417
        %v7419 = vrot.slane %v7111, 4
        %v7420 = vrot.slane %v7116, 4
        %v7421 = vsel %vm4655, %v7419, %v7420
        %v7422 = vrot.slane %v7121, 4
        %v7423 = vsel %vm4655, %v7420, %v7422
        %v7424 = vrot.slane %v7126, 4
        %v7425 = vrot.slane %v7131, 4
        %v7426 = vsel %vm4655, %v7424, %v7425
        %v7427 = vrot.slane %v7136, 4
        %v7428 = vsel %vm4655, %v7425, %v7427
        %v7429 = vrot.slane %v7141, 4
        %v7430 = vrot.slane %v7146, 4
        %v7431 = vsel %vm4655, %v7429, %v7430
        %v7432 = vrot.slane %v7151, 4
        %v7433 = vsel %vm4655, %v7430, %v7432
        %v7434 = vrot.slane %v7156, 4
        %v7435 = vrot.slane %v7161, 4
        %v7436 = vsel %vm4655, %v7434, %v7435
        %v7437 = vrot.slane %v7166, 4
        %v7438 = vsel %vm4655, %v7435, %v7437
        %v7439 = vrot.slane %v7171, 4
        %v7440 = vrot.slane %v7176, 4
        %v7441 = vsel %vm4655, %v7439, %v7440
        %v7442 = vrot.slane %v7181, 4
        %v7443 = vsel %vm4655, %v7440, %v7442
        %v7444 = vrot.slane %v7186, 4
        %v7445 = vrot.slane %v7191, 4
        %v7446 = vsel %vm4655, %v7444, %v7445
        %v7447 = vrot.slane %v7196, 4
        %v7448 = vsel %vm4655, %v7445, %v7447
        %v7449 = vrot.slane %v7201, 4
        %v7450 = vrot.slane %v7206, 4
        %v7451 = vsel %vm4655, %v7449, %v7450
        %v7452 = vrot.slane %v7211, 4
        %v7453 = vsel %vm4655, %v7450, %v7452
        %v7454 = vrot.slane %v7216, 4
        %v7455 = vrot.slane %v7221, 4
        %v7456 = vsel %vm4655, %v7454, %v7455
        %v7457 = vrot.slane %v7226, 4
        %v7458 = vsel %vm4655, %v7455, %v7457
        %v7459 = vrot.slane %v7231, 4
        %v7460 = vrot.slane %v7236, 4
        %v7461 = vsel %vm4655, %v7459, %v7460
        %v7462 = vrot.slane %v7241, 4
        %v7463 = vsel %vm4655, %v7460, %v7462
        %v7464 = vrot.slane %v7246, 4
        %v7465 = vrot.slane %v7251, 4
        %v7466 = vsel %vm4655, %v7464, %v7465
        %v7467 = vrot.slane %v7256, 4
        %v7468 = vsel %vm4655, %v7465, %v7467
        %v7469 = vrot.slane %v7261, 4
        %v7470 = vrot.slane %v7266, 4
        %v7471 = vsel %vm4655, %v7469, %v7470
        %v7472 = vrot.slane %v7271, 4
        %v7473 = vsel %vm4655, %v7470, %v7472
        %v7474 = vrot.slane %v7276, 4
        %v7475 = vrot.slane %v7281, 4
        %v7476 = vsel %vm4655, %v7474, %v7475
        %v7477 = vrot.slane %v7286, 4
        %v7478 = vsel %vm4655, %v7475, %v7477
        %v7479 = vrot.slane %v7291, 4
        %v7480 = vrot.slane %v7296, 4
        %v7481 = vsel %vm4655, %v7479, %v7480
        %v7482 = vrot.slane %v7301, 4
        %v7483 = vsel %vm4655, %v7480, %v7482
        %v7484 = vrot.slane %v7306, 4
        %v7485 = vrot.slane %v7311, 4
        %v7486 = vsel %vm4655, %v7484, %v7485
        %v7487 = vrot.slane %v7316, 4
        %v7488 = vsel %vm4655, %v7485, %v7487
        %v7489 = vrot.slane %v7321, 4
        %v7490 = vrot.slane %v7326, 4
        %v7491 = vsel %vm4655, %v7489, %v7490
        %v7492 = vrot.slane %v7331, 4
        %v7493 = vsel %vm4655, %v7490, %v7492
        %v7534 = vadd.f32 %v6927, %v7396
        %v7535 = vadd.f32 %v6928, %v7398
        %v7536 = vadd.f32 %v6929, %v7401
        %v7537 = vadd.f32 %v6930, %v7403
        %v7538 = vadd.f32 %v6931, %v7406
        %v7539 = vadd.f32 %v6932, %v7408
        %v7540 = vadd.f32 %v6933, %v7411
        %v7541 = vadd.f32 %v6934, %v7413
        %v7542 = vadd.f32 %v6935, %v7416
        %v7543 = vadd.f32 %v6936, %v7418
        %v7544 = vadd.f32 %v6937, %v7421
        %v7545 = vadd.f32 %v6938, %v7423
        %v7546 = vadd.f32 %v6939, %v7426
        %v7547 = vadd.f32 %v6940, %v7428
        %v7548 = vadd.f32 %v6941, %v7431
        %v7549 = vadd.f32 %v6942, %v7433
        %v7550 = vadd.f32 %v6943, %v7436
        %v7551 = vadd.f32 %v6944, %v7438
        %v7552 = vadd.f32 %v6945, %v7441
        %v7553 = vadd.f32 %v6946, %v7443
        %v7554 = vadd.f32 %v6947, %v7446
        %v7555 = vadd.f32 %v6948, %v7448
        %v7556 = vadd.f32 %v6949, %v7451
        %v7557 = vadd.f32 %v6950, %v7453
        %v7558 = vadd.f32 %v6951, %v7456
        %v7559 = vadd.f32 %v6952, %v7458
        %v7560 = vadd.f32 %v6953, %v7461
        %v7561 = vadd.f32 %v6954, %v7463
        %v7562 = vadd.f32 %v6955, %v7466
        %v7563 = vadd.f32 %v6956, %v7468
        %v7564 = vadd.f32 %v6957, %v7471
        %v7565 = vadd.f32 %v6958, %v7473
        %v7566 = vadd.f32 %v6959, %v7476
        %v7567 = vadd.f32 %v6960, %v7478
        %v7568 = vadd.f32 %v6961, %v7481
        %v7569 = vadd.f32 %v6962, %v7483
        %v7570 = vadd.f32 %v6963, %v7486
        %v7571 = vadd.f32 %v6964, %v7488
        %v7572 = vadd.f32 %v6965, %v7491
        %v7573 = vadd.f32 %v6966, %v7493
        %v7574 = vld [vmem:[%s6] sm:$0x1]
        %v7576 = vlaneseq
        %v7577 = vshrl.u32 %v7576, 7
        %v7578 = vsub.s32 0, %v7577
        %v7579 = vrot.slane %v7574, %v7578
        %v7581 = vsel 0, %v7579, 0.0
        %v7582 = vsel 1, %v7579, 0.0
        %v7583 = vadd.f32 %v7534, %v7581
        %v7584 = vadd.f32 %v7535, %v7581
        %v7585 = vadd.f32 %v7536, %v7581
        %v7586 = vadd.f32 %v7537, %v7581
        %v7587 = vadd.f32 %v7538, %v7582
        %v7588 = vadd.f32 %v7539, %v7582
        %v7589 = vadd.f32 %v7540, %v7582
        %v7590 = vadd.f32 %v7541, %v7582
        %v7591 = vadd.f32 %v7542, %v7582
        %v7592 = vadd.f32 %v7543, %v7582
        %v7593 = vadd.f32 %v7544, %v7582
        %v7594 = vadd.f32 %v7545, %v7582
        %v7595 = vadd.f32 %v7546, %v7582
        %v7596 = vadd.f32 %v7547, %v7582
        %v7597 = vadd.f32 %v7548, %v7582
        %v7598 = vadd.f32 %v7549, %v7582
        %v7599 = vadd.f32 %v7550, %v7582
        %v7600 = vadd.f32 %v7551, %v7582
        %v7601 = vadd.f32 %v7552, %v7582
        %v7602 = vadd.f32 %v7553, %v7582
        %v7603 = vadd.f32 %v7554, %v7582
        %v7604 = vadd.f32 %v7555, %v7582
        %v7605 = vadd.f32 %v7556, %v7582
        %v7606 = vadd.f32 %v7557, %v7582
        %v7607 = vadd.f32 %v7558, %v7582
        %v7608 = vadd.f32 %v7559, %v7582
        %v7609 = vadd.f32 %v7560, %v7582
        %v7610 = vadd.f32 %v7561, %v7582
        %v7611 = vadd.f32 %v7562, %v7582
        %v7612 = vadd.f32 %v7563, %v7582
        %v7613 = vadd.f32 %v7564, %v7582
        %v7614 = vadd.f32 %v7565, %v7582
        %v7615 = vadd.f32 %v7566, %v7582
        %v7616 = vadd.f32 %v7567, %v7582
        %v7617 = vadd.f32 %v7568, %v7582
        %v7618 = vadd.f32 %v7569, %v7582
        %v7619 = vadd.f32 %v7570, %v7581
        %v7620 = vadd.f32 %v7571, %v7581
        %v7621 = vadd.f32 %v7572, %v7581
        %v7622 = vadd.f32 %v7573, %v7581
        %v7623 = vld [vmem:[%s8] sm:$0x1]
        %v7625 = vlaneseq
        %v7626 = vshrl.u32 %v7625, 7
        %v7627 = vsub.s32 0, %v7626
        %v7628 = vrot.slane %v7623, %v7627
        %v7630 = vld [vmem:[%s7] sm:$0xff]
        %v7631 = vld [vmem:[%s7 + $0x8] sm:$0xff]
        %v7633 = vsel %vm2330, %v7583, 0
        %v7636 = vsel %vm2330, %v7584, 0
        %v7639 = vsel %vm2330, %v7585, 0
        %v7642 = vsel %vm2330, %v7586, 0
        %v7645 = vsel %vm2330, %v7587, 0
        %v7648 = vsel %vm2330, %v7588, 0
        %v7651 = vsel %vm2330, %v7589, 0
        %v7654 = vsel %vm2330, %v7590, 0
        %v7657 = vsel %vm2330, %v7591, 0
        %v7660 = vsel %vm2330, %v7592, 0
        %v7663 = vsel %vm2330, %v7593, 0
        %v7666 = vsel %vm2330, %v7594, 0
        %v7669 = vsel %vm2330, %v7595, 0
        %v7672 = vsel %vm2330, %v7596, 0
        %v7675 = vsel %vm2330, %v7597, 0
        %v7678 = vsel %vm2330, %v7598, 0
        %v7681 = vsel %vm2330, %v7599, 0
        %v7684 = vsel %vm2330, %v7600, 0
        %v7687 = vsel %vm2330, %v7601, 0
        %v7690 = vsel %vm2330, %v7602, 0
        %v7693 = vsel %vm2330, %v7603, 0
        %v7696 = vsel %vm2330, %v7604, 0
        %v7699 = vsel %vm2330, %v7605, 0
        %v7702 = vsel %vm2330, %v7606, 0
        %v7705 = vsel %vm2330, %v7607, 0
        %v7708 = vsel %vm2330, %v7608, 0
        %v7711 = vsel %vm2330, %v7609, 0
        %v7714 = vsel %vm2330, %v7610, 0
        %v7717 = vsel %vm2330, %v7611, 0
        %v7720 = vsel %vm2330, %v7612, 0
        %v7723 = vsel %vm2330, %v7613, 0
        %v7726 = vsel %vm2330, %v7614, 0
        %7728 = vmatprep.subr.mxu0 0.0
        %7729 = vmatpush1.msra.mxu0 0.0
        %7730 = vmatprep.subr.mxu0 0.0
        %7731 = vmatpush1.msra.mxu0 0.0
        %7732 = vmatprep.subr.mxu0 0.0
        %7733 = vmatpush1.msra.mxu0 0.0
        %7734 = vmatprep.subr.mxu0 0.0
        %7735 = vmatpush1.msra.mxu0 0.0
        %7736 = vmatprep.subr.mxu0 0.0
        %7737 = vmatpush1.msra.mxu0 0.0
        %7738 = vmatprep.subr.mxu0 0.0
        %7739 = vmatpush1.msra.mxu0 0.0
        %7740 = vmatprep.subr.mxu0 0.0
        %7741 = vmatpush1.msra.mxu0 0.0
        %7742 = vmatprep.subr.mxu0 0.0
        %7743 = vmatpush1.msra.mxu0 0.0
        %7744 = vmatprep.subr.mxu0 0.0
        %7745 = vmatpush1.msra.mxu0 0.0
        %7746 = vmatprep.subr.mxu0 0.0
        %7747 = vmatpush1.msra.mxu0 0.0
        %7748 = vmatprep.subr.mxu0 0.0
        %7749 = vmatpush1.msra.mxu0 0.0
        %7750 = vmatprep.subr.mxu0 0.0
        %7751 = vmatpush1.msra.mxu0 0.0
        %7752 = vmatprep.subr.mxu0 0.0
        %7753 = vmatpush1.msra.mxu0 0.0
        %7754 = vmatprep.subr.mxu0 0.0
        %7755 = vmatpush1.msra.mxu0 0.0
        %7756 = vmatprep.subr.mxu0 0.0
        %7757 = vmatpush1.msra.mxu0 %v7631
        %7758 = vmatprep.subr.mxu0 0.0
        %7759 = vmatpush1.msra.mxu0 %v7630
        %7760 = vmatprep.subr.mxu0 0.0
        %7761 = vmatpush2.msra.mxu0 0.0
        %7762 = vmatprep.subr.mxu0 0.0
        %7763 = vmatpush2.msra.mxu0 0.0
        %7764 = vmatprep.subr.mxu0 0.0
        %7765 = vmatpush2.msra.mxu0 0.0
        %7766 = vmatprep.subr.mxu0 0.0
        %7767 = vmatpush2.msra.mxu0 0.0
        %7768 = vmatprep.subr.mxu0 0.0
        %7769 = vmatpush2.msra.mxu0 0.0
        %7770 = vmatprep.subr.mxu0 0.0
        %7771 = vmatpush2.msra.mxu0 0.0
        %7772 = vmatprep.subr.mxu0 0.0
        %7773 = vmatpush2.msra.mxu0 0.0
        %7774 = vmatprep.subr.mxu0 0.0
        %7775 = vmatpush2.msra.mxu0 0.0
        %7776 = vmatprep.subr.mxu0 0.0
        %7777 = vmatpush2.msra.mxu0 0.0
        %7778 = vmatprep.subr.mxu0 0.0
        %7779 = vmatpush2.msra.mxu0 0.0
        %7780 = vmatprep.subr.mxu0 0.0
        %7781 = vmatpush2.msra.mxu0 0.0
        %7782 = vmatprep.subr.mxu0 0.0
        %7783 = vmatpush2.msra.mxu0 0.0
        %7784 = vmatprep.subr.mxu0 0.0
        %7785 = vmatpush2.msra.mxu0 0.0
        %7786 = vmatprep.subr.mxu0 0.0
        %7787 = vmatpush2.msra.mxu0 0.0
        %7788 = vmatprep.subr.mxu0 0.0
        %7789 = vmatpush2.msra.mxu0 0.0
        %7790 = vmatprep.subr.mxu0 0.0
        %7791 = vmatpush2.msra.mxu0 0.0
        %7792 = vmatprep.mubr.f32.mxu0 0.0
        %7793 = vmatmul.mubr.f32.gmra.mxu0 %v7633
        %v7794 = vpop.f32.mrf.mxu0
        %v7795 = vadd.f32 0.0, %v7794
        %v7796 = vpop.f32.mrf.mxu0
        %7797 = vmatprep.mubr.f32.mxu0 0.0
        %7798 = vmatmul.mubr.f32.gmra.mxu0 %v7636
        %v7799 = vpop.f32.mrf.mxu0
        %v7800 = vadd.f32 0.0, %v7799
        %v7801 = vpop.f32.mrf.mxu0
        %7802 = vmatprep.mubr.f32.mxu0 0.0
        %7803 = vmatmul.mubr.f32.gmra.mxu0 %v7639
        %v7804 = vpop.f32.mrf.mxu0
        %v7805 = vadd.f32 0.0, %v7804
        %v7806 = vpop.f32.mrf.mxu0
        %7807 = vmatprep.mubr.f32.mxu0 0.0
        %7808 = vmatmul.mubr.f32.gmra.mxu0 %v7642
        %v7809 = vpop.f32.mrf.mxu0
        %v7810 = vadd.f32 0.0, %v7809
        %v7811 = vpop.f32.mrf.mxu0
        %7812 = vmatprep.mubr.f32.mxu0 0.0
        %7813 = vmatmul.mubr.f32.gmra.mxu0 %v7645
        %v7814 = vpop.f32.mrf.mxu0
        %v7815 = vadd.f32 0.0, %v7814
        %v7816 = vpop.f32.mrf.mxu0
        %7817 = vmatprep.mubr.f32.mxu0 0.0
        %7818 = vmatmul.mubr.f32.gmra.mxu0 %v7648
        %v7819 = vpop.f32.mrf.mxu0
        %v7820 = vadd.f32 0.0, %v7819
        %v7821 = vpop.f32.mrf.mxu0
        %7822 = vmatprep.mubr.f32.mxu0 0.0
        %7823 = vmatmul.mubr.f32.gmra.mxu0 %v7651
        %v7824 = vpop.f32.mrf.mxu0
        %v7825 = vadd.f32 0.0, %v7824
        %v7826 = vpop.f32.mrf.mxu0
        %7827 = vmatprep.mubr.f32.mxu0 0.0
        %7828 = vmatmul.mubr.f32.gmra.mxu0 %v7654
        %v7829 = vpop.f32.mrf.mxu0
        %v7830 = vadd.f32 0.0, %v7829
        %v7831 = vpop.f32.mrf.mxu0
        %7832 = vmatprep.mubr.f32.mxu0 0.0
        %7833 = vmatmul.mubr.f32.gmra.mxu0 %v7657
        %v7834 = vpop.f32.mrf.mxu0
        %v7835 = vadd.f32 0.0, %v7834
        %v7836 = vpop.f32.mrf.mxu0
        %7837 = vmatprep.mubr.f32.mxu0 0.0
        %7838 = vmatmul.mubr.f32.gmra.mxu0 %v7660
        %v7839 = vpop.f32.mrf.mxu0
        %v7840 = vadd.f32 0.0, %v7839
        %v7841 = vpop.f32.mrf.mxu0
        %7842 = vmatprep.mubr.f32.mxu0 0.0
        %7843 = vmatmul.mubr.f32.gmra.mxu0 %v7663
        %v7844 = vpop.f32.mrf.mxu0
        %v7845 = vadd.f32 0.0, %v7844
        %v7846 = vpop.f32.mrf.mxu0
        %7847 = vmatprep.mubr.f32.mxu0 0.0
        %7848 = vmatmul.mubr.f32.gmra.mxu0 %v7666
        %v7849 = vpop.f32.mrf.mxu0
        %v7850 = vadd.f32 0.0, %v7849
        %v7851 = vpop.f32.mrf.mxu0
        %7852 = vmatprep.mubr.f32.mxu0 0.0
        %7853 = vmatmul.mubr.f32.gmra.mxu0 %v7669
        %v7854 = vpop.f32.mrf.mxu0
        %v7855 = vadd.f32 0.0, %v7854
        %v7856 = vpop.f32.mrf.mxu0
        %7857 = vmatprep.mubr.f32.mxu0 0.0
        %7858 = vmatmul.mubr.f32.gmra.mxu0 %v7672
        %v7859 = vpop.f32.mrf.mxu0
        %v7860 = vadd.f32 0.0, %v7859
        %v7861 = vpop.f32.mrf.mxu0
        %7862 = vmatprep.mubr.f32.mxu0 0.0
        %7863 = vmatmul.mubr.f32.gmra.mxu0 %v7675
        %v7864 = vpop.f32.mrf.mxu0
        %v7865 = vadd.f32 0.0, %v7864
        %v7866 = vpop.f32.mrf.mxu0
        %7867 = vmatprep.mubr.f32.mxu0 0.0
        %7868 = vmatmul.mubr.f32.gmra.mxu0 %v7678
        %v7869 = vpop.f32.mrf.mxu0
        %v7870 = vadd.f32 0.0, %v7869
        %v7871 = vpop.f32.mrf.mxu0
        %7872 = vmatprep.mubr.f32.mxu0 0.0
        %7873 = vmatmul.mubr.f32.gmra.mxu0 %v7681
        %v7874 = vpop.f32.mrf.mxu0
        %v7875 = vadd.f32 0.0, %v7874
        %v7876 = vpop.f32.mrf.mxu0
        %7877 = vmatprep.mubr.f32.mxu0 0.0
        %7878 = vmatmul.mubr.f32.gmra.mxu0 %v7684
        %v7879 = vpop.f32.mrf.mxu0
        %v7880 = vadd.f32 0.0, %v7879
        %v7881 = vpop.f32.mrf.mxu0
        %7882 = vmatprep.mubr.f32.mxu0 0.0
        %7883 = vmatmul.mubr.f32.gmra.mxu0 %v7687
        %v7884 = vpop.f32.mrf.mxu0
        %v7885 = vadd.f32 0.0, %v7884
        %v7886 = vpop.f32.mrf.mxu0
        %7887 = vmatprep.mubr.f32.mxu0 0.0
        %7888 = vmatmul.mubr.f32.gmra.mxu0 %v7690
        %v7889 = vpop.f32.mrf.mxu0
        %v7890 = vadd.f32 0.0, %v7889
        %v7891 = vpop.f32.mrf.mxu0
        %7892 = vmatprep.mubr.f32.mxu0 0.0
        %7893 = vmatmul.mubr.f32.gmra.mxu0 %v7693
        %v7894 = vpop.f32.mrf.mxu0
        %v7895 = vadd.f32 0.0, %v7894
        %v7896 = vpop.f32.mrf.mxu0
        %7897 = vmatprep.mubr.f32.mxu0 0.0
        %7898 = vmatmul.mubr.f32.gmra.mxu0 %v7696
        %v7899 = vpop.f32.mrf.mxu0
        %v7900 = vadd.f32 0.0, %v7899
        %v7901 = vpop.f32.mrf.mxu0
        %7902 = vmatprep.mubr.f32.mxu0 0.0
        %7903 = vmatmul.mubr.f32.gmra.mxu0 %v7699
        %v7904 = vpop.f32.mrf.mxu0
        %v7905 = vadd.f32 0.0, %v7904
        %v7906 = vpop.f32.mrf.mxu0
        %7907 = vmatprep.mubr.f32.mxu0 0.0
        %7908 = vmatmul.mubr.f32.gmra.mxu0 %v7702
        %v7909 = vpop.f32.mrf.mxu0
        %v7910 = vadd.f32 0.0, %v7909
        %v7911 = vpop.f32.mrf.mxu0
        %7912 = vmatprep.mubr.f32.mxu0 0.0
        %7913 = vmatmul.mubr.f32.gmra.mxu0 %v7705
        %v7914 = vpop.f32.mrf.mxu0
        %v7915 = vadd.f32 0.0, %v7914
        %v7916 = vpop.f32.mrf.mxu0
        %7917 = vmatprep.mubr.f32.mxu0 0.0
        %7918 = vmatmul.mubr.f32.gmra.mxu0 %v7708
        %v7919 = vpop.f32.mrf.mxu0
        %v7920 = vadd.f32 0.0, %v7919
        %v7921 = vpop.f32.mrf.mxu0
        %7922 = vmatprep.mubr.f32.mxu0 0.0
        %7923 = vmatmul.mubr.f32.gmra.mxu0 %v7711
        %v7924 = vpop.f32.mrf.mxu0
        %v7925 = vadd.f32 0.0, %v7924
        %v7926 = vpop.f32.mrf.mxu0
        %7927 = vmatprep.mubr.f32.mxu0 0.0
        %7928 = vmatmul.mubr.f32.gmra.mxu0 %v7714
        %v7929 = vpop.f32.mrf.mxu0
        %v7930 = vadd.f32 0.0, %v7929
        %v7931 = vpop.f32.mrf.mxu0
        %7932 = vmatprep.mubr.f32.mxu0 0.0
        %7933 = vmatmul.mubr.f32.gmra.mxu0 %v7717
        %v7934 = vpop.f32.mrf.mxu0
        %v7935 = vadd.f32 0.0, %v7934
        %v7936 = vpop.f32.mrf.mxu0
        %7937 = vmatprep.mubr.f32.mxu0 0.0
        %7938 = vmatmul.mubr.f32.gmra.mxu0 %v7720
        %v7939 = vpop.f32.mrf.mxu0
        %v7940 = vadd.f32 0.0, %v7939
        %v7941 = vpop.f32.mrf.mxu0
        %7942 = vmatprep.mubr.f32.mxu0 0.0
        %7943 = vmatmul.mubr.f32.gmra.mxu0 %v7723
        %v7944 = vpop.f32.mrf.mxu0
        %v7945 = vadd.f32 0.0, %v7944
        %v7946 = vpop.f32.mrf.mxu0
        %7947 = vmatprep.mubr.f32.mxu0 0.0
        %7948 = vmatmul.mubr.f32.gmra.mxu0 %v7726
        %v7949 = vpop.f32.mrf.mxu0
        %v7950 = vadd.f32 0.0, %v7949
        %v7951 = vpop.f32.mrf.mxu0
        %7952 = vdwg.mxu0
        %v7953 = vadd.f32 %v7628, %v7795
        %v7954 = vadd.f32 %v7628, %v7800
        %v7955 = vadd.f32 %v7628, %v7805
        %v7956 = vadd.f32 %v7628, %v7810
        %v7957 = vadd.f32 %v7628, %v7815
        %v7958 = vadd.f32 %v7628, %v7820
        %v7959 = vadd.f32 %v7628, %v7825
        %v7960 = vadd.f32 %v7628, %v7830
        %v7961 = vadd.f32 %v7628, %v7835
        %v7962 = vadd.f32 %v7628, %v7840
        %v7963 = vadd.f32 %v7628, %v7845
        %v7964 = vadd.f32 %v7628, %v7850
        %v7965 = vadd.f32 %v7628, %v7855
        %v7966 = vadd.f32 %v7628, %v7860
        %v7967 = vadd.f32 %v7628, %v7865
        %v7968 = vadd.f32 %v7628, %v7870
        %v7969 = vadd.f32 %v7628, %v7875
        %v7970 = vadd.f32 %v7628, %v7880
        %v7971 = vadd.f32 %v7628, %v7885
        %v7972 = vadd.f32 %v7628, %v7890
        %v7973 = vadd.f32 %v7628, %v7895
        %v7974 = vadd.f32 %v7628, %v7900
        %v7975 = vadd.f32 %v7628, %v7905
        %v7976 = vadd.f32 %v7628, %v7910
        %v7977 = vadd.f32 %v7628, %v7915
        %v7978 = vadd.f32 %v7628, %v7920
        %v7979 = vadd.f32 %v7628, %v7925
        %v7980 = vadd.f32 %v7628, %v7930
        %v7981 = vadd.f32 %v7628, %v7935
        %v7982 = vadd.f32 %v7628, %v7940
        %v7983 = vadd.f32 %v7628, %v7945
        %v7984 = vadd.f32 %v7628, %v7950
        %s7985 = scalar_lea.vmem %s7, 16
        %v7986 = vld [vmem:[%s7985] sm:$0xff]
        %v7987 = vld [vmem:[%s7985 + $0x8] sm:$0xff]
        %v7989 = vsel %vm2330, %v7615, 0
        %v7992 = vsel %vm2330, %v7616, 0
        %7994 = vmatprep.subr.mxu0 0.0
        %7995 = vmatpush1.msra.mxu0 0.0
        %7996 = vmatprep.subr.mxu0 0.0
        %7997 = vmatpush1.msra.mxu0 0.0
        %7998 = vmatprep.subr.mxu0 0.0
        %7999 = vmatpush1.msra.mxu0 0.0
        %8000 = vmatprep.subr.mxu0 0.0
        %8001 = vmatpush1.msra.mxu0 0.0
        %8002 = vmatprep.subr.mxu0 0.0
        %8003 = vmatpush1.msra.mxu0 0.0
        %8004 = vmatprep.subr.mxu0 0.0
        %8005 = vmatpush1.msra.mxu0 0.0
        %8006 = vmatprep.subr.mxu0 0.0
        %8007 = vmatpush1.msra.mxu0 0.0
        %8008 = vmatprep.subr.mxu0 0.0
        %8009 = vmatpush1.msra.mxu0 0.0
        %8010 = vmatprep.subr.mxu0 0.0
        %8011 = vmatpush1.msra.mxu0 0.0
        %8012 = vmatprep.subr.mxu0 0.0
        %8013 = vmatpush1.msra.mxu0 0.0
        %8014 = vmatprep.subr.mxu0 0.0
        %8015 = vmatpush1.msra.mxu0 0.0
        %8016 = vmatprep.subr.mxu0 0.0
        %8017 = vmatpush1.msra.mxu0 0.0
        %8018 = vmatprep.subr.mxu0 0.0
        %8019 = vmatpush1.msra.mxu0 0.0
        %8020 = vmatprep.subr.mxu0 0.0
        %8021 = vmatpush1.msra.mxu0 0.0
        %8022 = vmatprep.subr.mxu0 0.0
        %8023 = vmatpush1.msra.mxu0 %v7987
        %8024 = vmatprep.subr.mxu0 0.0
        %8025 = vmatpush1.msra.mxu0 %v7986
        %8026 = vmatprep.subr.mxu0 0.0
        %8027 = vmatpush2.msra.mxu0 0.0
        %8028 = vmatprep.subr.mxu0 0.0
        %8029 = vmatpush2.msra.mxu0 0.0
        %8030 = vmatprep.subr.mxu0 0.0
        %8031 = vmatpush2.msra.mxu0 0.0
        %8032 = vmatprep.subr.mxu0 0.0
        %8033 = vmatpush2.msra.mxu0 0.0
        %8034 = vmatprep.subr.mxu0 0.0
        %8035 = vmatpush2.msra.mxu0 0.0
        %8036 = vmatprep.subr.mxu0 0.0
        %8037 = vmatpush2.msra.mxu0 0.0
        %8038 = vmatprep.subr.mxu0 0.0
        %8039 = vmatpush2.msra.mxu0 0.0
        %8040 = vmatprep.subr.mxu0 0.0
        %8041 = vmatpush2.msra.mxu0 0.0
        %8042 = vmatprep.subr.mxu0 0.0
        %8043 = vmatpush2.msra.mxu0 0.0
        %8044 = vmatprep.subr.mxu0 0.0
        %8045 = vmatpush2.msra.mxu0 0.0
        %8046 = vmatprep.subr.mxu0 0.0
        %8047 = vmatpush2.msra.mxu0 0.0
        %8048 = vmatprep.subr.mxu0 0.0
        %8049 = vmatpush2.msra.mxu0 0.0
        %8050 = vmatprep.subr.mxu0 0.0
        %8051 = vmatpush2.msra.mxu0 0.0
        %8052 = vmatprep.subr.mxu0 0.0
        %8053 = vmatpush2.msra.mxu0 0.0
        %8054 = vmatprep.subr.mxu0 0.0
        %8055 = vmatpush2.msra.mxu0 0.0
        %8056 = vmatprep.subr.mxu0 0.0
        %8057 = vmatpush2.msra.mxu0 0.0
        %8058 = vmatprep.mubr.f32.mxu0 0.0
        %8059 = vmatmul.mubr.f32.gmra.mxu0 %v7639
        %v8060 = vpop.f32.mrf.mxu0
        %v8061 = vadd.f32 0.0, %v8060
        %v8062 = vpop.f32.mrf.mxu0
        %8063 = vmatprep.mubr.f32.mxu0 0.0
        %8064 = vmatmul.mubr.f32.gmra.mxu0 %v7642
        %v8065 = vpop.f32.mrf.mxu0
        %v8066 = vadd.f32 0.0, %v8065
        %v8067 = vpop.f32.mrf.mxu0
        %8068 = vmatprep.mubr.f32.mxu0 0.0
        %8069 = vmatmul.mubr.f32.gmra.mxu0 %v7645
        %v8070 = vpop.f32.mrf.mxu0
        %v8071 = vadd.f32 0.0, %v8070
        %v8072 = vpop.f32.mrf.mxu0
        %8073 = vmatprep.mubr.f32.mxu0 0.0
        %8074 = vmatmul.mubr.f32.gmra.mxu0 %v7648
        %v8075 = vpop.f32.mrf.mxu0
        %v8076 = vadd.f32 0.0, %v8075
        %v8077 = vpop.f32.mrf.mxu0
        %8078 = vmatprep.mubr.f32.mxu0 0.0
        %8079 = vmatmul.mubr.f32.gmra.mxu0 %v7651
        %v8080 = vpop.f32.mrf.mxu0
        %v8081 = vadd.f32 0.0, %v8080
        %v8082 = vpop.f32.mrf.mxu0
        %8083 = vmatprep.mubr.f32.mxu0 0.0
        %8084 = vmatmul.mubr.f32.gmra.mxu0 %v7654
        %v8085 = vpop.f32.mrf.mxu0
        %v8086 = vadd.f32 0.0, %v8085
        %v8087 = vpop.f32.mrf.mxu0
        %8088 = vmatprep.mubr.f32.mxu0 0.0
        %8089 = vmatmul.mubr.f32.gmra.mxu0 %v7657
        %v8090 = vpop.f32.mrf.mxu0
        %v8091 = vadd.f32 0.0, %v8090
        %v8092 = vpop.f32.mrf.mxu0
        %8093 = vmatprep.mubr.f32.mxu0 0.0
        %8094 = vmatmul.mubr.f32.gmra.mxu0 %v7660
        %v8095 = vpop.f32.mrf.mxu0
        %v8096 = vadd.f32 0.0, %v8095
        %v8097 = vpop.f32.mrf.mxu0
        %8098 = vmatprep.mubr.f32.mxu0 0.0
        %8099 = vmatmul.mubr.f32.gmra.mxu0 %v7663
        %v8100 = vpop.f32.mrf.mxu0
        %v8101 = vadd.f32 0.0, %v8100
        %v8102 = vpop.f32.mrf.mxu0
        %8103 = vmatprep.mubr.f32.mxu0 0.0
        %8104 = vmatmul.mubr.f32.gmra.mxu0 %v7666
        %v8105 = vpop.f32.mrf.mxu0
        %v8106 = vadd.f32 0.0, %v8105
        %v8107 = vpop.f32.mrf.mxu0
        %8108 = vmatprep.mubr.f32.mxu0 0.0
        %8109 = vmatmul.mubr.f32.gmra.mxu0 %v7669
        %v8110 = vpop.f32.mrf.mxu0
        %v8111 = vadd.f32 0.0, %v8110
        %v8112 = vpop.f32.mrf.mxu0
        %8113 = vmatprep.mubr.f32.mxu0 0.0
        %8114 = vmatmul.mubr.f32.gmra.mxu0 %v7672
        %v8115 = vpop.f32.mrf.mxu0
        %v8116 = vadd.f32 0.0, %v8115
        %v8117 = vpop.f32.mrf.mxu0
        %8118 = vmatprep.mubr.f32.mxu0 0.0
        %8119 = vmatmul.mubr.f32.gmra.mxu0 %v7675
        %v8120 = vpop.f32.mrf.mxu0
        %v8121 = vadd.f32 0.0, %v8120
        %v8122 = vpop.f32.mrf.mxu0
        %8123 = vmatprep.mubr.f32.mxu0 0.0
        %8124 = vmatmul.mubr.f32.gmra.mxu0 %v7678
        %v8125 = vpop.f32.mrf.mxu0
        %v8126 = vadd.f32 0.0, %v8125
        %v8127 = vpop.f32.mrf.mxu0
        %8128 = vmatprep.mubr.f32.mxu0 0.0
        %8129 = vmatmul.mubr.f32.gmra.mxu0 %v7681
        %v8130 = vpop.f32.mrf.mxu0
        %v8131 = vadd.f32 0.0, %v8130
        %v8132 = vpop.f32.mrf.mxu0
        %8133 = vmatprep.mubr.f32.mxu0 0.0
        %8134 = vmatmul.mubr.f32.gmra.mxu0 %v7684
        %v8135 = vpop.f32.mrf.mxu0
        %v8136 = vadd.f32 0.0, %v8135
        %v8137 = vpop.f32.mrf.mxu0
        %8138 = vmatprep.mubr.f32.mxu0 0.0
        %8139 = vmatmul.mubr.f32.gmra.mxu0 %v7687
        %v8140 = vpop.f32.mrf.mxu0
        %v8141 = vadd.f32 0.0, %v8140
        %v8142 = vpop.f32.mrf.mxu0
        %8143 = vmatprep.mubr.f32.mxu0 0.0
        %8144 = vmatmul.mubr.f32.gmra.mxu0 %v7690
        %v8145 = vpop.f32.mrf.mxu0
        %v8146 = vadd.f32 0.0, %v8145
        %v8147 = vpop.f32.mrf.mxu0
        %8148 = vmatprep.mubr.f32.mxu0 0.0
        %8149 = vmatmul.mubr.f32.gmra.mxu0 %v7693
        %v8150 = vpop.f32.mrf.mxu0
        %v8151 = vadd.f32 0.0, %v8150
        %v8152 = vpop.f32.mrf.mxu0
        %8153 = vmatprep.mubr.f32.mxu0 0.0
        %8154 = vmatmul.mubr.f32.gmra.mxu0 %v7696
        %v8155 = vpop.f32.mrf.mxu0
        %v8156 = vadd.f32 0.0, %v8155
        %v8157 = vpop.f32.mrf.mxu0
        %8158 = vmatprep.mubr.f32.mxu0 0.0
        %8159 = vmatmul.mubr.f32.gmra.mxu0 %v7699
        %v8160 = vpop.f32.mrf.mxu0
        %v8161 = vadd.f32 0.0, %v8160
        %v8162 = vpop.f32.mrf.mxu0
        %8163 = vmatprep.mubr.f32.mxu0 0.0
        %8164 = vmatmul.mubr.f32.gmra.mxu0 %v7702
        %v8165 = vpop.f32.mrf.mxu0
        %v8166 = vadd.f32 0.0, %v8165
        %v8167 = vpop.f32.mrf.mxu0
        %8168 = vmatprep.mubr.f32.mxu0 0.0
        %8169 = vmatmul.mubr.f32.gmra.mxu0 %v7705
        %v8170 = vpop.f32.mrf.mxu0
        %v8171 = vadd.f32 0.0, %v8170
        %v8172 = vpop.f32.mrf.mxu0
        %8173 = vmatprep.mubr.f32.mxu0 0.0
        %8174 = vmatmul.mubr.f32.gmra.mxu0 %v7708
        %v8175 = vpop.f32.mrf.mxu0
        %v8176 = vadd.f32 0.0, %v8175
        %v8177 = vpop.f32.mrf.mxu0
        %8178 = vmatprep.mubr.f32.mxu0 0.0
        %8179 = vmatmul.mubr.f32.gmra.mxu0 %v7711
        %v8180 = vpop.f32.mrf.mxu0
        %v8181 = vadd.f32 0.0, %v8180
        %v8182 = vpop.f32.mrf.mxu0
        %8183 = vmatprep.mubr.f32.mxu0 0.0
        %8184 = vmatmul.mubr.f32.gmra.mxu0 %v7714
        %v8185 = vpop.f32.mrf.mxu0
        %v8186 = vadd.f32 0.0, %v8185
        %v8187 = vpop.f32.mrf.mxu0
        %8188 = vmatprep.mubr.f32.mxu0 0.0
        %8189 = vmatmul.mubr.f32.gmra.mxu0 %v7717
        %v8190 = vpop.f32.mrf.mxu0
        %v8191 = vadd.f32 0.0, %v8190
        %v8192 = vpop.f32.mrf.mxu0
        %8193 = vmatprep.mubr.f32.mxu0 0.0
        %8194 = vmatmul.mubr.f32.gmra.mxu0 %v7720
        %v8195 = vpop.f32.mrf.mxu0
        %v8196 = vadd.f32 0.0, %v8195
        %v8197 = vpop.f32.mrf.mxu0
        %8198 = vmatprep.mubr.f32.mxu0 0.0
        %8199 = vmatmul.mubr.f32.gmra.mxu0 %v7723
        %v8200 = vpop.f32.mrf.mxu0
        %v8201 = vadd.f32 0.0, %v8200
        %v8202 = vpop.f32.mrf.mxu0
        %8203 = vmatprep.mubr.f32.mxu0 0.0
        %8204 = vmatmul.mubr.f32.gmra.mxu0 %v7726
        %v8205 = vpop.f32.mrf.mxu0
        %v8206 = vadd.f32 0.0, %v8205
        %v8207 = vpop.f32.mrf.mxu0
        %8208 = vmatprep.mubr.f32.mxu0 0.0
        %8209 = vmatmul.mubr.f32.gmra.mxu0 %v7989
        %v8210 = vpop.f32.mrf.mxu0
        %v8211 = vadd.f32 0.0, %v8210
        %v8212 = vpop.f32.mrf.mxu0
        %8213 = vmatprep.mubr.f32.mxu0 0.0
        %8214 = vmatmul.mubr.f32.gmra.mxu0 %v7992
        %v8215 = vpop.f32.mrf.mxu0
        %v8216 = vadd.f32 0.0, %v8215
        %v8217 = vpop.f32.mrf.mxu0
        %8218 = vdwg.mxu0
        %v8219 = vadd.f32 %v7953, %v8061
        %v8220 = vadd.f32 %v7954, %v8066
        %v8221 = vadd.f32 %v7955, %v8071
        %v8222 = vadd.f32 %v7956, %v8076
        %v8223 = vadd.f32 %v7957, %v8081
        %v8224 = vadd.f32 %v7958, %v8086
        %v8225 = vadd.f32 %v7959, %v8091
        %v8226 = vadd.f32 %v7960, %v8096
        %v8227 = vadd.f32 %v7961, %v8101
        %v8228 = vadd.f32 %v7962, %v8106
        %v8229 = vadd.f32 %v7963, %v8111
        %v8230 = vadd.f32 %v7964, %v8116
        %v8231 = vadd.f32 %v7965, %v8121
        %v8232 = vadd.f32 %v7966, %v8126
        %v8233 = vadd.f32 %v7967, %v8131
        %v8234 = vadd.f32 %v7968, %v8136
        %v8235 = vadd.f32 %v7969, %v8141
        %v8236 = vadd.f32 %v7970, %v8146
        %v8237 = vadd.f32 %v7971, %v8151
        %v8238 = vadd.f32 %v7972, %v8156
        %v8239 = vadd.f32 %v7973, %v8161
        %v8240 = vadd.f32 %v7974, %v8166
        %v8241 = vadd.f32 %v7975, %v8171
        %v8242 = vadd.f32 %v7976, %v8176
        %v8243 = vadd.f32 %v7977, %v8181
        %v8244 = vadd.f32 %v7978, %v8186
        %v8245 = vadd.f32 %v7979, %v8191
        %v8246 = vadd.f32 %v7980, %v8196
        %v8247 = vadd.f32 %v7981, %v8201
        %v8248 = vadd.f32 %v7982, %v8206
        %v8249 = vadd.f32 %v7983, %v8211
        %v8250 = vadd.f32 %v7984, %v8216
        %s8251 = scalar_lea.vmem %s7, 32
        %v8252 = vld [vmem:[%s8251] sm:$0xff]
        %v8253 = vld [vmem:[%s8251 + $0x8] sm:$0xff]
        %v8255 = vsel %vm2330, %v7617, 0
        %v8258 = vsel %vm2330, %v7618, 0
        %8260 = vmatprep.subr.mxu0 0.0
        %8261 = vmatpush1.msra.mxu0 0.0
        %8262 = vmatprep.subr.mxu0 0.0
        %8263 = vmatpush1.msra.mxu0 0.0
        %8264 = vmatprep.subr.mxu0 0.0
        %8265 = vmatpush1.msra.mxu0 0.0
        %8266 = vmatprep.subr.mxu0 0.0
        %8267 = vmatpush1.msra.mxu0 0.0
        %8268 = vmatprep.subr.mxu0 0.0
        %8269 = vmatpush1.msra.mxu0 0.0
        %8270 = vmatprep.subr.mxu0 0.0
        %8271 = vmatpush1.msra.mxu0 0.0
        %8272 = vmatprep.subr.mxu0 0.0
        %8273 = vmatpush1.msra.mxu0 0.0
        %8274 = vmatprep.subr.mxu0 0.0
        %8275 = vmatpush1.msra.mxu0 0.0
        %8276 = vmatprep.subr.mxu0 0.0
        %8277 = vmatpush1.msra.mxu0 0.0
        %8278 = vmatprep.subr.mxu0 0.0
        %8279 = vmatpush1.msra.mxu0 0.0
        %8280 = vmatprep.subr.mxu0 0.0
        %8281 = vmatpush1.msra.mxu0 0.0
        %8282 = vmatprep.subr.mxu0 0.0
        %8283 = vmatpush1.msra.mxu0 0.0
        %8284 = vmatprep.subr.mxu0 0.0
        %8285 = vmatpush1.msra.mxu0 0.0
        %8286 = vmatprep.subr.mxu0 0.0
        %8287 = vmatpush1.msra.mxu0 0.0
        %8288 = vmatprep.subr.mxu0 0.0
        %8289 = vmatpush1.msra.mxu0 %v8253
        %8290 = vmatprep.subr.mxu0 0.0
        %8291 = vmatpush1.msra.mxu0 %v8252
        %8292 = vmatprep.subr.mxu0 0.0
        %8293 = vmatpush2.msra.mxu0 0.0
        %8294 = vmatprep.subr.mxu0 0.0
        %8295 = vmatpush2.msra.mxu0 0.0
        %8296 = vmatprep.subr.mxu0 0.0
        %8297 = vmatpush2.msra.mxu0 0.0
        %8298 = vmatprep.subr.mxu0 0.0
        %8299 = vmatpush2.msra.mxu0 0.0
        %8300 = vmatprep.subr.mxu0 0.0
        %8301 = vmatpush2.msra.mxu0 0.0
        %8302 = vmatprep.subr.mxu0 0.0
        %8303 = vmatpush2.msra.mxu0 0.0
        %8304 = vmatprep.subr.mxu0 0.0
        %8305 = vmatpush2.msra.mxu0 0.0
        %8306 = vmatprep.subr.mxu0 0.0
        %8307 = vmatpush2.msra.mxu0 0.0
        %8308 = vmatprep.subr.mxu0 0.0
        %8309 = vmatpush2.msra.mxu0 0.0
        %8310 = vmatprep.subr.mxu0 0.0
        %8311 = vmatpush2.msra.mxu0 0.0
        %8312 = vmatprep.subr.mxu0 0.0
        %8313 = vmatpush2.msra.mxu0 0.0
        %8314 = vmatprep.subr.mxu0 0.0
        %8315 = vmatpush2.msra.mxu0 0.0
        %8316 = vmatprep.subr.mxu0 0.0
        %8317 = vmatpush2.msra.mxu0 0.0
        %8318 = vmatprep.subr.mxu0 0.0
        %8319 = vmatpush2.msra.mxu0 0.0
        %8320 = vmatprep.subr.mxu0 0.0
        %8321 = vmatpush2.msra.mxu0 0.0
        %8322 = vmatprep.subr.mxu0 0.0
        %8323 = vmatpush2.msra.mxu0 0.0
        %8324 = vmatprep.mubr.f32.mxu0 0.0
        %8325 = vmatmul.mubr.f32.gmra.mxu0 %v7645
        %v8326 = vpop.f32.mrf.mxu0
        %v8327 = vadd.f32 0.0, %v8326
        %v8328 = vpop.f32.mrf.mxu0
        %8329 = vmatprep.mubr.f32.mxu0 0.0
        %8330 = vmatmul.mubr.f32.gmra.mxu0 %v7648
        %v8331 = vpop.f32.mrf.mxu0
        %v8332 = vadd.f32 0.0, %v8331
        %v8333 = vpop.f32.mrf.mxu0
        %8334 = vmatprep.mubr.f32.mxu0 0.0
        %8335 = vmatmul.mubr.f32.gmra.mxu0 %v7651
        %v8336 = vpop.f32.mrf.mxu0
        %v8337 = vadd.f32 0.0, %v8336
        %v8338 = vpop.f32.mrf.mxu0
        %8339 = vmatprep.mubr.f32.mxu0 0.0
        %8340 = vmatmul.mubr.f32.gmra.mxu0 %v7654
        %v8341 = vpop.f32.mrf.mxu0
        %v8342 = vadd.f32 0.0, %v8341
        %v8343 = vpop.f32.mrf.mxu0
        %8344 = vmatprep.mubr.f32.mxu0 0.0
        %8345 = vmatmul.mubr.f32.gmra.mxu0 %v7657
        %v8346 = vpop.f32.mrf.mxu0
        %v8347 = vadd.f32 0.0, %v8346
        %v8348 = vpop.f32.mrf.mxu0
        %8349 = vmatprep.mubr.f32.mxu0 0.0
        %8350 = vmatmul.mubr.f32.gmra.mxu0 %v7660
        %v8351 = vpop.f32.mrf.mxu0
        %v8352 = vadd.f32 0.0, %v8351
        %v8353 = vpop.f32.mrf.mxu0
        %8354 = vmatprep.mubr.f32.mxu0 0.0
        %8355 = vmatmul.mubr.f32.gmra.mxu0 %v7663
        %v8356 = vpop.f32.mrf.mxu0
        %v8357 = vadd.f32 0.0, %v8356
        %v8358 = vpop.f32.mrf.mxu0
        %8359 = vmatprep.mubr.f32.mxu0 0.0
        %8360 = vmatmul.mubr.f32.gmra.mxu0 %v7666
        %v8361 = vpop.f32.mrf.mxu0
        %v8362 = vadd.f32 0.0, %v8361
        %v8363 = vpop.f32.mrf.mxu0
        %8364 = vmatprep.mubr.f32.mxu0 0.0
        %8365 = vmatmul.mubr.f32.gmra.mxu0 %v7669
        %v8366 = vpop.f32.mrf.mxu0
        %v8367 = vadd.f32 0.0, %v8366
        %v8368 = vpop.f32.mrf.mxu0
        %8369 = vmatprep.mubr.f32.mxu0 0.0
        %8370 = vmatmul.mubr.f32.gmra.mxu0 %v7672
        %v8371 = vpop.f32.mrf.mxu0
        %v8372 = vadd.f32 0.0, %v8371
        %v8373 = vpop.f32.mrf.mxu0
        %8374 = vmatprep.mubr.f32.mxu0 0.0
        %8375 = vmatmul.mubr.f32.gmra.mxu0 %v7675
        %v8376 = vpop.f32.mrf.mxu0
        %v8377 = vadd.f32 0.0, %v8376
        %v8378 = vpop.f32.mrf.mxu0
        %8379 = vmatprep.mubr.f32.mxu0 0.0
        %8380 = vmatmul.mubr.f32.gmra.mxu0 %v7678
        %v8381 = vpop.f32.mrf.mxu0
        %v8382 = vadd.f32 0.0, %v8381
        %v8383 = vpop.f32.mrf.mxu0
        %8384 = vmatprep.mubr.f32.mxu0 0.0
        %8385 = vmatmul.mubr.f32.gmra.mxu0 %v7681
        %v8386 = vpop.f32.mrf.mxu0
        %v8387 = vadd.f32 0.0, %v8386
        %v8388 = vpop.f32.mrf.mxu0
        %8389 = vmatprep.mubr.f32.mxu0 0.0
        %8390 = vmatmul.mubr.f32.gmra.mxu0 %v7684
        %v8391 = vpop.f32.mrf.mxu0
        %v8392 = vadd.f32 0.0, %v8391
        %v8393 = vpop.f32.mrf.mxu0
        %8394 = vmatprep.mubr.f32.mxu0 0.0
        %8395 = vmatmul.mubr.f32.gmra.mxu0 %v7687
        %v8396 = vpop.f32.mrf.mxu0
        %v8397 = vadd.f32 0.0, %v8396
        %v8398 = vpop.f32.mrf.mxu0
        %8399 = vmatprep.mubr.f32.mxu0 0.0
        %8400 = vmatmul.mubr.f32.gmra.mxu0 %v7690
        %v8401 = vpop.f32.mrf.mxu0
        %v8402 = vadd.f32 0.0, %v8401
        %v8403 = vpop.f32.mrf.mxu0
        %8404 = vmatprep.mubr.f32.mxu0 0.0
        %8405 = vmatmul.mubr.f32.gmra.mxu0 %v7693
        %v8406 = vpop.f32.mrf.mxu0
        %v8407 = vadd.f32 0.0, %v8406
        %v8408 = vpop.f32.mrf.mxu0
        %8409 = vmatprep.mubr.f32.mxu0 0.0
        %8410 = vmatmul.mubr.f32.gmra.mxu0 %v7696
        %v8411 = vpop.f32.mrf.mxu0
        %v8412 = vadd.f32 0.0, %v8411
        %v8413 = vpop.f32.mrf.mxu0
        %8414 = vmatprep.mubr.f32.mxu0 0.0
        %8415 = vmatmul.mubr.f32.gmra.mxu0 %v7699
        %v8416 = vpop.f32.mrf.mxu0
        %v8417 = vadd.f32 0.0, %v8416
        %v8418 = vpop.f32.mrf.mxu0
        %8419 = vmatprep.mubr.f32.mxu0 0.0
        %8420 = vmatmul.mubr.f32.gmra.mxu0 %v7702
        %v8421 = vpop.f32.mrf.mxu0
        %v8422 = vadd.f32 0.0, %v8421
        %v8423 = vpop.f32.mrf.mxu0
        %8424 = vmatprep.mubr.f32.mxu0 0.0
        %8425 = vmatmul.mubr.f32.gmra.mxu0 %v7705
        %v8426 = vpop.f32.mrf.mxu0
        %v8427 = vadd.f32 0.0, %v8426
        %v8428 = vpop.f32.mrf.mxu0
        %8429 = vmatprep.mubr.f32.mxu0 0.0
        %8430 = vmatmul.mubr.f32.gmra.mxu0 %v7708
        %v8431 = vpop.f32.mrf.mxu0
        %v8432 = vadd.f32 0.0, %v8431
        %v8433 = vpop.f32.mrf.mxu0
        %8434 = vmatprep.mubr.f32.mxu0 0.0
        %8435 = vmatmul.mubr.f32.gmra.mxu0 %v7711
        %v8436 = vpop.f32.mrf.mxu0
        %v8437 = vadd.f32 0.0, %v8436
        %v8438 = vpop.f32.mrf.mxu0
        %8439 = vmatprep.mubr.f32.mxu0 0.0
        %8440 = vmatmul.mubr.f32.gmra.mxu0 %v7714
        %v8441 = vpop.f32.mrf.mxu0
        %v8442 = vadd.f32 0.0, %v8441
        %v8443 = vpop.f32.mrf.mxu0
        %8444 = vmatprep.mubr.f32.mxu0 0.0
        %8445 = vmatmul.mubr.f32.gmra.mxu0 %v7717
        %v8446 = vpop.f32.mrf.mxu0
        %v8447 = vadd.f32 0.0, %v8446
        %v8448 = vpop.f32.mrf.mxu0
        %8449 = vmatprep.mubr.f32.mxu0 0.0
        %8450 = vmatmul.mubr.f32.gmra.mxu0 %v7720
        %v8451 = vpop.f32.mrf.mxu0
        %v8452 = vadd.f32 0.0, %v8451
        %v8453 = vpop.f32.mrf.mxu0
        %8454 = vmatprep.mubr.f32.mxu0 0.0
        %8455 = vmatmul.mubr.f32.gmra.mxu0 %v7723
        %v8456 = vpop.f32.mrf.mxu0
        %v8457 = vadd.f32 0.0, %v8456
        %v8458 = vpop.f32.mrf.mxu0
        %8459 = vmatprep.mubr.f32.mxu0 0.0
        %8460 = vmatmul.mubr.f32.gmra.mxu0 %v7726
        %v8461 = vpop.f32.mrf.mxu0
        %v8462 = vadd.f32 0.0, %v8461
        %v8463 = vpop.f32.mrf.mxu0
        %8464 = vmatprep.mubr.f32.mxu0 0.0
        %8465 = vmatmul.mubr.f32.gmra.mxu0 %v7989
        %v8466 = vpop.f32.mrf.mxu0
        %v8467 = vadd.f32 0.0, %v8466
        %v8468 = vpop.f32.mrf.mxu0
        %8469 = vmatprep.mubr.f32.mxu0 0.0
        %8470 = vmatmul.mubr.f32.gmra.mxu0 %v7992
        %v8471 = vpop.f32.mrf.mxu0
        %v8472 = vadd.f32 0.0, %v8471
        %v8473 = vpop.f32.mrf.mxu0
        %8474 = vmatprep.mubr.f32.mxu0 0.0
        %8475 = vmatmul.mubr.f32.gmra.mxu0 %v8255
        %v8476 = vpop.f32.mrf.mxu0
        %v8477 = vadd.f32 0.0, %v8476
        %v8478 = vpop.f32.mrf.mxu0
        %8479 = vmatprep.mubr.f32.mxu0 0.0
        %8480 = vmatmul.mubr.f32.gmra.mxu0 %v8258
        %v8481 = vpop.f32.mrf.mxu0
        %v8482 = vadd.f32 0.0, %v8481
        %v8483 = vpop.f32.mrf.mxu0
        %8484 = vdwg.mxu0
        %v8485 = vadd.f32 %v8219, %v8327
        %v8486 = vadd.f32 %v8220, %v8332
        %v8487 = vadd.f32 %v8221, %v8337
        %v8488 = vadd.f32 %v8222, %v8342
        %v8489 = vadd.f32 %v8223, %v8347
        %v8490 = vadd.f32 %v8224, %v8352
        %v8491 = vadd.f32 %v8225, %v8357
        %v8492 = vadd.f32 %v8226, %v8362
        %v8493 = vadd.f32 %v8227, %v8367
        %v8494 = vadd.f32 %v8228, %v8372
        %v8495 = vadd.f32 %v8229, %v8377
        %v8496 = vadd.f32 %v8230, %v8382
        %v8497 = vadd.f32 %v8231, %v8387
        %v8498 = vadd.f32 %v8232, %v8392
        %v8499 = vadd.f32 %v8233, %v8397
        %v8500 = vadd.f32 %v8234, %v8402
        %v8501 = vadd.f32 %v8235, %v8407
        %v8502 = vadd.f32 %v8236, %v8412
        %v8503 = vadd.f32 %v8237, %v8417
        %v8504 = vadd.f32 %v8238, %v8422
        %v8505 = vadd.f32 %v8239, %v8427
        %v8506 = vadd.f32 %v8240, %v8432
        %v8507 = vadd.f32 %v8241, %v8437
        %v8508 = vadd.f32 %v8242, %v8442
        %v8509 = vadd.f32 %v8243, %v8447
        %v8510 = vadd.f32 %v8244, %v8452
        %v8511 = vadd.f32 %v8245, %v8457
        %v8512 = vadd.f32 %v8246, %v8462
        %v8513 = vadd.f32 %v8247, %v8467
        %v8514 = vadd.f32 %v8248, %v8472
        %v8515 = vadd.f32 %v8249, %v8477
        %v8516 = vadd.f32 %v8250, %v8482
        %s8517 = scalar_lea.vmem %s7, 48
        %v8518 = vld [vmem:[%s8517] sm:$0xff]
        %v8519 = vld [vmem:[%s8517 + $0x8] sm:$0xff]
        %v8521 = vsel %vm2330, %v7619, 0
        %v8524 = vsel %vm2330, %v7620, 0
        %8526 = vmatprep.subr.mxu0 0.0
        %8527 = vmatpush1.msra.mxu0 0.0
        %8528 = vmatprep.subr.mxu0 0.0
        %8529 = vmatpush1.msra.mxu0 0.0
        %8530 = vmatprep.subr.mxu0 0.0
        %8531 = vmatpush1.msra.mxu0 0.0
        %8532 = vmatprep.subr.mxu0 0.0
        %8533 = vmatpush1.msra.mxu0 0.0
        %8534 = vmatprep.subr.mxu0 0.0
        %8535 = vmatpush1.msra.mxu0 0.0
        %8536 = vmatprep.subr.mxu0 0.0
        %8537 = vmatpush1.msra.mxu0 0.0
        %8538 = vmatprep.subr.mxu0 0.0
        %8539 = vmatpush1.msra.mxu0 0.0
        %8540 = vmatprep.subr.mxu0 0.0
        %8541 = vmatpush1.msra.mxu0 0.0
        %8542 = vmatprep.subr.mxu0 0.0
        %8543 = vmatpush1.msra.mxu0 0.0
        %8544 = vmatprep.subr.mxu0 0.0
        %8545 = vmatpush1.msra.mxu0 0.0
        %8546 = vmatprep.subr.mxu0 0.0
        %8547 = vmatpush1.msra.mxu0 0.0
        %8548 = vmatprep.subr.mxu0 0.0
        %8549 = vmatpush1.msra.mxu0 0.0
        %8550 = vmatprep.subr.mxu0 0.0
        %8551 = vmatpush1.msra.mxu0 0.0
        %8552 = vmatprep.subr.mxu0 0.0
        %8553 = vmatpush1.msra.mxu0 0.0
        %8554 = vmatprep.subr.mxu0 0.0
        %8555 = vmatpush1.msra.mxu0 %v8519
        %8556 = vmatprep.subr.mxu0 0.0
        %8557 = vmatpush1.msra.mxu0 %v8518
        %8558 = vmatprep.subr.mxu0 0.0
        %8559 = vmatpush2.msra.mxu0 0.0
        %8560 = vmatprep.subr.mxu0 0.0
        %8561 = vmatpush2.msra.mxu0 0.0
        %8562 = vmatprep.subr.mxu0 0.0
        %8563 = vmatpush2.msra.mxu0 0.0
        %8564 = vmatprep.subr.mxu0 0.0
        %8565 = vmatpush2.msra.mxu0 0.0
        %8566 = vmatprep.subr.mxu0 0.0
        %8567 = vmatpush2.msra.mxu0 0.0
        %8568 = vmatprep.subr.mxu0 0.0
        %8569 = vmatpush2.msra.mxu0 0.0
        %8570 = vmatprep.subr.mxu0 0.0
        %8571 = vmatpush2.msra.mxu0 0.0
        %8572 = vmatprep.subr.mxu0 0.0
        %8573 = vmatpush2.msra.mxu0 0.0
        %8574 = vmatprep.subr.mxu0 0.0
        %8575 = vmatpush2.msra.mxu0 0.0
        %8576 = vmatprep.subr.mxu0 0.0
        %8577 = vmatpush2.msra.mxu0 0.0
        %8578 = vmatprep.subr.mxu0 0.0
        %8579 = vmatpush2.msra.mxu0 0.0
        %8580 = vmatprep.subr.mxu0 0.0
        %8581 = vmatpush2.msra.mxu0 0.0
        %8582 = vmatprep.subr.mxu0 0.0
        %8583 = vmatpush2.msra.mxu0 0.0
        %8584 = vmatprep.subr.mxu0 0.0
        %8585 = vmatpush2.msra.mxu0 0.0
        %8586 = vmatprep.subr.mxu0 0.0
        %8587 = vmatpush2.msra.mxu0 0.0
        %8588 = vmatprep.subr.mxu0 0.0
        %8589 = vmatpush2.msra.mxu0 0.0
        %8590 = vmatprep.mubr.f32.mxu0 0.0
        %8591 = vmatmul.mubr.f32.gmra.mxu0 %v7651
        %v8592 = vpop.f32.mrf.mxu0
        %v8593 = vadd.f32 0.0, %v8592
        %v8594 = vpop.f32.mrf.mxu0
        %8595 = vmatprep.mubr.f32.mxu0 0.0
        %8596 = vmatmul.mubr.f32.gmra.mxu0 %v7654
        %v8597 = vpop.f32.mrf.mxu0
        %v8598 = vadd.f32 0.0, %v8597
        %v8599 = vpop.f32.mrf.mxu0
        %8600 = vmatprep.mubr.f32.mxu0 0.0
        %8601 = vmatmul.mubr.f32.gmra.mxu0 %v7657
        %v8602 = vpop.f32.mrf.mxu0
        %v8603 = vadd.f32 0.0, %v8602
        %v8604 = vpop.f32.mrf.mxu0
        %8605 = vmatprep.mubr.f32.mxu0 0.0
        %8606 = vmatmul.mubr.f32.gmra.mxu0 %v7660
        %v8607 = vpop.f32.mrf.mxu0
        %v8608 = vadd.f32 0.0, %v8607
        %v8609 = vpop.f32.mrf.mxu0
        %8610 = vmatprep.mubr.f32.mxu0 0.0
        %8611 = vmatmul.mubr.f32.gmra.mxu0 %v7663
        %v8612 = vpop.f32.mrf.mxu0
        %v8613 = vadd.f32 0.0, %v8612
        %v8614 = vpop.f32.mrf.mxu0
        %8615 = vmatprep.mubr.f32.mxu0 0.0
        %8616 = vmatmul.mubr.f32.gmra.mxu0 %v7666
        %v8617 = vpop.f32.mrf.mxu0
        %v8618 = vadd.f32 0.0, %v8617
        %v8619 = vpop.f32.mrf.mxu0
        %8620 = vmatprep.mubr.f32.mxu0 0.0
        %8621 = vmatmul.mubr.f32.gmra.mxu0 %v7669
        %v8622 = vpop.f32.mrf.mxu0
        %v8623 = vadd.f32 0.0, %v8622
        %v8624 = vpop.f32.mrf.mxu0
        %8625 = vmatprep.mubr.f32.mxu0 0.0
        %8626 = vmatmul.mubr.f32.gmra.mxu0 %v7672
        %v8627 = vpop.f32.mrf.mxu0
        %v8628 = vadd.f32 0.0, %v8627
        %v8629 = vpop.f32.mrf.mxu0
        %8630 = vmatprep.mubr.f32.mxu0 0.0
        %8631 = vmatmul.mubr.f32.gmra.mxu0 %v7675
        %v8632 = vpop.f32.mrf.mxu0
        %v8633 = vadd.f32 0.0, %v8632
        %v8634 = vpop.f32.mrf.mxu0
        %8635 = vmatprep.mubr.f32.mxu0 0.0
        %8636 = vmatmul.mubr.f32.gmra.mxu0 %v7678
        %v8637 = vpop.f32.mrf.mxu0
        %v8638 = vadd.f32 0.0, %v8637
        %v8639 = vpop.f32.mrf.mxu0
        %8640 = vmatprep.mubr.f32.mxu0 0.0
        %8641 = vmatmul.mubr.f32.gmra.mxu0 %v7681
        %v8642 = vpop.f32.mrf.mxu0
        %v8643 = vadd.f32 0.0, %v8642
        %v8644 = vpop.f32.mrf.mxu0
        %8645 = vmatprep.mubr.f32.mxu0 0.0
        %8646 = vmatmul.mubr.f32.gmra.mxu0 %v7684
        %v8647 = vpop.f32.mrf.mxu0
        %v8648 = vadd.f32 0.0, %v8647
        %v8649 = vpop.f32.mrf.mxu0
        %8650 = vmatprep.mubr.f32.mxu0 0.0
        %8651 = vmatmul.mubr.f32.gmra.mxu0 %v7687
        %v8652 = vpop.f32.mrf.mxu0
        %v8653 = vadd.f32 0.0, %v8652
        %v8654 = vpop.f32.mrf.mxu0
        %8655 = vmatprep.mubr.f32.mxu0 0.0
        %8656 = vmatmul.mubr.f32.gmra.mxu0 %v7690
        %v8657 = vpop.f32.mrf.mxu0
        %v8658 = vadd.f32 0.0, %v8657
        %v8659 = vpop.f32.mrf.mxu0
        %8660 = vmatprep.mubr.f32.mxu0 0.0
        %8661 = vmatmul.mubr.f32.gmra.mxu0 %v7693
        %v8662 = vpop.f32.mrf.mxu0
        %v8663 = vadd.f32 0.0, %v8662
        %v8664 = vpop.f32.mrf.mxu0
        %8665 = vmatprep.mubr.f32.mxu0 0.0
        %8666 = vmatmul.mubr.f32.gmra.mxu0 %v7696
        %v8667 = vpop.f32.mrf.mxu0
        %v8668 = vadd.f32 0.0, %v8667
        %v8669 = vpop.f32.mrf.mxu0
        %8670 = vmatprep.mubr.f32.mxu0 0.0
        %8671 = vmatmul.mubr.f32.gmra.mxu0 %v7699
        %v8672 = vpop.f32.mrf.mxu0
        %v8673 = vadd.f32 0.0, %v8672
        %v8674 = vpop.f32.mrf.mxu0
        %8675 = vmatprep.mubr.f32.mxu0 0.0
        %8676 = vmatmul.mubr.f32.gmra.mxu0 %v7702
        %v8677 = vpop.f32.mrf.mxu0
        %v8678 = vadd.f32 0.0, %v8677
        %v8679 = vpop.f32.mrf.mxu0
        %8680 = vmatprep.mubr.f32.mxu0 0.0
        %8681 = vmatmul.mubr.f32.gmra.mxu0 %v7705
        %v8682 = vpop.f32.mrf.mxu0
        %v8683 = vadd.f32 0.0, %v8682
        %v8684 = vpop.f32.mrf.mxu0
        %8685 = vmatprep.mubr.f32.mxu0 0.0
        %8686 = vmatmul.mubr.f32.gmra.mxu0 %v7708
        %v8687 = vpop.f32.mrf.mxu0
        %v8688 = vadd.f32 0.0, %v8687
        %v8689 = vpop.f32.mrf.mxu0
        %8690 = vmatprep.mubr.f32.mxu0 0.0
        %8691 = vmatmul.mubr.f32.gmra.mxu0 %v7711
        %v8692 = vpop.f32.mrf.mxu0
        %v8693 = vadd.f32 0.0, %v8692
        %v8694 = vpop.f32.mrf.mxu0
        %8695 = vmatprep.mubr.f32.mxu0 0.0
        %8696 = vmatmul.mubr.f32.gmra.mxu0 %v7714
        %v8697 = vpop.f32.mrf.mxu0
        %v8698 = vadd.f32 0.0, %v8697
        %v8699 = vpop.f32.mrf.mxu0
        %8700 = vmatprep.mubr.f32.mxu0 0.0
        %8701 = vmatmul.mubr.f32.gmra.mxu0 %v7717
        %v8702 = vpop.f32.mrf.mxu0
        %v8703 = vadd.f32 0.0, %v8702
        %v8704 = vpop.f32.mrf.mxu0
        %8705 = vmatprep.mubr.f32.mxu0 0.0
        %8706 = vmatmul.mubr.f32.gmra.mxu0 %v7720
        %v8707 = vpop.f32.mrf.mxu0
        %v8708 = vadd.f32 0.0, %v8707
        %v8709 = vpop.f32.mrf.mxu0
        %8710 = vmatprep.mubr.f32.mxu0 0.0
        %8711 = vmatmul.mubr.f32.gmra.mxu0 %v7723
        %v8712 = vpop.f32.mrf.mxu0
        %v8713 = vadd.f32 0.0, %v8712
        %v8714 = vpop.f32.mrf.mxu0
        %8715 = vmatprep.mubr.f32.mxu0 0.0
        %8716 = vmatmul.mubr.f32.gmra.mxu0 %v7726
        %v8717 = vpop.f32.mrf.mxu0
        %v8718 = vadd.f32 0.0, %v8717
        %v8719 = vpop.f32.mrf.mxu0
        %8720 = vmatprep.mubr.f32.mxu0 0.0
        %8721 = vmatmul.mubr.f32.gmra.mxu0 %v7989
        %v8722 = vpop.f32.mrf.mxu0
        %v8723 = vadd.f32 0.0, %v8722
        %v8724 = vpop.f32.mrf.mxu0
        %8725 = vmatprep.mubr.f32.mxu0 0.0
        %8726 = vmatmul.mubr.f32.gmra.mxu0 %v7992
        %v8727 = vpop.f32.mrf.mxu0
        %v8728 = vadd.f32 0.0, %v8727
        %v8729 = vpop.f32.mrf.mxu0
        %8730 = vmatprep.mubr.f32.mxu0 0.0
        %8731 = vmatmul.mubr.f32.gmra.mxu0 %v8255
        %v8732 = vpop.f32.mrf.mxu0
        %v8733 = vadd.f32 0.0, %v8732
        %v8734 = vpop.f32.mrf.mxu0
        %8735 = vmatprep.mubr.f32.mxu0 0.0
        %8736 = vmatmul.mubr.f32.gmra.mxu0 %v8258
        %v8737 = vpop.f32.mrf.mxu0
        %v8738 = vadd.f32 0.0, %v8737
        %v8739 = vpop.f32.mrf.mxu0
        %8740 = vmatprep.mubr.f32.mxu0 0.0
        %8741 = vmatmul.mubr.f32.gmra.mxu0 %v8521
        %v8742 = vpop.f32.mrf.mxu0
        %v8743 = vadd.f32 0.0, %v8742
        %v8744 = vpop.f32.mrf.mxu0
        %8745 = vmatprep.mubr.f32.mxu0 0.0
        %8746 = vmatmul.mubr.f32.gmra.mxu0 %v8524
        %v8747 = vpop.f32.mrf.mxu0
        %v8748 = vadd.f32 0.0, %v8747
        %v8749 = vpop.f32.mrf.mxu0
        %8750 = vdwg.mxu0
        %v8751 = vadd.f32 %v8485, %v8593
        %v8752 = vadd.f32 %v8486, %v8598
        %v8753 = vadd.f32 %v8487, %v8603
        %v8754 = vadd.f32 %v8488, %v8608
        %v8755 = vadd.f32 %v8489, %v8613
        %v8756 = vadd.f32 %v8490, %v8618
        %v8757 = vadd.f32 %v8491, %v8623
        %v8758 = vadd.f32 %v8492, %v8628
        %v8759 = vadd.f32 %v8493, %v8633
        %v8760 = vadd.f32 %v8494, %v8638
        %v8761 = vadd.f32 %v8495, %v8643
        %v8762 = vadd.f32 %v8496, %v8648
        %v8763 = vadd.f32 %v8497, %v8653
        %v8764 = vadd.f32 %v8498, %v8658
        %v8765 = vadd.f32 %v8499, %v8663
        %v8766 = vadd.f32 %v8500, %v8668
        %v8767 = vadd.f32 %v8501, %v8673
        %v8768 = vadd.f32 %v8502, %v8678
        %v8769 = vadd.f32 %v8503, %v8683
        %v8770 = vadd.f32 %v8504, %v8688
        %v8771 = vadd.f32 %v8505, %v8693
        %v8772 = vadd.f32 %v8506, %v8698
        %v8773 = vadd.f32 %v8507, %v8703
        %v8774 = vadd.f32 %v8508, %v8708
        %v8775 = vadd.f32 %v8509, %v8713
        %v8776 = vadd.f32 %v8510, %v8718
        %v8777 = vadd.f32 %v8511, %v8723
        %v8778 = vadd.f32 %v8512, %v8728
        %v8779 = vadd.f32 %v8513, %v8733
        %v8780 = vadd.f32 %v8514, %v8738
        %v8781 = vadd.f32 %v8515, %v8743
        %v8782 = vadd.f32 %v8516, %v8748
        %s8783 = scalar_lea.vmem %s7, 64
        %v8784 = vld [vmem:[%s8783] sm:$0xff]
        %v8785 = vld [vmem:[%s8783 + $0x8] sm:$0xff]
        %v8787 = vsel %vm2330, %v7621, 0
        %v8790 = vsel %vm2330, %v7622, 0
        %8792 = vmatprep.subr.mxu0 0.0
        %8793 = vmatpush1.msra.mxu0 0.0
        %8794 = vmatprep.subr.mxu0 0.0
        %8795 = vmatpush1.msra.mxu0 0.0
        %8796 = vmatprep.subr.mxu0 0.0
        %8797 = vmatpush1.msra.mxu0 0.0
        %8798 = vmatprep.subr.mxu0 0.0
        %8799 = vmatpush1.msra.mxu0 0.0
        %8800 = vmatprep.subr.mxu0 0.0
        %8801 = vmatpush1.msra.mxu0 0.0
        %8802 = vmatprep.subr.mxu0 0.0
        %8803 = vmatpush1.msra.mxu0 0.0
        %8804 = vmatprep.subr.mxu0 0.0
        %8805 = vmatpush1.msra.mxu0 0.0
        %8806 = vmatprep.subr.mxu0 0.0
        %8807 = vmatpush1.msra.mxu0 0.0
        %8808 = vmatprep.subr.mxu0 0.0
        %8809 = vmatpush1.msra.mxu0 0.0
        %8810 = vmatprep.subr.mxu0 0.0
        %8811 = vmatpush1.msra.mxu0 0.0
        %8812 = vmatprep.subr.mxu0 0.0
        %8813 = vmatpush1.msra.mxu0 0.0
        %8814 = vmatprep.subr.mxu0 0.0
        %8815 = vmatpush1.msra.mxu0 0.0
        %8816 = vmatprep.subr.mxu0 0.0
        %8817 = vmatpush1.msra.mxu0 0.0
        %8818 = vmatprep.subr.mxu0 0.0
        %8819 = vmatpush1.msra.mxu0 0.0
        %8820 = vmatprep.subr.mxu0 0.0
        %8821 = vmatpush1.msra.mxu0 %v8785
        %8822 = vmatprep.subr.mxu0 0.0
        %8823 = vmatpush1.msra.mxu0 %v8784
        %8824 = vmatprep.subr.mxu0 0.0
        %8825 = vmatpush2.msra.mxu0 0.0
        %8826 = vmatprep.subr.mxu0 0.0
        %8827 = vmatpush2.msra.mxu0 0.0
        %8828 = vmatprep.subr.mxu0 0.0
        %8829 = vmatpush2.msra.mxu0 0.0
        %8830 = vmatprep.subr.mxu0 0.0
        %8831 = vmatpush2.msra.mxu0 0.0
        %8832 = vmatprep.subr.mxu0 0.0
        %8833 = vmatpush2.msra.mxu0 0.0
        %8834 = vmatprep.subr.mxu0 0.0
        %8835 = vmatpush2.msra.mxu0 0.0
        %8836 = vmatprep.subr.mxu0 0.0
        %8837 = vmatpush2.msra.mxu0 0.0
        %8838 = vmatprep.subr.mxu0 0.0
        %8839 = vmatpush2.msra.mxu0 0.0
        %8840 = vmatprep.subr.mxu0 0.0
        %8841 = vmatpush2.msra.mxu0 0.0
        %8842 = vmatprep.subr.mxu0 0.0
        %8843 = vmatpush2.msra.mxu0 0.0
        %8844 = vmatprep.subr.mxu0 0.0
        %8845 = vmatpush2.msra.mxu0 0.0
        %8846 = vmatprep.subr.mxu0 0.0
        %8847 = vmatpush2.msra.mxu0 0.0
        %8848 = vmatprep.subr.mxu0 0.0
        %8849 = vmatpush2.msra.mxu0 0.0
        %8850 = vmatprep.subr.mxu0 0.0
        %8851 = vmatpush2.msra.mxu0 0.0
        %8852 = vmatprep.subr.mxu0 0.0
        %8853 = vmatpush2.msra.mxu0 0.0
        %8854 = vmatprep.subr.mxu0 0.0
        %8855 = vmatpush2.msra.mxu0 0.0
        %8856 = vmatprep.mubr.f32.mxu0 0.0
        %8857 = vmatmul.mubr.f32.gmra.mxu0 %v7657
        %v8858 = vpop.f32.mrf.mxu0
        %v8859 = vadd.f32 0.0, %v8858
        %v8860 = vpop.f32.mrf.mxu0
        %8861 = vmatprep.mubr.f32.mxu0 0.0
        %8862 = vmatmul.mubr.f32.gmra.mxu0 %v7660
        %v8863 = vpop.f32.mrf.mxu0
        %v8864 = vadd.f32 0.0, %v8863
        %v8865 = vpop.f32.mrf.mxu0
        %8866 = vmatprep.mubr.f32.mxu0 0.0
        %8867 = vmatmul.mubr.f32.gmra.mxu0 %v7663
        %v8868 = vpop.f32.mrf.mxu0
        %v8869 = vadd.f32 0.0, %v8868
        %v8870 = vpop.f32.mrf.mxu0
        %8871 = vmatprep.mubr.f32.mxu0 0.0
        %8872 = vmatmul.mubr.f32.gmra.mxu0 %v7666
        %v8873 = vpop.f32.mrf.mxu0
        %v8874 = vadd.f32 0.0, %v8873
        %v8875 = vpop.f32.mrf.mxu0
        %8876 = vmatprep.mubr.f32.mxu0 0.0
        %8877 = vmatmul.mubr.f32.gmra.mxu0 %v7669
        %v8878 = vpop.f32.mrf.mxu0
        %v8879 = vadd.f32 0.0, %v8878
        %v8880 = vpop.f32.mrf.mxu0
        %8881 = vmatprep.mubr.f32.mxu0 0.0
        %8882 = vmatmul.mubr.f32.gmra.mxu0 %v7672
        %v8883 = vpop.f32.mrf.mxu0
        %v8884 = vadd.f32 0.0, %v8883
        %v8885 = vpop.f32.mrf.mxu0
        %8886 = vmatprep.mubr.f32.mxu0 0.0
        %8887 = vmatmul.mubr.f32.gmra.mxu0 %v7675
        %v8888 = vpop.f32.mrf.mxu0
        %v8889 = vadd.f32 0.0, %v8888
        %v8890 = vpop.f32.mrf.mxu0
        %8891 = vmatprep.mubr.f32.mxu0 0.0
        %8892 = vmatmul.mubr.f32.gmra.mxu0 %v7678
        %v8893 = vpop.f32.mrf.mxu0
        %v8894 = vadd.f32 0.0, %v8893
        %v8895 = vpop.f32.mrf.mxu0
        %8896 = vmatprep.mubr.f32.mxu0 0.0
        %8897 = vmatmul.mubr.f32.gmra.mxu0 %v7681
        %v8898 = vpop.f32.mrf.mxu0
        %v8899 = vadd.f32 0.0, %v8898
        %v8900 = vpop.f32.mrf.mxu0
        %8901 = vmatprep.mubr.f32.mxu0 0.0
        %8902 = vmatmul.mubr.f32.gmra.mxu0 %v7684
        %v8903 = vpop.f32.mrf.mxu0
        %v8904 = vadd.f32 0.0, %v8903
        %v8905 = vpop.f32.mrf.mxu0
        %8906 = vmatprep.mubr.f32.mxu0 0.0
        %8907 = vmatmul.mubr.f32.gmra.mxu0 %v7687
        %v8908 = vpop.f32.mrf.mxu0
        %v8909 = vadd.f32 0.0, %v8908
        %v8910 = vpop.f32.mrf.mxu0
        %8911 = vmatprep.mubr.f32.mxu0 0.0
        %8912 = vmatmul.mubr.f32.gmra.mxu0 %v7690
        %v8913 = vpop.f32.mrf.mxu0
        %v8914 = vadd.f32 0.0, %v8913
        %v8915 = vpop.f32.mrf.mxu0
        %8916 = vmatprep.mubr.f32.mxu0 0.0
        %8917 = vmatmul.mubr.f32.gmra.mxu0 %v7693
        %v8918 = vpop.f32.mrf.mxu0
        %v8919 = vadd.f32 0.0, %v8918
        %v8920 = vpop.f32.mrf.mxu0
        %8921 = vmatprep.mubr.f32.mxu0 0.0
        %8922 = vmatmul.mubr.f32.gmra.mxu0 %v7696
        %v8923 = vpop.f32.mrf.mxu0
        %v8924 = vadd.f32 0.0, %v8923
        %v8925 = vpop.f32.mrf.mxu0
        %8926 = vmatprep.mubr.f32.mxu0 0.0
        %8927 = vmatmul.mubr.f32.gmra.mxu0 %v7699
        %v8928 = vpop.f32.mrf.mxu0
        %v8929 = vadd.f32 0.0, %v8928
        %v8930 = vpop.f32.mrf.mxu0
        %8931 = vmatprep.mubr.f32.mxu0 0.0
        %8932 = vmatmul.mubr.f32.gmra.mxu0 %v7702
        %v8933 = vpop.f32.mrf.mxu0
        %v8934 = vadd.f32 0.0, %v8933
        %v8935 = vpop.f32.mrf.mxu0
        %8936 = vmatprep.mubr.f32.mxu0 0.0
        %8937 = vmatmul.mubr.f32.gmra.mxu0 %v7705
        %v8938 = vpop.f32.mrf.mxu0
        %v8939 = vadd.f32 0.0, %v8938
        %v8940 = vpop.f32.mrf.mxu0
        %8941 = vmatprep.mubr.f32.mxu0 0.0
        %8942 = vmatmul.mubr.f32.gmra.mxu0 %v7708
        %v8943 = vpop.f32.mrf.mxu0
        %v8944 = vadd.f32 0.0, %v8943
        %v8945 = vpop.f32.mrf.mxu0
        %8946 = vmatprep.mubr.f32.mxu0 0.0
        %8947 = vmatmul.mubr.f32.gmra.mxu0 %v7711
        %v8948 = vpop.f32.mrf.mxu0
        %v8949 = vadd.f32 0.0, %v8948
        %v8950 = vpop.f32.mrf.mxu0
        %8951 = vmatprep.mubr.f32.mxu0 0.0
        %8952 = vmatmul.mubr.f32.gmra.mxu0 %v7714
        %v8953 = vpop.f32.mrf.mxu0
        %v8954 = vadd.f32 0.0, %v8953
        %v8955 = vpop.f32.mrf.mxu0
        %8956 = vmatprep.mubr.f32.mxu0 0.0
        %8957 = vmatmul.mubr.f32.gmra.mxu0 %v7717
        %v8958 = vpop.f32.mrf.mxu0
        %v8959 = vadd.f32 0.0, %v8958
        %v8960 = vpop.f32.mrf.mxu0
        %8961 = vmatprep.mubr.f32.mxu0 0.0
        %8962 = vmatmul.mubr.f32.gmra.mxu0 %v7720
        %v8963 = vpop.f32.mrf.mxu0
        %v8964 = vadd.f32 0.0, %v8963
        %v8965 = vpop.f32.mrf.mxu0
        %8966 = vmatprep.mubr.f32.mxu0 0.0
        %8967 = vmatmul.mubr.f32.gmra.mxu0 %v7723
        %v8968 = vpop.f32.mrf.mxu0
        %v8969 = vadd.f32 0.0, %v8968
        %v8970 = vpop.f32.mrf.mxu0
        %8971 = vmatprep.mubr.f32.mxu0 0.0
        %8972 = vmatmul.mubr.f32.gmra.mxu0 %v7726
        %v8973 = vpop.f32.mrf.mxu0
        %v8974 = vadd.f32 0.0, %v8973
        %v8975 = vpop.f32.mrf.mxu0
        %8976 = vmatprep.mubr.f32.mxu0 0.0
        %8977 = vmatmul.mubr.f32.gmra.mxu0 %v7989
        %v8978 = vpop.f32.mrf.mxu0
        %v8979 = vadd.f32 0.0, %v8978
        %v8980 = vpop.f32.mrf.mxu0
        %8981 = vmatprep.mubr.f32.mxu0 0.0
        %8982 = vmatmul.mubr.f32.gmra.mxu0 %v7992
        %v8983 = vpop.f32.mrf.mxu0
        %v8984 = vadd.f32 0.0, %v8983
        %v8985 = vpop.f32.mrf.mxu0
        %8986 = vmatprep.mubr.f32.mxu0 0.0
        %8987 = vmatmul.mubr.f32.gmra.mxu0 %v8255
        %v8988 = vpop.f32.mrf.mxu0
        %v8989 = vadd.f32 0.0, %v8988
        %v8990 = vpop.f32.mrf.mxu0
        %8991 = vmatprep.mubr.f32.mxu0 0.0
        %8992 = vmatmul.mubr.f32.gmra.mxu0 %v8258
        %v8993 = vpop.f32.mrf.mxu0
        %v8994 = vadd.f32 0.0, %v8993
        %v8995 = vpop.f32.mrf.mxu0
        %8996 = vmatprep.mubr.f32.mxu0 0.0
        %8997 = vmatmul.mubr.f32.gmra.mxu0 %v8521
        %v8998 = vpop.f32.mrf.mxu0
        %v8999 = vadd.f32 0.0, %v8998
        %v9000 = vpop.f32.mrf.mxu0
        %9001 = vmatprep.mubr.f32.mxu0 0.0
        %9002 = vmatmul.mubr.f32.gmra.mxu0 %v8524
        %v9003 = vpop.f32.mrf.mxu0
        %v9004 = vadd.f32 0.0, %v9003
        %v9005 = vpop.f32.mrf.mxu0
        %9006 = vmatprep.mubr.f32.mxu0 0.0
        %9007 = vmatmul.mubr.f32.gmra.mxu0 %v8787
        %v9008 = vpop.f32.mrf.mxu0
        %v9009 = vadd.f32 0.0, %v9008
        %v9010 = vpop.f32.mrf.mxu0
        %9011 = vmatprep.mubr.f32.mxu0 0.0
        %9012 = vmatmul.mubr.f32.gmra.mxu0 %v8790
        %v9013 = vpop.f32.mrf.mxu0
        %v9014 = vadd.f32 0.0, %v9013
        %v9015 = vpop.f32.mrf.mxu0
        %9016 = vdwg.mxu0
        %v9017 = vadd.f32 %v8751, %v8859
        %v9018 = vadd.f32 %v8752, %v8864
        %v9019 = vadd.f32 %v8753, %v8869
        %v9020 = vadd.f32 %v8754, %v8874
        %v9021 = vadd.f32 %v8755, %v8879
        %v9022 = vadd.f32 %v8756, %v8884
        %v9023 = vadd.f32 %v8757, %v8889
        %v9024 = vadd.f32 %v8758, %v8894
        %v9025 = vadd.f32 %v8759, %v8899
        %v9026 = vadd.f32 %v8760, %v8904
        %v9027 = vadd.f32 %v8761, %v8909
        %v9028 = vadd.f32 %v8762, %v8914
        %v9029 = vadd.f32 %v8763, %v8919
        %v9030 = vadd.f32 %v8764, %v8924
        %v9031 = vadd.f32 %v8765, %v8929
        %v9032 = vadd.f32 %v8766, %v8934
        %v9033 = vadd.f32 %v8767, %v8939
        %v9034 = vadd.f32 %v8768, %v8944
        %v9035 = vadd.f32 %v8769, %v8949
        %v9036 = vadd.f32 %v8770, %v8954
        %v9037 = vadd.f32 %v8771, %v8959
        %v9038 = vadd.f32 %v8772, %v8964
        %v9039 = vadd.f32 %v8773, %v8969
        %v9040 = vadd.f32 %v8774, %v8974
        %v9041 = vadd.f32 %v8775, %v8979
        %v9042 = vadd.f32 %v8776, %v8984
        %v9043 = vadd.f32 %v8777, %v8989
        %v9044 = vadd.f32 %v8778, %v8994
        %v9045 = vadd.f32 %v8779, %v8999
        %v9046 = vadd.f32 %v8780, %v9004
        %v9047 = vadd.f32 %v8781, %v9009
        %v9048 = vadd.f32 %v8782, %v9014
        %v9049 = vadd.f32 %v4768, %v9017
        %v9050 = vadd.f32 %v4769, %v9018
        %v9051 = vadd.f32 %v4770, %v9019
        %v9052 = vadd.f32 %v4771, %v9020
        %v9053 = vadd.f32 %v4772, %v9021
        %v9054 = vadd.f32 %v4773, %v9022
        %v9055 = vadd.f32 %v4774, %v9023
        %v9056 = vadd.f32 %v4775, %v9024
        %v9057 = vadd.f32 %v4776, %v9025
        %v9058 = vadd.f32 %v4777, %v9026
        %v9059 = vadd.f32 %v4778, %v9027
        %v9060 = vadd.f32 %v4779, %v9028
        %v9061 = vadd.f32 %v4780, %v9029
        %v9062 = vadd.f32 %v4781, %v9030
        %v9063 = vadd.f32 %v4782, %v9031
        %v9064 = vadd.f32 %v4783, %v9032
        %v9065 = vadd.f32 %v4784, %v9033
        %v9066 = vadd.f32 %v4785, %v9034
        %v9067 = vadd.f32 %v4786, %v9035
        %v9068 = vadd.f32 %v4787, %v9036
        %v9069 = vadd.f32 %v4788, %v9037
        %v9070 = vadd.f32 %v4789, %v9038
        %v9071 = vadd.f32 %v4790, %v9039
        %v9072 = vadd.f32 %v4791, %v9040
        %v9073 = vadd.f32 %v4792, %v9041
        %v9074 = vadd.f32 %v4793, %v9042
        %v9075 = vadd.f32 %v4794, %v9043
        %v9076 = vadd.f32 %v4795, %v9044
        %v9077 = vadd.f32 %v4796, %v9045
        %v9078 = vadd.f32 %v4797, %v9046
        %v9079 = vadd.f32 %v4798, %v9047
        %v9080 = vadd.f32 %v4799, %v9048
        %v9081 = vmax.f32 %v9049, 0.0
        %v9082 = vmax.f32 %v9050, 0.0
        %v9083 = vmax.f32 %v9051, 0.0
        %v9084 = vmax.f32 %v9052, 0.0
        %v9085 = vmax.f32 %v9053, 0.0
        %v9086 = vmax.f32 %v9054, 0.0
        %v9087 = vmax.f32 %v9055, 0.0
        %v9088 = vmax.f32 %v9056, 0.0
        %v9089 = vmax.f32 %v9057, 0.0
        %v9090 = vmax.f32 %v9058, 0.0
        %v9091 = vmax.f32 %v9059, 0.0
        %v9092 = vmax.f32 %v9060, 0.0
        %v9093 = vmax.f32 %v9061, 0.0
        %v9094 = vmax.f32 %v9062, 0.0
        %v9095 = vmax.f32 %v9063, 0.0
        %v9096 = vmax.f32 %v9064, 0.0
        %v9097 = vmax.f32 %v9065, 0.0
        %v9098 = vmax.f32 %v9066, 0.0
        %v9099 = vmax.f32 %v9067, 0.0
        %v9100 = vmax.f32 %v9068, 0.0
        %v9101 = vmax.f32 %v9069, 0.0
        %v9102 = vmax.f32 %v9070, 0.0
        %v9103 = vmax.f32 %v9071, 0.0
        %v9104 = vmax.f32 %v9072, 0.0
        %v9105 = vmax.f32 %v9073, 0.0
        %v9106 = vmax.f32 %v9074, 0.0
        %v9107 = vmax.f32 %v9075, 0.0
        %v9108 = vmax.f32 %v9076, 0.0
        %v9109 = vmax.f32 %v9077, 0.0
        %v9110 = vmax.f32 %v9078, 0.0
        %v9111 = vmax.f32 %v9079, 0.0
        %v9112 = vmax.f32 %v9080, 0.0
        %vm9113 = vcmask 195584
        %9114 = vst.msk [vmem:[%s325] sm:$0xff] %vm9113, %v9081
        %9115 = vst.msk [vmem:[%s325 + $0x8] sm:$0xff] %vm9113, %v9082
        %9116 = vst.msk [vmem:[%s325 + $0x10] sm:$0xff] %vm9113, %v9083
        %9117 = vst.msk [vmem:[%s325 + $0x18] sm:$0xff] %vm9113, %v9084
        %9118 = vst.msk [vmem:[%s325 + $0x20] sm:$0xff] %vm9113, %v9085
        %9119 = vst.msk [vmem:[%s325 + $0x28] sm:$0xff] %vm9113, %v9086
        %9120 = vst.msk [vmem:[%s325 + $0x30] sm:$0xff] %vm9113, %v9087
        %9121 = vst.msk [vmem:[%s325 + $0x38] sm:$0xff] %vm9113, %v9088
        %9122 = vst.msk [vmem:[%s325 + $0x40] sm:$0xff] %vm9113, %v9089
        %9123 = vst.msk [vmem:[%s325 + $0x48] sm:$0xff] %vm9113, %v9090
        %9124 = vst.msk [vmem:[%s325 + $0x50] sm:$0xff] %vm9113, %v9091
        %9125 = vst.msk [vmem:[%s325 + $0x58] sm:$0xff] %vm9113, %v9092
        %9126 = vst.msk [vmem:[%s325 + $0x60] sm:$0xff] %vm9113, %v9093
        %9127 = vst.msk [vmem:[%s325 + $0x68] sm:$0xff] %vm9113, %v9094
        %9128 = vst.msk [vmem:[%s325 + $0x70] sm:$0xff] %vm9113, %v9095
        %9129 = vst.msk [vmem:[%s325 + $0x78] sm:$0xff] %vm9113, %v9096
        %9130 = vst.msk [vmem:[%s325 + $0x80] sm:$0xff] %vm9113, %v9097
        %9131 = vst.msk [vmem:[%s325 + $0x88] sm:$0xff] %vm9113, %v9098
        %9132 = vst.msk [vmem:[%s325 + $0x90] sm:$0xff] %vm9113, %v9099
        %9133 = vst.msk [vmem:[%s325 + $0x98] sm:$0xff] %vm9113, %v9100
        %9134 = vst.msk [vmem:[%s325 + $0xa0] sm:$0xff] %vm9113, %v9101
        %9135 = vst.msk [vmem:[%s325 + $0xa8] sm:$0xff] %vm9113, %v9102
        %9136 = vst.msk [vmem:[%s325 + $0xb0] sm:$0xff] %vm9113, %v9103
        %9137 = vst.msk [vmem:[%s325 + $0xb8] sm:$0xff] %vm9113, %v9104
        %9138 = vst.msk [vmem:[%s325 + $0xc0] sm:$0xff] %vm9113, %v9105
        %9139 = vst.msk [vmem:[%s325 + $0xc8] sm:$0xff] %vm9113, %v9106
        %9140 = vst.msk [vmem:[%s325 + $0xd0] sm:$0xff] %vm9113, %v9107
        %9141 = vst.msk [vmem:[%s325 + $0xd8] sm:$0xff] %vm9113, %v9108
        %9142 = vst.msk [vmem:[%s325 + $0xe0] sm:$0xff] %vm9113, %v9109
        %9143 = vst.msk [vmem:[%s325 + $0xe8] sm:$0xff] %vm9113, %v9110
        %9144 = vst.msk [vmem:[%s325 + $0xf0] sm:$0xff] %vm9113, %v9111
        %9145 = vst.msk [vmem:[%s325 + $0xf8] sm:$0xff] %vm9113, %v9112
        %s9146 = sand.u32 %s225, 1
        %s9147 = scalar_lea.sflag [#allocation3], %s9146
        %s9148 = sand.u32 %s225, 1
        %s9149 = smul.addr %s9148, 256
        %s9150 = scalar_lea.vmem [#allocation2], %s9149
        // Predicated region
        $region57: #{large_separate_conv_forward.1} parent=55 // pred_check
          %p9151 = pneg %p235
        $region58: #{large_separate_conv_forward.1} parent=55 // pred_check_branch
          %9153 = sbr.rel (%p9151) target = $region60
        $region59: #{large_separate_conv_forward.1} parent=55 // pred_region
          %s9155 = ssub.s32 4096, 4096
          %9156 = vsyncadd %s9147, %s9155
          %s9157 = smul.addr %s23, 32
          %s9158 = smul.addr %s9157, 128
          %s9159 = scalar_lea.hbm %s9, %s9158
          %s9160 = sshll.u32 %s9150, 4
          %s9161 = int_to_ptr.vmem [resolvable:$true] %s9160
          %9166 = dma.vmem_to_hbm [thread:$0]  %s9161, 4096, %s9159, %s9147, 128, 128, 8
        $region60: #{large_separate_conv_forward.1} parent=55 // pred_fallthru
          _
      $region56: #{large_separate_conv_forward.1} parent=5 // pred_fallthru
        _
      %p9167 = scmp.le.s32.totalorder 2, %s18
      // Predicated region
      $region61: #{large_separate_conv_forward.1} parent=5 // pred_check
        %p9168 = pneg %p9167
      $region62: #{large_separate_conv_forward.1} parent=5 // pred_check_branch
        %9170 = sbr.rel (%p9168) target = $region64
      $region63: #{large_separate_conv_forward.1} parent=5 // pred_region
        %s9171 = ssub.s32 %s18, 2
        // Predicated region
        $region65: #{large_separate_conv_forward.1} parent=63 // pred_check
          %p9172 = pneg %p241
        $region66: #{large_separate_conv_forward.1} parent=63 // pred_check_branch
          %9174 = sbr.rel (%p9172) target = $region68
        $region67: #{large_separate_conv_forward.1} parent=63 // pred_region
          %s9175 = sand.u32 %s226, 1
          %s9176 = scalar_lea.sflag [#allocation3], %s9175
          %s9177 = sand.u32 %s226, 1
          %s9178 = smul.addr %s9177, 256
          %s9179 = scalar_lea.vmem [#allocation2], %s9178
          %9180 = dma.done %s9176, 4096
        $region68: #{large_separate_conv_forward.1} parent=63 // pred_fallthru
          _
      $region64: #{large_separate_conv_forward.1} parent=5 // pred_fallthru
        _
    $region6: #{large_separate_conv_forward.1} parent=1 // loop_footer
      %s22 = sadd.s32 1, %s18
    $region7: #{large_separate_conv_forward.1} parent=1 // loop_footer_branch
      %17 = sbr.rel target = $region3
    $region8: #{large_separate_conv_forward.1} parent=1 // loop_exit
      _
    %9181 = vsyncpa [#allocation3], 1
    %s9182 = scalar_lea.sflag [#allocation3], 1
    %9183 = vsyncpa %s9182, 1

</llo_original>
